<compile_context>
chip_gen: v7x
topology: tpu7x:2x2x1
jax: 0.10.0
libtpu: 0.0.40
codegen_flags: <defaults>
</compile_context>

<pallas_src>
import numpy as np
import jax
import jax.numpy as jnp
from jax.experimental import pallas as pl
from jax.experimental.pallas import tpu as pltpu


# ----------------------------- config ---------------------------------------
B, S, A, F = 2, 4, 14, 1
DIM, EDGE = 16, 32
ROUGH_MIN, ROUGH_MAX, ROUGH_NBINS = 3.25, 20.75, 8 + 1      # NUM_BINS + 1
DIST_MIN, DIST_MAX, DIST_NBINS = 2.0, 22.0, 12
POS_MIN, POS_MAX, POS_NBINS = -12.0, 12.0, 10
LANE = 128

# lane-aligned widths / offsets of the fused layouts
WR = 256                                        # atom-pair features: 196 -> 256 lanes
WP = 128                                        # local-vec features:  42 -> 128 lanes
DD = DIM * DIM                                  # 256 (outer-product / fd_til width)
OUT_W = ((EDGE + LANE - 1) // LANE) * LANE      # 128

# input feature slab [p_rows, FEAT_W]:  d | d_mask | local_vec | local_mask | pair_emb
F_D, F_DM, F_LV, F_LM, F_PF = 0, WR, 2 * WR, 2 * WR + WP, 2 * WR + 2 * WP
FEAT_W = 2 * WR + 3 * WP                        # 896

# in-kernel staging slab [TP, K_SLAB]:  9 rough bins | 12 dist bins | 10 pos bins | dm | lm
S_R = 0
S_D = S_R + ROUGH_NBINS * WR                    # 2304
S_P = S_D + DIST_NBINS * WR                     # 5376
S_DM = S_P + POS_NBINS * WP                     # 6656
S_LM = S_DM + WR                                # 6912
K_SLAB = S_LM + WP                              # 7040


def bin_params(min_bin, max_bin, no_bins):
    """Val2ContBins buffers: offsets (numpy [no_bins]) and coeff (python float)."""
    x_bin_size = (max_bin - min_bin) / (no_bins - 2)
    offsets = np.linspace(min_bin - x_bin_size / 2.0,
                          max_bin + x_bin_size / 2.0, no_bins).astype(np.float32)
    coeff = -0.5 / (x_bin_size * 0.2) ** 2
    return offsets, float(coeff)


OFF_R, COEFF_R = bin_params(ROUGH_MIN, ROUGH_MAX, ROUGH_NBINS)
OFF_D, COEFF_D = bin_params(DIST_MIN, DIST_MAX, DIST_NBINS)
OFF_P, COEFF_P = bin_params(POS_MIN, POS_MAX, POS_NBINS)


# ----------------------------- fused Pallas kernel ---------------------------
def _make_fused_kernel(offs_r, coeff_r, offs_d, coeff_d, offs_p, coeff_p):
    """Bin offsets / coeffs are baked in as compile-time python-float constants."""
    offs_r = [float(o) for o in offs_r]
    offs_d = [float(o) for o in offs_d]
    offs_p = [float(o) for o in offs_p]

    def kernel(feat_ref, wtil_ref, rep_ref, wz_ref, bsum_ref, bz_ref, out_ref, slab_ref):
        def soft_bin_to_slab(val_off, mask_off, offs, coeff, width, base):
            # Exact softmax over bins with a clip-based stabilization shift (softmax-
            # invariant, no per-bin max reduce).  Pass 1 stores the unscaled exps straight
            # into the slab (only `denom` stays live); pass 2 rescales each lane-aligned
            # slice in place -> no 12-deep live exp list, no unplanned spills.
            vals = feat_ref[:, pl.ds(val_off, width)]
            lo, hi = offs[0], offs[-1]
            oob = vals - jnp.clip(vals, lo, hi)
            shift = coeff * (oob * oob)                 # == max_b logit out of range, 0 inside
            denom = None
            for b, off in enumerate(offs):              # unrolled over <= 12 bins (VPU/EUP)
                x = vals - off
                e = jnp.exp(coeff * (x * x) - shift)
                slab_ref[:, pl.ds(base + b * width, width)] = e
                denom = e if denom is None else denom + e
            scale = (feat_ref[:, pl.ds(mask_off, width)]
                     * pl.reciprocal(denom, approx=True))        # EUP slot, free-ish
            for b in range(len(offs)):
                idx = pl.ds(base + b * width, width)
                slab_ref[:, idx] = slab_ref[:, idx] * scale

        # stage masked soft-bin probabilities (and the raw masks for the folded bias rows)
        soft_bin_to_slab(F_D, F_DM, offs_r, coeff_r, WR, S_R)
        soft_bin_to_slab(F_D, F_DM, offs_d, coeff_d, WR, S_D)
        soft_bin_to_slab(F_LV, F_LM, offs_p, coeff_p, WP, S_P)
        slab_ref[:, pl.ds(S_DM, WR)] = feat_ref[:, pl.ds(F_DM, WR)]
        slab_ref[:, pl.ds(S_LM, WP)] = feat_ref[:, pl.ds(F_LM, WP)]

        # ONE wide K=K_SLAB, N=dim*dim MXU contraction: bins->dim embedding Linears,
        # flatten->dim projections, mask-bias rows and the `til` expansion all folded in.
        fd_til = (jnp.dot(slab_ref[...], wtil_ref[...], preferred_element_type=jnp.float32)
                  + bsum_ref[...])                               # [TP, dim*dim]
        pf_rep = jnp.dot(feat_ref[:, pl.ds(F_PF, WP)], rep_ref[...],
                         preferred_element_type=jnp.float32)     # [TP, dim*dim]
        out_ref[...] = (jnp.dot(pf_rep * fd_til, wz_ref[...],
                                preferred_element_type=jnp.float32)
                        + bz_ref[...])                           # [TP, OUT_W] lane-dense

    return kernel


# ----------------------------- wrapper helpers --------------------------------
def _choose_row_tile(p_rows):
    """Row tile from padded-width VMEM accounting; prefer a divisor of p_rows (no row-pad
    copies) and keep >=2 grid steps so both v7x TensorCores get work."""
    weight_bytes = 2 * 4 * (K_SLAB * DD + WP * DD + DD * OUT_W + 8 * DD + 8 * OUT_W)
    per_row_bytes = 4 * (2 * FEAT_W + 2 * OUT_W + K_SLAB + 8 * WR)  # dbl-buf io + slab + live
    budget = 26 * 1024 * 1024 - weight_bytes
    cap = max(8, min(128, (max(budget, 0) // per_row_bytes) // 8 * 8))
    cap = min(cap, ((p_rows + 7) // 8) * 8)
    if p_rows >= 16:
        cap = min(cap, max(8, (((p_rows + 1) // 2) + 7) // 8 * 8))
    best = 0
    for t in range(8, cap + 1, 8):
        if p_rows % t == 0:
            best = t
    if best:
        return best, p_rows
    return cap, ((p_rows + cap - 1) // cap) * cap


def _pad_lanes(x, width):
    return jnp.pad(x, ((0, 0), (0, width - x.shape[1])))


def _pairwise_features(aatype1, pos_a, mask_a, pos_b, mask_b, rot, trans, aa_emb):
    """Residue-pair geometry in lane-dense flattened layout (plain JAX glue).

    The squared-distance expansion avoids materializing the [B,S,S,A,A,3] diff tensor.
    TODO(synk): fuse this geometry prep (and the aa_emb gather) into the kernel via
    (b,si,sj)-blocked BlockSpecs instead of precomputing the [p_rows, 896] feature slab.
    """
    b, s = aatype1.shape
    a = pos_a.shape[2]
    p_rows = b * s * s

    # aatype2 unused: the reference forward builds the pair index from aatype1 twice.
    pairwise = aatype1[:, :, None] * 21 + aatype1[:, None, :]
    pf = aa_emb[pairwise].reshape(p_rows, aa_emb.shape[1])

    na = jnp.sum(pos_a * pos_a, axis=-1)                                   # [B,S,A]
    nb_ = jnp.sum(pos_b * pos_b, axis=-1)                                  # [B,S,A]
    cross = jnp.einsum("bixc,bjyc->bijxy", pos_a, pos_b)                   # [B,S,S,A,A]
    dsq = na[:, :, None, :, None] + nb_[:, None, :, None, :] - 2.0 * cross
    d = jnp.sqrt(jnp.maximum(dsq, 0.0))
    d_mask = mask_a[:, :, None, :, None] * mask_b[:, None, :, None, :]     # [B,S,S,A,A]

    # local frame: R(si)^T (pos_b(sj) - t(si)), mean over F (=1) frames.
    rp = jnp.einsum("bsfji,btaj->bstfai", rot, pos_b)                      # [B,S,S,F,A,3]
    rt = jnp.einsum("bsfji,bsfj->bsfi", rot, trans)                        # [B,S,F,3]
    lv = jnp.mean(rp - rt[:, :, None, :, None, :], axis=3)                 # [B,S,S,A,3]
    local_mask = mask_b[:, None, :, :] * mask_b[:, :, None, :]             # [B,S,S,A]
    lm = jnp.broadcast_to(local_mask[..., None], local_mask.shape + (3,))

    return (pf,
            d.reshape(p_rows, a * a), d_mask.reshape(p_rows, a * a),
            lv.reshape(p_rows, a * 3), lm.reshape(p_rows, a * 3))


def _fold_params(params):
    """Fold everything linear after the soft binning into one [K_SLAB, dim*dim] MXU operand.

    bins->dim embedding Linears are folded into the flatten->dim projections
    (linear-into-linear), per-bin weights + mask-bias rows are concatenated along K in the
    slab layout above, and the `til` outer-product expansion is folded in so the single
    projection directly produces fd_til (N = dim*dim = 256 output lanes)."""
    dim = params["W_re"].shape[1]
    dd = dim * dim
    edge = params["bz"].shape[1]
    w_rl = params["W_rl"].reshape(A * A, dim, dim)   # [k, e, j]
    w_dl = params["W_dl"].reshape(A * A, dim, dim)
    w_pl = params["W_pl"].reshape(A * 3, dim, dim)
    wrf = jnp.einsum("be,kej->bkj", params["W_re"], w_rl)        # [NB_r, A*A, dim]
    wdf = jnp.einsum("be,kej->bkj", params["W_de"], w_dl)        # [NB_d, A*A, dim]
    wpf = jnp.einsum("be,kej->bkj", params["W_pe"], w_pl)        # [NB_p, A*3, dim]
    brd = (jnp.einsum("e,kej->kj", params["b_re"][0], w_rl)
           + jnp.einsum("e,kej->kj", params["b_de"][0], w_dl))   # [A*A, dim]  (x d_mask)
    bp = jnp.einsum("e,kej->kj", params["b_pe"][0], w_pl)        # [A*3, dim]  (x local_mask)
    bsum = params["b_rl"] + params["b_dl"] + params["b_pl"]      # [1, dim]

    def padk(x, w):                                  # zero-pad the K (second-to-last) axis
        return jnp.pad(x, [(0, 0)] * (x.ndim - 2) + [(0, w - x.shape[-2]), (0, 0)])

    w_all = jnp.concatenate([
        padk(wrf, WR).reshape(ROUGH_NBINS * WR, dim),
        padk(wdf, WR).reshape(DIST_NBINS * WR, dim),
        padk(wpf, WP).reshape(POS_NBINS * WP, dim),
        padk(brd, WR),
        padk(bp, WP),
    ], axis=0)                                       # [K_SLAB, dim]

    # outer-product expansion matrices; `til` is folded into the weights, `rep` stays.
    til = jnp.asarray(np.tile(np.eye(dim, dtype=np.float32), (1, dim)))        # [dim, dd]
    rep = jnp.asarray(np.repeat(np.eye(dim, dtype=np.float32), dim, axis=1))   # [dim, dd]
    rep_pad = jnp.pad(rep, ((0, WP - dim), (0, 0)))  # pf lives in a 128-lane input slice

    w_til = w_all @ til                              # [K_SLAB, dd]
    bsum_til = bsum @ til                            # [1, dd]

    wz_pad = jnp.pad(params["Wz"].reshape(dd, edge), ((0, 0), (0, OUT_W - edge)))
    bz_pad = jnp.pad(params["bz"], ((0, 0), (0, OUT_W - edge)))
    return w_til, rep_pad, wz_pad, bsum_til, bz_pad


@jax.jit
def struct_embedder_pallas(params, aatype1, aatype2, pos_a, mask_a,
                           pos_b, mask_b, rot, trans):
    del aatype2  # unused in the reference forward as written (pair index from aatype1 twice)
    b, s = aatype1.shape
    p_rows = b * s * s

    pf, d, dm, lv, lm = _pairwise_features(aatype1, pos_a, mask_a, pos_b, mask_b,
                                           rot, trans, params["aa_emb"])
    w_til, rep_pad, wz_pad, bsum_til, bz_pad = _fold_params(params)

    # one lane-aligned row slab -> a single input DMA per grid step
    feat = jnp.concatenate([_pad_lanes(d, WR), _pad_lanes(dm, WR),
                            _pad_lanes(lv, WP), _pad_lanes(lm, WP),
                            _pad_lanes(pf, WP)], axis=1)          # [p_rows, FEAT_W]

    tp, n_pad = _choose_row_tile(p_rows)
    if n_pad != p_rows:   # only when no multiple-of-8 divisor of p_rows fits the budget
        feat = jnp.pad(feat, ((0, n_pad - p_rows), (0, 0)))

    kernel = _make_fused_kernel(OFF_R, COEFF_R, OFF_D, COEFF_D, OFF_P, COEFF_P)

    def const(arr):  # grid-invariant operand, whole array as one block
        return pl.BlockSpec(arr.shape, lambda i: (0, 0))

    # NOTE: pipeline_mode=pl.Buffered(1) on the grid-invariant weight specs would halve
    # their VMEM footprint; left at the default double-buffering since everything fits the
    # 32 MiB scoped limit at this tile size.
    z = pl.pallas_call(
        kernel,
        out_shape=jax.ShapeDtypeStruct((n_pad, OUT_W), jnp.float32),
        grid=(n_pad // tp,),
        in_specs=[pl.BlockSpec((tp, FEAT_W), lambda i: (i, 0)),
                  const(w_til), const(rep_pad), const(wz_pad),
                  const(bsum_til), const(bz_pad)],
        out_specs=pl.BlockSpec((tp, OUT_W), lambda i: (i, 0)),
        scratch_shapes=[pltpu.VMEM((tp, K_SLAB), jnp.float32)],
        compiler_params=pltpu.CompilerParams(
            dimension_semantics=("parallel",),
            vmem_limit_bytes=32 * 1024 * 1024),
    )(feat, w_til, rep_pad, wz_pad, bsum_til, bz_pad)

    return z[:p_rows, :EDGE].reshape(b, s, s, EDGE)


# ----------------------------- pure-JAX reference ----------------------------
def ref_forward(params, aatype1, aatype2, pos_a, mask_a, pos_b, mask_b, rot, trans):
    del aatype2
    pairwise = aatype1[:, :, None] * 21 + aatype1[:, None, :]
    diff = pos_b[:, None, :, None] - pos_a[:, :, None, :, None]
    d = jnp.sqrt(jnp.sum(diff * diff, axis=-1))
    d_mask = (mask_b[:, None, :, None] * mask_a[:, :, None, :, None])[..., None]
    local_mask = (mask_b[:, None, :] * mask_b[:, :, None])[..., None]
    rb = rot[:, :, None, :, None]
    tb = trans[:, :, None, :, None]
    p = pos_b[:, None, :, None, :, :]
    local_vec = jnp.einsum("...ji,...j->...i", rb, p - tb).mean(axis=-3)

    def v2b(x, offsets, coeff):
        z = x[..., None] - offsets
        xn = coeff * z * z
        xn = xn - jnp.max(xn, axis=-1, keepdims=True)
        return jax.nn.softmax(xn, axis=-1)

    b, s = aatype1.shape
    pf = params["aa_emb"][pairwise]
    d1 = v2b(d, params["off_r"], COEFF_R) @ params["W_re"] + params["b_re"][0]
    d1 = d1 * d_mask
    d1 = d1.reshape(b, s, s, -1) @ params["W_rl"] + params["b_rl"][0]
    d2 = v2b(d, params["off_d"], COEFF_D) @ params["W_de"] + params["b_de"][0]
    d2 = d2 * d_mask
    d2 = d2.reshape(b, s, s, -1) @ params["W_dl"] + params["b_dl"][0]
    d3 = v2b(local_vec, params["off_p"], COEFF_P) @ params["W_pe"] + params["b_pe"][0]
    d3 = d3 * local_mask[..., None]
    d3 = d3.reshape(b, s, s, -1) @ params["W_pl"] + params["b_pl"][0]
    fd = d1 + d2 + d3
    o = jnp.einsum("bsdi,bsdj->bsdij", pf, fd)
    return jnp.einsum("bsdij,ijh->bsdh", o, params["Wz"]) + params["bz"][0]


# ----------------------------- params / inputs -------------------------------
def init_params(key):
    ks = jax.random.split(key, 16)

    def w(k, shape, fan_in):
        return jax.random.normal(k, shape, jnp.float32) / np.sqrt(fan_in)

    params = {
        "aa_emb": jax.random.normal(ks[0], (21 * 21, DIM), jnp.float32) * 0.5,
        "W_re": w(ks[1], (ROUGH_NBINS, DIM), ROUGH_NBINS),
        "b_re": jax.random.normal(ks[2], (1, DIM), jnp.float32) * 0.1,
        "W_de": w(ks[3], (DIST_NBINS, DIM), DIST_NBINS),
        "b_de": jax.random.normal(ks[4], (1, DIM), jnp.float32) * 0.1,
        "W_pe": w(ks[5], (POS_NBINS, DIM), POS_NBINS),
        "b_pe": jax.random.normal(ks[6], (1, DIM), jnp.float32) * 0.1,
        "W_rl": w(ks[7], (A * A * DIM, DIM), A * A * DIM),
        "b_rl": jax.random.normal(ks[8], (1, DIM), jnp.float32) * 0.1,
        "W_dl": w(ks[9], (A * A * DIM, DIM), A * A * DIM),
        "b_dl": jax.random.normal(ks[10], (1, DIM), jnp.float32) * 0.1,
        "W_pl": w(ks[11], (F * A * 3 * DIM, DIM), F * A * 3 * DIM),
        "b_pl": jax.random.normal(ks[12], (1, DIM), jnp.float32) * 0.1,
        # torch zero-inits Wz/bz; random here so the test is meaningful.
        "Wz": w(ks[13], (DIM, DIM, EDGE), DIM * DIM),
        "bz": jax.random.normal(ks[14], (1, EDGE), jnp.float32) * 0.1,
        "off_r": jnp.asarray(OFF_R), "off_d": jnp.asarray(OFF_D), "off_p": jnp.asarray(OFF_P),
    }
    return params


def quat_to_rotmat(q):
    q = q / jnp.linalg.norm(q, axis=-1, keepdims=True)
    w_, x, y, z = jnp.moveaxis(q, -1, 0)
    r = jnp.stack([
        1 - 2 * (y * y + z * z), 2 * (x * y - z * w_), 2 * (x * z + y * w_),
        2 * (x * y + z * w_), 1 - 2 * (x * x + z * z), 2 * (y * z - x * w_),
        2 * (x * z - y * w_), 2 * (y * z + x * w_), 1 - 2 * (x * x + y * y),
    ], axis=-1)
    return r.reshape(q.shape[:-1] + (3, 3))


if __name__ == "__main__":
    root = jax.random.PRNGKey(0)
    kp, ki = jax.random.split(root)
    params = init_params(kp)

    k = jax.random.split(ki, 8)
    aatype1 = jax.random.randint(k[0], (B, S), 0, 21, dtype=jnp.int32)
    aatype2 = jax.random.randint(k[1], (B, S), 0, 21, dtype=jnp.int32)
    pos_a = jax.random.normal(k[2], (B, S, A, 3), jnp.float32) * 3.0
    pos_b = jax.random.normal(k[3], (B, S, A, 3), jnp.float32) * 3.0
    mask_a = (jax.random.uniform(k[4], (B, S, A)) < 0.9).astype(jnp.float32)
    mask_b = (jax.random.uniform(k[5], (B, S, A)) < 0.9).astype(jnp.float32)
    rot = quat_to_rotmat(jax.random.normal(k[6], (B, S, F, 4), jnp.float32))
    trans = jax.random.normal(k[7], (B, S, F, 3), jnp.float32)

    z_pallas = jax.block_until_ready(
        struct_embedder_pallas(params, aatype1, aatype2, pos_a, mask_a,
                               pos_b, mask_b, rot, trans))
    z_ref = jax.block_until_ready(
        ref_forward(params, aatype1, aatype2, pos_a, mask_a, pos_b, mask_b, rot, trans))

    assert z_pallas.shape == (B, S, S, EDGE), z_pallas.shape
    np.testing.assert_allclose(np.asarray(z_pallas), np.asarray(z_ref),
                               rtol=5e-2, atol=1e-2)
    print("KERNEL_OK")
</pallas_src>

<mosaic_0001>
module attributes {stable_mosaic.version = 11 : i64} {
  func.func @kernel(%arg0: i32, %arg1: memref<16x896xf32, #tpu.memory_space<vmem>>, %arg2: memref<7040x256xf32, #tpu.memory_space<vmem>>, %arg3: memref<128x256xf32, #tpu.memory_space<vmem>>, %arg4: memref<256x128xf32, #tpu.memory_space<vmem>>, %arg5: memref<1x256xf32, #tpu.memory_space<vmem>>, %arg6: memref<1x128xf32, #tpu.memory_space<vmem>>, %arg7: memref<16x128xf32, #tpu.memory_space<vmem>>, %arg8: memref<16x7040xf32, #tpu.memory_space<vmem>>) attributes {dimension_semantics = [#tpu.dimension_semantics<parallel>], iteration_bounds = array<i64: 2>, scalar_prefetch = 0 : i64, scratch_operands = 1 : i64, tpu.core_type = #tpu.core_type<tc>, window_params = [{transform_indices = @transform_0, window_bounds = array<i64: 16, 896>}, {pipeline_mode = #tpu.pipeline_mode<synchronous>, transform_indices = @transform_1, window_bounds = array<i64: 7040, 256>}, {pipeline_mode = #tpu.pipeline_mode<synchronous>, transform_indices = @transform_2, window_bounds = array<i64: 128, 256>}, {pipeline_mode = #tpu.pipeline_mode<synchronous>, transform_indices = @transform_3, window_bounds = array<i64: 256, 128>}, {pipeline_mode = #tpu.pipeline_mode<synchronous>, transform_indices = @transform_4, window_bounds = array<i64: 1, 256>}, {pipeline_mode = #tpu.pipeline_mode<synchronous>, transform_indices = @transform_5, window_bounds = array<i64: 1, 128>}, {transform_indices = @transform_6, window_bounds = array<i64: 16, 128>}]} {
    %c0 = arith.constant 0 : index
    %c0_0 = arith.constant 0 : index
    %0 = vector.load %arg1[%c0, %c0_0] : memref<16x896xf32, #tpu.memory_space<vmem>>, vector<16x256xf32>
    %cst = arith.constant 2.000000e+00 : f32
    %cst_1 = arith.constant 2.200000e+01 : f32
    %1 = vector.broadcast %cst : f32 to vector<16x256xf32>
    %2 = arith.maximumf %1, %0 : vector<16x256xf32>
    %3 = vector.broadcast %cst_1 : f32 to vector<16x256xf32>
    %4 = arith.minimumf %3, %2 : vector<16x256xf32>
    %5 = arith.subf %0, %4 : vector<16x256xf32>
    %6 = arith.mulf %5, %5 : vector<16x256xf32>
    %cst_2 = arith.constant -2.000000e+00 : f32
    %7 = vector.broadcast %cst_2 : f32 to vector<16x256xf32>
    %8 = arith.mulf %7, %6 : vector<16x256xf32>
    %cst_3 = arith.constant 2.000000e+00 : f32
    %9 = vector.broadcast %cst_3 : f32 to vector<16x256xf32>
    %10 = arith.subf %0, %9 : vector<16x256xf32>
    %11 = arith.mulf %10, %10 : vector<16x256xf32>
    %cst_4 = arith.constant -2.000000e+00 : f32
    %12 = vector.broadcast %cst_4 : f32 to vector<16x256xf32>
    %13 = arith.mulf %12, %11 : vector<16x256xf32>
    %14 = arith.subf %13, %8 : vector<16x256xf32>
    %15 = math.exp %14 : vector<16x256xf32>
    %c0_5 = arith.constant 0 : index
    %c0_6 = arith.constant 0 : index
    %16 = vector.load %arg8[%c0_5, %c0_6] : memref<16x7040xf32, #tpu.memory_space<vmem>>, vector<16x256xf32>
    tpu.vector_store %arg8[%c0_5, %c0_6], %15 {strides = array<i32>} : memref<16x7040xf32, #tpu.memory_space<vmem>>, vector<16x256xf32>,
    %cst_7 = arith.constant 4.500000e+00 : f32
    %17 = vector.broadcast %cst_7 : f32 to vector<16x256xf32>
    %18 = arith.subf %0, %17 : vector<16x256xf32>
    %19 = arith.mulf %18, %18 : vector<16x256xf32>
    %cst_8 = arith.constant -2.000000e+00 : f32
    %20 = vector.broadcast %cst_8 : f32 to vector<16x256xf32>
    %21 = arith.mulf %20, %19 : vector<16x256xf32>
    %22 = arith.subf %21, %8 : vector<16x256xf32>
    %23 = math.exp %22 : vector<16x256xf32>
    %c0_9 = arith.constant 0 : index
    %c256 = arith.constant 256 : index
    %24 = vector.load %arg8[%c0_9, %c256] : memref<16x7040xf32, #tpu.memory_space<vmem>>, vector<16x256xf32>
    tpu.vector_store %arg8[%c0_9, %c256], %23 {strides = array<i32>} : memref<16x7040xf32, #tpu.memory_space<vmem>>, vector<16x256xf32>,
    %25 = arith.addf %15, %23 : vector<16x256xf32>
    %cst_10 = arith.constant 7.000000e+00 : f32
    %26 = vector.broadcast %cst_10 : f32 to vector<16x256xf32>
    %27 = arith.subf %0, %26 : vector<16x256xf32>
    %28 = arith.mulf %27, %27 : vector<16x256xf32>
    %cst_11 = arith.constant -2.000000e+00 : f32
    %29 = vector.broadcast %cst_11 : f32 to vector<16x256xf32>
    %30 = arith.mulf %29, %28 : vector<16x256xf32>
    %31 = arith.subf %30, %8 : vector<16x256xf32>
    %32 = math.exp %31 : vector<16x256xf32>
    %c0_12 = arith.constant 0 : index
    %c512 = arith.constant 512 : index
    %33 = vector.load %arg8[%c0_12, %c512] : memref<16x7040xf32, #tpu.memory_space<vmem>>, vector<16x256xf32>
    tpu.vector_store %arg8[%c0_12, %c512], %32 {strides = array<i32>} : memref<16x7040xf32, #tpu.memory_space<vmem>>, vector<16x256xf32>,
    %34 = arith.addf %25, %32 : vector<16x256xf32>
    %cst_13 = arith.constant 9.500000e+00 : f32
    %35 = vector.broadcast %cst_13 : f32 to vector<16x256xf32>
    %36 = arith.subf %0, %35 : vector<16x256xf32>
    %37 = arith.mulf %36, %36 : vector<16x256xf32>
    %cst_14 = arith.constant -2.000000e+00 : f32
    %38 = vector.broadcast %cst_14 : f32 to vector<16x256xf32>
    %39 = arith.mulf %38, %37 : vector<16x256xf32>
    %40 = arith.subf %39, %8 : vector<16x256xf32>
    %41 = math.exp %40 : vector<16x256xf32>
    %c0_15 = arith.constant 0 : index
    %c768 = arith.constant 768 : index
    %42 = vector.load %arg8[%c0_15, %c768] : memref<16x7040xf32, #tpu.memory_space<vmem>>, vector<16x256xf32>
    tpu.vector_store %arg8[%c0_15, %c768], %41 {strides = array<i32>} : memref<16x7040xf32, #tpu.memory_space<vmem>>, vector<16x256xf32>,
    %43 = arith.addf %34, %41 : vector<16x256xf32>
    %cst_16 = arith.constant 1.200000e+01 : f32
    %44 = vector.broadcast %cst_16 : f32 to vector<16x256xf32>
    %45 = arith.subf %0, %44 : vector<16x256xf32>
    %46 = arith.mulf %45, %45 : vector<16x256xf32>
    %cst_17 = arith.constant -2.000000e+00 : f32
    %47 = vector.broadcast %cst_17 : f32 to vector<16x256xf32>
    %48 = arith.mulf %47, %46 : vector<16x256xf32>
    %49 = arith.subf %48, %8 : vector<16x256xf32>
    %50 = math.exp %49 : vector<16x256xf32>
    %c0_18 = arith.constant 0 : index
    %c1024 = arith.constant 1024 : index
    %51 = vector.load %arg8[%c0_18, %c1024] : memref<16x7040xf32, #tpu.memory_space<vmem>>, vector<16x256xf32>
    tpu.vector_store %arg8[%c0_18, %c1024], %50 {strides = array<i32>} : memref<16x7040xf32, #tpu.memory_space<vmem>>, vector<16x256xf32>,
    %52 = arith.addf %43, %50 : vector<16x256xf32>
    %cst_19 = arith.constant 1.450000e+01 : f32
    %53 = vector.broadcast %cst_19 : f32 to vector<16x256xf32>
    %54 = arith.subf %0, %53 : vector<16x256xf32>
    %55 = arith.mulf %54, %54 : vector<16x256xf32>
    %cst_20 = arith.constant -2.000000e+00 : f32
    %56 = vector.broadcast %cst_20 : f32 to vector<16x256xf32>
    %57 = arith.mulf %56, %55 : vector<16x256xf32>
    %58 = arith.subf %57, %8 : vector<16x256xf32>
    %59 = math.exp %58 : vector<16x256xf32>
    %c0_21 = arith.constant 0 : index
    %c1280 = arith.constant 1280 : index
    %60 = vector.load %arg8[%c0_21, %c1280] : memref<16x7040xf32, #tpu.memory_space<vmem>>, vector<16x256xf32>
    tpu.vector_store %arg8[%c0_21, %c1280], %59 {strides = array<i32>} : memref<16x7040xf32, #tpu.memory_space<vmem>>, vector<16x256xf32>,
    %61 = arith.addf %52, %59 : vector<16x256xf32>
    %cst_22 = arith.constant 1.700000e+01 : f32
    %62 = vector.broadcast %cst_22 : f32 to vector<16x256xf32>
    %63 = arith.subf %0, %62 : vector<16x256xf32>
    %64 = arith.mulf %63, %63 : vector<16x256xf32>
    %cst_23 = arith.constant -2.000000e+00 : f32
    %65 = vector.broadcast %cst_23 : f32 to vector<16x256xf32>
    %66 = arith.mulf %65, %64 : vector<16x256xf32>
    %67 = arith.subf %66, %8 : vector<16x256xf32>
    %68 = math.exp %67 : vector<16x256xf32>
    %c0_24 = arith.constant 0 : index
    %c1536 = arith.constant 1536 : index
    %69 = vector.load %arg8[%c0_24, %c1536] : memref<16x7040xf32, #tpu.memory_space<vmem>>, vector<16x256xf32>
    tpu.vector_store %arg8[%c0_24, %c1536], %68 {strides = array<i32>} : memref<16x7040xf32, #tpu.memory_space<vmem>>, vector<16x256xf32>,
    %70 = arith.addf %61, %68 : vector<16x256xf32>
    %cst_25 = arith.constant 1.950000e+01 : f32
    %71 = vector.broadcast %cst_25 : f32 to vector<16x256xf32>
    %72 = arith.subf %0, %71 : vector<16x256xf32>
    %73 = arith.mulf %72, %72 : vector<16x256xf32>
    %cst_26 = arith.constant -2.000000e+00 : f32
    %74 = vector.broadcast %cst_26 : f32 to vector<16x256xf32>
    %75 = arith.mulf %74, %73 : vector<16x256xf32>
    %76 = arith.subf %75, %8 : vector<16x256xf32>
    %77 = math.exp %76 : vector<16x256xf32>
    %c0_27 = arith.constant 0 : index
    %c1792 = arith.constant 1792 : index
    %78 = vector.load %arg8[%c0_27, %c1792] : memref<16x7040xf32, #tpu.memory_space<vmem>>, vector<16x256xf32>
    tpu.vector_store %arg8[%c0_27, %c1792], %77 {strides = array<i32>} : memref<16x7040xf32, #tpu.memory_space<vmem>>, vector<16x256xf32>,
    %79 = arith.addf %70, %77 : vector<16x256xf32>
    %cst_28 = arith.constant 2.200000e+01 : f32
    %80 = vector.broadcast %cst_28 : f32 to vector<16x256xf32>
    %81 = arith.subf %0, %80 : vector<16x256xf32>
    %82 = arith.mulf %81, %81 : vector<16x256xf32>
    %cst_29 = arith.constant -2.000000e+00 : f32
    %83 = vector.broadcast %cst_29 : f32 to vector<16x256xf32>
    %84 = arith.mulf %83, %82 : vector<16x256xf32>
    %85 = arith.subf %84, %8 : vector<16x256xf32>
    %86 = math.exp %85 : vector<16x256xf32>
    %c0_30 = arith.constant 0 : index
    %c2048 = arith.constant 2048 : index
    %87 = vector.load %arg8[%c0_30, %c2048] : memref<16x7040xf32, #tpu.memory_space<vmem>>, vector<16x256xf32>
    tpu.vector_store %arg8[%c0_30, %c2048], %86 {strides = array<i32>} : memref<16x7040xf32, #tpu.memory_space<vmem>>, vector<16x256xf32>,
    %88 = arith.addf %79, %86 : vector<16x256xf32>
    %c0_31 = arith.constant 0 : index
    %c256_32 = arith.constant 256 : index
    %89 = vector.load %arg1[%c0_31, %c256_32] : memref<16x896xf32, #tpu.memory_space<vmem>>, vector<16x256xf32>
    %90 = tpu.reciprocal %88 {approx = true} : vector<16x256xf32> -> vector<16x256xf32>
    %91 = arith.mulf %89, %90 : vector<16x256xf32>
    %c0_33 = arith.constant 0 : index
    %c0_34 = arith.constant 0 : index
    %92 = vector.load %arg8[%c0_33, %c0_34] : memref<16x7040xf32, #tpu.memory_space<vmem>>, vector<16x256xf32>
    %93 = arith.mulf %92, %91 : vector<16x256xf32>
    %c0_35 = arith.constant 0 : index
    %c0_36 = arith.constant 0 : index
    %94 = vector.load %arg8[%c0_35, %c0_36] : memref<16x7040xf32, #tpu.memory_space<vmem>>, vector<16x256xf32>
    tpu.vector_store %arg8[%c0_35, %c0_36], %93 {strides = array<i32>} : memref<16x7040xf32, #tpu.memory_space<vmem>>, vector<16x256xf32>,
    %c0_37 = arith.constant 0 : index
    %c256_38 = arith.constant 256 : index
    %95 = vector.load %arg8[%c0_37, %c256_38] : memref<16x7040xf32, #tpu.memory_space<vmem>>, vector<16x256xf32>
    %96 = arith.mulf %95, %91 : vector<16x256xf32>
    %c0_39 = arith.constant 0 : index
    %c256_40 = arith.constant 256 : index
    %97 = vector.load %arg8[%c0_39, %c256_40] : memref<16x7040xf32, #tpu.memory_space<vmem>>, vector<16x256xf32>
    tpu.vector_store %arg8[%c0_39, %c256_40], %96 {strides = array<i32>} : memref<16x7040xf32, #tpu.memory_space<vmem>>, vector<16x256xf32>,
    %c0_41 = arith.constant 0 : index
    %c512_42 = arith.constant 512 : index
    %98 = vector.load %arg8[%c0_41, %c512_42] : memref<16x7040xf32, #tpu.memory_space<vmem>>, vector<16x256xf32>
    %99 = arith.mulf %98, %91 : vector<16x256xf32>
    %c0_43 = arith.constant 0 : index
    %c512_44 = arith.constant 512 : index
    %100 = vector.load %arg8[%c0_43, %c512_44] : memref<16x7040xf32, #tpu.memory_space<vmem>>, vector<16x256xf32>
    tpu.vector_store %arg8[%c0_43, %c512_44], %99 {strides = array<i32>} : memref<16x7040xf32, #tpu.memory_space<vmem>>, vector<16x256xf32>,
    %c0_45 = arith.constant 0 : index
    %c768_46 = arith.constant 768 : index
    %101 = vector.load %arg8[%c0_45, %c768_46] : memref<16x7040xf32, #tpu.memory_space<vmem>>, vector<16x256xf32>
    %102 = arith.mulf %101, %91 : vector<16x256xf32>
    %c0_47 = arith.constant 0 : index
    %c768_48 = arith.constant 768 : index
    %103 = vector.load %arg8[%c0_47, %c768_48] : memref<16x7040xf32, #tpu.memory_space<vmem>>, vector<16x256xf32>
    tpu.vector_store %arg8[%c0_47, %c768_48], %102 {strides = array<i32>} : memref<16x7040xf32, #tpu.memory_space<vmem>>, vector<16x256xf32>,
    %c0_49 = arith.constant 0 : index
    %c1024_50 = arith.constant 1024 : index
    %104 = vector.load %arg8[%c0_49, %c1024_50] : memref<16x7040xf32, #tpu.memory_space<vmem>>, vector<16x256xf32>
    %105 = arith.mulf %104, %91 : vector<16x256xf32>
    %c0_51 = arith.constant 0 : index
    %c1024_52 = arith.constant 1024 : index
    %106 = vector.load %arg8[%c0_51, %c1024_52] : memref<16x7040xf32, #tpu.memory_space<vmem>>, vector<16x256xf32>
    tpu.vector_store %arg8[%c0_51, %c1024_52], %105 {strides = array<i32>} : memref<16x7040xf32, #tpu.memory_space<vmem>>, vector<16x256xf32>,
    %c0_53 = arith.constant 0 : index
    %c1280_54 = arith.constant 1280 : index
    %107 = vector.load %arg8[%c0_53, %c1280_54] : memref<16x7040xf32, #tpu.memory_space<vmem>>, vector<16x256xf32>
    %108 = arith.mulf %107, %91 : vector<16x256xf32>
    %c0_55 = arith.constant 0 : index
    %c1280_56 = arith.constant 1280 : index
    %109 = vector.load %arg8[%c0_55, %c1280_56] : memref<16x7040xf32, #tpu.memory_space<vmem>>, vector<16x256xf32>
    tpu.vector_store %arg8[%c0_55, %c1280_56], %108 {strides = array<i32>} : memref<16x7040xf32, #tpu.memory_space<vmem>>, vector<16x256xf32>,
    %c0_57 = arith.constant 0 : index
    %c1536_58 = arith.constant 1536 : index
    %110 = vector.load %arg8[%c0_57, %c1536_58] : memref<16x7040xf32, #tpu.memory_space<vmem>>, vector<16x256xf32>
    %111 = arith.mulf %110, %91 : vector<16x256xf32>
    %c0_59 = arith.constant 0 : index
    %c1536_60 = arith.constant 1536 : index
    %112 = vector.load %arg8[%c0_59, %c1536_60] : memref<16x7040xf32, #tpu.memory_space<vmem>>, vector<16x256xf32>
    tpu.vector_store %arg8[%c0_59, %c1536_60], %111 {strides = array<i32>} : memref<16x7040xf32, #tpu.memory_space<vmem>>, vector<16x256xf32>,
    %c0_61 = arith.constant 0 : index
    %c1792_62 = arith.constant 1792 : index
    %113 = vector.load %arg8[%c0_61, %c1792_62] : memref<16x7040xf32, #tpu.memory_space<vmem>>, vector<16x256xf32>
    %114 = arith.mulf %113, %91 : vector<16x256xf32>
    %c0_63 = arith.constant 0 : index
    %c1792_64 = arith.constant 1792 : index
    %115 = vector.load %arg8[%c0_63, %c1792_64] : memref<16x7040xf32, #tpu.memory_space<vmem>>, vector<16x256xf32>
    tpu.vector_store %arg8[%c0_63, %c1792_64], %114 {strides = array<i32>} : memref<16x7040xf32, #tpu.memory_space<vmem>>, vector<16x256xf32>,
    %c0_65 = arith.constant 0 : index
    %c2048_66 = arith.constant 2048 : index
    %116 = vector.load %arg8[%c0_65, %c2048_66] : memref<16x7040xf32, #tpu.memory_space<vmem>>, vector<16x256xf32>
    %117 = arith.mulf %116, %91 : vector<16x256xf32>
    %c0_67 = arith.constant 0 : index
    %c2048_68 = arith.constant 2048 : index
    %118 = vector.load %arg8[%c0_67, %c2048_68] : memref<16x7040xf32, #tpu.memory_space<vmem>>, vector<16x256xf32>
    tpu.vector_store %arg8[%c0_67, %c2048_68], %117 {strides = array<i32>} : memref<16x7040xf32, #tpu.memory_space<vmem>>, vector<16x256xf32>,
    %c0_69 = arith.constant 0 : index
    %c0_70 = arith.constant 0 : index
    %119 = vector.load %arg1[%c0_69, %c0_70] : memref<16x896xf32, #tpu.memory_space<vmem>>, vector<16x256xf32>
    %cst_71 = arith.constant 1.000000e+00 : f32
    %cst_72 = arith.constant 2.300000e+01 : f32
    %120 = vector.broadcast %cst_71 : f32 to vector<16x256xf32>
    %121 = arith.maximumf %120, %119 : vector<16x256xf32>
    %122 = vector.broadcast %cst_72 : f32 to vector<16x256xf32>
    %123 = arith.minimumf %122, %121 : vector<16x256xf32>
    %124 = arith.subf %119, %123 : vector<16x256xf32>
    %125 = arith.mulf %124, %124 : vector<16x256xf32>
    %cst_73 = arith.constant -3.125000e+00 : f32
    %126 = vector.broadcast %cst_73 : f32 to vector<16x256xf32>
    %127 = arith.mulf %126, %125 : vector<16x256xf32>
    %cst_74 = arith.constant 1.000000e+00 : f32
    %128 = vector.broadcast %cst_74 : f32 to vector<16x256xf32>
    %129 = arith.subf %119, %128 : vector<16x256xf32>
    %130 = arith.mulf %129, %129 : vector<16x256xf32>
    %cst_75 = arith.constant -3.125000e+00 : f32
    %131 = vector.broadcast %cst_75 : f32 to vector<16x256xf32>
    %132 = arith.mulf %131, %130 : vector<16x256xf32>
    %133 = arith.subf %132, %127 : vector<16x256xf32>
    %134 = math.exp %133 : vector<16x256xf32>
    %c0_76 = arith.constant 0 : index
    %c2304 = arith.constant 2304 : index
    %135 = vector.load %arg8[%c0_76, %c2304] : memref<16x7040xf32, #tpu.memory_space<vmem>>, vector<16x256xf32>
    tpu.vector_store %arg8[%c0_76, %c2304], %134 {strides = array<i32>} : memref<16x7040xf32, #tpu.memory_space<vmem>>, vector<16x256xf32>,
    %cst_77 = arith.constant 3.000000e+00 : f32
    %136 = vector.broadcast %cst_77 : f32 to vector<16x256xf32>
    %137 = arith.subf %119, %136 : vector<16x256xf32>
    %138 = arith.mulf %137, %137 : vector<16x256xf32>
    %cst_78 = arith.constant -3.125000e+00 : f32
    %139 = vector.broadcast %cst_78 : f32 to vector<16x256xf32>
    %140 = arith.mulf %139, %138 : vector<16x256xf32>
    %141 = arith.subf %140, %127 : vector<16x256xf32>
    %142 = math.exp %141 : vector<16x256xf32>
    %c0_79 = arith.constant 0 : index
    %c2560 = arith.constant 2560 : index
    %143 = vector.load %arg8[%c0_79, %c2560] : memref<16x7040xf32, #tpu.memory_space<vmem>>, vector<16x256xf32>
    tpu.vector_store %arg8[%c0_79, %c2560], %142 {strides = array<i32>} : memref<16x7040xf32, #tpu.memory_space<vmem>>, vector<16x256xf32>,
    %144 = arith.addf %134, %142 : vector<16x256xf32>
    %cst_80 = arith.constant 5.000000e+00 : f32
    %145 = vector.broadcast %cst_80 : f32 to vector<16x256xf32>
    %146 = arith.subf %119, %145 : vector<16x256xf32>
    %147 = arith.mulf %146, %146 : vector<16x256xf32>
    %cst_81 = arith.constant -3.125000e+00 : f32
    %148 = vector.broadcast %cst_81 : f32 to vector<16x256xf32>
    %149 = arith.mulf %148, %147 : vector<16x256xf32>
    %150 = arith.subf %149, %127 : vector<16x256xf32>
    %151 = math.exp %150 : vector<16x256xf32>
    %c0_82 = arith.constant 0 : index
    %c2816 = arith.constant 2816 : index
    %152 = vector.load %arg8[%c0_82, %c2816] : memref<16x7040xf32, #tpu.memory_space<vmem>>, vector<16x256xf32>
    tpu.vector_store %arg8[%c0_82, %c2816], %151 {strides = array<i32>} : memref<16x7040xf32, #tpu.memory_space<vmem>>, vector<16x256xf32>,
    %153 = arith.addf %144, %151 : vector<16x256xf32>
    %cst_83 = arith.constant 7.000000e+00 : f32
    %154 = vector.broadcast %cst_83 : f32 to vector<16x256xf32>
    %155 = arith.subf %119, %154 : vector<16x256xf32>
    %156 = arith.mulf %155, %155 : vector<16x256xf32>
    %cst_84 = arith.constant -3.125000e+00 : f32
    %157 = vector.broadcast %cst_84 : f32 to vector<16x256xf32>
    %158 = arith.mulf %157, %156 : vector<16x256xf32>
    %159 = arith.subf %158, %127 : vector<16x256xf32>
    %160 = math.exp %159 : vector<16x256xf32>
    %c0_85 = arith.constant 0 : index
    %c3072 = arith.constant 3072 : index
    %161 = vector.load %arg8[%c0_85, %c3072] : memref<16x7040xf32, #tpu.memory_space<vmem>>, vector<16x256xf32>
    tpu.vector_store %arg8[%c0_85, %c3072], %160 {strides = array<i32>} : memref<16x7040xf32, #tpu.memory_space<vmem>>, vector<16x256xf32>,
    %162 = arith.addf %153, %160 : vector<16x256xf32>
    %cst_86 = arith.constant 9.000000e+00 : f32
    %163 = vector.broadcast %cst_86 : f32 to vector<16x256xf32>
    %164 = arith.subf %119, %163 : vector<16x256xf32>
    %165 = arith.mulf %164, %164 : vector<16x256xf32>
    %cst_87 = arith.constant -3.125000e+00 : f32
    %166 = vector.broadcast %cst_87 : f32 to vector<16x256xf32>
    %167 = arith.mulf %166, %165 : vector<16x256xf32>
    %168 = arith.subf %167, %127 : vector<16x256xf32>
    %169 = math.exp %168 : vector<16x256xf32>
    %c0_88 = arith.constant 0 : index
    %c3328 = arith.constant 3328 : index
    %170 = vector.load %arg8[%c0_88, %c3328] : memref<16x7040xf32, #tpu.memory_space<vmem>>, vector<16x256xf32>
    tpu.vector_store %arg8[%c0_88, %c3328], %169 {strides = array<i32>} : memref<16x7040xf32, #tpu.memory_space<vmem>>, vector<16x256xf32>,
    %171 = arith.addf %162, %169 : vector<16x256xf32>
    %cst_89 = arith.constant 1.100000e+01 : f32
    %172 = vector.broadcast %cst_89 : f32 to vector<16x256xf32>
    %173 = arith.subf %119, %172 : vector<16x256xf32>
    %174 = arith.mulf %173, %173 : vector<16x256xf32>
    %cst_90 = arith.constant -3.125000e+00 : f32
    %175 = vector.broadcast %cst_90 : f32 to vector<16x256xf32>
    %176 = arith.mulf %175, %174 : vector<16x256xf32>
    %177 = arith.subf %176, %127 : vector<16x256xf32>
    %178 = math.exp %177 : vector<16x256xf32>
    %c0_91 = arith.constant 0 : index
    %c3584 = arith.constant 3584 : index
    %179 = vector.load %arg8[%c0_91, %c3584] : memref<16x7040xf32, #tpu.memory_space<vmem>>, vector<16x256xf32>
    tpu.vector_store %arg8[%c0_91, %c3584], %178 {strides = array<i32>} : memref<16x7040xf32, #tpu.memory_space<vmem>>, vector<16x256xf32>,
    %180 = arith.addf %171, %178 : vector<16x256xf32>
    %cst_92 = arith.constant 1.300000e+01 : f32
    %181 = vector.broadcast %cst_92 : f32 to vector<16x256xf32>
    %182 = arith.subf %119, %181 : vector<16x256xf32>
    %183 = arith.mulf %182, %182 : vector<16x256xf32>
    %cst_93 = arith.constant -3.125000e+00 : f32
    %184 = vector.broadcast %cst_93 : f32 to vector<16x256xf32>
    %185 = arith.mulf %184, %183 : vector<16x256xf32>
    %186 = arith.subf %185, %127 : vector<16x256xf32>
    %187 = math.exp %186 : vector<16x256xf32>
    %c0_94 = arith.constant 0 : index
    %c3840 = arith.constant 3840 : index
    %188 = vector.load %arg8[%c0_94, %c3840] : memref<16x7040xf32, #tpu.memory_space<vmem>>, vector<16x256xf32>
    tpu.vector_store %arg8[%c0_94, %c3840], %187 {strides = array<i32>} : memref<16x7040xf32, #tpu.memory_space<vmem>>, vector<16x256xf32>,
    %189 = arith.addf %180, %187 : vector<16x256xf32>
    %cst_95 = arith.constant 1.500000e+01 : f32
    %190 = vector.broadcast %cst_95 : f32 to vector<16x256xf32>
    %191 = arith.subf %119, %190 : vector<16x256xf32>
    %192 = arith.mulf %191, %191 : vector<16x256xf32>
    %cst_96 = arith.constant -3.125000e+00 : f32
    %193 = vector.broadcast %cst_96 : f32 to vector<16x256xf32>
    %194 = arith.mulf %193, %192 : vector<16x256xf32>
    %195 = arith.subf %194, %127 : vector<16x256xf32>
    %196 = math.exp %195 : vector<16x256xf32>
    %c0_97 = arith.constant 0 : index
    %c4096 = arith.constant 4096 : index
    %197 = vector.load %arg8[%c0_97, %c4096] : memref<16x7040xf32, #tpu.memory_space<vmem>>, vector<16x256xf32>
    tpu.vector_store %arg8[%c0_97, %c4096], %196 {strides = array<i32>} : memref<16x7040xf32, #tpu.memory_space<vmem>>, vector<16x256xf32>,
    %198 = arith.addf %189, %196 : vector<16x256xf32>
    %cst_98 = arith.constant 1.700000e+01 : f32
    %199 = vector.broadcast %cst_98 : f32 to vector<16x256xf32>
    %200 = arith.subf %119, %199 : vector<16x256xf32>
    %201 = arith.mulf %200, %200 : vector<16x256xf32>
    %cst_99 = arith.constant -3.125000e+00 : f32
    %202 = vector.broadcast %cst_99 : f32 to vector<16x256xf32>
    %203 = arith.mulf %202, %201 : vector<16x256xf32>
    %204 = arith.subf %203, %127 : vector<16x256xf32>
    %205 = math.exp %204 : vector<16x256xf32>
    %c0_100 = arith.constant 0 : index
    %c4352 = arith.constant 4352 : index
    %206 = vector.load %arg8[%c0_100, %c4352] : memref<16x7040xf32, #tpu.memory_space<vmem>>, vector<16x256xf32>
    tpu.vector_store %arg8[%c0_100, %c4352], %205 {strides = array<i32>} : memref<16x7040xf32, #tpu.memory_space<vmem>>, vector<16x256xf32>,
    %207 = arith.addf %198, %205 : vector<16x256xf32>
    %cst_101 = arith.constant 1.900000e+01 : f32
    %208 = vector.broadcast %cst_101 : f32 to vector<16x256xf32>
    %209 = arith.subf %119, %208 : vector<16x256xf32>
    %210 = arith.mulf %209, %209 : vector<16x256xf32>
    %cst_102 = arith.constant -3.125000e+00 : f32
    %211 = vector.broadcast %cst_102 : f32 to vector<16x256xf32>
    %212 = arith.mulf %211, %210 : vector<16x256xf32>
    %213 = arith.subf %212, %127 : vector<16x256xf32>
    %214 = math.exp %213 : vector<16x256xf32>
    %c0_103 = arith.constant 0 : index
    %c4608 = arith.constant 4608 : index
    %215 = vector.load %arg8[%c0_103, %c4608] : memref<16x7040xf32, #tpu.memory_space<vmem>>, vector<16x256xf32>
    tpu.vector_store %arg8[%c0_103, %c4608], %214 {strides = array<i32>} : memref<16x7040xf32, #tpu.memory_space<vmem>>, vector<16x256xf32>,
    %216 = arith.addf %207, %214 : vector<16x256xf32>
    %cst_104 = arith.constant 2.100000e+01 : f32
    %217 = vector.broadcast %cst_104 : f32 to vector<16x256xf32>
    %218 = arith.subf %119, %217 : vector<16x256xf32>
    %219 = arith.mulf %218, %218 : vector<16x256xf32>
    %cst_105 = arith.constant -3.125000e+00 : f32
    %220 = vector.broadcast %cst_105 : f32 to vector<16x256xf32>
    %221 = arith.mulf %220, %219 : vector<16x256xf32>
    %222 = arith.subf %221, %127 : vector<16x256xf32>
    %223 = math.exp %222 : vector<16x256xf32>
    %c0_106 = arith.constant 0 : index
    %c4864 = arith.constant 4864 : index
    %224 = vector.load %arg8[%c0_106, %c4864] : memref<16x7040xf32, #tpu.memory_space<vmem>>, vector<16x256xf32>
    tpu.vector_store %arg8[%c0_106, %c4864], %223 {strides = array<i32>} : memref<16x7040xf32, #tpu.memory_space<vmem>>, vector<16x256xf32>,
    %225 = arith.addf %216, %223 : vector<16x256xf32>
    %cst_107 = arith.constant 2.300000e+01 : f32
    %226 = vector.broadcast %cst_107 : f32 to vector<16x256xf32>
    %227 = arith.subf %119, %226 : vector<16x256xf32>
    %228 = arith.mulf %227, %227 : vector<16x256xf32>
    %cst_108 = arith.constant -3.125000e+00 : f32
    %229 = vector.broadcast %cst_108 : f32 to vector<16x256xf32>
    %230 = arith.mulf %229, %228 : vector<16x256xf32>
    %231 = arith.subf %230, %127 : vector<16x256xf32>
    %232 = math.exp %231 : vector<16x256xf32>
    %c0_109 = arith.constant 0 : index
    %c5120 = arith.constant 5120 : index
    %233 = vector.load %arg8[%c0_109, %c5120] : memref<16x7040xf32, #tpu.memory_space<vmem>>, vector<16x256xf32>
    tpu.vector_store %arg8[%c0_109, %c5120], %232 {strides = array<i32>} : memref<16x7040xf32, #tpu.memory_space<vmem>>, vector<16x256xf32>,
    %234 = arith.addf %225, %232 : vector<16x256xf32>
    %c0_110 = arith.constant 0 : index
    %c256_111 = arith.constant 256 : index
    %235 = vector.load %arg1[%c0_110, %c256_111] : memref<16x896xf32, #tpu.memory_space<vmem>>, vector<16x256xf32>
    %236 = tpu.reciprocal %234 {approx = true} : vector<16x256xf32> -> vector<16x256xf32>
    %237 = arith.mulf %235, %236 : vector<16x256xf32>
    %c0_112 = arith.constant 0 : index
    %c2304_113 = arith.constant 2304 : index
    %238 = vector.load %arg8[%c0_112, %c2304_113] : memref<16x7040xf32, #tpu.memory_space<vmem>>, vector<16x256xf32>
    %239 = arith.mulf %238, %237 : vector<16x256xf32>
    %c0_114 = arith.constant 0 : index
    %c2304_115 = arith.constant 2304 : index
    %240 = vector.load %arg8[%c0_114, %c2304_115] : memref<16x7040xf32, #tpu.memory_space<vmem>>, vector<16x256xf32>
    tpu.vector_store %arg8[%c0_114, %c2304_115], %239 {strides = array<i32>} : memref<16x7040xf32, #tpu.memory_space<vmem>>, vector<16x256xf32>,
    %c0_116 = arith.constant 0 : index
    %c2560_117 = arith.constant 2560 : index
    %241 = vector.load %arg8[%c0_116, %c2560_117] : memref<16x7040xf32, #tpu.memory_space<vmem>>, vector<16x256xf32>
    %242 = arith.mulf %241, %237 : vector<16x256xf32>
    %c0_118 = arith.constant 0 : index
    %c2560_119 = arith.constant 2560 : index
    %243 = vector.load %arg8[%c0_118, %c2560_119] : memref<16x7040xf32, #tpu.memory_space<vmem>>, vector<16x256xf32>
    tpu.vector_store %arg8[%c0_118, %c2560_119], %242 {strides = array<i32>} : memref<16x7040xf32, #tpu.memory_space<vmem>>, vector<16x256xf32>,
    %c0_120 = arith.constant 0 : index
    %c2816_121 = arith.constant 2816 : index
    %244 = vector.load %arg8[%c0_120, %c2816_121] : memref<16x7040xf32, #tpu.memory_space<vmem>>, vector<16x256xf32>
    %245 = arith.mulf %244, %237 : vector<16x256xf32>
    %c0_122 = arith.constant 0 : index
    %c2816_123 = arith.constant 2816 : index
    %246 = vector.load %arg8[%c0_122, %c2816_123] : memref<16x7040xf32, #tpu.memory_space<vmem>>, vector<16x256xf32>
    tpu.vector_store %arg8[%c0_122, %c2816_123], %245 {strides = array<i32>} : memref<16x7040xf32, #tpu.memory_space<vmem>>, vector<16x256xf32>,
    %c0_124 = arith.constant 0 : index
    %c3072_125 = arith.constant 3072 : index
    %247 = vector.load %arg8[%c0_124, %c3072_125] : memref<16x7040xf32, #tpu.memory_space<vmem>>, vector<16x256xf32>
    %248 = arith.mulf %247, %237 : vector<16x256xf32>
    %c0_126 = arith.constant 0 : index
    %c3072_127 = arith.constant 3072 : index
    %249 = vector.load %arg8[%c0_126, %c3072_127] : memref<16x7040xf32, #tpu.memory_space<vmem>>, vector<16x256xf32>
    tpu.vector_store %arg8[%c0_126, %c3072_127], %248 {strides = array<i32>} : memref<16x7040xf32, #tpu.memory_space<vmem>>, vector<16x256xf32>,
    %c0_128 = arith.constant 0 : index
    %c3328_129 = arith.constant 3328 : index
    %250 = vector.load %arg8[%c0_128, %c3328_129] : memref<16x7040xf32, #tpu.memory_space<vmem>>, vector<16x256xf32>
    %251 = arith.mulf %250, %237 : vector<16x256xf32>
    %c0_130 = arith.constant 0 : index
    %c3328_131 = arith.constant 3328 : index
    %252 = vector.load %arg8[%c0_130, %c3328_131] : memref<16x7040xf32, #tpu.memory_space<vmem>>, vector<16x256xf32>
    tpu.vector_store %arg8[%c0_130, %c3328_131], %251 {strides = array<i32>} : memref<16x7040xf32, #tpu.memory_space<vmem>>, vector<16x256xf32>,
    %c0_132 = arith.constant 0 : index
    %c3584_133 = arith.constant 3584 : index
    %253 = vector.load %arg8[%c0_132, %c3584_133] : memref<16x7040xf32, #tpu.memory_space<vmem>>, vector<16x256xf32>
    %254 = arith.mulf %253, %237 : vector<16x256xf32>
    %c0_134 = arith.constant 0 : index
    %c3584_135 = arith.constant 3584 : index
    %255 = vector.load %arg8[%c0_134, %c3584_135] : memref<16x7040xf32, #tpu.memory_space<vmem>>, vector<16x256xf32>
    tpu.vector_store %arg8[%c0_134, %c3584_135], %254 {strides = array<i32>} : memref<16x7040xf32, #tpu.memory_space<vmem>>, vector<16x256xf32>,
    %c0_136 = arith.constant 0 : index
    %c3840_137 = arith.constant 3840 : index
    %256 = vector.load %arg8[%c0_136, %c3840_137] : memref<16x7040xf32, #tpu.memory_space<vmem>>, vector<16x256xf32>
    %257 = arith.mulf %256, %237 : vector<16x256xf32>
    %c0_138 = arith.constant 0 : index
    %c3840_139 = arith.constant 3840 : index
    %258 = vector.load %arg8[%c0_138, %c3840_139] : memref<16x7040xf32, #tpu.memory_space<vmem>>, vector<16x256xf32>
    tpu.vector_store %arg8[%c0_138, %c3840_139], %257 {strides = array<i32>} : memref<16x7040xf32, #tpu.memory_space<vmem>>, vector<16x256xf32>,
    %c0_140 = arith.constant 0 : index
    %c4096_141 = arith.constant 4096 : index
    %259 = vector.load %arg8[%c0_140, %c4096_141] : memref<16x7040xf32, #tpu.memory_space<vmem>>, vector<16x256xf32>
    %260 = arith.mulf %259, %237 : vector<16x256xf32>
    %c0_142 = arith.constant 0 : index
    %c4096_143 = arith.constant 4096 : index
    %261 = vector.load %arg8[%c0_142, %c4096_143] : memref<16x7040xf32, #tpu.memory_space<vmem>>, vector<16x256xf32>
    tpu.vector_store %arg8[%c0_142, %c4096_143], %260 {strides = array<i32>} : memref<16x7040xf32, #tpu.memory_space<vmem>>, vector<16x256xf32>,
    %c0_144 = arith.constant 0 : index
    %c4352_145 = arith.constant 4352 : index
    %262 = vector.load %arg8[%c0_144, %c4352_145] : memref<16x7040xf32, #tpu.memory_space<vmem>>, vector<16x256xf32>
    %263 = arith.mulf %262, %237 : vector<16x256xf32>
    %c0_146 = arith.constant 0 : index
    %c4352_147 = arith.constant 4352 : index
    %264 = vector.load %arg8[%c0_146, %c4352_147] : memref<16x7040xf32, #tpu.memory_space<vmem>>, vector<16x256xf32>
    tpu.vector_store %arg8[%c0_146, %c4352_147], %263 {strides = array<i32>} : memref<16x7040xf32, #tpu.memory_space<vmem>>, vector<16x256xf32>,
    %c0_148 = arith.constant 0 : index
    %c4608_149 = arith.constant 4608 : index
    %265 = vector.load %arg8[%c0_148, %c4608_149] : memref<16x7040xf32, #tpu.memory_space<vmem>>, vector<16x256xf32>
    %266 = arith.mulf %265, %237 : vector<16x256xf32>
    %c0_150 = arith.constant 0 : index
    %c4608_151 = arith.constant 4608 : index
    %267 = vector.load %arg8[%c0_150, %c4608_151] : memref<16x7040xf32, #tpu.memory_space<vmem>>, vector<16x256xf32>
    tpu.vector_store %arg8[%c0_150, %c4608_151], %266 {strides = array<i32>} : memref<16x7040xf32, #tpu.memory_space<vmem>>, vector<16x256xf32>,
    %c0_152 = arith.constant 0 : index
    %c4864_153 = arith.constant 4864 : index
    %268 = vector.load %arg8[%c0_152, %c4864_153] : memref<16x7040xf32, #tpu.memory_space<vmem>>, vector<16x256xf32>
    %269 = arith.mulf %268, %237 : vector<16x256xf32>
    %c0_154 = arith.constant 0 : index
    %c4864_155 = arith.constant 4864 : index
    %270 = vector.load %arg8[%c0_154, %c4864_155] : memref<16x7040xf32, #tpu.memory_space<vmem>>, vector<16x256xf32>
    tpu.vector_store %arg8[%c0_154, %c4864_155], %269 {strides = array<i32>} : memref<16x7040xf32, #tpu.memory_space<vmem>>, vector<16x256xf32>,
    %c0_156 = arith.constant 0 : index
    %c5120_157 = arith.constant 5120 : index
    %271 = vector.load %arg8[%c0_156, %c5120_157] : memref<16x7040xf32, #tpu.memory_space<vmem>>, vector<16x256xf32>
    %272 = arith.mulf %271, %237 : vector<16x256xf32>
    %c0_158 = arith.constant 0 : index
    %c5120_159 = arith.constant 5120 : index
    %273 = vector.load %arg8[%c0_158, %c5120_159] : memref<16x7040xf32, #tpu.memory_space<vmem>>, vector<16x256xf32>
    tpu.vector_store %arg8[%c0_158, %c5120_159], %272 {strides = array<i32>} : memref<16x7040xf32, #tpu.memory_space<vmem>>, vector<16x256xf32>,
    %c0_160 = arith.constant 0 : index
    %c512_161 = arith.constant 512 : index
    %274 = vector.load %arg1[%c0_160, %c512_161] : memref<16x896xf32, #tpu.memory_space<vmem>>, vector<16x128xf32>
    %cst_162 = arith.constant -1.350000e+01 : f32
    %cst_163 = arith.constant 1.350000e+01 : f32
    %275 = vector.broadcast %cst_162 : f32 to vector<16x128xf32>
    %276 = arith.maximumf %275, %274 : vector<16x128xf32>
    %277 = vector.broadcast %cst_163 : f32 to vector<16x128xf32>
    %278 = arith.minimumf %277, %276 : vector<16x128xf32>
    %279 = arith.subf %274, %278 : vector<16x128xf32>
    %280 = arith.mulf %279, %279 : vector<16x128xf32>
    %cst_164 = arith.constant -1.38888884 : f32
    %281 = vector.broadcast %cst_164 : f32 to vector<16x128xf32>
    %282 = arith.mulf %281, %280 : vector<16x128xf32>
    %cst_165 = arith.constant -1.350000e+01 : f32
    %283 = vector.broadcast %cst_165 : f32 to vector<16x128xf32>
    %284 = arith.subf %274, %283 : vector<16x128xf32>
    %285 = arith.mulf %284, %284 : vector<16x128xf32>
    %cst_166 = arith.constant -1.38888884 : f32
    %286 = vector.broadcast %cst_166 : f32 to vector<16x128xf32>
    %287 = arith.mulf %286, %285 : vector<16x128xf32>
    %288 = arith.subf %287, %282 : vector<16x128xf32>
    %289 = math.exp %288 : vector<16x128xf32>
    %c0_167 = arith.constant 0 : index
    %c5376 = arith.constant 5376 : index
    %290 = vector.load %arg8[%c0_167, %c5376] : memref<16x7040xf32, #tpu.memory_space<vmem>>, vector<16x128xf32>
    tpu.vector_store %arg8[%c0_167, %c5376], %289 {strides = array<i32>} : memref<16x7040xf32, #tpu.memory_space<vmem>>, vector<16x128xf32>,
    %cst_168 = arith.constant -1.050000e+01 : f32
    %291 = vector.broadcast %cst_168 : f32 to vector<16x128xf32>
    %292 = arith.subf %274, %291 : vector<16x128xf32>
    %293 = arith.mulf %292, %292 : vector<16x128xf32>
    %cst_169 = arith.constant -1.38888884 : f32
    %294 = vector.broadcast %cst_169 : f32 to vector<16x128xf32>
    %295 = arith.mulf %294, %293 : vector<16x128xf32>
    %296 = arith.subf %295, %282 : vector<16x128xf32>
    %297 = math.exp %296 : vector<16x128xf32>
    %c0_170 = arith.constant 0 : index
    %c5504 = arith.constant 5504 : index
    %298 = vector.load %arg8[%c0_170, %c5504] : memref<16x7040xf32, #tpu.memory_space<vmem>>, vector<16x128xf32>
    tpu.vector_store %arg8[%c0_170, %c5504], %297 {strides = array<i32>} : memref<16x7040xf32, #tpu.memory_space<vmem>>, vector<16x128xf32>,
    %299 = arith.addf %289, %297 : vector<16x128xf32>
    %cst_171 = arith.constant -7.500000e+00 : f32
    %300 = vector.broadcast %cst_171 : f32 to vector<16x128xf32>
    %301 = arith.subf %274, %300 : vector<16x128xf32>
    %302 = arith.mulf %301, %301 : vector<16x128xf32>
    %cst_172 = arith.constant -1.38888884 : f32
    %303 = vector.broadcast %cst_172 : f32 to vector<16x128xf32>
    %304 = arith.mulf %303, %302 : vector<16x128xf32>
    %305 = arith.subf %304, %282 : vector<16x128xf32>
    %306 = math.exp %305 : vector<16x128xf32>
    %c0_173 = arith.constant 0 : index
    %c5632 = arith.constant 5632 : index
    %307 = vector.load %arg8[%c0_173, %c5632] : memref<16x7040xf32, #tpu.memory_space<vmem>>, vector<16x128xf32>
    tpu.vector_store %arg8[%c0_173, %c5632], %306 {strides = array<i32>} : memref<16x7040xf32, #tpu.memory_space<vmem>>, vector<16x128xf32>,
    %308 = arith.addf %299, %306 : vector<16x128xf32>
    %cst_174 = arith.constant -4.500000e+00 : f32
    %309 = vector.broadcast %cst_174 : f32 to vector<16x128xf32>
    %310 = arith.subf %274, %309 : vector<16x128xf32>
    %311 = arith.mulf %310, %310 : vector<16x128xf32>
    %cst_175 = arith.constant -1.38888884 : f32
    %312 = vector.broadcast %cst_175 : f32 to vector<16x128xf32>
    %313 = arith.mulf %312, %311 : vector<16x128xf32>
    %314 = arith.subf %313, %282 : vector<16x128xf32>
    %315 = math.exp %314 : vector<16x128xf32>
    %c0_176 = arith.constant 0 : index
    %c5760 = arith.constant 5760 : index
    %316 = vector.load %arg8[%c0_176, %c5760] : memref<16x7040xf32, #tpu.memory_space<vmem>>, vector<16x128xf32>
    tpu.vector_store %arg8[%c0_176, %c5760], %315 {strides = array<i32>} : memref<16x7040xf32, #tpu.memory_space<vmem>>, vector<16x128xf32>,
    %317 = arith.addf %308, %315 : vector<16x128xf32>
    %cst_177 = arith.constant -1.500000e+00 : f32
    %318 = vector.broadcast %cst_177 : f32 to vector<16x128xf32>
    %319 = arith.subf %274, %318 : vector<16x128xf32>
    %320 = arith.mulf %319, %319 : vector<16x128xf32>
    %cst_178 = arith.constant -1.38888884 : f32
    %321 = vector.broadcast %cst_178 : f32 to vector<16x128xf32>
    %322 = arith.mulf %321, %320 : vector<16x128xf32>
    %323 = arith.subf %322, %282 : vector<16x128xf32>
    %324 = math.exp %323 : vector<16x128xf32>
    %c0_179 = arith.constant 0 : index
    %c5888 = arith.constant 5888 : index
    %325 = vector.load %arg8[%c0_179, %c5888] : memref<16x7040xf32, #tpu.memory_space<vmem>>, vector<16x128xf32>
    tpu.vector_store %arg8[%c0_179, %c5888], %324 {strides = array<i32>} : memref<16x7040xf32, #tpu.memory_space<vmem>>, vector<16x128xf32>,
    %326 = arith.addf %317, %324 : vector<16x128xf32>
    %cst_180 = arith.constant 1.500000e+00 : f32
    %327 = vector.broadcast %cst_180 : f32 to vector<16x128xf32>
    %328 = arith.subf %274, %327 : vector<16x128xf32>
    %329 = arith.mulf %328, %328 : vector<16x128xf32>
    %cst_181 = arith.constant -1.38888884 : f32
    %330 = vector.broadcast %cst_181 : f32 to vector<16x128xf32>
    %331 = arith.mulf %330, %329 : vector<16x128xf32>
    %332 = arith.subf %331, %282 : vector<16x128xf32>
    %333 = math.exp %332 : vector<16x128xf32>
    %c0_182 = arith.constant 0 : index
    %c6016 = arith.constant 6016 : index
    %334 = vector.load %arg8[%c0_182, %c6016] : memref<16x7040xf32, #tpu.memory_space<vmem>>, vector<16x128xf32>
    tpu.vector_store %arg8[%c0_182, %c6016], %333 {strides = array<i32>} : memref<16x7040xf32, #tpu.memory_space<vmem>>, vector<16x128xf32>,
    %335 = arith.addf %326, %333 : vector<16x128xf32>
    %cst_183 = arith.constant 4.500000e+00 : f32
    %336 = vector.broadcast %cst_183 : f32 to vector<16x128xf32>
    %337 = arith.subf %274, %336 : vector<16x128xf32>
    %338 = arith.mulf %337, %337 : vector<16x128xf32>
    %cst_184 = arith.constant -1.38888884 : f32
    %339 = vector.broadcast %cst_184 : f32 to vector<16x128xf32>
    %340 = arith.mulf %339, %338 : vector<16x128xf32>
    %341 = arith.subf %340, %282 : vector<16x128xf32>
    %342 = math.exp %341 : vector<16x128xf32>
    %c0_185 = arith.constant 0 : index
    %c6144 = arith.constant 6144 : index
    %343 = vector.load %arg8[%c0_185, %c6144] : memref<16x7040xf32, #tpu.memory_space<vmem>>, vector<16x128xf32>
    tpu.vector_store %arg8[%c0_185, %c6144], %342 {strides = array<i32>} : memref<16x7040xf32, #tpu.memory_space<vmem>>, vector<16x128xf32>,
    %344 = arith.addf %335, %342 : vector<16x128xf32>
    %cst_186 = arith.constant 7.500000e+00 : f32
    %345 = vector.broadcast %cst_186 : f32 to vector<16x128xf32>
    %346 = arith.subf %274, %345 : vector<16x128xf32>
    %347 = arith.mulf %346, %346 : vector<16x128xf32>
    %cst_187 = arith.constant -1.38888884 : f32
    %348 = vector.broadcast %cst_187 : f32 to vector<16x128xf32>
    %349 = arith.mulf %348, %347 : vector<16x128xf32>
    %350 = arith.subf %349, %282 : vector<16x128xf32>
    %351 = math.exp %350 : vector<16x128xf32>
    %c0_188 = arith.constant 0 : index
    %c6272 = arith.constant 6272 : index
    %352 = vector.load %arg8[%c0_188, %c6272] : memref<16x7040xf32, #tpu.memory_space<vmem>>, vector<16x128xf32>
    tpu.vector_store %arg8[%c0_188, %c6272], %351 {strides = array<i32>} : memref<16x7040xf32, #tpu.memory_space<vmem>>, vector<16x128xf32>,
    %353 = arith.addf %344, %351 : vector<16x128xf32>
    %cst_189 = arith.constant 1.050000e+01 : f32
    %354 = vector.broadcast %cst_189 : f32 to vector<16x128xf32>
    %355 = arith.subf %274, %354 : vector<16x128xf32>
    %356 = arith.mulf %355, %355 : vector<16x128xf32>
    %cst_190 = arith.constant -1.38888884 : f32
    %357 = vector.broadcast %cst_190 : f32 to vector<16x128xf32>
    %358 = arith.mulf %357, %356 : vector<16x128xf32>
    %359 = arith.subf %358, %282 : vector<16x128xf32>
    %360 = math.exp %359 : vector<16x128xf32>
    %c0_191 = arith.constant 0 : index
    %c6400 = arith.constant 6400 : index
    %361 = vector.load %arg8[%c0_191, %c6400] : memref<16x7040xf32, #tpu.memory_space<vmem>>, vector<16x128xf32>
    tpu.vector_store %arg8[%c0_191, %c6400], %360 {strides = array<i32>} : memref<16x7040xf32, #tpu.memory_space<vmem>>, vector<16x128xf32>,
    %362 = arith.addf %353, %360 : vector<16x128xf32>
    %cst_192 = arith.constant 1.350000e+01 : f32
    %363 = vector.broadcast %cst_192 : f32 to vector<16x128xf32>
    %364 = arith.subf %274, %363 : vector<16x128xf32>
    %365 = arith.mulf %364, %364 : vector<16x128xf32>
    %cst_193 = arith.constant -1.38888884 : f32
    %366 = vector.broadcast %cst_193 : f32 to vector<16x128xf32>
    %367 = arith.mulf %366, %365 : vector<16x128xf32>
    %368 = arith.subf %367, %282 : vector<16x128xf32>
    %369 = math.exp %368 : vector<16x128xf32>
    %c0_194 = arith.constant 0 : index
    %c6528 = arith.constant 6528 : index
    %370 = vector.load %arg8[%c0_194, %c6528] : memref<16x7040xf32, #tpu.memory_space<vmem>>, vector<16x128xf32>
    tpu.vector_store %arg8[%c0_194, %c6528], %369 {strides = array<i32>} : memref<16x7040xf32, #tpu.memory_space<vmem>>, vector<16x128xf32>,
    %371 = arith.addf %362, %369 : vector<16x128xf32>
    %c0_195 = arith.constant 0 : index
    %c640 = arith.constant 640 : index
    %372 = vector.load %arg1[%c0_195, %c640] : memref<16x896xf32, #tpu.memory_space<vmem>>, vector<16x128xf32>
    %373 = tpu.reciprocal %371 {approx = true} : vector<16x128xf32> -> vector<16x128xf32>
    %374 = arith.mulf %372, %373 : vector<16x128xf32>
    %c0_196 = arith.constant 0 : index
    %c5376_197 = arith.constant 5376 : index
    %375 = vector.load %arg8[%c0_196, %c5376_197] : memref<16x7040xf32, #tpu.memory_space<vmem>>, vector<16x128xf32>
    %376 = arith.mulf %375, %374 : vector<16x128xf32>
    %c0_198 = arith.constant 0 : index
    %c5376_199 = arith.constant 5376 : index
    %377 = vector.load %arg8[%c0_198, %c5376_199] : memref<16x7040xf32, #tpu.memory_space<vmem>>, vector<16x128xf32>
    tpu.vector_store %arg8[%c0_198, %c5376_199], %376 {strides = array<i32>} : memref<16x7040xf32, #tpu.memory_space<vmem>>, vector<16x128xf32>,
    %c0_200 = arith.constant 0 : index
    %c5504_201 = arith.constant 5504 : index
    %378 = vector.load %arg8[%c0_200, %c5504_201] : memref<16x7040xf32, #tpu.memory_space<vmem>>, vector<16x128xf32>
    %379 = arith.mulf %378, %374 : vector<16x128xf32>
    %c0_202 = arith.constant 0 : index
    %c5504_203 = arith.constant 5504 : index
    %380 = vector.load %arg8[%c0_202, %c5504_203] : memref<16x7040xf32, #tpu.memory_space<vmem>>, vector<16x128xf32>
    tpu.vector_store %arg8[%c0_202, %c5504_203], %379 {strides = array<i32>} : memref<16x7040xf32, #tpu.memory_space<vmem>>, vector<16x128xf32>,
    %c0_204 = arith.constant 0 : index
    %c5632_205 = arith.constant 5632 : index
    %381 = vector.load %arg8[%c0_204, %c5632_205] : memref<16x7040xf32, #tpu.memory_space<vmem>>, vector<16x128xf32>
    %382 = arith.mulf %381, %374 : vector<16x128xf32>
    %c0_206 = arith.constant 0 : index
    %c5632_207 = arith.constant 5632 : index
    %383 = vector.load %arg8[%c0_206, %c5632_207] : memref<16x7040xf32, #tpu.memory_space<vmem>>, vector<16x128xf32>
    tpu.vector_store %arg8[%c0_206, %c5632_207], %382 {strides = array<i32>} : memref<16x7040xf32, #tpu.memory_space<vmem>>, vector<16x128xf32>,
    %c0_208 = arith.constant 0 : index
    %c5760_209 = arith.constant 5760 : index
    %384 = vector.load %arg8[%c0_208, %c5760_209] : memref<16x7040xf32, #tpu.memory_space<vmem>>, vector<16x128xf32>
    %385 = arith.mulf %384, %374 : vector<16x128xf32>
    %c0_210 = arith.constant 0 : index
    %c5760_211 = arith.constant 5760 : index
    %386 = vector.load %arg8[%c0_210, %c5760_211] : memref<16x7040xf32, #tpu.memory_space<vmem>>, vector<16x128xf32>
    tpu.vector_store %arg8[%c0_210, %c5760_211], %385 {strides = array<i32>} : memref<16x7040xf32, #tpu.memory_space<vmem>>, vector<16x128xf32>,
    %c0_212 = arith.constant 0 : index
    %c5888_213 = arith.constant 5888 : index
    %387 = vector.load %arg8[%c0_212, %c5888_213] : memref<16x7040xf32, #tpu.memory_space<vmem>>, vector<16x128xf32>
    %388 = arith.mulf %387, %374 : vector<16x128xf32>
    %c0_214 = arith.constant 0 : index
    %c5888_215 = arith.constant 5888 : index
    %389 = vector.load %arg8[%c0_214, %c5888_215] : memref<16x7040xf32, #tpu.memory_space<vmem>>, vector<16x128xf32>
    tpu.vector_store %arg8[%c0_214, %c5888_215], %388 {strides = array<i32>} : memref<16x7040xf32, #tpu.memory_space<vmem>>, vector<16x128xf32>,
    %c0_216 = arith.constant 0 : index
    %c6016_217 = arith.constant 6016 : index
    %390 = vector.load %arg8[%c0_216, %c6016_217] : memref<16x7040xf32, #tpu.memory_space<vmem>>, vector<16x128xf32>
    %391 = arith.mulf %390, %374 : vector<16x128xf32>
    %c0_218 = arith.constant 0 : index
    %c6016_219 = arith.constant 6016 : index
    %392 = vector.load %arg8[%c0_218, %c6016_219] : memref<16x7040xf32, #tpu.memory_space<vmem>>, vector<16x128xf32>
    tpu.vector_store %arg8[%c0_218, %c6016_219], %391 {strides = array<i32>} : memref<16x7040xf32, #tpu.memory_space<vmem>>, vector<16x128xf32>,
    %c0_220 = arith.constant 0 : index
    %c6144_221 = arith.constant 6144 : index
    %393 = vector.load %arg8[%c0_220, %c6144_221] : memref<16x7040xf32, #tpu.memory_space<vmem>>, vector<16x128xf32>
    %394 = arith.mulf %393, %374 : vector<16x128xf32>
    %c0_222 = arith.constant 0 : index
    %c6144_223 = arith.constant 6144 : index
    %395 = vector.load %arg8[%c0_222, %c6144_223] : memref<16x7040xf32, #tpu.memory_space<vmem>>, vector<16x128xf32>
    tpu.vector_store %arg8[%c0_222, %c6144_223], %394 {strides = array<i32>} : memref<16x7040xf32, #tpu.memory_space<vmem>>, vector<16x128xf32>,
    %c0_224 = arith.constant 0 : index
    %c6272_225 = arith.constant 6272 : index
    %396 = vector.load %arg8[%c0_224, %c6272_225] : memref<16x7040xf32, #tpu.memory_space<vmem>>, vector<16x128xf32>
    %397 = arith.mulf %396, %374 : vector<16x128xf32>
    %c0_226 = arith.constant 0 : index
    %c6272_227 = arith.constant 6272 : index
    %398 = vector.load %arg8[%c0_226, %c6272_227] : memref<16x7040xf32, #tpu.memory_space<vmem>>, vector<16x128xf32>
    tpu.vector_store %arg8[%c0_226, %c6272_227], %397 {strides = array<i32>} : memref<16x7040xf32, #tpu.memory_space<vmem>>, vector<16x128xf32>,
    %c0_228 = arith.constant 0 : index
    %c6400_229 = arith.constant 6400 : index
    %399 = vector.load %arg8[%c0_228, %c6400_229] : memref<16x7040xf32, #tpu.memory_space<vmem>>, vector<16x128xf32>
    %400 = arith.mulf %399, %374 : vector<16x128xf32>
    %c0_230 = arith.constant 0 : index
    %c6400_231 = arith.constant 6400 : index
    %401 = vector.load %arg8[%c0_230, %c6400_231] : memref<16x7040xf32, #tpu.memory_space<vmem>>, vector<16x128xf32>
    tpu.vector_store %arg8[%c0_230, %c6400_231], %400 {strides = array<i32>} : memref<16x7040xf32, #tpu.memory_space<vmem>>, vector<16x128xf32>,
    %c0_232 = arith.constant 0 : index
    %c6528_233 = arith.constant 6528 : index
    %402 = vector.load %arg8[%c0_232, %c6528_233] : memref<16x7040xf32, #tpu.memory_space<vmem>>, vector<16x128xf32>
    %403 = arith.mulf %402, %374 : vector<16x128xf32>
    %c0_234 = arith.constant 0 : index
    %c6528_235 = arith.constant 6528 : index
    %404 = vector.load %arg8[%c0_234, %c6528_235] : memref<16x7040xf32, #tpu.memory_space<vmem>>, vector<16x128xf32>
    tpu.vector_store %arg8[%c0_234, %c6528_235], %403 {strides = array<i32>} : memref<16x7040xf32, #tpu.memory_space<vmem>>, vector<16x128xf32>,
    %c0_236 = arith.constant 0 : index
    %c256_237 = arith.constant 256 : index
    %405 = vector.load %arg1[%c0_236, %c256_237] : memref<16x896xf32, #tpu.memory_space<vmem>>, vector<16x256xf32>
    %c0_238 = arith.constant 0 : index
    %c6656 = arith.constant 6656 : index
    %406 = vector.load %arg8[%c0_238, %c6656] : memref<16x7040xf32, #tpu.memory_space<vmem>>, vector<16x256xf32>
    tpu.vector_store %arg8[%c0_238, %c6656], %405 {strides = array<i32>} : memref<16x7040xf32, #tpu.memory_space<vmem>>, vector<16x256xf32>,
    %c0_239 = arith.constant 0 : index
    %c640_240 = arith.constant 640 : index
    %407 = vector.load %arg1[%c0_239, %c640_240] : memref<16x896xf32, #tpu.memory_space<vmem>>, vector<16x128xf32>
    %c0_241 = arith.constant 0 : index
    %c6912 = arith.constant 6912 : index
    %408 = vector.load %arg8[%c0_241, %c6912] : memref<16x7040xf32, #tpu.memory_space<vmem>>, vector<16x128xf32>
    tpu.vector_store %arg8[%c0_241, %c6912], %407 {strides = array<i32>} : memref<16x7040xf32, #tpu.memory_space<vmem>>, vector<16x128xf32>,
    %c0_242 = arith.constant 0 : index
    %c0_243 = arith.constant 0 : index
    %409 = vector.load %arg8[%c0_242, %c0_243] : memref<16x7040xf32, #tpu.memory_space<vmem>>, vector<16x7040xf32>
    %c0_244 = arith.constant 0 : index
    %c0_245 = arith.constant 0 : index
    %410 = vector.load %arg2[%c0_244, %c0_245] : memref<7040x256xf32, #tpu.memory_space<vmem>>, vector<7040x256xf32>
    %cst_246 = arith.constant dense<0.000000e+00> : vector<16x256xf32>
    %411 = tpu.matmul %409, %410, %cst_246 {dimension_numbers = #tpu.dot_dimension_numbers<[1], [0], [0], [1], [0, 0, 1, 1], [], []>} : vector<16x7040xf32>, vector<7040x256xf32>, vector<16x256xf32> -> vector<16x256xf32>
    %c0_247 = arith.constant 0 : index
    %c0_248 = arith.constant 0 : index
    %412 = vector.load %arg5[%c0_247, %c0_248] : memref<1x256xf32, #tpu.memory_space<vmem>>, vector<1x256xf32>
    %413 = vector.broadcast %412 : vector<1x256xf32> to vector<16x256xf32>
    %414 = arith.addf %411, %413 : vector<16x256xf32>
    %c0_249 = arith.constant 0 : index
    %c768_250 = arith.constant 768 : index
    %415 = vector.load %arg1[%c0_249, %c768_250] : memref<16x896xf32, #tpu.memory_space<vmem>>, vector<16x128xf32>
    %c0_251 = arith.constant 0 : index
    %c0_252 = arith.constant 0 : index
    %416 = vector.load %arg3[%c0_251, %c0_252] : memref<128x256xf32, #tpu.memory_space<vmem>>, vector<128x256xf32>
    %cst_253 = arith.constant dense<0.000000e+00> : vector<16x256xf32>
    %417 = tpu.matmul %415, %416, %cst_253 {dimension_numbers = #tpu.dot_dimension_numbers<[1], [0], [0], [1], [0, 0, 1, 1], [], []>} : vector<16x128xf32>, vector<128x256xf32>, vector<16x256xf32> -> vector<16x256xf32>
    %418 = arith.mulf %417, %414 : vector<16x256xf32>
    %c0_254 = arith.constant 0 : index
    %c0_255 = arith.constant 0 : index
    %419 = vector.load %arg4[%c0_254, %c0_255] : memref<256x128xf32, #tpu.memory_space<vmem>>, vector<256x128xf32>
    %cst_256 = arith.constant dense<0.000000e+00> : vector<16x128xf32>
    %420 = tpu.matmul %418, %419, %cst_256 {dimension_numbers = #tpu.dot_dimension_numbers<[1], [0], [0], [1], [0, 0, 1, 1], [], []>} : vector<16x256xf32>, vector<256x128xf32>, vector<16x128xf32> -> vector<16x128xf32>
    %c0_257 = arith.constant 0 : index
    %c0_258 = arith.constant 0 : index
    %421 = vector.load %arg6[%c0_257, %c0_258] : memref<1x128xf32, #tpu.memory_space<vmem>>, vector<1x128xf32>
    %422 = vector.broadcast %421 : vector<1x128xf32> to vector<16x128xf32>
    %423 = arith.addf %420, %422 : vector<16x128xf32>
    %c0_259 = arith.constant 0 : index
    %c0_260 = arith.constant 0 : index
    %424 = vector.load %arg7[%c0_259, %c0_260] : memref<16x128xf32, #tpu.memory_space<vmem>>, vector<16x128xf32>
    tpu.vector_store %arg7[%c0_259, %c0_260], %423 {strides = array<i32>} : memref<16x128xf32, #tpu.memory_space<vmem>>, vector<16x128xf32>,
    return
  }
  func.func @transform_0(%arg0: i32) -> (i32, i32) {
    %c0_i32 = arith.constant 0 : i32
    %c0_i32_0 = arith.constant 0 : i32
    return %arg0, %c0_i32 : i32, i32
  }
  func.func @transform_1(%arg0: i32) -> (i32, i32) {
    %c0_i32 = arith.constant 0 : i32
    %c0_i32_0 = arith.constant 0 : i32
    %c0_i32_1 = arith.constant 0 : i32
    return %c0_i32, %c0_i32_0 : i32, i32
  }
  func.func @transform_2(%arg0: i32) -> (i32, i32) {
    %c0_i32 = arith.constant 0 : i32
    %c0_i32_0 = arith.constant 0 : i32
    %c0_i32_1 = arith.constant 0 : i32
    return %c0_i32, %c0_i32_0 : i32, i32
  }
  func.func @transform_3(%arg0: i32) -> (i32, i32) {
    %c0_i32 = arith.constant 0 : i32
    %c0_i32_0 = arith.constant 0 : i32
    %c0_i32_1 = arith.constant 0 : i32
    return %c0_i32, %c0_i32_0 : i32, i32
  }
  func.func @transform_4(%arg0: i32) -> (i32, i32) {
    %c0_i32 = arith.constant 0 : i32
    %c0_i32_0 = arith.constant 0 : i32
    %c0_i32_1 = arith.constant 0 : i32
    return %c0_i32, %c0_i32_0 : i32, i32
  }
  func.func @transform_5(%arg0: i32) -> (i32, i32) {
    %c0_i32 = arith.constant 0 : i32
    %c0_i32_0 = arith.constant 0 : i32
    %c0_i32_1 = arith.constant 0 : i32
    return %c0_i32, %c0_i32_0 : i32, i32
  }
  func.func @transform_6(%arg0: i32) -> (i32, i32) {
    %c0_i32 = arith.constant 0 : i32
    %c0_i32_0 = arith.constant 0 : i32
    return %arg0, %c0_i32 : i32, i32
  }
}

</mosaic_0001>

<llo_original>
// kernel: struct_embedder_pallas.1
$region0: #{struct_embedder_pallas.1}
  #allocation0 [shape = 'u32[]', space=smem, size = 0x4, offset = 0x4, fixed_abs, tag = 'smem constant byte address 0x4 - core index']
  #allocation1 [shape = 'u32[144,128]{1,0:T(1,128)}', space=vmem, size = 0x12000, scoped, tag = 'internal scratch']
  #allocation2 [shape = 'f32[16,7040]{1,0:T(8,128)}', space=vmem, size = 0x6e000, scoped, tag = 'scratch operand']
  %s0 = inlined_call_operand.vmem [shape: f32[32,896], index: 0, kind: input, shape index: {}]
  %s1 = inlined_call_operand.vmem [shape: f32[7040,256], index: 1, kind: input, shape index: {}]
  %s2 = inlined_call_operand.vmem [shape: f32[128,256], index: 2, kind: input, shape index: {}]
  %s3 = inlined_call_operand.vmem [shape: f32[256,128], index: 3, kind: input, shape index: {}]
  %s4 = inlined_call_operand.vmem [shape: f32[1,256], index: 4, kind: input, shape index: {}]
  %s5 = inlined_call_operand.vmem [shape: f32[1,128], index: 5, kind: input, shape index: {}]
  %s6 = inlined_call_operand.hbm [shape: f32[32,128], index: 6, kind: output, shape index: {}]
  %s7 = sld [smem:[#allocation0]]
  $region57: #{struct_embedder_pallas.1} parent=0
    _
  %s9 = ssub.s32 1, %s7
  %s10 = scalar_select 0, %s9, %s7
  $region1: #{struct_embedder_pallas.1} parent=0
    #allocation3 [shape = 'u8[16384]{0}', space=vmem, size = 0x4000, scoped, tag = 'output window, operand 0']
    #allocation4 [shape = 's32[2]{0}', space=sflag, size = 0x8, scoped, tag = 'scoped memory for struct_embedder_pallas.1']
    %11 = vsyncpa [#allocation4], 0
    %s12 = scalar_lea.sflag [#allocation4], 1
    %13 = vsyncpa %s12, 0
    loop: start=0, step=1, limit=4
    $region2: #{struct_embedder_pallas.1} parent=1 // loop_pre_header
      _
    $region3: #{struct_embedder_pallas.1} parent=1 // loop_header
      %s15 = sphi 0, %s19
      %p16 = scmp.ge.s32.totalorder %s15, 4
      %s25 = sphi 0, %s27
      %s28 = sphi 0, %s25
      %s29 = sphi 0, %s28
      %s45 = sphi 0, %s29
      %s49 = sphi 0, %s49
      %s51 = sphi 0, %s49
      %s52 = sphi 0, %s51
      %s66 = sphi 0, %s52
      %s70 = sphi 0, %s70
      %s72 = sphi 0, %s70
      %s73 = sphi 0, %s72
      %s87 = sphi 0, %s73
      %s91 = sphi 0, %s91
      %s93 = sphi 0, %s91
      %s94 = sphi 0, %s93
      %s108 = sphi 0, %s94
      %s112 = sphi 0, %s112
      %s114 = sphi 0, %s112
      %s115 = sphi 0, %s114
      %s129 = sphi 0, %s115
      %s133 = sphi 0, %s133
      %s135 = sphi 0, %s133
      %s136 = sphi 0, %s135
      %s150 = sphi 0, %s136
      %s156 = sphi 0, %s158
      %s159 = sphi 0, %s156
      %s160 = sphi 0, %s159
      %s176 = sphi 0, %s160
    $region4: #{struct_embedder_pallas.1} parent=1 // loop_header_branch
      %18 = sbr.rel (%p16) target = $region8
    $region5: #{struct_embedder_pallas.1} parent=1 // loop_body
      %s20 = ssub.s32 %s15, 1
      %s21 = ssub.s32 %s15, 2
      %s22 = sadd.s32 %s15, 1
      %s23 = ssub.s32 %s15, %s22
      %p24 = scmp.eq.s32.totalorder %s23, 0
      %s26 = sadd.s32 %s25, 1
      %s27 = scalar_select %p24, %s25, %s26
      %p30 = pneg %p24
      %p31 = scmp.eq.s32.totalorder %s15, 1
      %p32 = por %p30, %p31
      %p33 = scmp.ne.s32.totalorder %s25, %s28
      %p34 = scmp.eq.s32.totalorder %s15, 0
      %p35 = por %p33, %p34
      %p36 = scmp.ne.s32.totalorder %s25, %s28
      %p37 = scmp.eq.s32.totalorder %s20, 1
      %p38 = por %p36, %p37
      %p39 = scmp.ne.s32.totalorder %s28, %s29
      %p40 = scmp.eq.s32.totalorder %s20, 0
      %p41 = por %p39, %p40
      %p42 = scmp.ne.s32.totalorder %s28, %s29
      %p43 = scmp.eq.s32.totalorder %s21, 1
      %p44 = por %p42, %p43
      %p46 = scmp.ne.s32.totalorder %s29, %s45
      %p47 = scmp.eq.s32.totalorder %s21, 0
      %p48 = por %p46, %p47
      %s50 = sadd.s32 %s49, 1
      %p53 = scmp.eq.s32.totalorder %s15, 1
      %p54 = scmp.ne.s32.totalorder %s49, %s51
      %p55 = scmp.eq.s32.totalorder %s15, 0
      %p56 = por %p54, %p55
      %p57 = scmp.ne.s32.totalorder %s49, %s51
      %p58 = scmp.eq.s32.totalorder %s20, 1
      %p59 = por %p57, %p58
      %p60 = scmp.ne.s32.totalorder %s51, %s52
      %p61 = scmp.eq.s32.totalorder %s20, 0
      %p62 = por %p60, %p61
      %p63 = scmp.ne.s32.totalorder %s51, %s52
      %p64 = scmp.eq.s32.totalorder %s21, 1
      %p65 = por %p63, %p64
      %p67 = scmp.ne.s32.totalorder %s52, %s66
      %p68 = scmp.eq.s32.totalorder %s21, 0
      %p69 = por %p67, %p68
      %s71 = sadd.s32 %s70, 1
      %p74 = scmp.eq.s32.totalorder %s15, 1
      %p75 = scmp.ne.s32.totalorder %s70, %s72
      %p76 = scmp.eq.s32.totalorder %s15, 0
      %p77 = por %p75, %p76
      %p78 = scmp.ne.s32.totalorder %s70, %s72
      %p79 = scmp.eq.s32.totalorder %s20, 1
      %p80 = por %p78, %p79
      %p81 = scmp.ne.s32.totalorder %s72, %s73
      %p82 = scmp.eq.s32.totalorder %s20, 0
      %p83 = por %p81, %p82
      %p84 = scmp.ne.s32.totalorder %s72, %s73
      %p85 = scmp.eq.s32.totalorder %s21, 1
      %p86 = por %p84, %p85
      %p88 = scmp.ne.s32.totalorder %s73, %s87
      %p89 = scmp.eq.s32.totalorder %s21, 0
      %p90 = por %p88, %p89
      %s92 = sadd.s32 %s91, 1
      %p95 = scmp.eq.s32.totalorder %s15, 1
      %p96 = scmp.ne.s32.totalorder %s91, %s93
      %p97 = scmp.eq.s32.totalorder %s15, 0
      %p98 = por %p96, %p97
      %p99 = scmp.ne.s32.totalorder %s91, %s93
      %p100 = scmp.eq.s32.totalorder %s20, 1
      %p101 = por %p99, %p100
      %p102 = scmp.ne.s32.totalorder %s93, %s94
      %p103 = scmp.eq.s32.totalorder %s20, 0
      %p104 = por %p102, %p103
      %p105 = scmp.ne.s32.totalorder %s93, %s94
      %p106 = scmp.eq.s32.totalorder %s21, 1
      %p107 = por %p105, %p106
      %p109 = scmp.ne.s32.totalorder %s94, %s108
      %p110 = scmp.eq.s32.totalorder %s21, 0
      %p111 = por %p109, %p110
      %s113 = sadd.s32 %s112, 1
      %p116 = scmp.eq.s32.totalorder %s15, 1
      %p117 = scmp.ne.s32.totalorder %s112, %s114
      %p118 = scmp.eq.s32.totalorder %s15, 0
      %p119 = por %p117, %p118
      %p120 = scmp.ne.s32.totalorder %s112, %s114
      %p121 = scmp.eq.s32.totalorder %s20, 1
      %p122 = por %p120, %p121
      %p123 = scmp.ne.s32.totalorder %s114, %s115
      %p124 = scmp.eq.s32.totalorder %s20, 0
      %p125 = por %p123, %p124
      %p126 = scmp.ne.s32.totalorder %s114, %s115
      %p127 = scmp.eq.s32.totalorder %s21, 1
      %p128 = por %p126, %p127
      %p130 = scmp.ne.s32.totalorder %s115, %s129
      %p131 = scmp.eq.s32.totalorder %s21, 0
      %p132 = por %p130, %p131
      %s134 = sadd.s32 %s133, 1
      %p137 = scmp.eq.s32.totalorder %s15, 1
      %p138 = scmp.ne.s32.totalorder %s133, %s135
      %p139 = scmp.eq.s32.totalorder %s15, 0
      %p140 = por %p138, %p139
      %p141 = scmp.ne.s32.totalorder %s133, %s135
      %p142 = scmp.eq.s32.totalorder %s20, 1
      %p143 = por %p141, %p142
      %p144 = scmp.ne.s32.totalorder %s135, %s136
      %p145 = scmp.eq.s32.totalorder %s20, 0
      %p146 = por %p144, %p145
      %p147 = scmp.ne.s32.totalorder %s135, %s136
      %p148 = scmp.eq.s32.totalorder %s21, 1
      %p149 = por %p147, %p148
      %p151 = scmp.ne.s32.totalorder %s136, %s150
      %p152 = scmp.eq.s32.totalorder %s21, 0
      %p153 = por %p151, %p152
      %s154 = ssub.s32 %s15, %s22
      %p155 = scmp.eq.s32.totalorder %s154, 0
      %s157 = sadd.s32 %s156, 1
      %s158 = scalar_select %p155, %s156, %s157
      %p161 = pneg %p155
      %p162 = scmp.eq.s32.totalorder %s15, 1
      %p163 = por %p161, %p162
      %p164 = scmp.ne.s32.totalorder %s156, %s159
      %p165 = scmp.eq.s32.totalorder %s15, 0
      %p166 = por %p164, %p165
      %p167 = scmp.ne.s32.totalorder %s156, %s159
      %p168 = scmp.eq.s32.totalorder %s20, 1
      %p169 = por %p167, %p168
      %p170 = scmp.ne.s32.totalorder %s159, %s160
      %p171 = scmp.eq.s32.totalorder %s20, 0
      %p172 = por %p170, %p171
      %p173 = scmp.ne.s32.totalorder %s159, %s160
      %p174 = scmp.eq.s32.totalorder %s21, 1
      %p175 = por %p173, %p174
      %p177 = scmp.ne.s32.totalorder %s160, %s176
      %p178 = scmp.eq.s32.totalorder %s21, 0
      %p179 = por %p177, %p178
      %p180 = scmp.le.s32.totalorder 1, %s15
      %p181 = scmp.lt.s32.totalorder %s15, 3
      %p182 = pnand %p180, %p181
      %p183 = pneg %p182
      // Predicated region
      $region9: #{struct_embedder_pallas.1} parent=5 // pred_check
        _
      $region10: #{struct_embedder_pallas.1} parent=5 // pred_check_branch
        %185 = sbr.rel (%p182) target = $region12
      $region11: #{struct_embedder_pallas.1} parent=5 // pred_region
        %s186 = ssub.s32 %s15, 1
        // Predicated region
        $region13: #{struct_embedder_pallas.1} parent=11 // pred_check
          %p187 = pneg %p62
        $region14: #{struct_embedder_pallas.1} parent=11 // pred_check_branch
          %189 = sbr.rel (%p187) target = $region16
        $region15: #{struct_embedder_pallas.1} parent=11 // pred_region
          _
        $region16: #{struct_embedder_pallas.1} parent=11 // pred_fallthru
          _
        // Predicated region
        $region17: #{struct_embedder_pallas.1} parent=11 // pred_check
          %p190 = pneg %p83
        $region18: #{struct_embedder_pallas.1} parent=11 // pred_check_branch
          %192 = sbr.rel (%p190) target = $region20
        $region19: #{struct_embedder_pallas.1} parent=11 // pred_region
          _
        $region20: #{struct_embedder_pallas.1} parent=11 // pred_fallthru
          _
        // Predicated region
        $region21: #{struct_embedder_pallas.1} parent=11 // pred_check
          %p193 = pneg %p104
        $region22: #{struct_embedder_pallas.1} parent=11 // pred_check_branch
          %195 = sbr.rel (%p193) target = $region24
        $region23: #{struct_embedder_pallas.1} parent=11 // pred_region
          _
        $region24: #{struct_embedder_pallas.1} parent=11 // pred_fallthru
          _
        // Predicated region
        $region25: #{struct_embedder_pallas.1} parent=11 // pred_check
          %p196 = pneg %p125
        $region26: #{struct_embedder_pallas.1} parent=11 // pred_check_branch
          %198 = sbr.rel (%p196) target = $region28
        $region27: #{struct_embedder_pallas.1} parent=11 // pred_region
          _
        $region28: #{struct_embedder_pallas.1} parent=11 // pred_fallthru
          _
        // Predicated region
        $region29: #{struct_embedder_pallas.1} parent=11 // pred_check
          %p199 = pneg %p146
        $region30: #{struct_embedder_pallas.1} parent=11 // pred_check_branch
          %201 = sbr.rel (%p199) target = $region32
        $region31: #{struct_embedder_pallas.1} parent=11 // pred_region
          _
        $region32: #{struct_embedder_pallas.1} parent=11 // pred_fallthru
          _
      $region12: #{struct_embedder_pallas.1} parent=5 // pred_fallthru
        _
      %p202 = scmp.lt.s32.totalorder %s15, 2
      // Predicated region
      $region33: #{struct_embedder_pallas.1} parent=5 // pred_check
        %p203 = pneg %p202
      $region34: #{struct_embedder_pallas.1} parent=5 // pred_check_branch
        %205 = sbr.rel (%p203) target = $region36
      $region35: #{struct_embedder_pallas.1} parent=5 // pred_region
        // Predicated region
        $region37: #{struct_embedder_pallas.1} parent=35 // pred_check
          %p206 = pneg %p35
        $region38: #{struct_embedder_pallas.1} parent=35 // pred_check_branch
          %208 = sbr.rel (%p206) target = $region40
        $region39: #{struct_embedder_pallas.1} parent=35 // pred_region
          %s209 = smul.u32 2, %s15
          %p210 = scmp.lt.s32.totalorder %s209, 3
          %s211 = scalar_select %p210, %s209, 3
          %s212 = smul.addr %s211, 7
          %s213 = smul.addr %s212, 8
          %s214 = scalar_lea.vmem %s0, %s213
          %s215 = smul.u32 2, %s15
        $region40: #{struct_embedder_pallas.1} parent=35 // pred_fallthru
          _
      $region36: #{struct_embedder_pallas.1} parent=5 // pred_fallthru
        _
      %p216 = scmp.le.s32.totalorder 1, %s15
      %p217 = scmp.lt.s32.totalorder %s15, 3
      %p218 = pnand %p216, %p217
      %p219 = pneg %p218
      // Predicated region
      $region41: #{struct_embedder_pallas.1} parent=5 // pred_check
        _
      $region42: #{struct_embedder_pallas.1} parent=5 // pred_check_branch
        %221 = sbr.rel (%p218) target = $region44
      $region43: #{struct_embedder_pallas.1} parent=5 // pred_region
        %s222 = ssub.s32 %s15, 1
        %s223 = smul.u32 2, %s20
        %p224 = scmp.lt.s32.totalorder %s223, 3
        %s225 = scalar_select %p224, %s223, 3
        %s226 = smul.addr %s225, 7
        %s227 = smul.addr %s226, 8
        %s228 = scalar_lea.vmem %s0, %s227
        %p229 = pneg %p41
        %p230 = pneg %p38
        %p231 = pneg %p62
        %p232 = pneg %p59
        %p233 = pneg %p83
        %p234 = pneg %p80
        %p235 = pneg %p104
        %p236 = pneg %p101
        %p237 = pneg %p125
        %p238 = pneg %p122
        %p239 = pneg %p146
        %p240 = pneg %p143
        %p241 = pneg %p172
        %p242 = pneg %p169
        %s243 = sand.u32 %s159, 1
        %s244 = scalar_lea.sflag [#allocation4], %s243
        %s245 = sand.u32 %s159, 1
        %s246 = smul.addr %s245, 16
        %s247 = scalar_lea.vmem [#allocation3], %s246
        %s248 = smul.u32 2, %s20
        %p249 = scmp.lt.s32.totalorder %s248, 3
        %s250 = scalar_select %p249, %s248, 3
        %s251 = smul.addr %s250, 7
        %s252 = smul.addr %s251, 8
        %s253 = scalar_lea.vmem %s0, %s252
        %s254 = smul.u32 2, %s20
        %s255 = smul.u32 2, %s20
        %v256 = vld [vmem:[%s253] sm:$0xff]
        %v257 = vld [vmem:[%s253 + $0x8] sm:$0xff]
        %v258 = vld [vmem:[%s253 + $0x38] sm:$0xff]
        %v259 = vld [vmem:[%s253 + $0x40] sm:$0xff]
        %v260 = vmax.f32 %v256, 2.0
        %v261 = vmax.f32 %v257, 2.0
        %v262 = vmax.f32 %v258, 2.0
        %v263 = vmax.f32 %v259, 2.0
        %v264 = vmin.f32 %v260, 22.0
        %v265 = vmin.f32 %v261, 22.0
        %v266 = vmin.f32 %v262, 22.0
        %v267 = vmin.f32 %v263, 22.0
        %v268 = vsub.f32 %v256, %v264
        %v269 = vsub.f32 %v257, %v265
        %v270 = vsub.f32 %v258, %v266
        %v271 = vsub.f32 %v259, %v267
        %v272 = vmul.f32 %v268, %v268
        %v273 = vmul.f32 %v269, %v269
        %v274 = vmul.f32 %v270, %v270
        %v275 = vmul.f32 %v271, %v271
        %v276 = vmul.f32 %v272, -2.0
        %v277 = vmul.f32 %v273, -2.0
        %v278 = vmul.f32 %v274, -2.0
        %v279 = vmul.f32 %v275, -2.0
        %v280 = vsub.f32 %v256, 2.0
        %v281 = vsub.f32 %v257, 2.0
        %v282 = vsub.f32 %v258, 2.0
        %v283 = vsub.f32 %v259, 2.0
        %v284 = vmul.f32 %v280, %v280
        %v285 = vmul.f32 %v281, %v281
        %v286 = vmul.f32 %v282, %v282
        %v287 = vmul.f32 %v283, %v283
        %v288 = vmul.f32 %v284, -2.0
        %v289 = vmul.f32 %v285, -2.0
        %v290 = vmul.f32 %v286, -2.0
        %v291 = vmul.f32 %v287, -2.0
        %v292 = vsub.f32 %v288, %v276
        %v293 = vsub.f32 %v289, %v277
        %v294 = vsub.f32 %v290, %v278
        %v295 = vsub.f32 %v291, %v279
        %v296 = vmul.f32 %v292, 1.442695
        %v297 = vpow.pop %v296
        %v298 = vmul.f32 %v293, 1.442695
        %v299 = vpow.pop %v298
        %v300 = vmul.f32 %v294, 1.442695
        %v301 = vpow.pop %v300
        %v302 = vmul.f32 %v295, 1.442695
        %v303 = vpow.pop %v302
        %304 = vst [vmem:[#allocation2] sm:$0xff] %v297
        %305 = vst [vmem:[#allocation2 + $0x8] sm:$0xff] %v299
        %306 = vst [vmem:[#allocation2 + $0x1b8] sm:$0xff] %v301
        %307 = vst [vmem:[#allocation2 + $0x1c0] sm:$0xff] %v303
        %v308 = vsub.f32 %v256, 4.5
        %v309 = vsub.f32 %v257, 4.5
        %v310 = vsub.f32 %v258, 4.5
        %v311 = vsub.f32 %v259, 4.5
        %v312 = vmul.f32 %v308, %v308
        %v313 = vmul.f32 %v309, %v309
        %v314 = vmul.f32 %v310, %v310
        %v315 = vmul.f32 %v311, %v311
        %v316 = vmul.f32 %v312, -2.0
        %v317 = vmul.f32 %v313, -2.0
        %v318 = vmul.f32 %v314, -2.0
        %v319 = vmul.f32 %v315, -2.0
        %v320 = vsub.f32 %v316, %v276
        %v321 = vsub.f32 %v317, %v277
        %v322 = vsub.f32 %v318, %v278
        %v323 = vsub.f32 %v319, %v279
        %v324 = vmul.f32 %v320, 1.442695
        %v325 = vpow.pop %v324
        %v326 = vmul.f32 %v321, 1.442695
        %v327 = vpow.pop %v326
        %v328 = vmul.f32 %v322, 1.442695
        %v329 = vpow.pop %v328
        %v330 = vmul.f32 %v323, 1.442695
        %v331 = vpow.pop %v330
        %332 = vst [vmem:[#allocation2 + $0x10] sm:$0xff] %v325
        %333 = vst [vmem:[#allocation2 + $0x18] sm:$0xff] %v327
        %334 = vst [vmem:[#allocation2 + $0x1c8] sm:$0xff] %v329
        %335 = vst [vmem:[#allocation2 + $0x1d0] sm:$0xff] %v331
        %v336 = vadd.f32 %v297, %v325
        %v337 = vadd.f32 %v299, %v327
        %v338 = vadd.f32 %v301, %v329
        %v339 = vadd.f32 %v303, %v331
        %v340 = vsub.f32 %v256, 7.0
        %v341 = vsub.f32 %v257, 7.0
        %v342 = vsub.f32 %v258, 7.0
        %v343 = vsub.f32 %v259, 7.0
        %v344 = vmul.f32 %v340, %v340
        %v345 = vmul.f32 %v341, %v341
        %v346 = vmul.f32 %v342, %v342
        %v347 = vmul.f32 %v343, %v343
        %v348 = vmul.f32 %v344, -2.0
        %v349 = vmul.f32 %v345, -2.0
        %v350 = vmul.f32 %v346, -2.0
        %v351 = vmul.f32 %v347, -2.0
        %v352 = vsub.f32 %v348, %v276
        %v353 = vsub.f32 %v349, %v277
        %v354 = vsub.f32 %v350, %v278
        %v355 = vsub.f32 %v351, %v279
        %v356 = vmul.f32 %v352, 1.442695
        %v357 = vpow.pop %v356
        %v358 = vmul.f32 %v353, 1.442695
        %v359 = vpow.pop %v358
        %v360 = vmul.f32 %v354, 1.442695
        %v361 = vpow.pop %v360
        %v362 = vmul.f32 %v355, 1.442695
        %v363 = vpow.pop %v362
        %364 = vst [vmem:[#allocation2 + $0x20] sm:$0xff] %v357
        %365 = vst [vmem:[#allocation2 + $0x28] sm:$0xff] %v359
        %366 = vst [vmem:[#allocation2 + $0x1d8] sm:$0xff] %v361
        %367 = vst [vmem:[#allocation2 + $0x1e0] sm:$0xff] %v363
        %v368 = vadd.f32 %v336, %v357
        %v369 = vadd.f32 %v337, %v359
        %v370 = vadd.f32 %v338, %v361
        %v371 = vadd.f32 %v339, %v363
        %v372 = vsub.f32 %v256, 9.5
        %v373 = vsub.f32 %v257, 9.5
        %v374 = vsub.f32 %v258, 9.5
        %v375 = vsub.f32 %v259, 9.5
        %v376 = vmul.f32 %v372, %v372
        %v377 = vmul.f32 %v373, %v373
        %v378 = vmul.f32 %v374, %v374
        %v379 = vmul.f32 %v375, %v375
        %v380 = vmul.f32 %v376, -2.0
        %v381 = vmul.f32 %v377, -2.0
        %v382 = vmul.f32 %v378, -2.0
        %v383 = vmul.f32 %v379, -2.0
        %v384 = vsub.f32 %v380, %v276
        %v385 = vsub.f32 %v381, %v277
        %v386 = vsub.f32 %v382, %v278
        %v387 = vsub.f32 %v383, %v279
        %v388 = vmul.f32 %v384, 1.442695
        %v389 = vpow.pop %v388
        %v390 = vmul.f32 %v385, 1.442695
        %v391 = vpow.pop %v390
        %v392 = vmul.f32 %v386, 1.442695
        %v393 = vpow.pop %v392
        %v394 = vmul.f32 %v387, 1.442695
        %v395 = vpow.pop %v394
        %396 = vst [vmem:[#allocation2 + $0x30] sm:$0xff] %v389
        %397 = vst [vmem:[#allocation2 + $0x38] sm:$0xff] %v391
        %398 = vst [vmem:[#allocation2 + $0x1e8] sm:$0xff] %v393
        %399 = vst [vmem:[#allocation2 + $0x1f0] sm:$0xff] %v395
        %v400 = vadd.f32 %v368, %v389
        %v401 = vadd.f32 %v369, %v391
        %v402 = vadd.f32 %v370, %v393
        %v403 = vadd.f32 %v371, %v395
        %v404 = vsub.f32 %v256, 12.0
        %v405 = vsub.f32 %v257, 12.0
        %v406 = vsub.f32 %v258, 12.0
        %v407 = vsub.f32 %v259, 12.0
        %v408 = vmul.f32 %v404, %v404
        %v409 = vmul.f32 %v405, %v405
        %v410 = vmul.f32 %v406, %v406
        %v411 = vmul.f32 %v407, %v407
        %v412 = vmul.f32 %v408, -2.0
        %v413 = vmul.f32 %v409, -2.0
        %v414 = vmul.f32 %v410, -2.0
        %v415 = vmul.f32 %v411, -2.0
        %v416 = vsub.f32 %v412, %v276
        %v417 = vsub.f32 %v413, %v277
        %v418 = vsub.f32 %v414, %v278
        %v419 = vsub.f32 %v415, %v279
        %v420 = vmul.f32 %v416, 1.442695
        %v421 = vpow.pop %v420
        %v422 = vmul.f32 %v417, 1.442695
        %v423 = vpow.pop %v422
        %v424 = vmul.f32 %v418, 1.442695
        %v425 = vpow.pop %v424
        %v426 = vmul.f32 %v419, 1.442695
        %v427 = vpow.pop %v426
        %428 = vst [vmem:[#allocation2 + $0x40] sm:$0xff] %v421
        %429 = vst [vmem:[#allocation2 + $0x48] sm:$0xff] %v423
        %430 = vst [vmem:[#allocation2 + $0x1f8] sm:$0xff] %v425
        %431 = vst [vmem:[#allocation2 + $0x200] sm:$0xff] %v427
        %v432 = vadd.f32 %v400, %v421
        %v433 = vadd.f32 %v401, %v423
        %v434 = vadd.f32 %v402, %v425
        %v435 = vadd.f32 %v403, %v427
        %v436 = vsub.f32 %v256, 14.5
        %v437 = vsub.f32 %v257, 14.5
        %v438 = vsub.f32 %v258, 14.5
        %v439 = vsub.f32 %v259, 14.5
        %v440 = vmul.f32 %v436, %v436
        %v441 = vmul.f32 %v437, %v437
        %v442 = vmul.f32 %v438, %v438
        %v443 = vmul.f32 %v439, %v439
        %v444 = vmul.f32 %v440, -2.0
        %v445 = vmul.f32 %v441, -2.0
        %v446 = vmul.f32 %v442, -2.0
        %v447 = vmul.f32 %v443, -2.0
        %v448 = vsub.f32 %v444, %v276
        %v449 = vsub.f32 %v445, %v277
        %v450 = vsub.f32 %v446, %v278
        %v451 = vsub.f32 %v447, %v279
        %v452 = vmul.f32 %v448, 1.442695
        %v453 = vpow.pop %v452
        %v454 = vmul.f32 %v449, 1.442695
        %v455 = vpow.pop %v454
        %v456 = vmul.f32 %v450, 1.442695
        %v457 = vpow.pop %v456
        %v458 = vmul.f32 %v451, 1.442695
        %v459 = vpow.pop %v458
        %460 = vst [vmem:[#allocation2 + $0x50] sm:$0xff] %v453
        %461 = vst [vmem:[#allocation2 + $0x58] sm:$0xff] %v455
        %462 = vst [vmem:[#allocation2 + $0x208] sm:$0xff] %v457
        %463 = vst [vmem:[#allocation2 + $0x210] sm:$0xff] %v459
        %v464 = vadd.f32 %v432, %v453
        %v465 = vadd.f32 %v433, %v455
        %v466 = vadd.f32 %v434, %v457
        %v467 = vadd.f32 %v435, %v459
        %v468 = vsub.f32 %v256, 17.0
        %v469 = vsub.f32 %v257, 17.0
        %v470 = vsub.f32 %v258, 17.0
        %v471 = vsub.f32 %v259, 17.0
        %v472 = vmul.f32 %v468, %v468
        %v473 = vmul.f32 %v469, %v469
        %v474 = vmul.f32 %v470, %v470
        %v475 = vmul.f32 %v471, %v471
        %v476 = vmul.f32 %v472, -2.0
        %v477 = vmul.f32 %v473, -2.0
        %v478 = vmul.f32 %v474, -2.0
        %v479 = vmul.f32 %v475, -2.0
        %v480 = vsub.f32 %v476, %v276
        %v481 = vsub.f32 %v477, %v277
        %v482 = vsub.f32 %v478, %v278
        %v483 = vsub.f32 %v479, %v279
        %v484 = vmul.f32 %v480, 1.442695
        %v485 = vpow.pop %v484
        %v486 = vmul.f32 %v481, 1.442695
        %v487 = vpow.pop %v486
        %v488 = vmul.f32 %v482, 1.442695
        %v489 = vpow.pop %v488
        %v490 = vmul.f32 %v483, 1.442695
        %v491 = vpow.pop %v490
        %492 = vst [vmem:[#allocation2 + $0x60] sm:$0xff] %v485
        %493 = vst [vmem:[#allocation2 + $0x68] sm:$0xff] %v487
        %494 = vst [vmem:[#allocation2 + $0x218] sm:$0xff] %v489
        %495 = vst [vmem:[#allocation2 + $0x220] sm:$0xff] %v491
        %v496 = vadd.f32 %v464, %v485
        %v497 = vadd.f32 %v465, %v487
        %v498 = vadd.f32 %v466, %v489
        %v499 = vadd.f32 %v467, %v491
        %v500 = vsub.f32 %v256, 19.5
        %v501 = vsub.f32 %v257, 19.5
        %v502 = vsub.f32 %v258, 19.5
        %v503 = vsub.f32 %v259, 19.5
        %v504 = vmul.f32 %v500, %v500
        %v505 = vmul.f32 %v501, %v501
        %v506 = vmul.f32 %v502, %v502
        %v507 = vmul.f32 %v503, %v503
        %v508 = vmul.f32 %v504, -2.0
        %v509 = vmul.f32 %v505, -2.0
        %v510 = vmul.f32 %v506, -2.0
        %v511 = vmul.f32 %v507, -2.0
        %v512 = vsub.f32 %v508, %v276
        %v513 = vsub.f32 %v509, %v277
        %v514 = vsub.f32 %v510, %v278
        %v515 = vsub.f32 %v511, %v279
        %v516 = vmul.f32 %v512, 1.442695
        %v517 = vpow.pop %v516
        %v518 = vmul.f32 %v513, 1.442695
        %v519 = vpow.pop %v518
        %v520 = vmul.f32 %v514, 1.442695
        %v521 = vpow.pop %v520
        %v522 = vmul.f32 %v515, 1.442695
        %v523 = vpow.pop %v522
        %524 = vst [vmem:[#allocation2 + $0x70] sm:$0xff] %v517
        %525 = vst [vmem:[#allocation2 + $0x78] sm:$0xff] %v519
        %526 = vst [vmem:[#allocation2 + $0x228] sm:$0xff] %v521
        %527 = vst [vmem:[#allocation2 + $0x230] sm:$0xff] %v523
        %v528 = vadd.f32 %v496, %v517
        %v529 = vadd.f32 %v497, %v519
        %v530 = vadd.f32 %v498, %v521
        %v531 = vadd.f32 %v499, %v523
        %v532 = vsub.f32 %v256, 22.0
        %v533 = vsub.f32 %v257, 22.0
        %v534 = vsub.f32 %v258, 22.0
        %v535 = vsub.f32 %v259, 22.0
        %v536 = vmul.f32 %v532, %v532
        %v537 = vmul.f32 %v533, %v533
        %v538 = vmul.f32 %v534, %v534
        %v539 = vmul.f32 %v535, %v535
        %v540 = vmul.f32 %v536, -2.0
        %v541 = vmul.f32 %v537, -2.0
        %v542 = vmul.f32 %v538, -2.0
        %v543 = vmul.f32 %v539, -2.0
        %v544 = vsub.f32 %v540, %v276
        %v545 = vsub.f32 %v541, %v277
        %v546 = vsub.f32 %v542, %v278
        %v547 = vsub.f32 %v543, %v279
        %v548 = vmul.f32 %v544, 1.442695
        %v549 = vpow.pop %v548
        %v550 = vmul.f32 %v545, 1.442695
        %v551 = vpow.pop %v550
        %v552 = vmul.f32 %v546, 1.442695
        %v553 = vpow.pop %v552
        %v554 = vmul.f32 %v547, 1.442695
        %v555 = vpow.pop %v554
        %556 = vst [vmem:[#allocation2 + $0x80] sm:$0xff] %v549
        %557 = vst [vmem:[#allocation2 + $0x88] sm:$0xff] %v551
        %558 = vst [vmem:[#allocation2 + $0x238] sm:$0xff] %v553
        %559 = vst [vmem:[#allocation2 + $0x240] sm:$0xff] %v555
        %v560 = vadd.f32 %v528, %v549
        %v561 = vadd.f32 %v529, %v551
        %v562 = vadd.f32 %v530, %v553
        %v563 = vadd.f32 %v531, %v555
        %v564 = vld [vmem:[%s253 + $0x10] sm:$0xff]
        %v565 = vld [vmem:[%s253 + $0x18] sm:$0xff]
        %v566 = vld [vmem:[%s253 + $0x48] sm:$0xff]
        %v567 = vld [vmem:[%s253 + $0x50] sm:$0xff]
        %v568 = vrcp.pop %v560
        %v569 = vrcp.pop %v561
        %v570 = vrcp.pop %v562
        %v571 = vrcp.pop %v563
        %v572 = vmul.f32 %v564, %v568
        %v573 = vmul.f32 %v565, %v569
        %v574 = vmul.f32 %v566, %v570
        %v575 = vmul.f32 %v567, %v571
        %v576 = vld [vmem:[#allocation2] sm:$0xff]
        %v577 = vld [vmem:[#allocation2 + $0x8] sm:$0xff]
        %v578 = vld [vmem:[#allocation2 + $0x1b8] sm:$0xff]
        %v579 = vld [vmem:[#allocation2 + $0x1c0] sm:$0xff]
        %v580 = vmul.f32 %v576, %v572
        %v581 = vmul.f32 %v577, %v573
        %v582 = vmul.f32 %v578, %v574
        %v583 = vmul.f32 %v579, %v575
        %584 = vst [vmem:[#allocation2] sm:$0xff] %v580
        %585 = vst [vmem:[#allocation2 + $0x8] sm:$0xff] %v581
        %586 = vst [vmem:[#allocation2 + $0x1b8] sm:$0xff] %v582
        %587 = vst [vmem:[#allocation2 + $0x1c0] sm:$0xff] %v583
        %v588 = vld [vmem:[#allocation2 + $0x10] sm:$0xff]
        %v589 = vld [vmem:[#allocation2 + $0x18] sm:$0xff]
        %v590 = vld [vmem:[#allocation2 + $0x1c8] sm:$0xff]
        %v591 = vld [vmem:[#allocation2 + $0x1d0] sm:$0xff]
        %v592 = vmul.f32 %v588, %v572
        %v593 = vmul.f32 %v589, %v573
        %v594 = vmul.f32 %v590, %v574
        %v595 = vmul.f32 %v591, %v575
        %596 = vst [vmem:[#allocation2 + $0x10] sm:$0xff] %v592
        %597 = vst [vmem:[#allocation2 + $0x18] sm:$0xff] %v593
        %598 = vst [vmem:[#allocation2 + $0x1c8] sm:$0xff] %v594
        %599 = vst [vmem:[#allocation2 + $0x1d0] sm:$0xff] %v595
        %v600 = vld [vmem:[#allocation2 + $0x20] sm:$0xff]
        %v601 = vld [vmem:[#allocation2 + $0x28] sm:$0xff]
        %v602 = vld [vmem:[#allocation2 + $0x1d8] sm:$0xff]
        %v603 = vld [vmem:[#allocation2 + $0x1e0] sm:$0xff]
        %v604 = vmul.f32 %v600, %v572
        %v605 = vmul.f32 %v601, %v573
        %v606 = vmul.f32 %v602, %v574
        %v607 = vmul.f32 %v603, %v575
        %608 = vst [vmem:[#allocation2 + $0x20] sm:$0xff] %v604
        %609 = vst [vmem:[#allocation2 + $0x28] sm:$0xff] %v605
        %610 = vst [vmem:[#allocation2 + $0x1d8] sm:$0xff] %v606
        %611 = vst [vmem:[#allocation2 + $0x1e0] sm:$0xff] %v607
        %v612 = vld [vmem:[#allocation2 + $0x30] sm:$0xff]
        %v613 = vld [vmem:[#allocation2 + $0x38] sm:$0xff]
        %v614 = vld [vmem:[#allocation2 + $0x1e8] sm:$0xff]
        %v615 = vld [vmem:[#allocation2 + $0x1f0] sm:$0xff]
        %v616 = vmul.f32 %v612, %v572
        %v617 = vmul.f32 %v613, %v573
        %v618 = vmul.f32 %v614, %v574
        %v619 = vmul.f32 %v615, %v575
        %620 = vst [vmem:[#allocation2 + $0x30] sm:$0xff] %v616
        %621 = vst [vmem:[#allocation2 + $0x38] sm:$0xff] %v617
        %622 = vst [vmem:[#allocation2 + $0x1e8] sm:$0xff] %v618
        %623 = vst [vmem:[#allocation2 + $0x1f0] sm:$0xff] %v619
        %v624 = vld [vmem:[#allocation2 + $0x40] sm:$0xff]
        %v625 = vld [vmem:[#allocation2 + $0x48] sm:$0xff]
        %v626 = vld [vmem:[#allocation2 + $0x1f8] sm:$0xff]
        %v627 = vld [vmem:[#allocation2 + $0x200] sm:$0xff]
        %v628 = vmul.f32 %v624, %v572
        %v629 = vmul.f32 %v625, %v573
        %v630 = vmul.f32 %v626, %v574
        %v631 = vmul.f32 %v627, %v575
        %632 = vst [vmem:[#allocation2 + $0x40] sm:$0xff] %v628
        %633 = vst [vmem:[#allocation2 + $0x48] sm:$0xff] %v629
        %634 = vst [vmem:[#allocation2 + $0x1f8] sm:$0xff] %v630
        %635 = vst [vmem:[#allocation2 + $0x200] sm:$0xff] %v631
        %v636 = vld [vmem:[#allocation2 + $0x50] sm:$0xff]
        %v637 = vld [vmem:[#allocation2 + $0x58] sm:$0xff]
        %v638 = vld [vmem:[#allocation2 + $0x208] sm:$0xff]
        %v639 = vld [vmem:[#allocation2 + $0x210] sm:$0xff]
        %v640 = vmul.f32 %v636, %v572
        %v641 = vmul.f32 %v637, %v573
        %v642 = vmul.f32 %v638, %v574
        %v643 = vmul.f32 %v639, %v575
        %644 = vst [vmem:[#allocation2 + $0x50] sm:$0xff] %v640
        %645 = vst [vmem:[#allocation2 + $0x58] sm:$0xff] %v641
        %646 = vst [vmem:[#allocation2 + $0x208] sm:$0xff] %v642
        %647 = vst [vmem:[#allocation2 + $0x210] sm:$0xff] %v643
        %v648 = vld [vmem:[#allocation2 + $0x60] sm:$0xff]
        %v649 = vld [vmem:[#allocation2 + $0x68] sm:$0xff]
        %v650 = vld [vmem:[#allocation2 + $0x218] sm:$0xff]
        %v651 = vld [vmem:[#allocation2 + $0x220] sm:$0xff]
        %v652 = vmul.f32 %v648, %v572
        %v653 = vmul.f32 %v649, %v573
        %v654 = vmul.f32 %v650, %v574
        %v655 = vmul.f32 %v651, %v575
        %656 = vst [vmem:[#allocation2 + $0x60] sm:$0xff] %v652
        %657 = vst [vmem:[#allocation2 + $0x68] sm:$0xff] %v653
        %658 = vst [vmem:[#allocation2 + $0x218] sm:$0xff] %v654
        %659 = vst [vmem:[#allocation2 + $0x220] sm:$0xff] %v655
        %v660 = vld [vmem:[#allocation2 + $0x70] sm:$0xff]
        %v661 = vld [vmem:[#allocation2 + $0x78] sm:$0xff]
        %v662 = vld [vmem:[#allocation2 + $0x228] sm:$0xff]
        %v663 = vld [vmem:[#allocation2 + $0x230] sm:$0xff]
        %v664 = vmul.f32 %v660, %v572
        %v665 = vmul.f32 %v661, %v573
        %v666 = vmul.f32 %v662, %v574
        %v667 = vmul.f32 %v663, %v575
        %668 = vst [vmem:[#allocation2 + $0x70] sm:$0xff] %v664
        %669 = vst [vmem:[#allocation2 + $0x78] sm:$0xff] %v665
        %670 = vst [vmem:[#allocation2 + $0x228] sm:$0xff] %v666
        %671 = vst [vmem:[#allocation2 + $0x230] sm:$0xff] %v667
        %v672 = vld [vmem:[#allocation2 + $0x80] sm:$0xff]
        %v673 = vld [vmem:[#allocation2 + $0x88] sm:$0xff]
        %v674 = vld [vmem:[#allocation2 + $0x238] sm:$0xff]
        %v675 = vld [vmem:[#allocation2 + $0x240] sm:$0xff]
        %v676 = vmul.f32 %v672, %v572
        %v677 = vmul.f32 %v673, %v573
        %v678 = vmul.f32 %v674, %v574
        %v679 = vmul.f32 %v675, %v575
        %680 = vst [vmem:[#allocation2 + $0x80] sm:$0xff] %v676
        %681 = vst [vmem:[#allocation2 + $0x88] sm:$0xff] %v677
        %682 = vst [vmem:[#allocation2 + $0x238] sm:$0xff] %v678
        %683 = vst [vmem:[#allocation2 + $0x240] sm:$0xff] %v679
        %v684 = vld [vmem:[%s253] sm:$0xff]
        %v685 = vld [vmem:[%s253 + $0x8] sm:$0xff]
        %v686 = vld [vmem:[%s253 + $0x38] sm:$0xff]
        %v687 = vld [vmem:[%s253 + $0x40] sm:$0xff]
        %v688 = vmax.f32 %v684, 1.0
        %v689 = vmax.f32 %v685, 1.0
        %v690 = vmax.f32 %v686, 1.0
        %v691 = vmax.f32 %v687, 1.0
        %v692 = vmin.f32 %v688, 23.0
        %v693 = vmin.f32 %v689, 23.0
        %v694 = vmin.f32 %v690, 23.0
        %v695 = vmin.f32 %v691, 23.0
        %v696 = vsub.f32 %v684, %v692
        %v697 = vsub.f32 %v685, %v693
        %v698 = vsub.f32 %v686, %v694
        %v699 = vsub.f32 %v687, %v695
        %v700 = vmul.f32 %v696, %v696
        %v701 = vmul.f32 %v697, %v697
        %v702 = vmul.f32 %v698, %v698
        %v703 = vmul.f32 %v699, %v699
        %v704 = vmul.f32 %v700, -3.125
        %v705 = vmul.f32 %v701, -3.125
        %v706 = vmul.f32 %v702, -3.125
        %v707 = vmul.f32 %v703, -3.125
        %v708 = vsub.f32 %v684, 1.0
        %v709 = vsub.f32 %v685, 1.0
        %v710 = vsub.f32 %v686, 1.0
        %v711 = vsub.f32 %v687, 1.0
        %v712 = vmul.f32 %v708, %v708
        %v713 = vmul.f32 %v709, %v709
        %v714 = vmul.f32 %v710, %v710
        %v715 = vmul.f32 %v711, %v711
        %v716 = vmul.f32 %v712, -3.125
        %v717 = vmul.f32 %v713, -3.125
        %v718 = vmul.f32 %v714, -3.125
        %v719 = vmul.f32 %v715, -3.125
        %v720 = vsub.f32 %v716, %v704
        %v721 = vsub.f32 %v717, %v705
        %v722 = vsub.f32 %v718, %v706
        %v723 = vsub.f32 %v719, %v707
        %v724 = vmul.f32 %v720, 1.442695
        %v725 = vpow.pop %v724
        %v726 = vmul.f32 %v721, 1.442695
        %v727 = vpow.pop %v726
        %v728 = vmul.f32 %v722, 1.442695
        %v729 = vpow.pop %v728
        %v730 = vmul.f32 %v723, 1.442695
        %v731 = vpow.pop %v730
        %732 = vst [vmem:[#allocation2 + $0x90] sm:$0xff] %v725
        %733 = vst [vmem:[#allocation2 + $0x98] sm:$0xff] %v727
        %734 = vst [vmem:[#allocation2 + $0x248] sm:$0xff] %v729
        %735 = vst [vmem:[#allocation2 + $0x250] sm:$0xff] %v731
        %v736 = vsub.f32 %v684, 3.0
        %v737 = vsub.f32 %v685, 3.0
        %v738 = vsub.f32 %v686, 3.0
        %v739 = vsub.f32 %v687, 3.0
        %v740 = vmul.f32 %v736, %v736
        %v741 = vmul.f32 %v737, %v737
        %v742 = vmul.f32 %v738, %v738
        %v743 = vmul.f32 %v739, %v739
        %v744 = vmul.f32 %v740, -3.125
        %v745 = vmul.f32 %v741, -3.125
        %v746 = vmul.f32 %v742, -3.125
        %v747 = vmul.f32 %v743, -3.125
        %v748 = vsub.f32 %v744, %v704
        %v749 = vsub.f32 %v745, %v705
        %v750 = vsub.f32 %v746, %v706
        %v751 = vsub.f32 %v747, %v707
        %v752 = vmul.f32 %v748, 1.442695
        %v753 = vpow.pop %v752
        %v754 = vmul.f32 %v749, 1.442695
        %v755 = vpow.pop %v754
        %v756 = vmul.f32 %v750, 1.442695
        %v757 = vpow.pop %v756
        %v758 = vmul.f32 %v751, 1.442695
        %v759 = vpow.pop %v758
        %760 = vst [vmem:[#allocation2 + $0xa0] sm:$0xff] %v753
        %761 = vst [vmem:[#allocation2 + $0xa8] sm:$0xff] %v755
        %762 = vst [vmem:[#allocation2 + $0x258] sm:$0xff] %v757
        %763 = vst [vmem:[#allocation2 + $0x260] sm:$0xff] %v759
        %v764 = vadd.f32 %v725, %v753
        %v765 = vadd.f32 %v727, %v755
        %v766 = vadd.f32 %v729, %v757
        %v767 = vadd.f32 %v731, %v759
        %v768 = vsub.f32 %v684, 5.0
        %v769 = vsub.f32 %v685, 5.0
        %v770 = vsub.f32 %v686, 5.0
        %v771 = vsub.f32 %v687, 5.0
        %v772 = vmul.f32 %v768, %v768
        %v773 = vmul.f32 %v769, %v769
        %v774 = vmul.f32 %v770, %v770
        %v775 = vmul.f32 %v771, %v771
        %v776 = vmul.f32 %v772, -3.125
        %v777 = vmul.f32 %v773, -3.125
        %v778 = vmul.f32 %v774, -3.125
        %v779 = vmul.f32 %v775, -3.125
        %v780 = vsub.f32 %v776, %v704
        %v781 = vsub.f32 %v777, %v705
        %v782 = vsub.f32 %v778, %v706
        %v783 = vsub.f32 %v779, %v707
        %v784 = vmul.f32 %v780, 1.442695
        %v785 = vpow.pop %v784
        %v786 = vmul.f32 %v781, 1.442695
        %v787 = vpow.pop %v786
        %v788 = vmul.f32 %v782, 1.442695
        %v789 = vpow.pop %v788
        %v790 = vmul.f32 %v783, 1.442695
        %v791 = vpow.pop %v790
        %792 = vst [vmem:[#allocation2 + $0xb0] sm:$0xff] %v785
        %793 = vst [vmem:[#allocation2 + $0xb8] sm:$0xff] %v787
        %794 = vst [vmem:[#allocation2 + $0x268] sm:$0xff] %v789
        %795 = vst [vmem:[#allocation2 + $0x270] sm:$0xff] %v791
        %v796 = vadd.f32 %v764, %v785
        %v797 = vadd.f32 %v765, %v787
        %v798 = vadd.f32 %v766, %v789
        %v799 = vadd.f32 %v767, %v791
        %v800 = vsub.f32 %v684, 7.0
        %v801 = vsub.f32 %v685, 7.0
        %v802 = vsub.f32 %v686, 7.0
        %v803 = vsub.f32 %v687, 7.0
        %v804 = vmul.f32 %v800, %v800
        %v805 = vmul.f32 %v801, %v801
        %v806 = vmul.f32 %v802, %v802
        %v807 = vmul.f32 %v803, %v803
        %v808 = vmul.f32 %v804, -3.125
        %v809 = vmul.f32 %v805, -3.125
        %v810 = vmul.f32 %v806, -3.125
        %v811 = vmul.f32 %v807, -3.125
        %v812 = vsub.f32 %v808, %v704
        %v813 = vsub.f32 %v809, %v705
        %v814 = vsub.f32 %v810, %v706
        %v815 = vsub.f32 %v811, %v707
        %v816 = vmul.f32 %v812, 1.442695
        %v817 = vpow.pop %v816
        %v818 = vmul.f32 %v813, 1.442695
        %v819 = vpow.pop %v818
        %v820 = vmul.f32 %v814, 1.442695
        %v821 = vpow.pop %v820
        %v822 = vmul.f32 %v815, 1.442695
        %v823 = vpow.pop %v822
        %824 = vst [vmem:[#allocation2 + $0xc0] sm:$0xff] %v817
        %825 = vst [vmem:[#allocation2 + $0xc8] sm:$0xff] %v819
        %826 = vst [vmem:[#allocation2 + $0x278] sm:$0xff] %v821
        %827 = vst [vmem:[#allocation2 + $0x280] sm:$0xff] %v823
        %v828 = vadd.f32 %v796, %v817
        %v829 = vadd.f32 %v797, %v819
        %v830 = vadd.f32 %v798, %v821
        %v831 = vadd.f32 %v799, %v823
        %v832 = vsub.f32 %v684, 9.0
        %v833 = vsub.f32 %v685, 9.0
        %v834 = vsub.f32 %v686, 9.0
        %v835 = vsub.f32 %v687, 9.0
        %v836 = vmul.f32 %v832, %v832
        %v837 = vmul.f32 %v833, %v833
        %v838 = vmul.f32 %v834, %v834
        %v839 = vmul.f32 %v835, %v835
        %v840 = vmul.f32 %v836, -3.125
        %v841 = vmul.f32 %v837, -3.125
        %v842 = vmul.f32 %v838, -3.125
        %v843 = vmul.f32 %v839, -3.125
        %v844 = vsub.f32 %v840, %v704
        %v845 = vsub.f32 %v841, %v705
        %v846 = vsub.f32 %v842, %v706
        %v847 = vsub.f32 %v843, %v707
        %v848 = vmul.f32 %v844, 1.442695
        %v849 = vpow.pop %v848
        %v850 = vmul.f32 %v845, 1.442695
        %v851 = vpow.pop %v850
        %v852 = vmul.f32 %v846, 1.442695
        %v853 = vpow.pop %v852
        %v854 = vmul.f32 %v847, 1.442695
        %v855 = vpow.pop %v854
        %856 = vst [vmem:[#allocation2 + $0xd0] sm:$0xff] %v849
        %857 = vst [vmem:[#allocation2 + $0xd8] sm:$0xff] %v851
        %858 = vst [vmem:[#allocation2 + $0x288] sm:$0xff] %v853
        %859 = vst [vmem:[#allocation2 + $0x290] sm:$0xff] %v855
        %v860 = vadd.f32 %v828, %v849
        %v861 = vadd.f32 %v829, %v851
        %v862 = vadd.f32 %v830, %v853
        %v863 = vadd.f32 %v831, %v855
        %v864 = vsub.f32 %v684, 11.0
        %v865 = vsub.f32 %v685, 11.0
        %v866 = vsub.f32 %v686, 11.0
        %v867 = vsub.f32 %v687, 11.0
        %v868 = vmul.f32 %v864, %v864
        %v869 = vmul.f32 %v865, %v865
        %v870 = vmul.f32 %v866, %v866
        %v871 = vmul.f32 %v867, %v867
        %v872 = vmul.f32 %v868, -3.125
        %v873 = vmul.f32 %v869, -3.125
        %v874 = vmul.f32 %v870, -3.125
        %v875 = vmul.f32 %v871, -3.125
        %v876 = vsub.f32 %v872, %v704
        %v877 = vsub.f32 %v873, %v705
        %v878 = vsub.f32 %v874, %v706
        %v879 = vsub.f32 %v875, %v707
        %v880 = vmul.f32 %v876, 1.442695
        %v881 = vpow.pop %v880
        %v882 = vmul.f32 %v877, 1.442695
        %v883 = vpow.pop %v882
        %v884 = vmul.f32 %v878, 1.442695
        %v885 = vpow.pop %v884
        %v886 = vmul.f32 %v879, 1.442695
        %v887 = vpow.pop %v886
        %888 = vst [vmem:[#allocation2 + $0xe0] sm:$0xff] %v881
        %889 = vst [vmem:[#allocation2 + $0xe8] sm:$0xff] %v883
        %890 = vst [vmem:[#allocation2 + $0x298] sm:$0xff] %v885
        %891 = vst [vmem:[#allocation2 + $0x2a0] sm:$0xff] %v887
        %v892 = vadd.f32 %v860, %v881
        %v893 = vadd.f32 %v861, %v883
        %v894 = vadd.f32 %v862, %v885
        %v895 = vadd.f32 %v863, %v887
        %v896 = vsub.f32 %v684, 13.0
        %v897 = vsub.f32 %v685, 13.0
        %v898 = vsub.f32 %v686, 13.0
        %v899 = vsub.f32 %v687, 13.0
        %v900 = vmul.f32 %v896, %v896
        %v901 = vmul.f32 %v897, %v897
        %v902 = vmul.f32 %v898, %v898
        %v903 = vmul.f32 %v899, %v899
        %v904 = vmul.f32 %v900, -3.125
        %v905 = vmul.f32 %v901, -3.125
        %v906 = vmul.f32 %v902, -3.125
        %v907 = vmul.f32 %v903, -3.125
        %v908 = vsub.f32 %v904, %v704
        %v909 = vsub.f32 %v905, %v705
        %v910 = vsub.f32 %v906, %v706
        %v911 = vsub.f32 %v907, %v707
        %v912 = vmul.f32 %v908, 1.442695
        %v913 = vpow.pop %v912
        %v914 = vmul.f32 %v909, 1.442695
        %v915 = vpow.pop %v914
        %v916 = vmul.f32 %v910, 1.442695
        %v917 = vpow.pop %v916
        %v918 = vmul.f32 %v911, 1.442695
        %v919 = vpow.pop %v918
        %920 = vst [vmem:[#allocation2 + $0xf0] sm:$0xff] %v913
        %921 = vst [vmem:[#allocation2 + $0xf8] sm:$0xff] %v915
        %922 = vst [vmem:[#allocation2 + $0x2a8] sm:$0xff] %v917
        %923 = vst [vmem:[#allocation2 + $0x2b0] sm:$0xff] %v919
        %v924 = vadd.f32 %v892, %v913
        %v925 = vadd.f32 %v893, %v915
        %v926 = vadd.f32 %v894, %v917
        %v927 = vadd.f32 %v895, %v919
        %v928 = vsub.f32 %v684, 15.0
        %v929 = vsub.f32 %v685, 15.0
        %v930 = vsub.f32 %v686, 15.0
        %v931 = vsub.f32 %v687, 15.0
        %v932 = vmul.f32 %v928, %v928
        %v933 = vmul.f32 %v929, %v929
        %v934 = vmul.f32 %v930, %v930
        %v935 = vmul.f32 %v931, %v931
        %v936 = vmul.f32 %v932, -3.125
        %v937 = vmul.f32 %v933, -3.125
        %v938 = vmul.f32 %v934, -3.125
        %v939 = vmul.f32 %v935, -3.125
        %v940 = vsub.f32 %v936, %v704
        %v941 = vsub.f32 %v937, %v705
        %v942 = vsub.f32 %v938, %v706
        %v943 = vsub.f32 %v939, %v707
        %v944 = vmul.f32 %v940, 1.442695
        %v945 = vpow.pop %v944
        %v946 = vmul.f32 %v941, 1.442695
        %v947 = vpow.pop %v946
        %v948 = vmul.f32 %v942, 1.442695
        %v949 = vpow.pop %v948
        %v950 = vmul.f32 %v943, 1.442695
        %v951 = vpow.pop %v950
        %952 = vst [vmem:[#allocation2 + $0x100] sm:$0xff] %v945
        %953 = vst [vmem:[#allocation2 + $0x108] sm:$0xff] %v947
        %954 = vst [vmem:[#allocation2 + $0x2b8] sm:$0xff] %v949
        %955 = vst [vmem:[#allocation2 + $0x2c0] sm:$0xff] %v951
        %v956 = vadd.f32 %v924, %v945
        %v957 = vadd.f32 %v925, %v947
        %v958 = vadd.f32 %v926, %v949
        %v959 = vadd.f32 %v927, %v951
        %v960 = vsub.f32 %v684, 17.0
        %v961 = vsub.f32 %v685, 17.0
        %v962 = vsub.f32 %v686, 17.0
        %v963 = vsub.f32 %v687, 17.0
        %v964 = vmul.f32 %v960, %v960
        %v965 = vmul.f32 %v961, %v961
        %v966 = vmul.f32 %v962, %v962
        %v967 = vmul.f32 %v963, %v963
        %v968 = vmul.f32 %v964, -3.125
        %v969 = vmul.f32 %v965, -3.125
        %v970 = vmul.f32 %v966, -3.125
        %v971 = vmul.f32 %v967, -3.125
        %v972 = vsub.f32 %v968, %v704
        %v973 = vsub.f32 %v969, %v705
        %v974 = vsub.f32 %v970, %v706
        %v975 = vsub.f32 %v971, %v707
        %v976 = vmul.f32 %v972, 1.442695
        %v977 = vpow.pop %v976
        %v978 = vmul.f32 %v973, 1.442695
        %v979 = vpow.pop %v978
        %v980 = vmul.f32 %v974, 1.442695
        %v981 = vpow.pop %v980
        %v982 = vmul.f32 %v975, 1.442695
        %v983 = vpow.pop %v982
        %984 = vst [vmem:[#allocation2 + $0x110] sm:$0xff] %v977
        %985 = vst [vmem:[#allocation2 + $0x118] sm:$0xff] %v979
        %986 = vst [vmem:[#allocation2 + $0x2c8] sm:$0xff] %v981
        %987 = vst [vmem:[#allocation2 + $0x2d0] sm:$0xff] %v983
        %v988 = vadd.f32 %v956, %v977
        %v989 = vadd.f32 %v957, %v979
        %v990 = vadd.f32 %v958, %v981
        %v991 = vadd.f32 %v959, %v983
        %v992 = vsub.f32 %v684, 19.0
        %v993 = vsub.f32 %v685, 19.0
        %v994 = vsub.f32 %v686, 19.0
        %v995 = vsub.f32 %v687, 19.0
        %v996 = vmul.f32 %v992, %v992
        %v997 = vmul.f32 %v993, %v993
        %v998 = vmul.f32 %v994, %v994
        %v999 = vmul.f32 %v995, %v995
        %v1000 = vmul.f32 %v996, -3.125
        %v1001 = vmul.f32 %v997, -3.125
        %v1002 = vmul.f32 %v998, -3.125
        %v1003 = vmul.f32 %v999, -3.125
        %v1004 = vsub.f32 %v1000, %v704
        %v1005 = vsub.f32 %v1001, %v705
        %v1006 = vsub.f32 %v1002, %v706
        %v1007 = vsub.f32 %v1003, %v707
        %v1008 = vmul.f32 %v1004, 1.442695
        %v1009 = vpow.pop %v1008
        %v1010 = vmul.f32 %v1005, 1.442695
        %v1011 = vpow.pop %v1010
        %v1012 = vmul.f32 %v1006, 1.442695
        %v1013 = vpow.pop %v1012
        %v1014 = vmul.f32 %v1007, 1.442695
        %v1015 = vpow.pop %v1014
        %1016 = vst [vmem:[#allocation2 + $0x120] sm:$0xff] %v1009
        %1017 = vst [vmem:[#allocation2 + $0x128] sm:$0xff] %v1011
        %1018 = vst [vmem:[#allocation2 + $0x2d8] sm:$0xff] %v1013
        %1019 = vst [vmem:[#allocation2 + $0x2e0] sm:$0xff] %v1015
        %v1020 = vadd.f32 %v988, %v1009
        %v1021 = vadd.f32 %v989, %v1011
        %v1022 = vadd.f32 %v990, %v1013
        %v1023 = vadd.f32 %v991, %v1015
        %v1024 = vsub.f32 %v684, 21.0
        %v1025 = vsub.f32 %v685, 21.0
        %v1026 = vsub.f32 %v686, 21.0
        %v1027 = vsub.f32 %v687, 21.0
        %v1028 = vmul.f32 %v1024, %v1024
        %v1029 = vmul.f32 %v1025, %v1025
        %v1030 = vmul.f32 %v1026, %v1026
        %v1031 = vmul.f32 %v1027, %v1027
        %v1032 = vmul.f32 %v1028, -3.125
        %v1033 = vmul.f32 %v1029, -3.125
        %v1034 = vmul.f32 %v1030, -3.125
        %v1035 = vmul.f32 %v1031, -3.125
        %v1036 = vsub.f32 %v1032, %v704
        %v1037 = vsub.f32 %v1033, %v705
        %v1038 = vsub.f32 %v1034, %v706
        %v1039 = vsub.f32 %v1035, %v707
        %v1040 = vmul.f32 %v1036, 1.442695
        %v1041 = vpow.pop %v1040
        %v1042 = vmul.f32 %v1037, 1.442695
        %v1043 = vpow.pop %v1042
        %v1044 = vmul.f32 %v1038, 1.442695
        %v1045 = vpow.pop %v1044
        %v1046 = vmul.f32 %v1039, 1.442695
        %v1047 = vpow.pop %v1046
        %1048 = vst [vmem:[#allocation2 + $0x130] sm:$0xff] %v1041
        %1049 = vst [vmem:[#allocation2 + $0x138] sm:$0xff] %v1043
        %1050 = vst [vmem:[#allocation2 + $0x2e8] sm:$0xff] %v1045
        %1051 = vst [vmem:[#allocation2 + $0x2f0] sm:$0xff] %v1047
        %v1052 = vadd.f32 %v1020, %v1041
        %v1053 = vadd.f32 %v1021, %v1043
        %v1054 = vadd.f32 %v1022, %v1045
        %v1055 = vadd.f32 %v1023, %v1047
        %v1056 = vsub.f32 %v684, 23.0
        %v1057 = vsub.f32 %v685, 23.0
        %v1058 = vsub.f32 %v686, 23.0
        %v1059 = vsub.f32 %v687, 23.0
        %v1060 = vmul.f32 %v1056, %v1056
        %v1061 = vmul.f32 %v1057, %v1057
        %v1062 = vmul.f32 %v1058, %v1058
        %v1063 = vmul.f32 %v1059, %v1059
        %v1064 = vmul.f32 %v1060, -3.125
        %v1065 = vmul.f32 %v1061, -3.125
        %v1066 = vmul.f32 %v1062, -3.125
        %v1067 = vmul.f32 %v1063, -3.125
        %v1068 = vsub.f32 %v1064, %v704
        %v1069 = vsub.f32 %v1065, %v705
        %v1070 = vsub.f32 %v1066, %v706
        %v1071 = vsub.f32 %v1067, %v707
        %v1072 = vmul.f32 %v1068, 1.442695
        %v1073 = vpow.pop %v1072
        %v1074 = vmul.f32 %v1069, 1.442695
        %v1075 = vpow.pop %v1074
        %v1076 = vmul.f32 %v1070, 1.442695
        %v1077 = vpow.pop %v1076
        %v1078 = vmul.f32 %v1071, 1.442695
        %v1079 = vpow.pop %v1078
        %1080 = vst [vmem:[#allocation2 + $0x140] sm:$0xff] %v1073
        %1081 = vst [vmem:[#allocation2 + $0x148] sm:$0xff] %v1075
        %1082 = vst [vmem:[#allocation2 + $0x2f8] sm:$0xff] %v1077
        %1083 = vst [vmem:[#allocation2 + $0x300] sm:$0xff] %v1079
        %v1084 = vadd.f32 %v1052, %v1073
        %v1085 = vadd.f32 %v1053, %v1075
        %v1086 = vadd.f32 %v1054, %v1077
        %v1087 = vadd.f32 %v1055, %v1079
        %v1088 = vld [vmem:[%s253 + $0x10] sm:$0xff]
        %v1089 = vld [vmem:[%s253 + $0x18] sm:$0xff]
        %v1090 = vld [vmem:[%s253 + $0x48] sm:$0xff]
        %v1091 = vld [vmem:[%s253 + $0x50] sm:$0xff]
        %v1092 = vrcp.pop %v1084
        %v1093 = vrcp.pop %v1085
        %v1094 = vrcp.pop %v1086
        %v1095 = vrcp.pop %v1087
        %v1096 = vmul.f32 %v1088, %v1092
        %v1097 = vmul.f32 %v1089, %v1093
        %v1098 = vmul.f32 %v1090, %v1094
        %v1099 = vmul.f32 %v1091, %v1095
        %v1100 = vld [vmem:[#allocation2 + $0x90] sm:$0xff]
        %v1101 = vld [vmem:[#allocation2 + $0x98] sm:$0xff]
        %v1102 = vld [vmem:[#allocation2 + $0x248] sm:$0xff]
        %v1103 = vld [vmem:[#allocation2 + $0x250] sm:$0xff]
        %v1104 = vmul.f32 %v1100, %v1096
        %v1105 = vmul.f32 %v1101, %v1097
        %v1106 = vmul.f32 %v1102, %v1098
        %v1107 = vmul.f32 %v1103, %v1099
        %1108 = vst [vmem:[#allocation2 + $0x90] sm:$0xff] %v1104
        %1109 = vst [vmem:[#allocation2 + $0x98] sm:$0xff] %v1105
        %1110 = vst [vmem:[#allocation2 + $0x248] sm:$0xff] %v1106
        %1111 = vst [vmem:[#allocation2 + $0x250] sm:$0xff] %v1107
        %v1112 = vld [vmem:[#allocation2 + $0xa0] sm:$0xff]
        %v1113 = vld [vmem:[#allocation2 + $0xa8] sm:$0xff]
        %v1114 = vld [vmem:[#allocation2 + $0x258] sm:$0xff]
        %v1115 = vld [vmem:[#allocation2 + $0x260] sm:$0xff]
        %v1116 = vmul.f32 %v1112, %v1096
        %v1117 = vmul.f32 %v1113, %v1097
        %v1118 = vmul.f32 %v1114, %v1098
        %v1119 = vmul.f32 %v1115, %v1099
        %1120 = vst [vmem:[#allocation2 + $0xa0] sm:$0xff] %v1116
        %1121 = vst [vmem:[#allocation2 + $0xa8] sm:$0xff] %v1117
        %1122 = vst [vmem:[#allocation2 + $0x258] sm:$0xff] %v1118
        %1123 = vst [vmem:[#allocation2 + $0x260] sm:$0xff] %v1119
        %v1124 = vld [vmem:[#allocation2 + $0xb0] sm:$0xff]
        %v1125 = vld [vmem:[#allocation2 + $0xb8] sm:$0xff]
        %v1126 = vld [vmem:[#allocation2 + $0x268] sm:$0xff]
        %v1127 = vld [vmem:[#allocation2 + $0x270] sm:$0xff]
        %v1128 = vmul.f32 %v1124, %v1096
        %v1129 = vmul.f32 %v1125, %v1097
        %v1130 = vmul.f32 %v1126, %v1098
        %v1131 = vmul.f32 %v1127, %v1099
        %1132 = vst [vmem:[#allocation2 + $0xb0] sm:$0xff] %v1128
        %1133 = vst [vmem:[#allocation2 + $0xb8] sm:$0xff] %v1129
        %1134 = vst [vmem:[#allocation2 + $0x268] sm:$0xff] %v1130
        %1135 = vst [vmem:[#allocation2 + $0x270] sm:$0xff] %v1131
        %v1136 = vld [vmem:[#allocation2 + $0xc0] sm:$0xff]
        %v1137 = vld [vmem:[#allocation2 + $0xc8] sm:$0xff]
        %v1138 = vld [vmem:[#allocation2 + $0x278] sm:$0xff]
        %v1139 = vld [vmem:[#allocation2 + $0x280] sm:$0xff]
        %v1140 = vmul.f32 %v1136, %v1096
        %v1141 = vmul.f32 %v1137, %v1097
        %v1142 = vmul.f32 %v1138, %v1098
        %v1143 = vmul.f32 %v1139, %v1099
        %1144 = vst [vmem:[#allocation2 + $0xc0] sm:$0xff] %v1140
        %1145 = vst [vmem:[#allocation2 + $0xc8] sm:$0xff] %v1141
        %1146 = vst [vmem:[#allocation2 + $0x278] sm:$0xff] %v1142
        %1147 = vst [vmem:[#allocation2 + $0x280] sm:$0xff] %v1143
        %v1148 = vld [vmem:[#allocation2 + $0xd0] sm:$0xff]
        %v1149 = vld [vmem:[#allocation2 + $0xd8] sm:$0xff]
        %v1150 = vld [vmem:[#allocation2 + $0x288] sm:$0xff]
        %v1151 = vld [vmem:[#allocation2 + $0x290] sm:$0xff]
        %v1152 = vmul.f32 %v1148, %v1096
        %v1153 = vmul.f32 %v1149, %v1097
        %v1154 = vmul.f32 %v1150, %v1098
        %v1155 = vmul.f32 %v1151, %v1099
        %1156 = vst [vmem:[#allocation2 + $0xd0] sm:$0xff] %v1152
        %1157 = vst [vmem:[#allocation2 + $0xd8] sm:$0xff] %v1153
        %1158 = vst [vmem:[#allocation2 + $0x288] sm:$0xff] %v1154
        %1159 = vst [vmem:[#allocation2 + $0x290] sm:$0xff] %v1155
        %v1160 = vld [vmem:[#allocation2 + $0xe0] sm:$0xff]
        %v1161 = vld [vmem:[#allocation2 + $0xe8] sm:$0xff]
        %v1162 = vld [vmem:[#allocation2 + $0x298] sm:$0xff]
        %v1163 = vld [vmem:[#allocation2 + $0x2a0] sm:$0xff]
        %v1164 = vmul.f32 %v1160, %v1096
        %v1165 = vmul.f32 %v1161, %v1097
        %v1166 = vmul.f32 %v1162, %v1098
        %v1167 = vmul.f32 %v1163, %v1099
        %1168 = vst [vmem:[#allocation2 + $0xe0] sm:$0xff] %v1164
        %1169 = vst [vmem:[#allocation2 + $0xe8] sm:$0xff] %v1165
        %1170 = vst [vmem:[#allocation2 + $0x298] sm:$0xff] %v1166
        %1171 = vst [vmem:[#allocation2 + $0x2a0] sm:$0xff] %v1167
        %v1172 = vld [vmem:[#allocation2 + $0xf0] sm:$0xff]
        %v1173 = vld [vmem:[#allocation2 + $0xf8] sm:$0xff]
        %v1174 = vld [vmem:[#allocation2 + $0x2a8] sm:$0xff]
        %v1175 = vld [vmem:[#allocation2 + $0x2b0] sm:$0xff]
        %v1176 = vmul.f32 %v1172, %v1096
        %v1177 = vmul.f32 %v1173, %v1097
        %v1178 = vmul.f32 %v1174, %v1098
        %v1179 = vmul.f32 %v1175, %v1099
        %1180 = vst [vmem:[#allocation2 + $0xf0] sm:$0xff] %v1176
        %1181 = vst [vmem:[#allocation2 + $0xf8] sm:$0xff] %v1177
        %1182 = vst [vmem:[#allocation2 + $0x2a8] sm:$0xff] %v1178
        %1183 = vst [vmem:[#allocation2 + $0x2b0] sm:$0xff] %v1179
        %v1184 = vld [vmem:[#allocation2 + $0x100] sm:$0xff]
        %v1185 = vld [vmem:[#allocation2 + $0x108] sm:$0xff]
        %v1186 = vld [vmem:[#allocation2 + $0x2b8] sm:$0xff]
        %v1187 = vld [vmem:[#allocation2 + $0x2c0] sm:$0xff]
        %v1188 = vmul.f32 %v1184, %v1096
        %v1189 = vmul.f32 %v1185, %v1097
        %v1190 = vmul.f32 %v1186, %v1098
        %v1191 = vmul.f32 %v1187, %v1099
        %1192 = vst [vmem:[#allocation2 + $0x100] sm:$0xff] %v1188
        %1193 = vst [vmem:[#allocation2 + $0x108] sm:$0xff] %v1189
        %1194 = vst [vmem:[#allocation2 + $0x2b8] sm:$0xff] %v1190
        %1195 = vst [vmem:[#allocation2 + $0x2c0] sm:$0xff] %v1191
        %v1196 = vld [vmem:[#allocation2 + $0x110] sm:$0xff]
        %v1197 = vld [vmem:[#allocation2 + $0x118] sm:$0xff]
        %v1198 = vld [vmem:[#allocation2 + $0x2c8] sm:$0xff]
        %v1199 = vld [vmem:[#allocation2 + $0x2d0] sm:$0xff]
        %v1200 = vmul.f32 %v1196, %v1096
        %v1201 = vmul.f32 %v1197, %v1097
        %v1202 = vmul.f32 %v1198, %v1098
        %v1203 = vmul.f32 %v1199, %v1099
        %1204 = vst [vmem:[#allocation2 + $0x110] sm:$0xff] %v1200
        %1205 = vst [vmem:[#allocation2 + $0x118] sm:$0xff] %v1201
        %1206 = vst [vmem:[#allocation2 + $0x2c8] sm:$0xff] %v1202
        %1207 = vst [vmem:[#allocation2 + $0x2d0] sm:$0xff] %v1203
        %v1208 = vld [vmem:[#allocation2 + $0x120] sm:$0xff]
        %v1209 = vld [vmem:[#allocation2 + $0x128] sm:$0xff]
        %v1210 = vld [vmem:[#allocation2 + $0x2d8] sm:$0xff]
        %v1211 = vld [vmem:[#allocation2 + $0x2e0] sm:$0xff]
        %v1212 = vmul.f32 %v1208, %v1096
        %v1213 = vmul.f32 %v1209, %v1097
        %v1214 = vmul.f32 %v1210, %v1098
        %v1215 = vmul.f32 %v1211, %v1099
        %1216 = vst [vmem:[#allocation2 + $0x120] sm:$0xff] %v1212
        %1217 = vst [vmem:[#allocation2 + $0x128] sm:$0xff] %v1213
        %1218 = vst [vmem:[#allocation2 + $0x2d8] sm:$0xff] %v1214
        %1219 = vst [vmem:[#allocation2 + $0x2e0] sm:$0xff] %v1215
        %v1220 = vld [vmem:[#allocation2 + $0x130] sm:$0xff]
        %v1221 = vld [vmem:[#allocation2 + $0x138] sm:$0xff]
        %v1222 = vld [vmem:[#allocation2 + $0x2e8] sm:$0xff]
        %v1223 = vld [vmem:[#allocation2 + $0x2f0] sm:$0xff]
        %v1224 = vmul.f32 %v1220, %v1096
        %v1225 = vmul.f32 %v1221, %v1097
        %v1226 = vmul.f32 %v1222, %v1098
        %v1227 = vmul.f32 %v1223, %v1099
        %1228 = vst [vmem:[#allocation2 + $0x130] sm:$0xff] %v1224
        %1229 = vst [vmem:[#allocation2 + $0x138] sm:$0xff] %v1225
        %1230 = vst [vmem:[#allocation2 + $0x2e8] sm:$0xff] %v1226
        %1231 = vst [vmem:[#allocation2 + $0x2f0] sm:$0xff] %v1227
        %v1232 = vld [vmem:[#allocation2 + $0x140] sm:$0xff]
        %v1233 = vld [vmem:[#allocation2 + $0x148] sm:$0xff]
        %v1234 = vld [vmem:[#allocation2 + $0x2f8] sm:$0xff]
        %v1235 = vld [vmem:[#allocation2 + $0x300] sm:$0xff]
        %v1236 = vmul.f32 %v1232, %v1096
        %v1237 = vmul.f32 %v1233, %v1097
        %v1238 = vmul.f32 %v1234, %v1098
        %v1239 = vmul.f32 %v1235, %v1099
        %1240 = vst [vmem:[#allocation2 + $0x140] sm:$0xff] %v1236
        %1241 = vst [vmem:[#allocation2 + $0x148] sm:$0xff] %v1237
        %1242 = vst [vmem:[#allocation2 + $0x2f8] sm:$0xff] %v1238
        %1243 = vst [vmem:[#allocation2 + $0x300] sm:$0xff] %v1239
        %v1244 = vld [vmem:[%s253 + $0x20] sm:$0xff]
        %v1245 = vld [vmem:[%s253 + $0x58] sm:$0xff]
        %v1246 = vmax.f32 %v1244, -13.5
        %v1247 = vmax.f32 %v1245, -13.5
        %v1248 = vmin.f32 %v1246, 13.5
        %v1249 = vmin.f32 %v1247, 13.5
        %v1250 = vsub.f32 %v1244, %v1248
        %v1251 = vsub.f32 %v1245, %v1249
        %v1252 = vmul.f32 %v1250, %v1250
        %v1253 = vmul.f32 %v1251, %v1251
        %v1254 = vmul.f32 %v1252, -1.3888888
        %v1255 = vmul.f32 %v1253, -1.3888888
        %v1256 = vsub.f32 %v1244, -13.5
        %v1257 = vsub.f32 %v1245, -13.5
        %v1258 = vmul.f32 %v1256, %v1256
        %v1259 = vmul.f32 %v1257, %v1257
        %v1260 = vmul.f32 %v1258, -1.3888888
        %v1261 = vmul.f32 %v1259, -1.3888888
        %v1262 = vsub.f32 %v1260, %v1254
        %v1263 = vsub.f32 %v1261, %v1255
        %v1264 = vmul.f32 %v1262, 1.442695
        %v1265 = vpow.pop %v1264
        %v1266 = vmul.f32 %v1263, 1.442695
        %v1267 = vpow.pop %v1266
        %1268 = vst [vmem:[#allocation2 + $0x150] sm:$0xff] %v1265
        %1269 = vst [vmem:[#allocation2 + $0x308] sm:$0xff] %v1267
        %v1270 = vsub.f32 %v1244, -10.5
        %v1271 = vsub.f32 %v1245, -10.5
        %v1272 = vmul.f32 %v1270, %v1270
        %v1273 = vmul.f32 %v1271, %v1271
        %v1274 = vmul.f32 %v1272, -1.3888888
        %v1275 = vmul.f32 %v1273, -1.3888888
        %v1276 = vsub.f32 %v1274, %v1254
        %v1277 = vsub.f32 %v1275, %v1255
        %v1278 = vmul.f32 %v1276, 1.442695
        %v1279 = vpow.pop %v1278
        %v1280 = vmul.f32 %v1277, 1.442695
        %v1281 = vpow.pop %v1280
        %1282 = vst [vmem:[#allocation2 + $0x158] sm:$0xff] %v1279
        %1283 = vst [vmem:[#allocation2 + $0x310] sm:$0xff] %v1281
        %v1284 = vadd.f32 %v1265, %v1279
        %v1285 = vadd.f32 %v1267, %v1281
        %v1286 = vsub.f32 %v1244, -7.5
        %v1287 = vsub.f32 %v1245, -7.5
        %v1288 = vmul.f32 %v1286, %v1286
        %v1289 = vmul.f32 %v1287, %v1287
        %v1290 = vmul.f32 %v1288, -1.3888888
        %v1291 = vmul.f32 %v1289, -1.3888888
        %v1292 = vsub.f32 %v1290, %v1254
        %v1293 = vsub.f32 %v1291, %v1255
        %v1294 = vmul.f32 %v1292, 1.442695
        %v1295 = vpow.pop %v1294
        %v1296 = vmul.f32 %v1293, 1.442695
        %v1297 = vpow.pop %v1296
        %1298 = vst [vmem:[#allocation2 + $0x160] sm:$0xff] %v1295
        %1299 = vst [vmem:[#allocation2 + $0x318] sm:$0xff] %v1297
        %v1300 = vadd.f32 %v1284, %v1295
        %v1301 = vadd.f32 %v1285, %v1297
        %v1302 = vsub.f32 %v1244, -4.5
        %v1303 = vsub.f32 %v1245, -4.5
        %v1304 = vmul.f32 %v1302, %v1302
        %v1305 = vmul.f32 %v1303, %v1303
        %v1306 = vmul.f32 %v1304, -1.3888888
        %v1307 = vmul.f32 %v1305, -1.3888888
        %v1308 = vsub.f32 %v1306, %v1254
        %v1309 = vsub.f32 %v1307, %v1255
        %v1310 = vmul.f32 %v1308, 1.442695
        %v1311 = vpow.pop %v1310
        %v1312 = vmul.f32 %v1309, 1.442695
        %v1313 = vpow.pop %v1312
        %1314 = vst [vmem:[#allocation2 + $0x168] sm:$0xff] %v1311
        %1315 = vst [vmem:[#allocation2 + $0x320] sm:$0xff] %v1313
        %v1316 = vadd.f32 %v1300, %v1311
        %v1317 = vadd.f32 %v1301, %v1313
        %v1318 = vsub.f32 %v1244, -1.5
        %v1319 = vsub.f32 %v1245, -1.5
        %v1320 = vmul.f32 %v1318, %v1318
        %v1321 = vmul.f32 %v1319, %v1319
        %v1322 = vmul.f32 %v1320, -1.3888888
        %v1323 = vmul.f32 %v1321, -1.3888888
        %v1324 = vsub.f32 %v1322, %v1254
        %v1325 = vsub.f32 %v1323, %v1255
        %v1326 = vmul.f32 %v1324, 1.442695
        %v1327 = vpow.pop %v1326
        %v1328 = vmul.f32 %v1325, 1.442695
        %v1329 = vpow.pop %v1328
        %1330 = vst [vmem:[#allocation2 + $0x170] sm:$0xff] %v1327
        %1331 = vst [vmem:[#allocation2 + $0x328] sm:$0xff] %v1329
        %v1332 = vadd.f32 %v1316, %v1327
        %v1333 = vadd.f32 %v1317, %v1329
        %v1334 = vsub.f32 %v1244, 1.5
        %v1335 = vsub.f32 %v1245, 1.5
        %v1336 = vmul.f32 %v1334, %v1334
        %v1337 = vmul.f32 %v1335, %v1335
        %v1338 = vmul.f32 %v1336, -1.3888888
        %v1339 = vmul.f32 %v1337, -1.3888888
        %v1340 = vsub.f32 %v1338, %v1254
        %v1341 = vsub.f32 %v1339, %v1255
        %v1342 = vmul.f32 %v1340, 1.442695
        %v1343 = vpow.pop %v1342
        %v1344 = vmul.f32 %v1341, 1.442695
        %v1345 = vpow.pop %v1344
        %1346 = vst [vmem:[#allocation2 + $0x178] sm:$0xff] %v1343
        %1347 = vst [vmem:[#allocation2 + $0x330] sm:$0xff] %v1345
        %v1348 = vadd.f32 %v1332, %v1343
        %v1349 = vadd.f32 %v1333, %v1345
        %v1350 = vsub.f32 %v1244, 4.5
        %v1351 = vsub.f32 %v1245, 4.5
        %v1352 = vmul.f32 %v1350, %v1350
        %v1353 = vmul.f32 %v1351, %v1351
        %v1354 = vmul.f32 %v1352, -1.3888888
        %v1355 = vmul.f32 %v1353, -1.3888888
        %v1356 = vsub.f32 %v1354, %v1254
        %v1357 = vsub.f32 %v1355, %v1255
        %v1358 = vmul.f32 %v1356, 1.442695
        %v1359 = vpow.pop %v1358
        %v1360 = vmul.f32 %v1357, 1.442695
        %v1361 = vpow.pop %v1360
        %1362 = vst [vmem:[#allocation2 + $0x180] sm:$0xff] %v1359
        %1363 = vst [vmem:[#allocation2 + $0x338] sm:$0xff] %v1361
        %v1364 = vadd.f32 %v1348, %v1359
        %v1365 = vadd.f32 %v1349, %v1361
        %v1366 = vsub.f32 %v1244, 7.5
        %v1367 = vsub.f32 %v1245, 7.5
        %v1368 = vmul.f32 %v1366, %v1366
        %v1369 = vmul.f32 %v1367, %v1367
        %v1370 = vmul.f32 %v1368, -1.3888888
        %v1371 = vmul.f32 %v1369, -1.3888888
        %v1372 = vsub.f32 %v1370, %v1254
        %v1373 = vsub.f32 %v1371, %v1255
        %v1374 = vmul.f32 %v1372, 1.442695
        %v1375 = vpow.pop %v1374
        %v1376 = vmul.f32 %v1373, 1.442695
        %v1377 = vpow.pop %v1376
        %1378 = vst [vmem:[#allocation2 + $0x188] sm:$0xff] %v1375
        %1379 = vst [vmem:[#allocation2 + $0x340] sm:$0xff] %v1377
        %v1380 = vadd.f32 %v1364, %v1375
        %v1381 = vadd.f32 %v1365, %v1377
        %v1382 = vsub.f32 %v1244, 10.5
        %v1383 = vsub.f32 %v1245, 10.5
        %v1384 = vmul.f32 %v1382, %v1382
        %v1385 = vmul.f32 %v1383, %v1383
        %v1386 = vmul.f32 %v1384, -1.3888888
        %v1387 = vmul.f32 %v1385, -1.3888888
        %v1388 = vsub.f32 %v1386, %v1254
        %v1389 = vsub.f32 %v1387, %v1255
        %v1390 = vmul.f32 %v1388, 1.442695
        %v1391 = vpow.pop %v1390
        %v1392 = vmul.f32 %v1389, 1.442695
        %v1393 = vpow.pop %v1392
        %1394 = vst [vmem:[#allocation2 + $0x190] sm:$0xff] %v1391
        %1395 = vst [vmem:[#allocation2 + $0x348] sm:$0xff] %v1393
        %v1396 = vadd.f32 %v1380, %v1391
        %v1397 = vadd.f32 %v1381, %v1393
        %v1398 = vsub.f32 %v1244, 13.5
        %v1399 = vsub.f32 %v1245, 13.5
        %v1400 = vmul.f32 %v1398, %v1398
        %v1401 = vmul.f32 %v1399, %v1399
        %v1402 = vmul.f32 %v1400, -1.3888888
        %v1403 = vmul.f32 %v1401, -1.3888888
        %v1404 = vsub.f32 %v1402, %v1254
        %v1405 = vsub.f32 %v1403, %v1255
        %v1406 = vmul.f32 %v1404, 1.442695
        %v1407 = vpow.pop %v1406
        %v1408 = vmul.f32 %v1405, 1.442695
        %v1409 = vpow.pop %v1408
        %1410 = vst [vmem:[#allocation2 + $0x198] sm:$0xff] %v1407
        %1411 = vst [vmem:[#allocation2 + $0x350] sm:$0xff] %v1409
        %v1412 = vadd.f32 %v1396, %v1407
        %v1413 = vadd.f32 %v1397, %v1409
        %v1414 = vld [vmem:[%s253 + $0x28] sm:$0xff]
        %v1415 = vld [vmem:[%s253 + $0x60] sm:$0xff]
        %v1416 = vrcp.pop %v1412
        %v1417 = vrcp.pop %v1413
        %v1418 = vmul.f32 %v1414, %v1416
        %v1419 = vmul.f32 %v1415, %v1417
        %v1420 = vld [vmem:[#allocation2 + $0x150] sm:$0xff]
        %v1421 = vld [vmem:[#allocation2 + $0x308] sm:$0xff]
        %v1422 = vmul.f32 %v1420, %v1418
        %v1423 = vmul.f32 %v1421, %v1419
        %1424 = vst [vmem:[#allocation2 + $0x150] sm:$0xff] %v1422
        %1425 = vst [vmem:[#allocation2 + $0x308] sm:$0xff] %v1423
        %v1426 = vld [vmem:[#allocation2 + $0x158] sm:$0xff]
        %v1427 = vld [vmem:[#allocation2 + $0x310] sm:$0xff]
        %v1428 = vmul.f32 %v1426, %v1418
        %v1429 = vmul.f32 %v1427, %v1419
        %1430 = vst [vmem:[#allocation2 + $0x158] sm:$0xff] %v1428
        %1431 = vst [vmem:[#allocation2 + $0x310] sm:$0xff] %v1429
        %v1432 = vld [vmem:[#allocation2 + $0x160] sm:$0xff]
        %v1433 = vld [vmem:[#allocation2 + $0x318] sm:$0xff]
        %v1434 = vmul.f32 %v1432, %v1418
        %v1435 = vmul.f32 %v1433, %v1419
        %1436 = vst [vmem:[#allocation2 + $0x160] sm:$0xff] %v1434
        %1437 = vst [vmem:[#allocation2 + $0x318] sm:$0xff] %v1435
        %v1438 = vld [vmem:[#allocation2 + $0x168] sm:$0xff]
        %v1439 = vld [vmem:[#allocation2 + $0x320] sm:$0xff]
        %v1440 = vmul.f32 %v1438, %v1418
        %v1441 = vmul.f32 %v1439, %v1419
        %1442 = vst [vmem:[#allocation2 + $0x168] sm:$0xff] %v1440
        %1443 = vst [vmem:[#allocation2 + $0x320] sm:$0xff] %v1441
        %v1444 = vld [vmem:[#allocation2 + $0x170] sm:$0xff]
        %v1445 = vld [vmem:[#allocation2 + $0x328] sm:$0xff]
        %v1446 = vmul.f32 %v1444, %v1418
        %v1447 = vmul.f32 %v1445, %v1419
        %1448 = vst [vmem:[#allocation2 + $0x170] sm:$0xff] %v1446
        %1449 = vst [vmem:[#allocation2 + $0x328] sm:$0xff] %v1447
        %v1450 = vld [vmem:[#allocation2 + $0x178] sm:$0xff]
        %v1451 = vld [vmem:[#allocation2 + $0x330] sm:$0xff]
        %v1452 = vmul.f32 %v1450, %v1418
        %v1453 = vmul.f32 %v1451, %v1419
        %1454 = vst [vmem:[#allocation2 + $0x178] sm:$0xff] %v1452
        %1455 = vst [vmem:[#allocation2 + $0x330] sm:$0xff] %v1453
        %v1456 = vld [vmem:[#allocation2 + $0x180] sm:$0xff]
        %v1457 = vld [vmem:[#allocation2 + $0x338] sm:$0xff]
        %v1458 = vmul.f32 %v1456, %v1418
        %v1459 = vmul.f32 %v1457, %v1419
        %1460 = vst [vmem:[#allocation2 + $0x180] sm:$0xff] %v1458
        %1461 = vst [vmem:[#allocation2 + $0x338] sm:$0xff] %v1459
        %v1462 = vld [vmem:[#allocation2 + $0x188] sm:$0xff]
        %v1463 = vld [vmem:[#allocation2 + $0x340] sm:$0xff]
        %v1464 = vmul.f32 %v1462, %v1418
        %v1465 = vmul.f32 %v1463, %v1419
        %1466 = vst [vmem:[#allocation2 + $0x188] sm:$0xff] %v1464
        %1467 = vst [vmem:[#allocation2 + $0x340] sm:$0xff] %v1465
        %v1468 = vld [vmem:[#allocation2 + $0x190] sm:$0xff]
        %v1469 = vld [vmem:[#allocation2 + $0x348] sm:$0xff]
        %v1470 = vmul.f32 %v1468, %v1418
        %v1471 = vmul.f32 %v1469, %v1419
        %1472 = vst [vmem:[#allocation2 + $0x190] sm:$0xff] %v1470
        %1473 = vst [vmem:[#allocation2 + $0x348] sm:$0xff] %v1471
        %v1474 = vld [vmem:[#allocation2 + $0x198] sm:$0xff]
        %v1475 = vld [vmem:[#allocation2 + $0x350] sm:$0xff]
        %v1476 = vmul.f32 %v1474, %v1418
        %v1477 = vmul.f32 %v1475, %v1419
        %1478 = vst [vmem:[#allocation2 + $0x198] sm:$0xff] %v1476
        %1479 = vst [vmem:[#allocation2 + $0x350] sm:$0xff] %v1477
        %v1480 = vld [vmem:[%s253 + $0x10] sm:$0xff]
        %v1481 = vld [vmem:[%s253 + $0x18] sm:$0xff]
        %v1482 = vld [vmem:[%s253 + $0x48] sm:$0xff]
        %v1483 = vld [vmem:[%s253 + $0x50] sm:$0xff]
        %1484 = vst [vmem:[#allocation2 + $0x1a0] sm:$0xff] %v1480
        %1485 = vst [vmem:[#allocation2 + $0x1a8] sm:$0xff] %v1481
        %1486 = vst [vmem:[#allocation2 + $0x358] sm:$0xff] %v1482
        %1487 = vst [vmem:[#allocation2 + $0x360] sm:$0xff] %v1483
        %v1488 = vld [vmem:[%s253 + $0x28] sm:$0xff]
        %v1489 = vld [vmem:[%s253 + $0x60] sm:$0xff]
        %1490 = vst [vmem:[#allocation2 + $0x1b0] sm:$0xff] %v1488
        %1491 = vst [vmem:[#allocation2 + $0x368] sm:$0xff] %v1489
        %v1492 = vld [vmem:[#allocation2] sm:$0xff]
        %v1493 = vld [vmem:[#allocation2 + $0x8] sm:$0xff]
        %v1494 = vld [vmem:[#allocation2 + $0x10] sm:$0xff]
        %v1495 = vld [vmem:[#allocation2 + $0x18] sm:$0xff]
        %v1496 = vld [vmem:[#allocation2 + $0x20] sm:$0xff]
        %v1497 = vld [vmem:[#allocation2 + $0x28] sm:$0xff]
        %v1498 = vld [vmem:[#allocation2 + $0x30] sm:$0xff]
        %v1499 = vld [vmem:[#allocation2 + $0x38] sm:$0xff]
        %v1500 = vld [vmem:[#allocation2 + $0x40] sm:$0xff]
        %v1501 = vld [vmem:[#allocation2 + $0x48] sm:$0xff]
        %v1502 = vld [vmem:[#allocation2 + $0x50] sm:$0xff]
        %v1503 = vld [vmem:[#allocation2 + $0x58] sm:$0xff]
        %v1504 = vld [vmem:[#allocation2 + $0x60] sm:$0xff]
        %v1505 = vld [vmem:[#allocation2 + $0x68] sm:$0xff]
        %v1506 = vld [vmem:[#allocation2 + $0x70] sm:$0xff]
        %v1507 = vld [vmem:[#allocation2 + $0x78] sm:$0xff]
        %v1508 = vld [vmem:[#allocation2 + $0x80] sm:$0xff]
        %v1509 = vld [vmem:[#allocation2 + $0x88] sm:$0xff]
        %v1510 = vld [vmem:[#allocation2 + $0x90] sm:$0xff]
        %v1511 = vld [vmem:[#allocation2 + $0x98] sm:$0xff]
        %v1512 = vld [vmem:[#allocation2 + $0xa0] sm:$0xff]
        %v1513 = vld [vmem:[#allocation2 + $0xa8] sm:$0xff]
        %v1514 = vld [vmem:[#allocation2 + $0xb0] sm:$0xff]
        %v1515 = vld [vmem:[#allocation2 + $0xb8] sm:$0xff]
        %v1516 = vld [vmem:[#allocation2 + $0xc0] sm:$0xff]
        %v1517 = vld [vmem:[#allocation2 + $0xc8] sm:$0xff]
        %v1518 = vld [vmem:[#allocation2 + $0xd0] sm:$0xff]
        %v1519 = vld [vmem:[#allocation2 + $0xd8] sm:$0xff]
        %v1520 = vld [vmem:[#allocation2 + $0xe0] sm:$0xff]
        %v1521 = vld [vmem:[#allocation2 + $0xe8] sm:$0xff]
        %v1522 = vld [vmem:[#allocation2 + $0xf0] sm:$0xff]
        %v1523 = vld [vmem:[#allocation2 + $0xf8] sm:$0xff]
        %v1524 = vld [vmem:[#allocation2 + $0x100] sm:$0xff]
        %v1525 = vld [vmem:[#allocation2 + $0x108] sm:$0xff]
        %v1526 = vld [vmem:[#allocation2 + $0x110] sm:$0xff]
        %v1527 = vld [vmem:[#allocation2 + $0x118] sm:$0xff]
        %v1528 = vld [vmem:[#allocation2 + $0x120] sm:$0xff]
        %v1529 = vld [vmem:[#allocation2 + $0x128] sm:$0xff]
        %v1530 = vld [vmem:[#allocation2 + $0x130] sm:$0xff]
        %v1531 = vld [vmem:[#allocation2 + $0x138] sm:$0xff]
        %v1532 = vld [vmem:[#allocation2 + $0x140] sm:$0xff]
        %v1533 = vld [vmem:[#allocation2 + $0x148] sm:$0xff]
        %v1534 = vld [vmem:[#allocation2 + $0x150] sm:$0xff]
        %v1535 = vld [vmem:[#allocation2 + $0x158] sm:$0xff]
        %v1536 = vld [vmem:[#allocation2 + $0x160] sm:$0xff]
        %v1537 = vld [vmem:[#allocation2 + $0x168] sm:$0xff]
        %v1538 = vld [vmem:[#allocation2 + $0x170] sm:$0xff]
        %v1539 = vld [vmem:[#allocation2 + $0x178] sm:$0xff]
        %v1540 = vld [vmem:[#allocation2 + $0x180] sm:$0xff]
        %v1541 = vld [vmem:[#allocation2 + $0x188] sm:$0xff]
        %v1542 = vld [vmem:[#allocation2 + $0x190] sm:$0xff]
        %v1543 = vld [vmem:[#allocation2 + $0x198] sm:$0xff]
        %v1544 = vld [vmem:[#allocation2 + $0x1a0] sm:$0xff]
        %v1545 = vld [vmem:[#allocation2 + $0x1a8] sm:$0xff]
        %v1546 = vld [vmem:[#allocation2 + $0x1b0] sm:$0xff]
        %v1547 = vld [vmem:[#allocation2 + $0x1b8] sm:$0xff]
        %v1548 = vld [vmem:[#allocation2 + $0x1c0] sm:$0xff]
        %v1549 = vld [vmem:[#allocation2 + $0x1c8] sm:$0xff]
        %v1550 = vld [vmem:[#allocation2 + $0x1d0] sm:$0xff]
        %v1551 = vld [vmem:[#allocation2 + $0x1d8] sm:$0xff]
        %v1552 = vld [vmem:[#allocation2 + $0x1e0] sm:$0xff]
        %v1553 = vld [vmem:[#allocation2 + $0x1e8] sm:$0xff]
        %v1554 = vld [vmem:[#allocation2 + $0x1f0] sm:$0xff]
        %v1555 = vld [vmem:[#allocation2 + $0x1f8] sm:$0xff]
        %v1556 = vld [vmem:[#allocation2 + $0x200] sm:$0xff]
        %v1557 = vld [vmem:[#allocation2 + $0x208] sm:$0xff]
        %v1558 = vld [vmem:[#allocation2 + $0x210] sm:$0xff]
        %v1559 = vld [vmem:[#allocation2 + $0x218] sm:$0xff]
        %v1560 = vld [vmem:[#allocation2 + $0x220] sm:$0xff]
        %v1561 = vld [vmem:[#allocation2 + $0x228] sm:$0xff]
        %v1562 = vld [vmem:[#allocation2 + $0x230] sm:$0xff]
        %v1563 = vld [vmem:[#allocation2 + $0x238] sm:$0xff]
        %v1564 = vld [vmem:[#allocation2 + $0x240] sm:$0xff]
        %v1565 = vld [vmem:[#allocation2 + $0x248] sm:$0xff]
        %v1566 = vld [vmem:[#allocation2 + $0x250] sm:$0xff]
        %v1567 = vld [vmem:[#allocation2 + $0x258] sm:$0xff]
        %v1568 = vld [vmem:[#allocation2 + $0x260] sm:$0xff]
        %v1569 = vld [vmem:[#allocation2 + $0x268] sm:$0xff]
        %v1570 = vld [vmem:[#allocation2 + $0x270] sm:$0xff]
        %v1571 = vld [vmem:[#allocation2 + $0x278] sm:$0xff]
        %v1572 = vld [vmem:[#allocation2 + $0x280] sm:$0xff]
        %v1573 = vld [vmem:[#allocation2 + $0x288] sm:$0xff]
        %v1574 = vld [vmem:[#allocation2 + $0x290] sm:$0xff]
        %v1575 = vld [vmem:[#allocation2 + $0x298] sm:$0xff]
        %v1576 = vld [vmem:[#allocation2 + $0x2a0] sm:$0xff]
        %v1577 = vld [vmem:[#allocation2 + $0x2a8] sm:$0xff]
        %v1578 = vld [vmem:[#allocation2 + $0x2b0] sm:$0xff]
        %v1579 = vld [vmem:[#allocation2 + $0x2b8] sm:$0xff]
        %v1580 = vld [vmem:[#allocation2 + $0x2c0] sm:$0xff]
        %v1581 = vld [vmem:[#allocation2 + $0x2c8] sm:$0xff]
        %v1582 = vld [vmem:[#allocation2 + $0x2d0] sm:$0xff]
        %v1583 = vld [vmem:[#allocation2 + $0x2d8] sm:$0xff]
        %v1584 = vld [vmem:[#allocation2 + $0x2e0] sm:$0xff]
        %v1585 = vld [vmem:[#allocation2 + $0x2e8] sm:$0xff]
        %v1586 = vld [vmem:[#allocation2 + $0x2f0] sm:$0xff]
        %v1587 = vld [vmem:[#allocation2 + $0x2f8] sm:$0xff]
        %v1588 = vld [vmem:[#allocation2 + $0x300] sm:$0xff]
        %v1589 = vld [vmem:[#allocation2 + $0x308] sm:$0xff]
        %v1590 = vld [vmem:[#allocation2 + $0x310] sm:$0xff]
        %v1591 = vld [vmem:[#allocation2 + $0x318] sm:$0xff]
        %v1592 = vld [vmem:[#allocation2 + $0x320] sm:$0xff]
        %v1593 = vld [vmem:[#allocation2 + $0x328] sm:$0xff]
        %v1594 = vld [vmem:[#allocation2 + $0x330] sm:$0xff]
        %v1595 = vld [vmem:[#allocation2 + $0x338] sm:$0xff]
        %v1596 = vld [vmem:[#allocation2 + $0x340] sm:$0xff]
        %v1597 = vld [vmem:[#allocation2 + $0x348] sm:$0xff]
        %v1598 = vld [vmem:[#allocation2 + $0x350] sm:$0xff]
        %v1599 = vld [vmem:[#allocation2 + $0x358] sm:$0xff]
        %v1600 = vld [vmem:[#allocation2 + $0x360] sm:$0xff]
        %v1601 = vld [vmem:[#allocation2 + $0x368] sm:$0xff]
        %v1602 = vld [vmem:[%s1] sm:$0xff]
        %v1603 = vld [vmem:[%s1 + $0x8] sm:$0xff]
        %v1604 = vld [vmem:[%s1 + $0x10] sm:$0xff]
        %v1605 = vld [vmem:[%s1 + $0x18] sm:$0xff]
        %v1606 = vld [vmem:[%s1 + $0x20] sm:$0xff]
        %v1607 = vld [vmem:[%s1 + $0x28] sm:$0xff]
        %v1608 = vld [vmem:[%s1 + $0x30] sm:$0xff]
        %v1609 = vld [vmem:[%s1 + $0x38] sm:$0xff]
        %v1610 = vld [vmem:[%s1 + $0x40] sm:$0xff]
        %v1611 = vld [vmem:[%s1 + $0x48] sm:$0xff]
        %v1612 = vld [vmem:[%s1 + $0x50] sm:$0xff]
        %v1613 = vld [vmem:[%s1 + $0x58] sm:$0xff]
        %v1614 = vld [vmem:[%s1 + $0x60] sm:$0xff]
        %v1615 = vld [vmem:[%s1 + $0x68] sm:$0xff]
        %v1616 = vld [vmem:[%s1 + $0x70] sm:$0xff]
        %v1617 = vld [vmem:[%s1 + $0x78] sm:$0xff]
        %v1618 = vld [vmem:[%s1 + $0x80] sm:$0xff]
        %v1619 = vld [vmem:[%s1 + $0x88] sm:$0xff]
        %v1620 = vld [vmem:[%s1 + $0x90] sm:$0xff]
        %v1621 = vld [vmem:[%s1 + $0x98] sm:$0xff]
        %v1622 = vld [vmem:[%s1 + $0xa0] sm:$0xff]
        %v1623 = vld [vmem:[%s1 + $0xa8] sm:$0xff]
        %v1624 = vld [vmem:[%s1 + $0xb0] sm:$0xff]
        %v1625 = vld [vmem:[%s1 + $0xb8] sm:$0xff]
        %v1626 = vld [vmem:[%s1 + $0xc0] sm:$0xff]
        %v1627 = vld [vmem:[%s1 + $0xc8] sm:$0xff]
        %v1628 = vld [vmem:[%s1 + $0xd0] sm:$0xff]
        %v1629 = vld [vmem:[%s1 + $0xd8] sm:$0xff]
        %v1630 = vld [vmem:[%s1 + $0xe0] sm:$0xff]
        %v1631 = vld [vmem:[%s1 + $0xe8] sm:$0xff]
        %v1632 = vld [vmem:[%s1 + $0xf0] sm:$0xff]
        %v1633 = vld [vmem:[%s1 + $0xf8] sm:$0xff]
        %v1634 = vld [vmem:[%s1 + $0x100] sm:$0xff]
        %v1635 = vld [vmem:[%s1 + $0x108] sm:$0xff]
        %v1636 = vld [vmem:[%s1 + $0x110] sm:$0xff]
        %v1637 = vld [vmem:[%s1 + $0x118] sm:$0xff]
        %v1638 = vld [vmem:[%s1 + $0x120] sm:$0xff]
        %v1639 = vld [vmem:[%s1 + $0x128] sm:$0xff]
        %v1640 = vld [vmem:[%s1 + $0x130] sm:$0xff]
        %v1641 = vld [vmem:[%s1 + $0x138] sm:$0xff]
        %v1642 = vld [vmem:[%s1 + $0x140] sm:$0xff]
        %v1643 = vld [vmem:[%s1 + $0x148] sm:$0xff]
        %v1644 = vld [vmem:[%s1 + $0x150] sm:$0xff]
        %v1645 = vld [vmem:[%s1 + $0x158] sm:$0xff]
        %v1646 = vld [vmem:[%s1 + $0x160] sm:$0xff]
        %v1647 = vld [vmem:[%s1 + $0x168] sm:$0xff]
        %v1648 = vld [vmem:[%s1 + $0x170] sm:$0xff]
        %v1649 = vld [vmem:[%s1 + $0x178] sm:$0xff]
        %v1650 = vld [vmem:[%s1 + $0x180] sm:$0xff]
        %v1651 = vld [vmem:[%s1 + $0x188] sm:$0xff]
        %v1652 = vld [vmem:[%s1 + $0x190] sm:$0xff]
        %v1653 = vld [vmem:[%s1 + $0x198] sm:$0xff]
        %v1654 = vld [vmem:[%s1 + $0x1a0] sm:$0xff]
        %v1655 = vld [vmem:[%s1 + $0x1a8] sm:$0xff]
        %v1656 = vld [vmem:[%s1 + $0x1b0] sm:$0xff]
        %v1657 = vld [vmem:[%s1 + $0x1b8] sm:$0xff]
        %v1658 = vld [vmem:[%s1 + $0x1c0] sm:$0xff]
        %v1659 = vld [vmem:[%s1 + $0x1c8] sm:$0xff]
        %v1660 = vld [vmem:[%s1 + $0x1d0] sm:$0xff]
        %v1661 = vld [vmem:[%s1 + $0x1d8] sm:$0xff]
        %v1662 = vld [vmem:[%s1 + $0x1e0] sm:$0xff]
        %v1663 = vld [vmem:[%s1 + $0x1e8] sm:$0xff]
        %v1664 = vld [vmem:[%s1 + $0x1f0] sm:$0xff]
        %v1665 = vld [vmem:[%s1 + $0x1f8] sm:$0xff]
        %v1666 = vld [vmem:[%s1 + $0x200] sm:$0xff]
        %v1667 = vld [vmem:[%s1 + $0x208] sm:$0xff]
        %v1668 = vld [vmem:[%s1 + $0x210] sm:$0xff]
        %v1669 = vld [vmem:[%s1 + $0x218] sm:$0xff]
        %v1670 = vld [vmem:[%s1 + $0x220] sm:$0xff]
        %v1671 = vld [vmem:[%s1 + $0x228] sm:$0xff]
        %v1672 = vld [vmem:[%s1 + $0x230] sm:$0xff]
        %v1673 = vld [vmem:[%s1 + $0x238] sm:$0xff]
        %v1674 = vld [vmem:[%s1 + $0x240] sm:$0xff]
        %v1675 = vld [vmem:[%s1 + $0x248] sm:$0xff]
        %v1676 = vld [vmem:[%s1 + $0x250] sm:$0xff]
        %v1677 = vld [vmem:[%s1 + $0x258] sm:$0xff]
        %v1678 = vld [vmem:[%s1 + $0x260] sm:$0xff]
        %v1679 = vld [vmem:[%s1 + $0x268] sm:$0xff]
        %v1680 = vld [vmem:[%s1 + $0x270] sm:$0xff]
        %v1681 = vld [vmem:[%s1 + $0x278] sm:$0xff]
        %v1682 = vld [vmem:[%s1 + $0x280] sm:$0xff]
        %v1683 = vld [vmem:[%s1 + $0x288] sm:$0xff]
        %v1684 = vld [vmem:[%s1 + $0x290] sm:$0xff]
        %v1685 = vld [vmem:[%s1 + $0x298] sm:$0xff]
        %v1686 = vld [vmem:[%s1 + $0x2a0] sm:$0xff]
        %v1687 = vld [vmem:[%s1 + $0x2a8] sm:$0xff]
        %v1688 = vld [vmem:[%s1 + $0x2b0] sm:$0xff]
        %v1689 = vld [vmem:[%s1 + $0x2b8] sm:$0xff]
        %v1690 = vld [vmem:[%s1 + $0x2c0] sm:$0xff]
        %v1691 = vld [vmem:[%s1 + $0x2c8] sm:$0xff]
        %v1692 = vld [vmem:[%s1 + $0x2d0] sm:$0xff]
        %v1693 = vld [vmem:[%s1 + $0x2d8] sm:$0xff]
        %v1694 = vld [vmem:[%s1 + $0x2e0] sm:$0xff]
        %v1695 = vld [vmem:[%s1 + $0x2e8] sm:$0xff]
        %v1696 = vld [vmem:[%s1 + $0x2f0] sm:$0xff]
        %v1697 = vld [vmem:[%s1 + $0x2f8] sm:$0xff]
        %v1698 = vld [vmem:[%s1 + $0x300] sm:$0xff]
        %v1699 = vld [vmem:[%s1 + $0x308] sm:$0xff]
        %v1700 = vld [vmem:[%s1 + $0x310] sm:$0xff]
        %v1701 = vld [vmem:[%s1 + $0x318] sm:$0xff]
        %v1702 = vld [vmem:[%s1 + $0x320] sm:$0xff]
        %v1703 = vld [vmem:[%s1 + $0x328] sm:$0xff]
        %v1704 = vld [vmem:[%s1 + $0x330] sm:$0xff]
        %v1705 = vld [vmem:[%s1 + $0x338] sm:$0xff]
        %v1706 = vld [vmem:[%s1 + $0x340] sm:$0xff]
        %v1707 = vld [vmem:[%s1 + $0x348] sm:$0xff]
        %v1708 = vld [vmem:[%s1 + $0x350] sm:$0xff]
        %v1709 = vld [vmem:[%s1 + $0x358] sm:$0xff]
        %v1710 = vld [vmem:[%s1 + $0x360] sm:$0xff]
        %v1711 = vld [vmem:[%s1 + $0x368] sm:$0xff]
        %v1712 = vld [vmem:[%s1 + $0x370] sm:$0xff]
        %v1713 = vld [vmem:[%s1 + $0x378] sm:$0xff]
        %v1714 = vld [vmem:[%s1 + $0x380] sm:$0xff]
        %v1715 = vld [vmem:[%s1 + $0x388] sm:$0xff]
        %v1716 = vld [vmem:[%s1 + $0x390] sm:$0xff]
        %v1717 = vld [vmem:[%s1 + $0x398] sm:$0xff]
        %v1718 = vld [vmem:[%s1 + $0x3a0] sm:$0xff]
        %v1719 = vld [vmem:[%s1 + $0x3a8] sm:$0xff]
        %v1720 = vld [vmem:[%s1 + $0x3b0] sm:$0xff]
        %v1721 = vld [vmem:[%s1 + $0x3b8] sm:$0xff]
        %v1722 = vld [vmem:[%s1 + $0x3c0] sm:$0xff]
        %v1723 = vld [vmem:[%s1 + $0x3c8] sm:$0xff]
        %v1724 = vld [vmem:[%s1 + $0x3d0] sm:$0xff]
        %v1725 = vld [vmem:[%s1 + $0x3d8] sm:$0xff]
        %v1726 = vld [vmem:[%s1 + $0x3e0] sm:$0xff]
        %v1727 = vld [vmem:[%s1 + $0x3e8] sm:$0xff]
        %v1728 = vld [vmem:[%s1 + $0x3f0] sm:$0xff]
        %v1729 = vld [vmem:[%s1 + $0x3f8] sm:$0xff]
        %v1730 = vld [vmem:[%s1 + $0x400] sm:$0xff]
        %v1731 = vld [vmem:[%s1 + $0x408] sm:$0xff]
        %v1732 = vld [vmem:[%s1 + $0x410] sm:$0xff]
        %v1733 = vld [vmem:[%s1 + $0x418] sm:$0xff]
        %v1734 = vld [vmem:[%s1 + $0x420] sm:$0xff]
        %v1735 = vld [vmem:[%s1 + $0x428] sm:$0xff]
        %v1736 = vld [vmem:[%s1 + $0x430] sm:$0xff]
        %v1737 = vld [vmem:[%s1 + $0x438] sm:$0xff]
        %v1738 = vld [vmem:[%s1 + $0x440] sm:$0xff]
        %v1739 = vld [vmem:[%s1 + $0x448] sm:$0xff]
        %v1740 = vld [vmem:[%s1 + $0x450] sm:$0xff]
        %v1741 = vld [vmem:[%s1 + $0x458] sm:$0xff]
        %v1742 = vld [vmem:[%s1 + $0x460] sm:$0xff]
        %v1743 = vld [vmem:[%s1 + $0x468] sm:$0xff]
        %v1744 = vld [vmem:[%s1 + $0x470] sm:$0xff]
        %v1745 = vld [vmem:[%s1 + $0x478] sm:$0xff]
        %v1746 = vld [vmem:[%s1 + $0x480] sm:$0xff]
        %v1747 = vld [vmem:[%s1 + $0x488] sm:$0xff]
        %v1748 = vld [vmem:[%s1 + $0x490] sm:$0xff]
        %v1749 = vld [vmem:[%s1 + $0x498] sm:$0xff]
        %v1750 = vld [vmem:[%s1 + $0x4a0] sm:$0xff]
        %v1751 = vld [vmem:[%s1 + $0x4a8] sm:$0xff]
        %v1752 = vld [vmem:[%s1 + $0x4b0] sm:$0xff]
        %v1753 = vld [vmem:[%s1 + $0x4b8] sm:$0xff]
        %v1754 = vld [vmem:[%s1 + $0x4c0] sm:$0xff]
        %v1755 = vld [vmem:[%s1 + $0x4c8] sm:$0xff]
        %v1756 = vld [vmem:[%s1 + $0x4d0] sm:$0xff]
        %v1757 = vld [vmem:[%s1 + $0x4d8] sm:$0xff]
        %v1758 = vld [vmem:[%s1 + $0x4e0] sm:$0xff]
        %v1759 = vld [vmem:[%s1 + $0x4e8] sm:$0xff]
        %v1760 = vld [vmem:[%s1 + $0x4f0] sm:$0xff]
        %v1761 = vld [vmem:[%s1 + $0x4f8] sm:$0xff]
        %v1762 = vld [vmem:[%s1 + $0x500] sm:$0xff]
        %v1763 = vld [vmem:[%s1 + $0x508] sm:$0xff]
        %v1764 = vld [vmem:[%s1 + $0x510] sm:$0xff]
        %v1765 = vld [vmem:[%s1 + $0x518] sm:$0xff]
        %v1766 = vld [vmem:[%s1 + $0x520] sm:$0xff]
        %v1767 = vld [vmem:[%s1 + $0x528] sm:$0xff]
        %v1768 = vld [vmem:[%s1 + $0x530] sm:$0xff]
        %v1769 = vld [vmem:[%s1 + $0x538] sm:$0xff]
        %v1770 = vld [vmem:[%s1 + $0x540] sm:$0xff]
        %v1771 = vld [vmem:[%s1 + $0x548] sm:$0xff]
        %v1772 = vld [vmem:[%s1 + $0x550] sm:$0xff]
        %v1773 = vld [vmem:[%s1 + $0x558] sm:$0xff]
        %v1774 = vld [vmem:[%s1 + $0x560] sm:$0xff]
        %v1775 = vld [vmem:[%s1 + $0x568] sm:$0xff]
        %v1776 = vld [vmem:[%s1 + $0x570] sm:$0xff]
        %v1777 = vld [vmem:[%s1 + $0x578] sm:$0xff]
        %v1778 = vld [vmem:[%s1 + $0x580] sm:$0xff]
        %v1779 = vld [vmem:[%s1 + $0x588] sm:$0xff]
        %v1780 = vld [vmem:[%s1 + $0x590] sm:$0xff]
        %v1781 = vld [vmem:[%s1 + $0x598] sm:$0xff]
        %v1782 = vld [vmem:[%s1 + $0x5a0] sm:$0xff]
        %v1783 = vld [vmem:[%s1 + $0x5a8] sm:$0xff]
        %v1784 = vld [vmem:[%s1 + $0x5b0] sm:$0xff]
        %v1785 = vld [vmem:[%s1 + $0x5b8] sm:$0xff]
        %v1786 = vld [vmem:[%s1 + $0x5c0] sm:$0xff]
        %v1787 = vld [vmem:[%s1 + $0x5c8] sm:$0xff]
        %v1788 = vld [vmem:[%s1 + $0x5d0] sm:$0xff]
        %v1789 = vld [vmem:[%s1 + $0x5d8] sm:$0xff]
        %v1790 = vld [vmem:[%s1 + $0x5e0] sm:$0xff]
        %v1791 = vld [vmem:[%s1 + $0x5e8] sm:$0xff]
        %v1792 = vld [vmem:[%s1 + $0x5f0] sm:$0xff]
        %v1793 = vld [vmem:[%s1 + $0x5f8] sm:$0xff]
        %v1794 = vld [vmem:[%s1 + $0x600] sm:$0xff]
        %v1795 = vld [vmem:[%s1 + $0x608] sm:$0xff]
        %v1796 = vld [vmem:[%s1 + $0x610] sm:$0xff]
        %v1797 = vld [vmem:[%s1 + $0x618] sm:$0xff]
        %v1798 = vld [vmem:[%s1 + $0x620] sm:$0xff]
        %v1799 = vld [vmem:[%s1 + $0x628] sm:$0xff]
        %v1800 = vld [vmem:[%s1 + $0x630] sm:$0xff]
        %v1801 = vld [vmem:[%s1 + $0x638] sm:$0xff]
        %v1802 = vld [vmem:[%s1 + $0x640] sm:$0xff]
        %v1803 = vld [vmem:[%s1 + $0x648] sm:$0xff]
        %v1804 = vld [vmem:[%s1 + $0x650] sm:$0xff]
        %v1805 = vld [vmem:[%s1 + $0x658] sm:$0xff]
        %v1806 = vld [vmem:[%s1 + $0x660] sm:$0xff]
        %v1807 = vld [vmem:[%s1 + $0x668] sm:$0xff]
        %v1808 = vld [vmem:[%s1 + $0x670] sm:$0xff]
        %v1809 = vld [vmem:[%s1 + $0x678] sm:$0xff]
        %v1810 = vld [vmem:[%s1 + $0x680] sm:$0xff]
        %v1811 = vld [vmem:[%s1 + $0x688] sm:$0xff]
        %v1812 = vld [vmem:[%s1 + $0x690] sm:$0xff]
        %v1813 = vld [vmem:[%s1 + $0x698] sm:$0xff]
        %v1814 = vld [vmem:[%s1 + $0x6a0] sm:$0xff]
        %v1815 = vld [vmem:[%s1 + $0x6a8] sm:$0xff]
        %v1816 = vld [vmem:[%s1 + $0x6b0] sm:$0xff]
        %v1817 = vld [vmem:[%s1 + $0x6b8] sm:$0xff]
        %v1818 = vld [vmem:[%s1 + $0x6c0] sm:$0xff]
        %v1819 = vld [vmem:[%s1 + $0x6c8] sm:$0xff]
        %v1820 = vld [vmem:[%s1 + $0x6d0] sm:$0xff]
        %v1821 = vld [vmem:[%s1 + $0x6d8] sm:$0xff]
        %v1822 = vld [vmem:[%s1 + $0x6e0] sm:$0xff]
        %v1823 = vld [vmem:[%s1 + $0x6e8] sm:$0xff]
        %v1824 = vld [vmem:[%s1 + $0x6f0] sm:$0xff]
        %v1825 = vld [vmem:[%s1 + $0x6f8] sm:$0xff]
        %v1826 = vld [vmem:[%s1 + $0x700] sm:$0xff]
        %v1827 = vld [vmem:[%s1 + $0x708] sm:$0xff]
        %v1828 = vld [vmem:[%s1 + $0x710] sm:$0xff]
        %v1829 = vld [vmem:[%s1 + $0x718] sm:$0xff]
        %v1830 = vld [vmem:[%s1 + $0x720] sm:$0xff]
        %v1831 = vld [vmem:[%s1 + $0x728] sm:$0xff]
        %v1832 = vld [vmem:[%s1 + $0x730] sm:$0xff]
        %v1833 = vld [vmem:[%s1 + $0x738] sm:$0xff]
        %v1834 = vld [vmem:[%s1 + $0x740] sm:$0xff]
        %v1835 = vld [vmem:[%s1 + $0x748] sm:$0xff]
        %v1836 = vld [vmem:[%s1 + $0x750] sm:$0xff]
        %v1837 = vld [vmem:[%s1 + $0x758] sm:$0xff]
        %v1838 = vld [vmem:[%s1 + $0x760] sm:$0xff]
        %v1839 = vld [vmem:[%s1 + $0x768] sm:$0xff]
        %v1840 = vld [vmem:[%s1 + $0x770] sm:$0xff]
        %v1841 = vld [vmem:[%s1 + $0x778] sm:$0xff]
        %v1842 = vld [vmem:[%s1 + $0x780] sm:$0xff]
        %v1843 = vld [vmem:[%s1 + $0x788] sm:$0xff]
        %v1844 = vld [vmem:[%s1 + $0x790] sm:$0xff]
        %v1845 = vld [vmem:[%s1 + $0x798] sm:$0xff]
        %v1846 = vld [vmem:[%s1 + $0x7a0] sm:$0xff]
        %v1847 = vld [vmem:[%s1 + $0x7a8] sm:$0xff]
        %v1848 = vld [vmem:[%s1 + $0x7b0] sm:$0xff]
        %v1849 = vld [vmem:[%s1 + $0x7b8] sm:$0xff]
        %v1850 = vld [vmem:[%s1 + $0x7c0] sm:$0xff]
        %v1851 = vld [vmem:[%s1 + $0x7c8] sm:$0xff]
        %v1852 = vld [vmem:[%s1 + $0x7d0] sm:$0xff]
        %v1853 = vld [vmem:[%s1 + $0x7d8] sm:$0xff]
        %v1854 = vld [vmem:[%s1 + $0x7e0] sm:$0xff]
        %v1855 = vld [vmem:[%s1 + $0x7e8] sm:$0xff]
        %v1856 = vld [vmem:[%s1 + $0x7f0] sm:$0xff]
        %v1857 = vld [vmem:[%s1 + $0x7f8] sm:$0xff]
        %v1858 = vld [vmem:[%s1 + $0x800] sm:$0xff]
        %v1859 = vld [vmem:[%s1 + $0x808] sm:$0xff]
        %v1860 = vld [vmem:[%s1 + $0x810] sm:$0xff]
        %v1861 = vld [vmem:[%s1 + $0x818] sm:$0xff]
        %v1862 = vld [vmem:[%s1 + $0x820] sm:$0xff]
        %v1863 = vld [vmem:[%s1 + $0x828] sm:$0xff]
        %v1864 = vld [vmem:[%s1 + $0x830] sm:$0xff]
        %v1865 = vld [vmem:[%s1 + $0x838] sm:$0xff]
        %v1866 = vld [vmem:[%s1 + $0x840] sm:$0xff]
        %v1867 = vld [vmem:[%s1 + $0x848] sm:$0xff]
        %v1868 = vld [vmem:[%s1 + $0x850] sm:$0xff]
        %v1869 = vld [vmem:[%s1 + $0x858] sm:$0xff]
        %v1870 = vld [vmem:[%s1 + $0x860] sm:$0xff]
        %v1871 = vld [vmem:[%s1 + $0x868] sm:$0xff]
        %v1872 = vld [vmem:[%s1 + $0x870] sm:$0xff]
        %v1873 = vld [vmem:[%s1 + $0x878] sm:$0xff]
        %v1874 = vld [vmem:[%s1 + $0x880] sm:$0xff]
        %v1875 = vld [vmem:[%s1 + $0x888] sm:$0xff]
        %v1876 = vld [vmem:[%s1 + $0x890] sm:$0xff]
        %v1877 = vld [vmem:[%s1 + $0x898] sm:$0xff]
        %v1878 = vld [vmem:[%s1 + $0x8a0] sm:$0xff]
        %v1879 = vld [vmem:[%s1 + $0x8a8] sm:$0xff]
        %v1880 = vld [vmem:[%s1 + $0x8b0] sm:$0xff]
        %v1881 = vld [vmem:[%s1 + $0x8b8] sm:$0xff]
        %v1882 = vld [vmem:[%s1 + $0x8c0] sm:$0xff]
        %v1883 = vld [vmem:[%s1 + $0x8c8] sm:$0xff]
        %v1884 = vld [vmem:[%s1 + $0x8d0] sm:$0xff]
        %v1885 = vld [vmem:[%s1 + $0x8d8] sm:$0xff]
        %v1886 = vld [vmem:[%s1 + $0x8e0] sm:$0xff]
        %v1887 = vld [vmem:[%s1 + $0x8e8] sm:$0xff]
        %v1888 = vld [vmem:[%s1 + $0x8f0] sm:$0xff]
        %v1889 = vld [vmem:[%s1 + $0x8f8] sm:$0xff]
        %v1890 = vld [vmem:[%s1 + $0x900] sm:$0xff]
        %v1891 = vld [vmem:[%s1 + $0x908] sm:$0xff]
        %v1892 = vld [vmem:[%s1 + $0x910] sm:$0xff]
        %v1893 = vld [vmem:[%s1 + $0x918] sm:$0xff]
        %v1894 = vld [vmem:[%s1 + $0x920] sm:$0xff]
        %v1895 = vld [vmem:[%s1 + $0x928] sm:$0xff]
        %v1896 = vld [vmem:[%s1 + $0x930] sm:$0xff]
        %v1897 = vld [vmem:[%s1 + $0x938] sm:$0xff]
        %v1898 = vld [vmem:[%s1 + $0x940] sm:$0xff]
        %v1899 = vld [vmem:[%s1 + $0x948] sm:$0xff]
        %v1900 = vld [vmem:[%s1 + $0x950] sm:$0xff]
        %v1901 = vld [vmem:[%s1 + $0x958] sm:$0xff]
        %v1902 = vld [vmem:[%s1 + $0x960] sm:$0xff]
        %v1903 = vld [vmem:[%s1 + $0x968] sm:$0xff]
        %v1904 = vld [vmem:[%s1 + $0x970] sm:$0xff]
        %v1905 = vld [vmem:[%s1 + $0x978] sm:$0xff]
        %v1906 = vld [vmem:[%s1 + $0x980] sm:$0xff]
        %v1907 = vld [vmem:[%s1 + $0x988] sm:$0xff]
        %v1908 = vld [vmem:[%s1 + $0x990] sm:$0xff]
        %v1909 = vld [vmem:[%s1 + $0x998] sm:$0xff]
        %v1910 = vld [vmem:[%s1 + $0x9a0] sm:$0xff]
        %v1911 = vld [vmem:[%s1 + $0x9a8] sm:$0xff]
        %v1912 = vld [vmem:[%s1 + $0x9b0] sm:$0xff]
        %v1913 = vld [vmem:[%s1 + $0x9b8] sm:$0xff]
        %v1914 = vld [vmem:[%s1 + $0x9c0] sm:$0xff]
        %v1915 = vld [vmem:[%s1 + $0x9c8] sm:$0xff]
        %v1916 = vld [vmem:[%s1 + $0x9d0] sm:$0xff]
        %v1917 = vld [vmem:[%s1 + $0x9d8] sm:$0xff]
        %v1918 = vld [vmem:[%s1 + $0x9e0] sm:$0xff]
        %v1919 = vld [vmem:[%s1 + $0x9e8] sm:$0xff]
        %v1920 = vld [vmem:[%s1 + $0x9f0] sm:$0xff]
        %v1921 = vld [vmem:[%s1 + $0x9f8] sm:$0xff]
        %v1922 = vld [vmem:[%s1 + $0xa00] sm:$0xff]
        %v1923 = vld [vmem:[%s1 + $0xa08] sm:$0xff]
        %v1924 = vld [vmem:[%s1 + $0xa10] sm:$0xff]
        %v1925 = vld [vmem:[%s1 + $0xa18] sm:$0xff]
        %v1926 = vld [vmem:[%s1 + $0xa20] sm:$0xff]
        %v1927 = vld [vmem:[%s1 + $0xa28] sm:$0xff]
        %v1928 = vld [vmem:[%s1 + $0xa30] sm:$0xff]
        %v1929 = vld [vmem:[%s1 + $0xa38] sm:$0xff]
        %v1930 = vld [vmem:[%s1 + $0xa40] sm:$0xff]
        %v1931 = vld [vmem:[%s1 + $0xa48] sm:$0xff]
        %v1932 = vld [vmem:[%s1 + $0xa50] sm:$0xff]
        %v1933 = vld [vmem:[%s1 + $0xa58] sm:$0xff]
        %v1934 = vld [vmem:[%s1 + $0xa60] sm:$0xff]
        %v1935 = vld [vmem:[%s1 + $0xa68] sm:$0xff]
        %v1936 = vld [vmem:[%s1 + $0xa70] sm:$0xff]
        %v1937 = vld [vmem:[%s1 + $0xa78] sm:$0xff]
        %v1938 = vld [vmem:[%s1 + $0xa80] sm:$0xff]
        %v1939 = vld [vmem:[%s1 + $0xa88] sm:$0xff]
        %v1940 = vld [vmem:[%s1 + $0xa90] sm:$0xff]
        %v1941 = vld [vmem:[%s1 + $0xa98] sm:$0xff]
        %v1942 = vld [vmem:[%s1 + $0xaa0] sm:$0xff]
        %v1943 = vld [vmem:[%s1 + $0xaa8] sm:$0xff]
        %v1944 = vld [vmem:[%s1 + $0xab0] sm:$0xff]
        %v1945 = vld [vmem:[%s1 + $0xab8] sm:$0xff]
        %v1946 = vld [vmem:[%s1 + $0xac0] sm:$0xff]
        %v1947 = vld [vmem:[%s1 + $0xac8] sm:$0xff]
        %v1948 = vld [vmem:[%s1 + $0xad0] sm:$0xff]
        %v1949 = vld [vmem:[%s1 + $0xad8] sm:$0xff]
        %v1950 = vld [vmem:[%s1 + $0xae0] sm:$0xff]
        %v1951 = vld [vmem:[%s1 + $0xae8] sm:$0xff]
        %v1952 = vld [vmem:[%s1 + $0xaf0] sm:$0xff]
        %v1953 = vld [vmem:[%s1 + $0xaf8] sm:$0xff]
        %v1954 = vld [vmem:[%s1 + $0xb00] sm:$0xff]
        %v1955 = vld [vmem:[%s1 + $0xb08] sm:$0xff]
        %v1956 = vld [vmem:[%s1 + $0xb10] sm:$0xff]
        %v1957 = vld [vmem:[%s1 + $0xb18] sm:$0xff]
        %v1958 = vld [vmem:[%s1 + $0xb20] sm:$0xff]
        %v1959 = vld [vmem:[%s1 + $0xb28] sm:$0xff]
        %v1960 = vld [vmem:[%s1 + $0xb30] sm:$0xff]
        %v1961 = vld [vmem:[%s1 + $0xb38] sm:$0xff]
        %v1962 = vld [vmem:[%s1 + $0xb40] sm:$0xff]
        %v1963 = vld [vmem:[%s1 + $0xb48] sm:$0xff]
        %v1964 = vld [vmem:[%s1 + $0xb50] sm:$0xff]
        %v1965 = vld [vmem:[%s1 + $0xb58] sm:$0xff]
        %v1966 = vld [vmem:[%s1 + $0xb60] sm:$0xff]
        %v1967 = vld [vmem:[%s1 + $0xb68] sm:$0xff]
        %v1968 = vld [vmem:[%s1 + $0xb70] sm:$0xff]
        %v1969 = vld [vmem:[%s1 + $0xb78] sm:$0xff]
        %v1970 = vld [vmem:[%s1 + $0xb80] sm:$0xff]
        %v1971 = vld [vmem:[%s1 + $0xb88] sm:$0xff]
        %v1972 = vld [vmem:[%s1 + $0xb90] sm:$0xff]
        %v1973 = vld [vmem:[%s1 + $0xb98] sm:$0xff]
        %v1974 = vld [vmem:[%s1 + $0xba0] sm:$0xff]
        %v1975 = vld [vmem:[%s1 + $0xba8] sm:$0xff]
        %v1976 = vld [vmem:[%s1 + $0xbb0] sm:$0xff]
        %v1977 = vld [vmem:[%s1 + $0xbb8] sm:$0xff]
        %v1978 = vld [vmem:[%s1 + $0xbc0] sm:$0xff]
        %v1979 = vld [vmem:[%s1 + $0xbc8] sm:$0xff]
        %v1980 = vld [vmem:[%s1 + $0xbd0] sm:$0xff]
        %v1981 = vld [vmem:[%s1 + $0xbd8] sm:$0xff]
        %v1982 = vld [vmem:[%s1 + $0xbe0] sm:$0xff]
        %v1983 = vld [vmem:[%s1 + $0xbe8] sm:$0xff]
        %v1984 = vld [vmem:[%s1 + $0xbf0] sm:$0xff]
        %v1985 = vld [vmem:[%s1 + $0xbf8] sm:$0xff]
        %v1986 = vld [vmem:[%s1 + $0xc00] sm:$0xff]
        %v1987 = vld [vmem:[%s1 + $0xc08] sm:$0xff]
        %v1988 = vld [vmem:[%s1 + $0xc10] sm:$0xff]
        %v1989 = vld [vmem:[%s1 + $0xc18] sm:$0xff]
        %v1990 = vld [vmem:[%s1 + $0xc20] sm:$0xff]
        %v1991 = vld [vmem:[%s1 + $0xc28] sm:$0xff]
        %v1992 = vld [vmem:[%s1 + $0xc30] sm:$0xff]
        %v1993 = vld [vmem:[%s1 + $0xc38] sm:$0xff]
        %v1994 = vld [vmem:[%s1 + $0xc40] sm:$0xff]
        %v1995 = vld [vmem:[%s1 + $0xc48] sm:$0xff]
        %v1996 = vld [vmem:[%s1 + $0xc50] sm:$0xff]
        %v1997 = vld [vmem:[%s1 + $0xc58] sm:$0xff]
        %v1998 = vld [vmem:[%s1 + $0xc60] sm:$0xff]
        %v1999 = vld [vmem:[%s1 + $0xc68] sm:$0xff]
        %v2000 = vld [vmem:[%s1 + $0xc70] sm:$0xff]
        %v2001 = vld [vmem:[%s1 + $0xc78] sm:$0xff]
        %v2002 = vld [vmem:[%s1 + $0xc80] sm:$0xff]
        %v2003 = vld [vmem:[%s1 + $0xc88] sm:$0xff]
        %v2004 = vld [vmem:[%s1 + $0xc90] sm:$0xff]
        %v2005 = vld [vmem:[%s1 + $0xc98] sm:$0xff]
        %v2006 = vld [vmem:[%s1 + $0xca0] sm:$0xff]
        %v2007 = vld [vmem:[%s1 + $0xca8] sm:$0xff]
        %v2008 = vld [vmem:[%s1 + $0xcb0] sm:$0xff]
        %v2009 = vld [vmem:[%s1 + $0xcb8] sm:$0xff]
        %v2010 = vld [vmem:[%s1 + $0xcc0] sm:$0xff]
        %v2011 = vld [vmem:[%s1 + $0xcc8] sm:$0xff]
        %v2012 = vld [vmem:[%s1 + $0xcd0] sm:$0xff]
        %v2013 = vld [vmem:[%s1 + $0xcd8] sm:$0xff]
        %v2014 = vld [vmem:[%s1 + $0xce0] sm:$0xff]
        %v2015 = vld [vmem:[%s1 + $0xce8] sm:$0xff]
        %v2016 = vld [vmem:[%s1 + $0xcf0] sm:$0xff]
        %v2017 = vld [vmem:[%s1 + $0xcf8] sm:$0xff]
        %v2018 = vld [vmem:[%s1 + $0xd00] sm:$0xff]
        %v2019 = vld [vmem:[%s1 + $0xd08] sm:$0xff]
        %v2020 = vld [vmem:[%s1 + $0xd10] sm:$0xff]
        %v2021 = vld [vmem:[%s1 + $0xd18] sm:$0xff]
        %v2022 = vld [vmem:[%s1 + $0xd20] sm:$0xff]
        %v2023 = vld [vmem:[%s1 + $0xd28] sm:$0xff]
        %v2024 = vld [vmem:[%s1 + $0xd30] sm:$0xff]
        %v2025 = vld [vmem:[%s1 + $0xd38] sm:$0xff]
        %v2026 = vld [vmem:[%s1 + $0xd40] sm:$0xff]
        %v2027 = vld [vmem:[%s1 + $0xd48] sm:$0xff]
        %v2028 = vld [vmem:[%s1 + $0xd50] sm:$0xff]
        %v2029 = vld [vmem:[%s1 + $0xd58] sm:$0xff]
        %v2030 = vld [vmem:[%s1 + $0xd60] sm:$0xff]
        %v2031 = vld [vmem:[%s1 + $0xd68] sm:$0xff]
        %v2032 = vld [vmem:[%s1 + $0xd70] sm:$0xff]
        %v2033 = vld [vmem:[%s1 + $0xd78] sm:$0xff]
        %v2034 = vld [vmem:[%s1 + $0xd80] sm:$0xff]
        %v2035 = vld [vmem:[%s1 + $0xd88] sm:$0xff]
        %v2036 = vld [vmem:[%s1 + $0xd90] sm:$0xff]
        %v2037 = vld [vmem:[%s1 + $0xd98] sm:$0xff]
        %v2038 = vld [vmem:[%s1 + $0xda0] sm:$0xff]
        %v2039 = vld [vmem:[%s1 + $0xda8] sm:$0xff]
        %v2040 = vld [vmem:[%s1 + $0xdb0] sm:$0xff]
        %v2041 = vld [vmem:[%s1 + $0xdb8] sm:$0xff]
        %v2042 = vld [vmem:[%s1 + $0xdc0] sm:$0xff]
        %v2043 = vld [vmem:[%s1 + $0xdc8] sm:$0xff]
        %v2044 = vld [vmem:[%s1 + $0xdd0] sm:$0xff]
        %v2045 = vld [vmem:[%s1 + $0xdd8] sm:$0xff]
        %v2046 = vld [vmem:[%s1 + $0xde0] sm:$0xff]
        %v2047 = vld [vmem:[%s1 + $0xde8] sm:$0xff]
        %v2048 = vld [vmem:[%s1 + $0xdf0] sm:$0xff]
        %v2049 = vld [vmem:[%s1 + $0xdf8] sm:$0xff]
        %v2050 = vld [vmem:[%s1 + $0xe00] sm:$0xff]
        %v2051 = vld [vmem:[%s1 + $0xe08] sm:$0xff]
        %v2052 = vld [vmem:[%s1 + $0xe10] sm:$0xff]
        %v2053 = vld [vmem:[%s1 + $0xe18] sm:$0xff]
        %v2054 = vld [vmem:[%s1 + $0xe20] sm:$0xff]
        %v2055 = vld [vmem:[%s1 + $0xe28] sm:$0xff]
        %v2056 = vld [vmem:[%s1 + $0xe30] sm:$0xff]
        %v2057 = vld [vmem:[%s1 + $0xe38] sm:$0xff]
        %v2058 = vld [vmem:[%s1 + $0xe40] sm:$0xff]
        %v2059 = vld [vmem:[%s1 + $0xe48] sm:$0xff]
        %v2060 = vld [vmem:[%s1 + $0xe50] sm:$0xff]
        %v2061 = vld [vmem:[%s1 + $0xe58] sm:$0xff]
        %v2062 = vld [vmem:[%s1 + $0xe60] sm:$0xff]
        %v2063 = vld [vmem:[%s1 + $0xe68] sm:$0xff]
        %v2064 = vld [vmem:[%s1 + $0xe70] sm:$0xff]
        %v2065 = vld [vmem:[%s1 + $0xe78] sm:$0xff]
        %v2066 = vld [vmem:[%s1 + $0xe80] sm:$0xff]
        %v2067 = vld [vmem:[%s1 + $0xe88] sm:$0xff]
        %v2068 = vld [vmem:[%s1 + $0xe90] sm:$0xff]
        %v2069 = vld [vmem:[%s1 + $0xe98] sm:$0xff]
        %v2070 = vld [vmem:[%s1 + $0xea0] sm:$0xff]
        %v2071 = vld [vmem:[%s1 + $0xea8] sm:$0xff]
        %v2072 = vld [vmem:[%s1 + $0xeb0] sm:$0xff]
        %v2073 = vld [vmem:[%s1 + $0xeb8] sm:$0xff]
        %v2074 = vld [vmem:[%s1 + $0xec0] sm:$0xff]
        %v2075 = vld [vmem:[%s1 + $0xec8] sm:$0xff]
        %v2076 = vld [vmem:[%s1 + $0xed0] sm:$0xff]
        %v2077 = vld [vmem:[%s1 + $0xed8] sm:$0xff]
        %v2078 = vld [vmem:[%s1 + $0xee0] sm:$0xff]
        %v2079 = vld [vmem:[%s1 + $0xee8] sm:$0xff]
        %v2080 = vld [vmem:[%s1 + $0xef0] sm:$0xff]
        %v2081 = vld [vmem:[%s1 + $0xef8] sm:$0xff]
        %v2082 = vld [vmem:[%s1 + $0xf00] sm:$0xff]
        %v2083 = vld [vmem:[%s1 + $0xf08] sm:$0xff]
        %v2084 = vld [vmem:[%s1 + $0xf10] sm:$0xff]
        %v2085 = vld [vmem:[%s1 + $0xf18] sm:$0xff]
        %v2086 = vld [vmem:[%s1 + $0xf20] sm:$0xff]
        %v2087 = vld [vmem:[%s1 + $0xf28] sm:$0xff]
        %v2088 = vld [vmem:[%s1 + $0xf30] sm:$0xff]
        %v2089 = vld [vmem:[%s1 + $0xf38] sm:$0xff]
        %v2090 = vld [vmem:[%s1 + $0xf40] sm:$0xff]
        %v2091 = vld [vmem:[%s1 + $0xf48] sm:$0xff]
        %v2092 = vld [vmem:[%s1 + $0xf50] sm:$0xff]
        %v2093 = vld [vmem:[%s1 + $0xf58] sm:$0xff]
        %v2094 = vld [vmem:[%s1 + $0xf60] sm:$0xff]
        %v2095 = vld [vmem:[%s1 + $0xf68] sm:$0xff]
        %v2096 = vld [vmem:[%s1 + $0xf70] sm:$0xff]
        %v2097 = vld [vmem:[%s1 + $0xf78] sm:$0xff]
        %v2098 = vld [vmem:[%s1 + $0xf80] sm:$0xff]
        %v2099 = vld [vmem:[%s1 + $0xf88] sm:$0xff]
        %v2100 = vld [vmem:[%s1 + $0xf90] sm:$0xff]
        %v2101 = vld [vmem:[%s1 + $0xf98] sm:$0xff]
        %v2102 = vld [vmem:[%s1 + $0xfa0] sm:$0xff]
        %v2103 = vld [vmem:[%s1 + $0xfa8] sm:$0xff]
        %v2104 = vld [vmem:[%s1 + $0xfb0] sm:$0xff]
        %v2105 = vld [vmem:[%s1 + $0xfb8] sm:$0xff]
        %v2106 = vld [vmem:[%s1 + $0xfc0] sm:$0xff]
        %v2107 = vld [vmem:[%s1 + $0xfc8] sm:$0xff]
        %v2108 = vld [vmem:[%s1 + $0xfd0] sm:$0xff]
        %v2109 = vld [vmem:[%s1 + $0xfd8] sm:$0xff]
        %v2110 = vld [vmem:[%s1 + $0xfe0] sm:$0xff]
        %v2111 = vld [vmem:[%s1 + $0xfe8] sm:$0xff]
        %v2112 = vld [vmem:[%s1 + $0xff0] sm:$0xff]
        %v2113 = vld [vmem:[%s1 + $0xff8] sm:$0xff]
        %v2114 = vld [vmem:[%s1 + $0x1000] sm:$0xff]
        %v2115 = vld [vmem:[%s1 + $0x1008] sm:$0xff]
        %v2116 = vld [vmem:[%s1 + $0x1010] sm:$0xff]
        %v2117 = vld [vmem:[%s1 + $0x1018] sm:$0xff]
        %v2118 = vld [vmem:[%s1 + $0x1020] sm:$0xff]
        %v2119 = vld [vmem:[%s1 + $0x1028] sm:$0xff]
        %v2120 = vld [vmem:[%s1 + $0x1030] sm:$0xff]
        %v2121 = vld [vmem:[%s1 + $0x1038] sm:$0xff]
        %v2122 = vld [vmem:[%s1 + $0x1040] sm:$0xff]
        %v2123 = vld [vmem:[%s1 + $0x1048] sm:$0xff]
        %v2124 = vld [vmem:[%s1 + $0x1050] sm:$0xff]
        %v2125 = vld [vmem:[%s1 + $0x1058] sm:$0xff]
        %v2126 = vld [vmem:[%s1 + $0x1060] sm:$0xff]
        %v2127 = vld [vmem:[%s1 + $0x1068] sm:$0xff]
        %v2128 = vld [vmem:[%s1 + $0x1070] sm:$0xff]
        %v2129 = vld [vmem:[%s1 + $0x1078] sm:$0xff]
        %v2130 = vld [vmem:[%s1 + $0x1080] sm:$0xff]
        %v2131 = vld [vmem:[%s1 + $0x1088] sm:$0xff]
        %v2132 = vld [vmem:[%s1 + $0x1090] sm:$0xff]
        %v2133 = vld [vmem:[%s1 + $0x1098] sm:$0xff]
        %v2134 = vld [vmem:[%s1 + $0x10a0] sm:$0xff]
        %v2135 = vld [vmem:[%s1 + $0x10a8] sm:$0xff]
        %v2136 = vld [vmem:[%s1 + $0x10b0] sm:$0xff]
        %v2137 = vld [vmem:[%s1 + $0x10b8] sm:$0xff]
        %v2138 = vld [vmem:[%s1 + $0x10c0] sm:$0xff]
        %v2139 = vld [vmem:[%s1 + $0x10c8] sm:$0xff]
        %v2140 = vld [vmem:[%s1 + $0x10d0] sm:$0xff]
        %v2141 = vld [vmem:[%s1 + $0x10d8] sm:$0xff]
        %v2142 = vld [vmem:[%s1 + $0x10e0] sm:$0xff]
        %v2143 = vld [vmem:[%s1 + $0x10e8] sm:$0xff]
        %v2144 = vld [vmem:[%s1 + $0x10f0] sm:$0xff]
        %v2145 = vld [vmem:[%s1 + $0x10f8] sm:$0xff]
        %v2146 = vld [vmem:[%s1 + $0x1100] sm:$0xff]
        %v2147 = vld [vmem:[%s1 + $0x1108] sm:$0xff]
        %v2148 = vld [vmem:[%s1 + $0x1110] sm:$0xff]
        %v2149 = vld [vmem:[%s1 + $0x1118] sm:$0xff]
        %v2150 = vld [vmem:[%s1 + $0x1120] sm:$0xff]
        %v2151 = vld [vmem:[%s1 + $0x1128] sm:$0xff]
        %v2152 = vld [vmem:[%s1 + $0x1130] sm:$0xff]
        %v2153 = vld [vmem:[%s1 + $0x1138] sm:$0xff]
        %v2154 = vld [vmem:[%s1 + $0x1140] sm:$0xff]
        %v2155 = vld [vmem:[%s1 + $0x1148] sm:$0xff]
        %v2156 = vld [vmem:[%s1 + $0x1150] sm:$0xff]
        %v2157 = vld [vmem:[%s1 + $0x1158] sm:$0xff]
        %v2158 = vld [vmem:[%s1 + $0x1160] sm:$0xff]
        %v2159 = vld [vmem:[%s1 + $0x1168] sm:$0xff]
        %v2160 = vld [vmem:[%s1 + $0x1170] sm:$0xff]
        %v2161 = vld [vmem:[%s1 + $0x1178] sm:$0xff]
        %v2162 = vld [vmem:[%s1 + $0x1180] sm:$0xff]
        %v2163 = vld [vmem:[%s1 + $0x1188] sm:$0xff]
        %v2164 = vld [vmem:[%s1 + $0x1190] sm:$0xff]
        %v2165 = vld [vmem:[%s1 + $0x1198] sm:$0xff]
        %v2166 = vld [vmem:[%s1 + $0x11a0] sm:$0xff]
        %v2167 = vld [vmem:[%s1 + $0x11a8] sm:$0xff]
        %v2168 = vld [vmem:[%s1 + $0x11b0] sm:$0xff]
        %v2169 = vld [vmem:[%s1 + $0x11b8] sm:$0xff]
        %v2170 = vld [vmem:[%s1 + $0x11c0] sm:$0xff]
        %v2171 = vld [vmem:[%s1 + $0x11c8] sm:$0xff]
        %v2172 = vld [vmem:[%s1 + $0x11d0] sm:$0xff]
        %v2173 = vld [vmem:[%s1 + $0x11d8] sm:$0xff]
        %v2174 = vld [vmem:[%s1 + $0x11e0] sm:$0xff]
        %v2175 = vld [vmem:[%s1 + $0x11e8] sm:$0xff]
        %v2176 = vld [vmem:[%s1 + $0x11f0] sm:$0xff]
        %v2177 = vld [vmem:[%s1 + $0x11f8] sm:$0xff]
        %v2178 = vld [vmem:[%s1 + $0x1200] sm:$0xff]
        %v2179 = vld [vmem:[%s1 + $0x1208] sm:$0xff]
        %v2180 = vld [vmem:[%s1 + $0x1210] sm:$0xff]
        %v2181 = vld [vmem:[%s1 + $0x1218] sm:$0xff]
        %v2182 = vld [vmem:[%s1 + $0x1220] sm:$0xff]
        %v2183 = vld [vmem:[%s1 + $0x1228] sm:$0xff]
        %v2184 = vld [vmem:[%s1 + $0x1230] sm:$0xff]
        %v2185 = vld [vmem:[%s1 + $0x1238] sm:$0xff]
        %v2186 = vld [vmem:[%s1 + $0x1240] sm:$0xff]
        %v2187 = vld [vmem:[%s1 + $0x1248] sm:$0xff]
        %v2188 = vld [vmem:[%s1 + $0x1250] sm:$0xff]
        %v2189 = vld [vmem:[%s1 + $0x1258] sm:$0xff]
        %v2190 = vld [vmem:[%s1 + $0x1260] sm:$0xff]
        %v2191 = vld [vmem:[%s1 + $0x1268] sm:$0xff]
        %v2192 = vld [vmem:[%s1 + $0x1270] sm:$0xff]
        %v2193 = vld [vmem:[%s1 + $0x1278] sm:$0xff]
        %v2194 = vld [vmem:[%s1 + $0x1280] sm:$0xff]
        %v2195 = vld [vmem:[%s1 + $0x1288] sm:$0xff]
        %v2196 = vld [vmem:[%s1 + $0x1290] sm:$0xff]
        %v2197 = vld [vmem:[%s1 + $0x1298] sm:$0xff]
        %v2198 = vld [vmem:[%s1 + $0x12a0] sm:$0xff]
        %v2199 = vld [vmem:[%s1 + $0x12a8] sm:$0xff]
        %v2200 = vld [vmem:[%s1 + $0x12b0] sm:$0xff]
        %v2201 = vld [vmem:[%s1 + $0x12b8] sm:$0xff]
        %v2202 = vld [vmem:[%s1 + $0x12c0] sm:$0xff]
        %v2203 = vld [vmem:[%s1 + $0x12c8] sm:$0xff]
        %v2204 = vld [vmem:[%s1 + $0x12d0] sm:$0xff]
        %v2205 = vld [vmem:[%s1 + $0x12d8] sm:$0xff]
        %v2206 = vld [vmem:[%s1 + $0x12e0] sm:$0xff]
        %v2207 = vld [vmem:[%s1 + $0x12e8] sm:$0xff]
        %v2208 = vld [vmem:[%s1 + $0x12f0] sm:$0xff]
        %v2209 = vld [vmem:[%s1 + $0x12f8] sm:$0xff]
        %v2210 = vld [vmem:[%s1 + $0x1300] sm:$0xff]
        %v2211 = vld [vmem:[%s1 + $0x1308] sm:$0xff]
        %v2212 = vld [vmem:[%s1 + $0x1310] sm:$0xff]
        %v2213 = vld [vmem:[%s1 + $0x1318] sm:$0xff]
        %v2214 = vld [vmem:[%s1 + $0x1320] sm:$0xff]
        %v2215 = vld [vmem:[%s1 + $0x1328] sm:$0xff]
        %v2216 = vld [vmem:[%s1 + $0x1330] sm:$0xff]
        %v2217 = vld [vmem:[%s1 + $0x1338] sm:$0xff]
        %v2218 = vld [vmem:[%s1 + $0x1340] sm:$0xff]
        %v2219 = vld [vmem:[%s1 + $0x1348] sm:$0xff]
        %v2220 = vld [vmem:[%s1 + $0x1350] sm:$0xff]
        %v2221 = vld [vmem:[%s1 + $0x1358] sm:$0xff]
        %v2222 = vld [vmem:[%s1 + $0x1360] sm:$0xff]
        %v2223 = vld [vmem:[%s1 + $0x1368] sm:$0xff]
        %v2224 = vld [vmem:[%s1 + $0x1370] sm:$0xff]
        %v2225 = vld [vmem:[%s1 + $0x1378] sm:$0xff]
        %v2226 = vld [vmem:[%s1 + $0x1380] sm:$0xff]
        %v2227 = vld [vmem:[%s1 + $0x1388] sm:$0xff]
        %v2228 = vld [vmem:[%s1 + $0x1390] sm:$0xff]
        %v2229 = vld [vmem:[%s1 + $0x1398] sm:$0xff]
        %v2230 = vld [vmem:[%s1 + $0x13a0] sm:$0xff]
        %v2231 = vld [vmem:[%s1 + $0x13a8] sm:$0xff]
        %v2232 = vld [vmem:[%s1 + $0x13b0] sm:$0xff]
        %v2233 = vld [vmem:[%s1 + $0x13b8] sm:$0xff]
        %v2234 = vld [vmem:[%s1 + $0x13c0] sm:$0xff]
        %v2235 = vld [vmem:[%s1 + $0x13c8] sm:$0xff]
        %v2236 = vld [vmem:[%s1 + $0x13d0] sm:$0xff]
        %v2237 = vld [vmem:[%s1 + $0x13d8] sm:$0xff]
        %v2238 = vld [vmem:[%s1 + $0x13e0] sm:$0xff]
        %v2239 = vld [vmem:[%s1 + $0x13e8] sm:$0xff]
        %v2240 = vld [vmem:[%s1 + $0x13f0] sm:$0xff]
        %v2241 = vld [vmem:[%s1 + $0x13f8] sm:$0xff]
        %v2242 = vld [vmem:[%s1 + $0x1400] sm:$0xff]
        %v2243 = vld [vmem:[%s1 + $0x1408] sm:$0xff]
        %v2244 = vld [vmem:[%s1 + $0x1410] sm:$0xff]
        %v2245 = vld [vmem:[%s1 + $0x1418] sm:$0xff]
        %v2246 = vld [vmem:[%s1 + $0x1420] sm:$0xff]
        %v2247 = vld [vmem:[%s1 + $0x1428] sm:$0xff]
        %v2248 = vld [vmem:[%s1 + $0x1430] sm:$0xff]
        %v2249 = vld [vmem:[%s1 + $0x1438] sm:$0xff]
        %v2250 = vld [vmem:[%s1 + $0x1440] sm:$0xff]
        %v2251 = vld [vmem:[%s1 + $0x1448] sm:$0xff]
        %v2252 = vld [vmem:[%s1 + $0x1450] sm:$0xff]
        %v2253 = vld [vmem:[%s1 + $0x1458] sm:$0xff]
        %v2254 = vld [vmem:[%s1 + $0x1460] sm:$0xff]
        %v2255 = vld [vmem:[%s1 + $0x1468] sm:$0xff]
        %v2256 = vld [vmem:[%s1 + $0x1470] sm:$0xff]
        %v2257 = vld [vmem:[%s1 + $0x1478] sm:$0xff]
        %v2258 = vld [vmem:[%s1 + $0x1480] sm:$0xff]
        %v2259 = vld [vmem:[%s1 + $0x1488] sm:$0xff]
        %v2260 = vld [vmem:[%s1 + $0x1490] sm:$0xff]
        %v2261 = vld [vmem:[%s1 + $0x1498] sm:$0xff]
        %v2262 = vld [vmem:[%s1 + $0x14a0] sm:$0xff]
        %v2263 = vld [vmem:[%s1 + $0x14a8] sm:$0xff]
        %v2264 = vld [vmem:[%s1 + $0x14b0] sm:$0xff]
        %v2265 = vld [vmem:[%s1 + $0x14b8] sm:$0xff]
        %v2266 = vld [vmem:[%s1 + $0x14c0] sm:$0xff]
        %v2267 = vld [vmem:[%s1 + $0x14c8] sm:$0xff]
        %v2268 = vld [vmem:[%s1 + $0x14d0] sm:$0xff]
        %v2269 = vld [vmem:[%s1 + $0x14d8] sm:$0xff]
        %v2270 = vld [vmem:[%s1 + $0x14e0] sm:$0xff]
        %v2271 = vld [vmem:[%s1 + $0x14e8] sm:$0xff]
        %v2272 = vld [vmem:[%s1 + $0x14f0] sm:$0xff]
        %v2273 = vld [vmem:[%s1 + $0x14f8] sm:$0xff]
        %v2274 = vld [vmem:[%s1 + $0x1500] sm:$0xff]
        %v2275 = vld [vmem:[%s1 + $0x1508] sm:$0xff]
        %v2276 = vld [vmem:[%s1 + $0x1510] sm:$0xff]
        %v2277 = vld [vmem:[%s1 + $0x1518] sm:$0xff]
        %v2278 = vld [vmem:[%s1 + $0x1520] sm:$0xff]
        %v2279 = vld [vmem:[%s1 + $0x1528] sm:$0xff]
        %v2280 = vld [vmem:[%s1 + $0x1530] sm:$0xff]
        %v2281 = vld [vmem:[%s1 + $0x1538] sm:$0xff]
        %v2282 = vld [vmem:[%s1 + $0x1540] sm:$0xff]
        %v2283 = vld [vmem:[%s1 + $0x1548] sm:$0xff]
        %v2284 = vld [vmem:[%s1 + $0x1550] sm:$0xff]
        %v2285 = vld [vmem:[%s1 + $0x1558] sm:$0xff]
        %v2286 = vld [vmem:[%s1 + $0x1560] sm:$0xff]
        %v2287 = vld [vmem:[%s1 + $0x1568] sm:$0xff]
        %v2288 = vld [vmem:[%s1 + $0x1570] sm:$0xff]
        %v2289 = vld [vmem:[%s1 + $0x1578] sm:$0xff]
        %v2290 = vld [vmem:[%s1 + $0x1580] sm:$0xff]
        %v2291 = vld [vmem:[%s1 + $0x1588] sm:$0xff]
        %v2292 = vld [vmem:[%s1 + $0x1590] sm:$0xff]
        %v2293 = vld [vmem:[%s1 + $0x1598] sm:$0xff]
        %v2294 = vld [vmem:[%s1 + $0x15a0] sm:$0xff]
        %v2295 = vld [vmem:[%s1 + $0x15a8] sm:$0xff]
        %v2296 = vld [vmem:[%s1 + $0x15b0] sm:$0xff]
        %v2297 = vld [vmem:[%s1 + $0x15b8] sm:$0xff]
        %v2298 = vld [vmem:[%s1 + $0x15c0] sm:$0xff]
        %v2299 = vld [vmem:[%s1 + $0x15c8] sm:$0xff]
        %v2300 = vld [vmem:[%s1 + $0x15d0] sm:$0xff]
        %v2301 = vld [vmem:[%s1 + $0x15d8] sm:$0xff]
        %v2302 = vld [vmem:[%s1 + $0x15e0] sm:$0xff]
        %v2303 = vld [vmem:[%s1 + $0x15e8] sm:$0xff]
        %v2304 = vld [vmem:[%s1 + $0x15f0] sm:$0xff]
        %v2305 = vld [vmem:[%s1 + $0x15f8] sm:$0xff]
        %v2306 = vld [vmem:[%s1 + $0x1600] sm:$0xff]
        %v2307 = vld [vmem:[%s1 + $0x1608] sm:$0xff]
        %v2308 = vld [vmem:[%s1 + $0x1610] sm:$0xff]
        %v2309 = vld [vmem:[%s1 + $0x1618] sm:$0xff]
        %v2310 = vld [vmem:[%s1 + $0x1620] sm:$0xff]
        %v2311 = vld [vmem:[%s1 + $0x1628] sm:$0xff]
        %v2312 = vld [vmem:[%s1 + $0x1630] sm:$0xff]
        %v2313 = vld [vmem:[%s1 + $0x1638] sm:$0xff]
        %v2314 = vld [vmem:[%s1 + $0x1640] sm:$0xff]
        %v2315 = vld [vmem:[%s1 + $0x1648] sm:$0xff]
        %v2316 = vld [vmem:[%s1 + $0x1650] sm:$0xff]
        %v2317 = vld [vmem:[%s1 + $0x1658] sm:$0xff]
        %v2318 = vld [vmem:[%s1 + $0x1660] sm:$0xff]
        %v2319 = vld [vmem:[%s1 + $0x1668] sm:$0xff]
        %v2320 = vld [vmem:[%s1 + $0x1670] sm:$0xff]
        %v2321 = vld [vmem:[%s1 + $0x1678] sm:$0xff]
        %v2322 = vld [vmem:[%s1 + $0x1680] sm:$0xff]
        %v2323 = vld [vmem:[%s1 + $0x1688] sm:$0xff]
        %v2324 = vld [vmem:[%s1 + $0x1690] sm:$0xff]
        %v2325 = vld [vmem:[%s1 + $0x1698] sm:$0xff]
        %v2326 = vld [vmem:[%s1 + $0x16a0] sm:$0xff]
        %v2327 = vld [vmem:[%s1 + $0x16a8] sm:$0xff]
        %v2328 = vld [vmem:[%s1 + $0x16b0] sm:$0xff]
        %v2329 = vld [vmem:[%s1 + $0x16b8] sm:$0xff]
        %v2330 = vld [vmem:[%s1 + $0x16c0] sm:$0xff]
        %v2331 = vld [vmem:[%s1 + $0x16c8] sm:$0xff]
        %v2332 = vld [vmem:[%s1 + $0x16d0] sm:$0xff]
        %v2333 = vld [vmem:[%s1 + $0x16d8] sm:$0xff]
        %v2334 = vld [vmem:[%s1 + $0x16e0] sm:$0xff]
        %v2335 = vld [vmem:[%s1 + $0x16e8] sm:$0xff]
        %v2336 = vld [vmem:[%s1 + $0x16f0] sm:$0xff]
        %v2337 = vld [vmem:[%s1 + $0x16f8] sm:$0xff]
        %v2338 = vld [vmem:[%s1 + $0x1700] sm:$0xff]
        %v2339 = vld [vmem:[%s1 + $0x1708] sm:$0xff]
        %v2340 = vld [vmem:[%s1 + $0x1710] sm:$0xff]
        %v2341 = vld [vmem:[%s1 + $0x1718] sm:$0xff]
        %v2342 = vld [vmem:[%s1 + $0x1720] sm:$0xff]
        %v2343 = vld [vmem:[%s1 + $0x1728] sm:$0xff]
        %v2344 = vld [vmem:[%s1 + $0x1730] sm:$0xff]
        %v2345 = vld [vmem:[%s1 + $0x1738] sm:$0xff]
        %v2346 = vld [vmem:[%s1 + $0x1740] sm:$0xff]
        %v2347 = vld [vmem:[%s1 + $0x1748] sm:$0xff]
        %v2348 = vld [vmem:[%s1 + $0x1750] sm:$0xff]
        %v2349 = vld [vmem:[%s1 + $0x1758] sm:$0xff]
        %v2350 = vld [vmem:[%s1 + $0x1760] sm:$0xff]
        %v2351 = vld [vmem:[%s1 + $0x1768] sm:$0xff]
        %v2352 = vld [vmem:[%s1 + $0x1770] sm:$0xff]
        %v2353 = vld [vmem:[%s1 + $0x1778] sm:$0xff]
        %v2354 = vld [vmem:[%s1 + $0x1780] sm:$0xff]
        %v2355 = vld [vmem:[%s1 + $0x1788] sm:$0xff]
        %v2356 = vld [vmem:[%s1 + $0x1790] sm:$0xff]
        %v2357 = vld [vmem:[%s1 + $0x1798] sm:$0xff]
        %v2358 = vld [vmem:[%s1 + $0x17a0] sm:$0xff]
        %v2359 = vld [vmem:[%s1 + $0x17a8] sm:$0xff]
        %v2360 = vld [vmem:[%s1 + $0x17b0] sm:$0xff]
        %v2361 = vld [vmem:[%s1 + $0x17b8] sm:$0xff]
        %v2362 = vld [vmem:[%s1 + $0x17c0] sm:$0xff]
        %v2363 = vld [vmem:[%s1 + $0x17c8] sm:$0xff]
        %v2364 = vld [vmem:[%s1 + $0x17d0] sm:$0xff]
        %v2365 = vld [vmem:[%s1 + $0x17d8] sm:$0xff]
        %v2366 = vld [vmem:[%s1 + $0x17e0] sm:$0xff]
        %v2367 = vld [vmem:[%s1 + $0x17e8] sm:$0xff]
        %v2368 = vld [vmem:[%s1 + $0x17f0] sm:$0xff]
        %v2369 = vld [vmem:[%s1 + $0x17f8] sm:$0xff]
        %v2370 = vld [vmem:[%s1 + $0x1800] sm:$0xff]
        %v2371 = vld [vmem:[%s1 + $0x1808] sm:$0xff]
        %v2372 = vld [vmem:[%s1 + $0x1810] sm:$0xff]
        %v2373 = vld [vmem:[%s1 + $0x1818] sm:$0xff]
        %v2374 = vld [vmem:[%s1 + $0x1820] sm:$0xff]
        %v2375 = vld [vmem:[%s1 + $0x1828] sm:$0xff]
        %v2376 = vld [vmem:[%s1 + $0x1830] sm:$0xff]
        %v2377 = vld [vmem:[%s1 + $0x1838] sm:$0xff]
        %v2378 = vld [vmem:[%s1 + $0x1840] sm:$0xff]
        %v2379 = vld [vmem:[%s1 + $0x1848] sm:$0xff]
        %v2380 = vld [vmem:[%s1 + $0x1850] sm:$0xff]
        %v2381 = vld [vmem:[%s1 + $0x1858] sm:$0xff]
        %v2382 = vld [vmem:[%s1 + $0x1860] sm:$0xff]
        %v2383 = vld [vmem:[%s1 + $0x1868] sm:$0xff]
        %v2384 = vld [vmem:[%s1 + $0x1870] sm:$0xff]
        %v2385 = vld [vmem:[%s1 + $0x1878] sm:$0xff]
        %v2386 = vld [vmem:[%s1 + $0x1880] sm:$0xff]
        %v2387 = vld [vmem:[%s1 + $0x1888] sm:$0xff]
        %v2388 = vld [vmem:[%s1 + $0x1890] sm:$0xff]
        %v2389 = vld [vmem:[%s1 + $0x1898] sm:$0xff]
        %v2390 = vld [vmem:[%s1 + $0x18a0] sm:$0xff]
        %v2391 = vld [vmem:[%s1 + $0x18a8] sm:$0xff]
        %v2392 = vld [vmem:[%s1 + $0x18b0] sm:$0xff]
        %v2393 = vld [vmem:[%s1 + $0x18b8] sm:$0xff]
        %v2394 = vld [vmem:[%s1 + $0x18c0] sm:$0xff]
        %v2395 = vld [vmem:[%s1 + $0x18c8] sm:$0xff]
        %v2396 = vld [vmem:[%s1 + $0x18d0] sm:$0xff]
        %v2397 = vld [vmem:[%s1 + $0x18d8] sm:$0xff]
        %v2398 = vld [vmem:[%s1 + $0x18e0] sm:$0xff]
        %v2399 = vld [vmem:[%s1 + $0x18e8] sm:$0xff]
        %v2400 = vld [vmem:[%s1 + $0x18f0] sm:$0xff]
        %v2401 = vld [vmem:[%s1 + $0x18f8] sm:$0xff]
        %v2402 = vld [vmem:[%s1 + $0x1900] sm:$0xff]
        %v2403 = vld [vmem:[%s1 + $0x1908] sm:$0xff]
        %v2404 = vld [vmem:[%s1 + $0x1910] sm:$0xff]
        %v2405 = vld [vmem:[%s1 + $0x1918] sm:$0xff]
        %v2406 = vld [vmem:[%s1 + $0x1920] sm:$0xff]
        %v2407 = vld [vmem:[%s1 + $0x1928] sm:$0xff]
        %v2408 = vld [vmem:[%s1 + $0x1930] sm:$0xff]
        %v2409 = vld [vmem:[%s1 + $0x1938] sm:$0xff]
        %v2410 = vld [vmem:[%s1 + $0x1940] sm:$0xff]
        %v2411 = vld [vmem:[%s1 + $0x1948] sm:$0xff]
        %v2412 = vld [vmem:[%s1 + $0x1950] sm:$0xff]
        %v2413 = vld [vmem:[%s1 + $0x1958] sm:$0xff]
        %v2414 = vld [vmem:[%s1 + $0x1960] sm:$0xff]
        %v2415 = vld [vmem:[%s1 + $0x1968] sm:$0xff]
        %v2416 = vld [vmem:[%s1 + $0x1970] sm:$0xff]
        %v2417 = vld [vmem:[%s1 + $0x1978] sm:$0xff]
        %v2418 = vld [vmem:[%s1 + $0x1980] sm:$0xff]
        %v2419 = vld [vmem:[%s1 + $0x1988] sm:$0xff]
        %v2420 = vld [vmem:[%s1 + $0x1990] sm:$0xff]
        %v2421 = vld [vmem:[%s1 + $0x1998] sm:$0xff]
        %v2422 = vld [vmem:[%s1 + $0x19a0] sm:$0xff]
        %v2423 = vld [vmem:[%s1 + $0x19a8] sm:$0xff]
        %v2424 = vld [vmem:[%s1 + $0x19b0] sm:$0xff]
        %v2425 = vld [vmem:[%s1 + $0x19b8] sm:$0xff]
        %v2426 = vld [vmem:[%s1 + $0x19c0] sm:$0xff]
        %v2427 = vld [vmem:[%s1 + $0x19c8] sm:$0xff]
        %v2428 = vld [vmem:[%s1 + $0x19d0] sm:$0xff]
        %v2429 = vld [vmem:[%s1 + $0x19d8] sm:$0xff]
        %v2430 = vld [vmem:[%s1 + $0x19e0] sm:$0xff]
        %v2431 = vld [vmem:[%s1 + $0x19e8] sm:$0xff]
        %v2432 = vld [vmem:[%s1 + $0x19f0] sm:$0xff]
        %v2433 = vld [vmem:[%s1 + $0x19f8] sm:$0xff]
        %v2434 = vld [vmem:[%s1 + $0x1a00] sm:$0xff]
        %v2435 = vld [vmem:[%s1 + $0x1a08] sm:$0xff]
        %v2436 = vld [vmem:[%s1 + $0x1a10] sm:$0xff]
        %v2437 = vld [vmem:[%s1 + $0x1a18] sm:$0xff]
        %v2438 = vld [vmem:[%s1 + $0x1a20] sm:$0xff]
        %v2439 = vld [vmem:[%s1 + $0x1a28] sm:$0xff]
        %v2440 = vld [vmem:[%s1 + $0x1a30] sm:$0xff]
        %v2441 = vld [vmem:[%s1 + $0x1a38] sm:$0xff]
        %v2442 = vld [vmem:[%s1 + $0x1a40] sm:$0xff]
        %v2443 = vld [vmem:[%s1 + $0x1a48] sm:$0xff]
        %v2444 = vld [vmem:[%s1 + $0x1a50] sm:$0xff]
        %v2445 = vld [vmem:[%s1 + $0x1a58] sm:$0xff]
        %v2446 = vld [vmem:[%s1 + $0x1a60] sm:$0xff]
        %v2447 = vld [vmem:[%s1 + $0x1a68] sm:$0xff]
        %v2448 = vld [vmem:[%s1 + $0x1a70] sm:$0xff]
        %v2449 = vld [vmem:[%s1 + $0x1a78] sm:$0xff]
        %v2450 = vld [vmem:[%s1 + $0x1a80] sm:$0xff]
        %v2451 = vld [vmem:[%s1 + $0x1a88] sm:$0xff]
        %v2452 = vld [vmem:[%s1 + $0x1a90] sm:$0xff]
        %v2453 = vld [vmem:[%s1 + $0x1a98] sm:$0xff]
        %v2454 = vld [vmem:[%s1 + $0x1aa0] sm:$0xff]
        %v2455 = vld [vmem:[%s1 + $0x1aa8] sm:$0xff]
        %v2456 = vld [vmem:[%s1 + $0x1ab0] sm:$0xff]
        %v2457 = vld [vmem:[%s1 + $0x1ab8] sm:$0xff]
        %v2458 = vld [vmem:[%s1 + $0x1ac0] sm:$0xff]
        %v2459 = vld [vmem:[%s1 + $0x1ac8] sm:$0xff]
        %v2460 = vld [vmem:[%s1 + $0x1ad0] sm:$0xff]
        %v2461 = vld [vmem:[%s1 + $0x1ad8] sm:$0xff]
        %v2462 = vld [vmem:[%s1 + $0x1ae0] sm:$0xff]
        %v2463 = vld [vmem:[%s1 + $0x1ae8] sm:$0xff]
        %v2464 = vld [vmem:[%s1 + $0x1af0] sm:$0xff]
        %v2465 = vld [vmem:[%s1 + $0x1af8] sm:$0xff]
        %v2466 = vld [vmem:[%s1 + $0x1b00] sm:$0xff]
        %v2467 = vld [vmem:[%s1 + $0x1b08] sm:$0xff]
        %v2468 = vld [vmem:[%s1 + $0x1b10] sm:$0xff]
        %v2469 = vld [vmem:[%s1 + $0x1b18] sm:$0xff]
        %v2470 = vld [vmem:[%s1 + $0x1b20] sm:$0xff]
        %v2471 = vld [vmem:[%s1 + $0x1b28] sm:$0xff]
        %v2472 = vld [vmem:[%s1 + $0x1b30] sm:$0xff]
        %v2473 = vld [vmem:[%s1 + $0x1b38] sm:$0xff]
        %v2474 = vld [vmem:[%s1 + $0x1b40] sm:$0xff]
        %v2475 = vld [vmem:[%s1 + $0x1b48] sm:$0xff]
        %v2476 = vld [vmem:[%s1 + $0x1b50] sm:$0xff]
        %v2477 = vld [vmem:[%s1 + $0x1b58] sm:$0xff]
        %v2478 = vld [vmem:[%s1 + $0x1b60] sm:$0xff]
        %v2479 = vld [vmem:[%s1 + $0x1b68] sm:$0xff]
        %v2480 = vld [vmem:[%s1 + $0x1b70] sm:$0xff]
        %v2481 = vld [vmem:[%s1 + $0x1b78] sm:$0xff]
        %v2482 = vld [vmem:[%s1 + $0x1b80] sm:$0xff]
        %v2483 = vld [vmem:[%s1 + $0x1b88] sm:$0xff]
        %v2484 = vld [vmem:[%s1 + $0x1b90] sm:$0xff]
        %v2485 = vld [vmem:[%s1 + $0x1b98] sm:$0xff]
        %v2486 = vld [vmem:[%s1 + $0x1ba0] sm:$0xff]
        %v2487 = vld [vmem:[%s1 + $0x1ba8] sm:$0xff]
        %v2488 = vld [vmem:[%s1 + $0x1bb0] sm:$0xff]
        %v2489 = vld [vmem:[%s1 + $0x1bb8] sm:$0xff]
        %v2490 = vld [vmem:[%s1 + $0x1bc0] sm:$0xff]
        %v2491 = vld [vmem:[%s1 + $0x1bc8] sm:$0xff]
        %v2492 = vld [vmem:[%s1 + $0x1bd0] sm:$0xff]
        %v2493 = vld [vmem:[%s1 + $0x1bd8] sm:$0xff]
        %v2494 = vld [vmem:[%s1 + $0x1be0] sm:$0xff]
        %v2495 = vld [vmem:[%s1 + $0x1be8] sm:$0xff]
        %v2496 = vld [vmem:[%s1 + $0x1bf0] sm:$0xff]
        %v2497 = vld [vmem:[%s1 + $0x1bf8] sm:$0xff]
        %v2498 = vld [vmem:[%s1 + $0x1c00] sm:$0xff]
        %v2499 = vld [vmem:[%s1 + $0x1c08] sm:$0xff]
        %v2500 = vld [vmem:[%s1 + $0x1c10] sm:$0xff]
        %v2501 = vld [vmem:[%s1 + $0x1c18] sm:$0xff]
        %v2502 = vld [vmem:[%s1 + $0x1c20] sm:$0xff]
        %v2503 = vld [vmem:[%s1 + $0x1c28] sm:$0xff]
        %v2504 = vld [vmem:[%s1 + $0x1c30] sm:$0xff]
        %v2505 = vld [vmem:[%s1 + $0x1c38] sm:$0xff]
        %v2506 = vld [vmem:[%s1 + $0x1c40] sm:$0xff]
        %v2507 = vld [vmem:[%s1 + $0x1c48] sm:$0xff]
        %v2508 = vld [vmem:[%s1 + $0x1c50] sm:$0xff]
        %v2509 = vld [vmem:[%s1 + $0x1c58] sm:$0xff]
        %v2510 = vld [vmem:[%s1 + $0x1c60] sm:$0xff]
        %v2511 = vld [vmem:[%s1 + $0x1c68] sm:$0xff]
        %v2512 = vld [vmem:[%s1 + $0x1c70] sm:$0xff]
        %v2513 = vld [vmem:[%s1 + $0x1c78] sm:$0xff]
        %v2514 = vld [vmem:[%s1 + $0x1c80] sm:$0xff]
        %v2515 = vld [vmem:[%s1 + $0x1c88] sm:$0xff]
        %v2516 = vld [vmem:[%s1 + $0x1c90] sm:$0xff]
        %v2517 = vld [vmem:[%s1 + $0x1c98] sm:$0xff]
        %v2518 = vld [vmem:[%s1 + $0x1ca0] sm:$0xff]
        %v2519 = vld [vmem:[%s1 + $0x1ca8] sm:$0xff]
        %v2520 = vld [vmem:[%s1 + $0x1cb0] sm:$0xff]
        %v2521 = vld [vmem:[%s1 + $0x1cb8] sm:$0xff]
        %v2522 = vld [vmem:[%s1 + $0x1cc0] sm:$0xff]
        %v2523 = vld [vmem:[%s1 + $0x1cc8] sm:$0xff]
        %v2524 = vld [vmem:[%s1 + $0x1cd0] sm:$0xff]
        %v2525 = vld [vmem:[%s1 + $0x1cd8] sm:$0xff]
        %v2526 = vld [vmem:[%s1 + $0x1ce0] sm:$0xff]
        %v2527 = vld [vmem:[%s1 + $0x1ce8] sm:$0xff]
        %v2528 = vld [vmem:[%s1 + $0x1cf0] sm:$0xff]
        %v2529 = vld [vmem:[%s1 + $0x1cf8] sm:$0xff]
        %v2530 = vld [vmem:[%s1 + $0x1d00] sm:$0xff]
        %v2531 = vld [vmem:[%s1 + $0x1d08] sm:$0xff]
        %v2532 = vld [vmem:[%s1 + $0x1d10] sm:$0xff]
        %v2533 = vld [vmem:[%s1 + $0x1d18] sm:$0xff]
        %v2534 = vld [vmem:[%s1 + $0x1d20] sm:$0xff]
        %v2535 = vld [vmem:[%s1 + $0x1d28] sm:$0xff]
        %v2536 = vld [vmem:[%s1 + $0x1d30] sm:$0xff]
        %v2537 = vld [vmem:[%s1 + $0x1d38] sm:$0xff]
        %v2538 = vld [vmem:[%s1 + $0x1d40] sm:$0xff]
        %v2539 = vld [vmem:[%s1 + $0x1d48] sm:$0xff]
        %v2540 = vld [vmem:[%s1 + $0x1d50] sm:$0xff]
        %v2541 = vld [vmem:[%s1 + $0x1d58] sm:$0xff]
        %v2542 = vld [vmem:[%s1 + $0x1d60] sm:$0xff]
        %v2543 = vld [vmem:[%s1 + $0x1d68] sm:$0xff]
        %v2544 = vld [vmem:[%s1 + $0x1d70] sm:$0xff]
        %v2545 = vld [vmem:[%s1 + $0x1d78] sm:$0xff]
        %v2546 = vld [vmem:[%s1 + $0x1d80] sm:$0xff]
        %v2547 = vld [vmem:[%s1 + $0x1d88] sm:$0xff]
        %v2548 = vld [vmem:[%s1 + $0x1d90] sm:$0xff]
        %v2549 = vld [vmem:[%s1 + $0x1d98] sm:$0xff]
        %v2550 = vld [vmem:[%s1 + $0x1da0] sm:$0xff]
        %v2551 = vld [vmem:[%s1 + $0x1da8] sm:$0xff]
        %v2552 = vld [vmem:[%s1 + $0x1db0] sm:$0xff]
        %v2553 = vld [vmem:[%s1 + $0x1db8] sm:$0xff]
        %v2554 = vld [vmem:[%s1 + $0x1dc0] sm:$0xff]
        %v2555 = vld [vmem:[%s1 + $0x1dc8] sm:$0xff]
        %v2556 = vld [vmem:[%s1 + $0x1dd0] sm:$0xff]
        %v2557 = vld [vmem:[%s1 + $0x1dd8] sm:$0xff]
        %v2558 = vld [vmem:[%s1 + $0x1de0] sm:$0xff]
        %v2559 = vld [vmem:[%s1 + $0x1de8] sm:$0xff]
        %v2560 = vld [vmem:[%s1 + $0x1df0] sm:$0xff]
        %v2561 = vld [vmem:[%s1 + $0x1df8] sm:$0xff]
        %v2562 = vld [vmem:[%s1 + $0x1e00] sm:$0xff]
        %v2563 = vld [vmem:[%s1 + $0x1e08] sm:$0xff]
        %v2564 = vld [vmem:[%s1 + $0x1e10] sm:$0xff]
        %v2565 = vld [vmem:[%s1 + $0x1e18] sm:$0xff]
        %v2566 = vld [vmem:[%s1 + $0x1e20] sm:$0xff]
        %v2567 = vld [vmem:[%s1 + $0x1e28] sm:$0xff]
        %v2568 = vld [vmem:[%s1 + $0x1e30] sm:$0xff]
        %v2569 = vld [vmem:[%s1 + $0x1e38] sm:$0xff]
        %v2570 = vld [vmem:[%s1 + $0x1e40] sm:$0xff]
        %v2571 = vld [vmem:[%s1 + $0x1e48] sm:$0xff]
        %v2572 = vld [vmem:[%s1 + $0x1e50] sm:$0xff]
        %v2573 = vld [vmem:[%s1 + $0x1e58] sm:$0xff]
        %v2574 = vld [vmem:[%s1 + $0x1e60] sm:$0xff]
        %v2575 = vld [vmem:[%s1 + $0x1e68] sm:$0xff]
        %v2576 = vld [vmem:[%s1 + $0x1e70] sm:$0xff]
        %v2577 = vld [vmem:[%s1 + $0x1e78] sm:$0xff]
        %v2578 = vld [vmem:[%s1 + $0x1e80] sm:$0xff]
        %v2579 = vld [vmem:[%s1 + $0x1e88] sm:$0xff]
        %v2580 = vld [vmem:[%s1 + $0x1e90] sm:$0xff]
        %v2581 = vld [vmem:[%s1 + $0x1e98] sm:$0xff]
        %v2582 = vld [vmem:[%s1 + $0x1ea0] sm:$0xff]
        %v2583 = vld [vmem:[%s1 + $0x1ea8] sm:$0xff]
        %v2584 = vld [vmem:[%s1 + $0x1eb0] sm:$0xff]
        %v2585 = vld [vmem:[%s1 + $0x1eb8] sm:$0xff]
        %v2586 = vld [vmem:[%s1 + $0x1ec0] sm:$0xff]
        %v2587 = vld [vmem:[%s1 + $0x1ec8] sm:$0xff]
        %v2588 = vld [vmem:[%s1 + $0x1ed0] sm:$0xff]
        %v2589 = vld [vmem:[%s1 + $0x1ed8] sm:$0xff]
        %v2590 = vld [vmem:[%s1 + $0x1ee0] sm:$0xff]
        %v2591 = vld [vmem:[%s1 + $0x1ee8] sm:$0xff]
        %v2592 = vld [vmem:[%s1 + $0x1ef0] sm:$0xff]
        %v2593 = vld [vmem:[%s1 + $0x1ef8] sm:$0xff]
        %v2594 = vld [vmem:[%s1 + $0x1f00] sm:$0xff]
        %v2595 = vld [vmem:[%s1 + $0x1f08] sm:$0xff]
        %v2596 = vld [vmem:[%s1 + $0x1f10] sm:$0xff]
        %v2597 = vld [vmem:[%s1 + $0x1f18] sm:$0xff]
        %v2598 = vld [vmem:[%s1 + $0x1f20] sm:$0xff]
        %v2599 = vld [vmem:[%s1 + $0x1f28] sm:$0xff]
        %v2600 = vld [vmem:[%s1 + $0x1f30] sm:$0xff]
        %v2601 = vld [vmem:[%s1 + $0x1f38] sm:$0xff]
        %v2602 = vld [vmem:[%s1 + $0x1f40] sm:$0xff]
        %v2603 = vld [vmem:[%s1 + $0x1f48] sm:$0xff]
        %v2604 = vld [vmem:[%s1 + $0x1f50] sm:$0xff]
        %v2605 = vld [vmem:[%s1 + $0x1f58] sm:$0xff]
        %v2606 = vld [vmem:[%s1 + $0x1f60] sm:$0xff]
        %v2607 = vld [vmem:[%s1 + $0x1f68] sm:$0xff]
        %v2608 = vld [vmem:[%s1 + $0x1f70] sm:$0xff]
        %v2609 = vld [vmem:[%s1 + $0x1f78] sm:$0xff]
        %v2610 = vld [vmem:[%s1 + $0x1f80] sm:$0xff]
        %v2611 = vld [vmem:[%s1 + $0x1f88] sm:$0xff]
        %v2612 = vld [vmem:[%s1 + $0x1f90] sm:$0xff]
        %v2613 = vld [vmem:[%s1 + $0x1f98] sm:$0xff]
        %v2614 = vld [vmem:[%s1 + $0x1fa0] sm:$0xff]
        %v2615 = vld [vmem:[%s1 + $0x1fa8] sm:$0xff]
        %v2616 = vld [vmem:[%s1 + $0x1fb0] sm:$0xff]
        %v2617 = vld [vmem:[%s1 + $0x1fb8] sm:$0xff]
        %v2618 = vld [vmem:[%s1 + $0x1fc0] sm:$0xff]
        %v2619 = vld [vmem:[%s1 + $0x1fc8] sm:$0xff]
        %v2620 = vld [vmem:[%s1 + $0x1fd0] sm:$0xff]
        %v2621 = vld [vmem:[%s1 + $0x1fd8] sm:$0xff]
        %v2622 = vld [vmem:[%s1 + $0x1fe0] sm:$0xff]
        %v2623 = vld [vmem:[%s1 + $0x1fe8] sm:$0xff]
        %v2624 = vld [vmem:[%s1 + $0x1ff0] sm:$0xff]
        %v2625 = vld [vmem:[%s1 + $0x1ff8] sm:$0xff]
        %v2626 = vld [vmem:[%s1 + $0x2000] sm:$0xff]
        %v2627 = vld [vmem:[%s1 + $0x2008] sm:$0xff]
        %v2628 = vld [vmem:[%s1 + $0x2010] sm:$0xff]
        %v2629 = vld [vmem:[%s1 + $0x2018] sm:$0xff]
        %v2630 = vld [vmem:[%s1 + $0x2020] sm:$0xff]
        %v2631 = vld [vmem:[%s1 + $0x2028] sm:$0xff]
        %v2632 = vld [vmem:[%s1 + $0x2030] sm:$0xff]
        %v2633 = vld [vmem:[%s1 + $0x2038] sm:$0xff]
        %v2634 = vld [vmem:[%s1 + $0x2040] sm:$0xff]
        %v2635 = vld [vmem:[%s1 + $0x2048] sm:$0xff]
        %v2636 = vld [vmem:[%s1 + $0x2050] sm:$0xff]
        %v2637 = vld [vmem:[%s1 + $0x2058] sm:$0xff]
        %v2638 = vld [vmem:[%s1 + $0x2060] sm:$0xff]
        %v2639 = vld [vmem:[%s1 + $0x2068] sm:$0xff]
        %v2640 = vld [vmem:[%s1 + $0x2070] sm:$0xff]
        %v2641 = vld [vmem:[%s1 + $0x2078] sm:$0xff]
        %v2642 = vld [vmem:[%s1 + $0x2080] sm:$0xff]
        %v2643 = vld [vmem:[%s1 + $0x2088] sm:$0xff]
        %v2644 = vld [vmem:[%s1 + $0x2090] sm:$0xff]
        %v2645 = vld [vmem:[%s1 + $0x2098] sm:$0xff]
        %v2646 = vld [vmem:[%s1 + $0x20a0] sm:$0xff]
        %v2647 = vld [vmem:[%s1 + $0x20a8] sm:$0xff]
        %v2648 = vld [vmem:[%s1 + $0x20b0] sm:$0xff]
        %v2649 = vld [vmem:[%s1 + $0x20b8] sm:$0xff]
        %v2650 = vld [vmem:[%s1 + $0x20c0] sm:$0xff]
        %v2651 = vld [vmem:[%s1 + $0x20c8] sm:$0xff]
        %v2652 = vld [vmem:[%s1 + $0x20d0] sm:$0xff]
        %v2653 = vld [vmem:[%s1 + $0x20d8] sm:$0xff]
        %v2654 = vld [vmem:[%s1 + $0x20e0] sm:$0xff]
        %v2655 = vld [vmem:[%s1 + $0x20e8] sm:$0xff]
        %v2656 = vld [vmem:[%s1 + $0x20f0] sm:$0xff]
        %v2657 = vld [vmem:[%s1 + $0x20f8] sm:$0xff]
        %v2658 = vld [vmem:[%s1 + $0x2100] sm:$0xff]
        %v2659 = vld [vmem:[%s1 + $0x2108] sm:$0xff]
        %v2660 = vld [vmem:[%s1 + $0x2110] sm:$0xff]
        %v2661 = vld [vmem:[%s1 + $0x2118] sm:$0xff]
        %v2662 = vld [vmem:[%s1 + $0x2120] sm:$0xff]
        %v2663 = vld [vmem:[%s1 + $0x2128] sm:$0xff]
        %v2664 = vld [vmem:[%s1 + $0x2130] sm:$0xff]
        %v2665 = vld [vmem:[%s1 + $0x2138] sm:$0xff]
        %v2666 = vld [vmem:[%s1 + $0x2140] sm:$0xff]
        %v2667 = vld [vmem:[%s1 + $0x2148] sm:$0xff]
        %v2668 = vld [vmem:[%s1 + $0x2150] sm:$0xff]
        %v2669 = vld [vmem:[%s1 + $0x2158] sm:$0xff]
        %v2670 = vld [vmem:[%s1 + $0x2160] sm:$0xff]
        %v2671 = vld [vmem:[%s1 + $0x2168] sm:$0xff]
        %v2672 = vld [vmem:[%s1 + $0x2170] sm:$0xff]
        %v2673 = vld [vmem:[%s1 + $0x2178] sm:$0xff]
        %v2674 = vld [vmem:[%s1 + $0x2180] sm:$0xff]
        %v2675 = vld [vmem:[%s1 + $0x2188] sm:$0xff]
        %v2676 = vld [vmem:[%s1 + $0x2190] sm:$0xff]
        %v2677 = vld [vmem:[%s1 + $0x2198] sm:$0xff]
        %v2678 = vld [vmem:[%s1 + $0x21a0] sm:$0xff]
        %v2679 = vld [vmem:[%s1 + $0x21a8] sm:$0xff]
        %v2680 = vld [vmem:[%s1 + $0x21b0] sm:$0xff]
        %v2681 = vld [vmem:[%s1 + $0x21b8] sm:$0xff]
        %v2682 = vld [vmem:[%s1 + $0x21c0] sm:$0xff]
        %v2683 = vld [vmem:[%s1 + $0x21c8] sm:$0xff]
        %v2684 = vld [vmem:[%s1 + $0x21d0] sm:$0xff]
        %v2685 = vld [vmem:[%s1 + $0x21d8] sm:$0xff]
        %v2686 = vld [vmem:[%s1 + $0x21e0] sm:$0xff]
        %v2687 = vld [vmem:[%s1 + $0x21e8] sm:$0xff]
        %v2688 = vld [vmem:[%s1 + $0x21f0] sm:$0xff]
        %v2689 = vld [vmem:[%s1 + $0x21f8] sm:$0xff]
        %v2690 = vld [vmem:[%s1 + $0x2200] sm:$0xff]
        %v2691 = vld [vmem:[%s1 + $0x2208] sm:$0xff]
        %v2692 = vld [vmem:[%s1 + $0x2210] sm:$0xff]
        %v2693 = vld [vmem:[%s1 + $0x2218] sm:$0xff]
        %v2694 = vld [vmem:[%s1 + $0x2220] sm:$0xff]
        %v2695 = vld [vmem:[%s1 + $0x2228] sm:$0xff]
        %v2696 = vld [vmem:[%s1 + $0x2230] sm:$0xff]
        %v2697 = vld [vmem:[%s1 + $0x2238] sm:$0xff]
        %v2698 = vld [vmem:[%s1 + $0x2240] sm:$0xff]
        %v2699 = vld [vmem:[%s1 + $0x2248] sm:$0xff]
        %v2700 = vld [vmem:[%s1 + $0x2250] sm:$0xff]
        %v2701 = vld [vmem:[%s1 + $0x2258] sm:$0xff]
        %v2702 = vld [vmem:[%s1 + $0x2260] sm:$0xff]
        %v2703 = vld [vmem:[%s1 + $0x2268] sm:$0xff]
        %v2704 = vld [vmem:[%s1 + $0x2270] sm:$0xff]
        %v2705 = vld [vmem:[%s1 + $0x2278] sm:$0xff]
        %v2706 = vld [vmem:[%s1 + $0x2280] sm:$0xff]
        %v2707 = vld [vmem:[%s1 + $0x2288] sm:$0xff]
        %v2708 = vld [vmem:[%s1 + $0x2290] sm:$0xff]
        %v2709 = vld [vmem:[%s1 + $0x2298] sm:$0xff]
        %v2710 = vld [vmem:[%s1 + $0x22a0] sm:$0xff]
        %v2711 = vld [vmem:[%s1 + $0x22a8] sm:$0xff]
        %v2712 = vld [vmem:[%s1 + $0x22b0] sm:$0xff]
        %v2713 = vld [vmem:[%s1 + $0x22b8] sm:$0xff]
        %v2714 = vld [vmem:[%s1 + $0x22c0] sm:$0xff]
        %v2715 = vld [vmem:[%s1 + $0x22c8] sm:$0xff]
        %v2716 = vld [vmem:[%s1 + $0x22d0] sm:$0xff]
        %v2717 = vld [vmem:[%s1 + $0x22d8] sm:$0xff]
        %v2718 = vld [vmem:[%s1 + $0x22e0] sm:$0xff]
        %v2719 = vld [vmem:[%s1 + $0x22e8] sm:$0xff]
        %v2720 = vld [vmem:[%s1 + $0x22f0] sm:$0xff]
        %v2721 = vld [vmem:[%s1 + $0x22f8] sm:$0xff]
        %v2722 = vld [vmem:[%s1 + $0x2300] sm:$0xff]
        %v2723 = vld [vmem:[%s1 + $0x2308] sm:$0xff]
        %v2724 = vld [vmem:[%s1 + $0x2310] sm:$0xff]
        %v2725 = vld [vmem:[%s1 + $0x2318] sm:$0xff]
        %v2726 = vld [vmem:[%s1 + $0x2320] sm:$0xff]
        %v2727 = vld [vmem:[%s1 + $0x2328] sm:$0xff]
        %v2728 = vld [vmem:[%s1 + $0x2330] sm:$0xff]
        %v2729 = vld [vmem:[%s1 + $0x2338] sm:$0xff]
        %v2730 = vld [vmem:[%s1 + $0x2340] sm:$0xff]
        %v2731 = vld [vmem:[%s1 + $0x2348] sm:$0xff]
        %v2732 = vld [vmem:[%s1 + $0x2350] sm:$0xff]
        %v2733 = vld [vmem:[%s1 + $0x2358] sm:$0xff]
        %v2734 = vld [vmem:[%s1 + $0x2360] sm:$0xff]
        %v2735 = vld [vmem:[%s1 + $0x2368] sm:$0xff]
        %v2736 = vld [vmem:[%s1 + $0x2370] sm:$0xff]
        %v2737 = vld [vmem:[%s1 + $0x2378] sm:$0xff]
        %v2738 = vld [vmem:[%s1 + $0x2380] sm:$0xff]
        %v2739 = vld [vmem:[%s1 + $0x2388] sm:$0xff]
        %v2740 = vld [vmem:[%s1 + $0x2390] sm:$0xff]
        %v2741 = vld [vmem:[%s1 + $0x2398] sm:$0xff]
        %v2742 = vld [vmem:[%s1 + $0x23a0] sm:$0xff]
        %v2743 = vld [vmem:[%s1 + $0x23a8] sm:$0xff]
        %v2744 = vld [vmem:[%s1 + $0x23b0] sm:$0xff]
        %v2745 = vld [vmem:[%s1 + $0x23b8] sm:$0xff]
        %v2746 = vld [vmem:[%s1 + $0x23c0] sm:$0xff]
        %v2747 = vld [vmem:[%s1 + $0x23c8] sm:$0xff]
        %v2748 = vld [vmem:[%s1 + $0x23d0] sm:$0xff]
        %v2749 = vld [vmem:[%s1 + $0x23d8] sm:$0xff]
        %v2750 = vld [vmem:[%s1 + $0x23e0] sm:$0xff]
        %v2751 = vld [vmem:[%s1 + $0x23e8] sm:$0xff]
        %v2752 = vld [vmem:[%s1 + $0x23f0] sm:$0xff]
        %v2753 = vld [vmem:[%s1 + $0x23f8] sm:$0xff]
        %v2754 = vld [vmem:[%s1 + $0x2400] sm:$0xff]
        %v2755 = vld [vmem:[%s1 + $0x2408] sm:$0xff]
        %v2756 = vld [vmem:[%s1 + $0x2410] sm:$0xff]
        %v2757 = vld [vmem:[%s1 + $0x2418] sm:$0xff]
        %v2758 = vld [vmem:[%s1 + $0x2420] sm:$0xff]
        %v2759 = vld [vmem:[%s1 + $0x2428] sm:$0xff]
        %v2760 = vld [vmem:[%s1 + $0x2430] sm:$0xff]
        %v2761 = vld [vmem:[%s1 + $0x2438] sm:$0xff]
        %v2762 = vld [vmem:[%s1 + $0x2440] sm:$0xff]
        %v2763 = vld [vmem:[%s1 + $0x2448] sm:$0xff]
        %v2764 = vld [vmem:[%s1 + $0x2450] sm:$0xff]
        %v2765 = vld [vmem:[%s1 + $0x2458] sm:$0xff]
        %v2766 = vld [vmem:[%s1 + $0x2460] sm:$0xff]
        %v2767 = vld [vmem:[%s1 + $0x2468] sm:$0xff]
        %v2768 = vld [vmem:[%s1 + $0x2470] sm:$0xff]
        %v2769 = vld [vmem:[%s1 + $0x2478] sm:$0xff]
        %v2770 = vld [vmem:[%s1 + $0x2480] sm:$0xff]
        %v2771 = vld [vmem:[%s1 + $0x2488] sm:$0xff]
        %v2772 = vld [vmem:[%s1 + $0x2490] sm:$0xff]
        %v2773 = vld [vmem:[%s1 + $0x2498] sm:$0xff]
        %v2774 = vld [vmem:[%s1 + $0x24a0] sm:$0xff]
        %v2775 = vld [vmem:[%s1 + $0x24a8] sm:$0xff]
        %v2776 = vld [vmem:[%s1 + $0x24b0] sm:$0xff]
        %v2777 = vld [vmem:[%s1 + $0x24b8] sm:$0xff]
        %v2778 = vld [vmem:[%s1 + $0x24c0] sm:$0xff]
        %v2779 = vld [vmem:[%s1 + $0x24c8] sm:$0xff]
        %v2780 = vld [vmem:[%s1 + $0x24d0] sm:$0xff]
        %v2781 = vld [vmem:[%s1 + $0x24d8] sm:$0xff]
        %v2782 = vld [vmem:[%s1 + $0x24e0] sm:$0xff]
        %v2783 = vld [vmem:[%s1 + $0x24e8] sm:$0xff]
        %v2784 = vld [vmem:[%s1 + $0x24f0] sm:$0xff]
        %v2785 = vld [vmem:[%s1 + $0x24f8] sm:$0xff]
        %v2786 = vld [vmem:[%s1 + $0x2500] sm:$0xff]
        %v2787 = vld [vmem:[%s1 + $0x2508] sm:$0xff]
        %v2788 = vld [vmem:[%s1 + $0x2510] sm:$0xff]
        %v2789 = vld [vmem:[%s1 + $0x2518] sm:$0xff]
        %v2790 = vld [vmem:[%s1 + $0x2520] sm:$0xff]
        %v2791 = vld [vmem:[%s1 + $0x2528] sm:$0xff]
        %v2792 = vld [vmem:[%s1 + $0x2530] sm:$0xff]
        %v2793 = vld [vmem:[%s1 + $0x2538] sm:$0xff]
        %v2794 = vld [vmem:[%s1 + $0x2540] sm:$0xff]
        %v2795 = vld [vmem:[%s1 + $0x2548] sm:$0xff]
        %v2796 = vld [vmem:[%s1 + $0x2550] sm:$0xff]
        %v2797 = vld [vmem:[%s1 + $0x2558] sm:$0xff]
        %v2798 = vld [vmem:[%s1 + $0x2560] sm:$0xff]
        %v2799 = vld [vmem:[%s1 + $0x2568] sm:$0xff]
        %v2800 = vld [vmem:[%s1 + $0x2570] sm:$0xff]
        %v2801 = vld [vmem:[%s1 + $0x2578] sm:$0xff]
        %v2802 = vld [vmem:[%s1 + $0x2580] sm:$0xff]
        %v2803 = vld [vmem:[%s1 + $0x2588] sm:$0xff]
        %v2804 = vld [vmem:[%s1 + $0x2590] sm:$0xff]
        %v2805 = vld [vmem:[%s1 + $0x2598] sm:$0xff]
        %v2806 = vld [vmem:[%s1 + $0x25a0] sm:$0xff]
        %v2807 = vld [vmem:[%s1 + $0x25a8] sm:$0xff]
        %v2808 = vld [vmem:[%s1 + $0x25b0] sm:$0xff]
        %v2809 = vld [vmem:[%s1 + $0x25b8] sm:$0xff]
        %v2810 = vld [vmem:[%s1 + $0x25c0] sm:$0xff]
        %v2811 = vld [vmem:[%s1 + $0x25c8] sm:$0xff]
        %v2812 = vld [vmem:[%s1 + $0x25d0] sm:$0xff]
        %v2813 = vld [vmem:[%s1 + $0x25d8] sm:$0xff]
        %v2814 = vld [vmem:[%s1 + $0x25e0] sm:$0xff]
        %v2815 = vld [vmem:[%s1 + $0x25e8] sm:$0xff]
        %v2816 = vld [vmem:[%s1 + $0x25f0] sm:$0xff]
        %v2817 = vld [vmem:[%s1 + $0x25f8] sm:$0xff]
        %v2818 = vld [vmem:[%s1 + $0x2600] sm:$0xff]
        %v2819 = vld [vmem:[%s1 + $0x2608] sm:$0xff]
        %v2820 = vld [vmem:[%s1 + $0x2610] sm:$0xff]
        %v2821 = vld [vmem:[%s1 + $0x2618] sm:$0xff]
        %v2822 = vld [vmem:[%s1 + $0x2620] sm:$0xff]
        %v2823 = vld [vmem:[%s1 + $0x2628] sm:$0xff]
        %v2824 = vld [vmem:[%s1 + $0x2630] sm:$0xff]
        %v2825 = vld [vmem:[%s1 + $0x2638] sm:$0xff]
        %v2826 = vld [vmem:[%s1 + $0x2640] sm:$0xff]
        %v2827 = vld [vmem:[%s1 + $0x2648] sm:$0xff]
        %v2828 = vld [vmem:[%s1 + $0x2650] sm:$0xff]
        %v2829 = vld [vmem:[%s1 + $0x2658] sm:$0xff]
        %v2830 = vld [vmem:[%s1 + $0x2660] sm:$0xff]
        %v2831 = vld [vmem:[%s1 + $0x2668] sm:$0xff]
        %v2832 = vld [vmem:[%s1 + $0x2670] sm:$0xff]
        %v2833 = vld [vmem:[%s1 + $0x2678] sm:$0xff]
        %v2834 = vld [vmem:[%s1 + $0x2680] sm:$0xff]
        %v2835 = vld [vmem:[%s1 + $0x2688] sm:$0xff]
        %v2836 = vld [vmem:[%s1 + $0x2690] sm:$0xff]
        %v2837 = vld [vmem:[%s1 + $0x2698] sm:$0xff]
        %v2838 = vld [vmem:[%s1 + $0x26a0] sm:$0xff]
        %v2839 = vld [vmem:[%s1 + $0x26a8] sm:$0xff]
        %v2840 = vld [vmem:[%s1 + $0x26b0] sm:$0xff]
        %v2841 = vld [vmem:[%s1 + $0x26b8] sm:$0xff]
        %v2842 = vld [vmem:[%s1 + $0x26c0] sm:$0xff]
        %v2843 = vld [vmem:[%s1 + $0x26c8] sm:$0xff]
        %v2844 = vld [vmem:[%s1 + $0x26d0] sm:$0xff]
        %v2845 = vld [vmem:[%s1 + $0x26d8] sm:$0xff]
        %v2846 = vld [vmem:[%s1 + $0x26e0] sm:$0xff]
        %v2847 = vld [vmem:[%s1 + $0x26e8] sm:$0xff]
        %v2848 = vld [vmem:[%s1 + $0x26f0] sm:$0xff]
        %v2849 = vld [vmem:[%s1 + $0x26f8] sm:$0xff]
        %v2850 = vld [vmem:[%s1 + $0x2700] sm:$0xff]
        %v2851 = vld [vmem:[%s1 + $0x2708] sm:$0xff]
        %v2852 = vld [vmem:[%s1 + $0x2710] sm:$0xff]
        %v2853 = vld [vmem:[%s1 + $0x2718] sm:$0xff]
        %v2854 = vld [vmem:[%s1 + $0x2720] sm:$0xff]
        %v2855 = vld [vmem:[%s1 + $0x2728] sm:$0xff]
        %v2856 = vld [vmem:[%s1 + $0x2730] sm:$0xff]
        %v2857 = vld [vmem:[%s1 + $0x2738] sm:$0xff]
        %v2858 = vld [vmem:[%s1 + $0x2740] sm:$0xff]
        %v2859 = vld [vmem:[%s1 + $0x2748] sm:$0xff]
        %v2860 = vld [vmem:[%s1 + $0x2750] sm:$0xff]
        %v2861 = vld [vmem:[%s1 + $0x2758] sm:$0xff]
        %v2862 = vld [vmem:[%s1 + $0x2760] sm:$0xff]
        %v2863 = vld [vmem:[%s1 + $0x2768] sm:$0xff]
        %v2864 = vld [vmem:[%s1 + $0x2770] sm:$0xff]
        %v2865 = vld [vmem:[%s1 + $0x2778] sm:$0xff]
        %v2866 = vld [vmem:[%s1 + $0x2780] sm:$0xff]
        %v2867 = vld [vmem:[%s1 + $0x2788] sm:$0xff]
        %v2868 = vld [vmem:[%s1 + $0x2790] sm:$0xff]
        %v2869 = vld [vmem:[%s1 + $0x2798] sm:$0xff]
        %v2870 = vld [vmem:[%s1 + $0x27a0] sm:$0xff]
        %v2871 = vld [vmem:[%s1 + $0x27a8] sm:$0xff]
        %v2872 = vld [vmem:[%s1 + $0x27b0] sm:$0xff]
        %v2873 = vld [vmem:[%s1 + $0x27b8] sm:$0xff]
        %v2874 = vld [vmem:[%s1 + $0x27c0] sm:$0xff]
        %v2875 = vld [vmem:[%s1 + $0x27c8] sm:$0xff]
        %v2876 = vld [vmem:[%s1 + $0x27d0] sm:$0xff]
        %v2877 = vld [vmem:[%s1 + $0x27d8] sm:$0xff]
        %v2878 = vld [vmem:[%s1 + $0x27e0] sm:$0xff]
        %v2879 = vld [vmem:[%s1 + $0x27e8] sm:$0xff]
        %v2880 = vld [vmem:[%s1 + $0x27f0] sm:$0xff]
        %v2881 = vld [vmem:[%s1 + $0x27f8] sm:$0xff]
        %v2882 = vld [vmem:[%s1 + $0x2800] sm:$0xff]
        %v2883 = vld [vmem:[%s1 + $0x2808] sm:$0xff]
        %v2884 = vld [vmem:[%s1 + $0x2810] sm:$0xff]
        %v2885 = vld [vmem:[%s1 + $0x2818] sm:$0xff]
        %v2886 = vld [vmem:[%s1 + $0x2820] sm:$0xff]
        %v2887 = vld [vmem:[%s1 + $0x2828] sm:$0xff]
        %v2888 = vld [vmem:[%s1 + $0x2830] sm:$0xff]
        %v2889 = vld [vmem:[%s1 + $0x2838] sm:$0xff]
        %v2890 = vld [vmem:[%s1 + $0x2840] sm:$0xff]
        %v2891 = vld [vmem:[%s1 + $0x2848] sm:$0xff]
        %v2892 = vld [vmem:[%s1 + $0x2850] sm:$0xff]
        %v2893 = vld [vmem:[%s1 + $0x2858] sm:$0xff]
        %v2894 = vld [vmem:[%s1 + $0x2860] sm:$0xff]
        %v2895 = vld [vmem:[%s1 + $0x2868] sm:$0xff]
        %v2896 = vld [vmem:[%s1 + $0x2870] sm:$0xff]
        %v2897 = vld [vmem:[%s1 + $0x2878] sm:$0xff]
        %v2898 = vld [vmem:[%s1 + $0x2880] sm:$0xff]
        %v2899 = vld [vmem:[%s1 + $0x2888] sm:$0xff]
        %v2900 = vld [vmem:[%s1 + $0x2890] sm:$0xff]
        %v2901 = vld [vmem:[%s1 + $0x2898] sm:$0xff]
        %v2902 = vld [vmem:[%s1 + $0x28a0] sm:$0xff]
        %v2903 = vld [vmem:[%s1 + $0x28a8] sm:$0xff]
        %v2904 = vld [vmem:[%s1 + $0x28b0] sm:$0xff]
        %v2905 = vld [vmem:[%s1 + $0x28b8] sm:$0xff]
        %v2906 = vld [vmem:[%s1 + $0x28c0] sm:$0xff]
        %v2907 = vld [vmem:[%s1 + $0x28c8] sm:$0xff]
        %v2908 = vld [vmem:[%s1 + $0x28d0] sm:$0xff]
        %v2909 = vld [vmem:[%s1 + $0x28d8] sm:$0xff]
        %v2910 = vld [vmem:[%s1 + $0x28e0] sm:$0xff]
        %v2911 = vld [vmem:[%s1 + $0x28e8] sm:$0xff]
        %v2912 = vld [vmem:[%s1 + $0x28f0] sm:$0xff]
        %v2913 = vld [vmem:[%s1 + $0x28f8] sm:$0xff]
        %v2914 = vld [vmem:[%s1 + $0x2900] sm:$0xff]
        %v2915 = vld [vmem:[%s1 + $0x2908] sm:$0xff]
        %v2916 = vld [vmem:[%s1 + $0x2910] sm:$0xff]
        %v2917 = vld [vmem:[%s1 + $0x2918] sm:$0xff]
        %v2918 = vld [vmem:[%s1 + $0x2920] sm:$0xff]
        %v2919 = vld [vmem:[%s1 + $0x2928] sm:$0xff]
        %v2920 = vld [vmem:[%s1 + $0x2930] sm:$0xff]
        %v2921 = vld [vmem:[%s1 + $0x2938] sm:$0xff]
        %v2922 = vld [vmem:[%s1 + $0x2940] sm:$0xff]
        %v2923 = vld [vmem:[%s1 + $0x2948] sm:$0xff]
        %v2924 = vld [vmem:[%s1 + $0x2950] sm:$0xff]
        %v2925 = vld [vmem:[%s1 + $0x2958] sm:$0xff]
        %v2926 = vld [vmem:[%s1 + $0x2960] sm:$0xff]
        %v2927 = vld [vmem:[%s1 + $0x2968] sm:$0xff]
        %v2928 = vld [vmem:[%s1 + $0x2970] sm:$0xff]
        %v2929 = vld [vmem:[%s1 + $0x2978] sm:$0xff]
        %v2930 = vld [vmem:[%s1 + $0x2980] sm:$0xff]
        %v2931 = vld [vmem:[%s1 + $0x2988] sm:$0xff]
        %v2932 = vld [vmem:[%s1 + $0x2990] sm:$0xff]
        %v2933 = vld [vmem:[%s1 + $0x2998] sm:$0xff]
        %v2934 = vld [vmem:[%s1 + $0x29a0] sm:$0xff]
        %v2935 = vld [vmem:[%s1 + $0x29a8] sm:$0xff]
        %v2936 = vld [vmem:[%s1 + $0x29b0] sm:$0xff]
        %v2937 = vld [vmem:[%s1 + $0x29b8] sm:$0xff]
        %v2938 = vld [vmem:[%s1 + $0x29c0] sm:$0xff]
        %v2939 = vld [vmem:[%s1 + $0x29c8] sm:$0xff]
        %v2940 = vld [vmem:[%s1 + $0x29d0] sm:$0xff]
        %v2941 = vld [vmem:[%s1 + $0x29d8] sm:$0xff]
        %v2942 = vld [vmem:[%s1 + $0x29e0] sm:$0xff]
        %v2943 = vld [vmem:[%s1 + $0x29e8] sm:$0xff]
        %v2944 = vld [vmem:[%s1 + $0x29f0] sm:$0xff]
        %v2945 = vld [vmem:[%s1 + $0x29f8] sm:$0xff]
        %v2946 = vld [vmem:[%s1 + $0x2a00] sm:$0xff]
        %v2947 = vld [vmem:[%s1 + $0x2a08] sm:$0xff]
        %v2948 = vld [vmem:[%s1 + $0x2a10] sm:$0xff]
        %v2949 = vld [vmem:[%s1 + $0x2a18] sm:$0xff]
        %v2950 = vld [vmem:[%s1 + $0x2a20] sm:$0xff]
        %v2951 = vld [vmem:[%s1 + $0x2a28] sm:$0xff]
        %v2952 = vld [vmem:[%s1 + $0x2a30] sm:$0xff]
        %v2953 = vld [vmem:[%s1 + $0x2a38] sm:$0xff]
        %v2954 = vld [vmem:[%s1 + $0x2a40] sm:$0xff]
        %v2955 = vld [vmem:[%s1 + $0x2a48] sm:$0xff]
        %v2956 = vld [vmem:[%s1 + $0x2a50] sm:$0xff]
        %v2957 = vld [vmem:[%s1 + $0x2a58] sm:$0xff]
        %v2958 = vld [vmem:[%s1 + $0x2a60] sm:$0xff]
        %v2959 = vld [vmem:[%s1 + $0x2a68] sm:$0xff]
        %v2960 = vld [vmem:[%s1 + $0x2a70] sm:$0xff]
        %v2961 = vld [vmem:[%s1 + $0x2a78] sm:$0xff]
        %v2962 = vld [vmem:[%s1 + $0x2a80] sm:$0xff]
        %v2963 = vld [vmem:[%s1 + $0x2a88] sm:$0xff]
        %v2964 = vld [vmem:[%s1 + $0x2a90] sm:$0xff]
        %v2965 = vld [vmem:[%s1 + $0x2a98] sm:$0xff]
        %v2966 = vld [vmem:[%s1 + $0x2aa0] sm:$0xff]
        %v2967 = vld [vmem:[%s1 + $0x2aa8] sm:$0xff]
        %v2968 = vld [vmem:[%s1 + $0x2ab0] sm:$0xff]
        %v2969 = vld [vmem:[%s1 + $0x2ab8] sm:$0xff]
        %v2970 = vld [vmem:[%s1 + $0x2ac0] sm:$0xff]
        %v2971 = vld [vmem:[%s1 + $0x2ac8] sm:$0xff]
        %v2972 = vld [vmem:[%s1 + $0x2ad0] sm:$0xff]
        %v2973 = vld [vmem:[%s1 + $0x2ad8] sm:$0xff]
        %v2974 = vld [vmem:[%s1 + $0x2ae0] sm:$0xff]
        %v2975 = vld [vmem:[%s1 + $0x2ae8] sm:$0xff]
        %v2976 = vld [vmem:[%s1 + $0x2af0] sm:$0xff]
        %v2977 = vld [vmem:[%s1 + $0x2af8] sm:$0xff]
        %v2978 = vld [vmem:[%s1 + $0x2b00] sm:$0xff]
        %v2979 = vld [vmem:[%s1 + $0x2b08] sm:$0xff]
        %v2980 = vld [vmem:[%s1 + $0x2b10] sm:$0xff]
        %v2981 = vld [vmem:[%s1 + $0x2b18] sm:$0xff]
        %v2982 = vld [vmem:[%s1 + $0x2b20] sm:$0xff]
        %v2983 = vld [vmem:[%s1 + $0x2b28] sm:$0xff]
        %v2984 = vld [vmem:[%s1 + $0x2b30] sm:$0xff]
        %v2985 = vld [vmem:[%s1 + $0x2b38] sm:$0xff]
        %v2986 = vld [vmem:[%s1 + $0x2b40] sm:$0xff]
        %v2987 = vld [vmem:[%s1 + $0x2b48] sm:$0xff]
        %v2988 = vld [vmem:[%s1 + $0x2b50] sm:$0xff]
        %v2989 = vld [vmem:[%s1 + $0x2b58] sm:$0xff]
        %v2990 = vld [vmem:[%s1 + $0x2b60] sm:$0xff]
        %v2991 = vld [vmem:[%s1 + $0x2b68] sm:$0xff]
        %v2992 = vld [vmem:[%s1 + $0x2b70] sm:$0xff]
        %v2993 = vld [vmem:[%s1 + $0x2b78] sm:$0xff]
        %v2994 = vld [vmem:[%s1 + $0x2b80] sm:$0xff]
        %v2995 = vld [vmem:[%s1 + $0x2b88] sm:$0xff]
        %v2996 = vld [vmem:[%s1 + $0x2b90] sm:$0xff]
        %v2997 = vld [vmem:[%s1 + $0x2b98] sm:$0xff]
        %v2998 = vld [vmem:[%s1 + $0x2ba0] sm:$0xff]
        %v2999 = vld [vmem:[%s1 + $0x2ba8] sm:$0xff]
        %v3000 = vld [vmem:[%s1 + $0x2bb0] sm:$0xff]
        %v3001 = vld [vmem:[%s1 + $0x2bb8] sm:$0xff]
        %v3002 = vld [vmem:[%s1 + $0x2bc0] sm:$0xff]
        %v3003 = vld [vmem:[%s1 + $0x2bc8] sm:$0xff]
        %v3004 = vld [vmem:[%s1 + $0x2bd0] sm:$0xff]
        %v3005 = vld [vmem:[%s1 + $0x2bd8] sm:$0xff]
        %v3006 = vld [vmem:[%s1 + $0x2be0] sm:$0xff]
        %v3007 = vld [vmem:[%s1 + $0x2be8] sm:$0xff]
        %v3008 = vld [vmem:[%s1 + $0x2bf0] sm:$0xff]
        %v3009 = vld [vmem:[%s1 + $0x2bf8] sm:$0xff]
        %v3010 = vld [vmem:[%s1 + $0x2c00] sm:$0xff]
        %v3011 = vld [vmem:[%s1 + $0x2c08] sm:$0xff]
        %v3012 = vld [vmem:[%s1 + $0x2c10] sm:$0xff]
        %v3013 = vld [vmem:[%s1 + $0x2c18] sm:$0xff]
        %v3014 = vld [vmem:[%s1 + $0x2c20] sm:$0xff]
        %v3015 = vld [vmem:[%s1 + $0x2c28] sm:$0xff]
        %v3016 = vld [vmem:[%s1 + $0x2c30] sm:$0xff]
        %v3017 = vld [vmem:[%s1 + $0x2c38] sm:$0xff]
        %v3018 = vld [vmem:[%s1 + $0x2c40] sm:$0xff]
        %v3019 = vld [vmem:[%s1 + $0x2c48] sm:$0xff]
        %v3020 = vld [vmem:[%s1 + $0x2c50] sm:$0xff]
        %v3021 = vld [vmem:[%s1 + $0x2c58] sm:$0xff]
        %v3022 = vld [vmem:[%s1 + $0x2c60] sm:$0xff]
        %v3023 = vld [vmem:[%s1 + $0x2c68] sm:$0xff]
        %v3024 = vld [vmem:[%s1 + $0x2c70] sm:$0xff]
        %v3025 = vld [vmem:[%s1 + $0x2c78] sm:$0xff]
        %v3026 = vld [vmem:[%s1 + $0x2c80] sm:$0xff]
        %v3027 = vld [vmem:[%s1 + $0x2c88] sm:$0xff]
        %v3028 = vld [vmem:[%s1 + $0x2c90] sm:$0xff]
        %v3029 = vld [vmem:[%s1 + $0x2c98] sm:$0xff]
        %v3030 = vld [vmem:[%s1 + $0x2ca0] sm:$0xff]
        %v3031 = vld [vmem:[%s1 + $0x2ca8] sm:$0xff]
        %v3032 = vld [vmem:[%s1 + $0x2cb0] sm:$0xff]
        %v3033 = vld [vmem:[%s1 + $0x2cb8] sm:$0xff]
        %v3034 = vld [vmem:[%s1 + $0x2cc0] sm:$0xff]
        %v3035 = vld [vmem:[%s1 + $0x2cc8] sm:$0xff]
        %v3036 = vld [vmem:[%s1 + $0x2cd0] sm:$0xff]
        %v3037 = vld [vmem:[%s1 + $0x2cd8] sm:$0xff]
        %v3038 = vld [vmem:[%s1 + $0x2ce0] sm:$0xff]
        %v3039 = vld [vmem:[%s1 + $0x2ce8] sm:$0xff]
        %v3040 = vld [vmem:[%s1 + $0x2cf0] sm:$0xff]
        %v3041 = vld [vmem:[%s1 + $0x2cf8] sm:$0xff]
        %v3042 = vld [vmem:[%s1 + $0x2d00] sm:$0xff]
        %v3043 = vld [vmem:[%s1 + $0x2d08] sm:$0xff]
        %v3044 = vld [vmem:[%s1 + $0x2d10] sm:$0xff]
        %v3045 = vld [vmem:[%s1 + $0x2d18] sm:$0xff]
        %v3046 = vld [vmem:[%s1 + $0x2d20] sm:$0xff]
        %v3047 = vld [vmem:[%s1 + $0x2d28] sm:$0xff]
        %v3048 = vld [vmem:[%s1 + $0x2d30] sm:$0xff]
        %v3049 = vld [vmem:[%s1 + $0x2d38] sm:$0xff]
        %v3050 = vld [vmem:[%s1 + $0x2d40] sm:$0xff]
        %v3051 = vld [vmem:[%s1 + $0x2d48] sm:$0xff]
        %v3052 = vld [vmem:[%s1 + $0x2d50] sm:$0xff]
        %v3053 = vld [vmem:[%s1 + $0x2d58] sm:$0xff]
        %v3054 = vld [vmem:[%s1 + $0x2d60] sm:$0xff]
        %v3055 = vld [vmem:[%s1 + $0x2d68] sm:$0xff]
        %v3056 = vld [vmem:[%s1 + $0x2d70] sm:$0xff]
        %v3057 = vld [vmem:[%s1 + $0x2d78] sm:$0xff]
        %v3058 = vld [vmem:[%s1 + $0x2d80] sm:$0xff]
        %v3059 = vld [vmem:[%s1 + $0x2d88] sm:$0xff]
        %v3060 = vld [vmem:[%s1 + $0x2d90] sm:$0xff]
        %v3061 = vld [vmem:[%s1 + $0x2d98] sm:$0xff]
        %v3062 = vld [vmem:[%s1 + $0x2da0] sm:$0xff]
        %v3063 = vld [vmem:[%s1 + $0x2da8] sm:$0xff]
        %v3064 = vld [vmem:[%s1 + $0x2db0] sm:$0xff]
        %v3065 = vld [vmem:[%s1 + $0x2db8] sm:$0xff]
        %v3066 = vld [vmem:[%s1 + $0x2dc0] sm:$0xff]
        %v3067 = vld [vmem:[%s1 + $0x2dc8] sm:$0xff]
        %v3068 = vld [vmem:[%s1 + $0x2dd0] sm:$0xff]
        %v3069 = vld [vmem:[%s1 + $0x2dd8] sm:$0xff]
        %v3070 = vld [vmem:[%s1 + $0x2de0] sm:$0xff]
        %v3071 = vld [vmem:[%s1 + $0x2de8] sm:$0xff]
        %v3072 = vld [vmem:[%s1 + $0x2df0] sm:$0xff]
        %v3073 = vld [vmem:[%s1 + $0x2df8] sm:$0xff]
        %v3074 = vld [vmem:[%s1 + $0x2e00] sm:$0xff]
        %v3075 = vld [vmem:[%s1 + $0x2e08] sm:$0xff]
        %v3076 = vld [vmem:[%s1 + $0x2e10] sm:$0xff]
        %v3077 = vld [vmem:[%s1 + $0x2e18] sm:$0xff]
        %v3078 = vld [vmem:[%s1 + $0x2e20] sm:$0xff]
        %v3079 = vld [vmem:[%s1 + $0x2e28] sm:$0xff]
        %v3080 = vld [vmem:[%s1 + $0x2e30] sm:$0xff]
        %v3081 = vld [vmem:[%s1 + $0x2e38] sm:$0xff]
        %v3082 = vld [vmem:[%s1 + $0x2e40] sm:$0xff]
        %v3083 = vld [vmem:[%s1 + $0x2e48] sm:$0xff]
        %v3084 = vld [vmem:[%s1 + $0x2e50] sm:$0xff]
        %v3085 = vld [vmem:[%s1 + $0x2e58] sm:$0xff]
        %v3086 = vld [vmem:[%s1 + $0x2e60] sm:$0xff]
        %v3087 = vld [vmem:[%s1 + $0x2e68] sm:$0xff]
        %v3088 = vld [vmem:[%s1 + $0x2e70] sm:$0xff]
        %v3089 = vld [vmem:[%s1 + $0x2e78] sm:$0xff]
        %v3090 = vld [vmem:[%s1 + $0x2e80] sm:$0xff]
        %v3091 = vld [vmem:[%s1 + $0x2e88] sm:$0xff]
        %v3092 = vld [vmem:[%s1 + $0x2e90] sm:$0xff]
        %v3093 = vld [vmem:[%s1 + $0x2e98] sm:$0xff]
        %v3094 = vld [vmem:[%s1 + $0x2ea0] sm:$0xff]
        %v3095 = vld [vmem:[%s1 + $0x2ea8] sm:$0xff]
        %v3096 = vld [vmem:[%s1 + $0x2eb0] sm:$0xff]
        %v3097 = vld [vmem:[%s1 + $0x2eb8] sm:$0xff]
        %v3098 = vld [vmem:[%s1 + $0x2ec0] sm:$0xff]
        %v3099 = vld [vmem:[%s1 + $0x2ec8] sm:$0xff]
        %v3100 = vld [vmem:[%s1 + $0x2ed0] sm:$0xff]
        %v3101 = vld [vmem:[%s1 + $0x2ed8] sm:$0xff]
        %v3102 = vld [vmem:[%s1 + $0x2ee0] sm:$0xff]
        %v3103 = vld [vmem:[%s1 + $0x2ee8] sm:$0xff]
        %v3104 = vld [vmem:[%s1 + $0x2ef0] sm:$0xff]
        %v3105 = vld [vmem:[%s1 + $0x2ef8] sm:$0xff]
        %v3106 = vld [vmem:[%s1 + $0x2f00] sm:$0xff]
        %v3107 = vld [vmem:[%s1 + $0x2f08] sm:$0xff]
        %v3108 = vld [vmem:[%s1 + $0x2f10] sm:$0xff]
        %v3109 = vld [vmem:[%s1 + $0x2f18] sm:$0xff]
        %v3110 = vld [vmem:[%s1 + $0x2f20] sm:$0xff]
        %v3111 = vld [vmem:[%s1 + $0x2f28] sm:$0xff]
        %v3112 = vld [vmem:[%s1 + $0x2f30] sm:$0xff]
        %v3113 = vld [vmem:[%s1 + $0x2f38] sm:$0xff]
        %v3114 = vld [vmem:[%s1 + $0x2f40] sm:$0xff]
        %v3115 = vld [vmem:[%s1 + $0x2f48] sm:$0xff]
        %v3116 = vld [vmem:[%s1 + $0x2f50] sm:$0xff]
        %v3117 = vld [vmem:[%s1 + $0x2f58] sm:$0xff]
        %v3118 = vld [vmem:[%s1 + $0x2f60] sm:$0xff]
        %v3119 = vld [vmem:[%s1 + $0x2f68] sm:$0xff]
        %v3120 = vld [vmem:[%s1 + $0x2f70] sm:$0xff]
        %v3121 = vld [vmem:[%s1 + $0x2f78] sm:$0xff]
        %v3122 = vld [vmem:[%s1 + $0x2f80] sm:$0xff]
        %v3123 = vld [vmem:[%s1 + $0x2f88] sm:$0xff]
        %v3124 = vld [vmem:[%s1 + $0x2f90] sm:$0xff]
        %v3125 = vld [vmem:[%s1 + $0x2f98] sm:$0xff]
        %v3126 = vld [vmem:[%s1 + $0x2fa0] sm:$0xff]
        %v3127 = vld [vmem:[%s1 + $0x2fa8] sm:$0xff]
        %v3128 = vld [vmem:[%s1 + $0x2fb0] sm:$0xff]
        %v3129 = vld [vmem:[%s1 + $0x2fb8] sm:$0xff]
        %v3130 = vld [vmem:[%s1 + $0x2fc0] sm:$0xff]
        %v3131 = vld [vmem:[%s1 + $0x2fc8] sm:$0xff]
        %v3132 = vld [vmem:[%s1 + $0x2fd0] sm:$0xff]
        %v3133 = vld [vmem:[%s1 + $0x2fd8] sm:$0xff]
        %v3134 = vld [vmem:[%s1 + $0x2fe0] sm:$0xff]
        %v3135 = vld [vmem:[%s1 + $0x2fe8] sm:$0xff]
        %v3136 = vld [vmem:[%s1 + $0x2ff0] sm:$0xff]
        %v3137 = vld [vmem:[%s1 + $0x2ff8] sm:$0xff]
        %v3138 = vld [vmem:[%s1 + $0x3000] sm:$0xff]
        %v3139 = vld [vmem:[%s1 + $0x3008] sm:$0xff]
        %v3140 = vld [vmem:[%s1 + $0x3010] sm:$0xff]
        %v3141 = vld [vmem:[%s1 + $0x3018] sm:$0xff]
        %v3142 = vld [vmem:[%s1 + $0x3020] sm:$0xff]
        %v3143 = vld [vmem:[%s1 + $0x3028] sm:$0xff]
        %v3144 = vld [vmem:[%s1 + $0x3030] sm:$0xff]
        %v3145 = vld [vmem:[%s1 + $0x3038] sm:$0xff]
        %v3146 = vld [vmem:[%s1 + $0x3040] sm:$0xff]
        %v3147 = vld [vmem:[%s1 + $0x3048] sm:$0xff]
        %v3148 = vld [vmem:[%s1 + $0x3050] sm:$0xff]
        %v3149 = vld [vmem:[%s1 + $0x3058] sm:$0xff]
        %v3150 = vld [vmem:[%s1 + $0x3060] sm:$0xff]
        %v3151 = vld [vmem:[%s1 + $0x3068] sm:$0xff]
        %v3152 = vld [vmem:[%s1 + $0x3070] sm:$0xff]
        %v3153 = vld [vmem:[%s1 + $0x3078] sm:$0xff]
        %v3154 = vld [vmem:[%s1 + $0x3080] sm:$0xff]
        %v3155 = vld [vmem:[%s1 + $0x3088] sm:$0xff]
        %v3156 = vld [vmem:[%s1 + $0x3090] sm:$0xff]
        %v3157 = vld [vmem:[%s1 + $0x3098] sm:$0xff]
        %v3158 = vld [vmem:[%s1 + $0x30a0] sm:$0xff]
        %v3159 = vld [vmem:[%s1 + $0x30a8] sm:$0xff]
        %v3160 = vld [vmem:[%s1 + $0x30b0] sm:$0xff]
        %v3161 = vld [vmem:[%s1 + $0x30b8] sm:$0xff]
        %v3162 = vld [vmem:[%s1 + $0x30c0] sm:$0xff]
        %v3163 = vld [vmem:[%s1 + $0x30c8] sm:$0xff]
        %v3164 = vld [vmem:[%s1 + $0x30d0] sm:$0xff]
        %v3165 = vld [vmem:[%s1 + $0x30d8] sm:$0xff]
        %v3166 = vld [vmem:[%s1 + $0x30e0] sm:$0xff]
        %v3167 = vld [vmem:[%s1 + $0x30e8] sm:$0xff]
        %v3168 = vld [vmem:[%s1 + $0x30f0] sm:$0xff]
        %v3169 = vld [vmem:[%s1 + $0x30f8] sm:$0xff]
        %v3170 = vld [vmem:[%s1 + $0x3100] sm:$0xff]
        %v3171 = vld [vmem:[%s1 + $0x3108] sm:$0xff]
        %v3172 = vld [vmem:[%s1 + $0x3110] sm:$0xff]
        %v3173 = vld [vmem:[%s1 + $0x3118] sm:$0xff]
        %v3174 = vld [vmem:[%s1 + $0x3120] sm:$0xff]
        %v3175 = vld [vmem:[%s1 + $0x3128] sm:$0xff]
        %v3176 = vld [vmem:[%s1 + $0x3130] sm:$0xff]
        %v3177 = vld [vmem:[%s1 + $0x3138] sm:$0xff]
        %v3178 = vld [vmem:[%s1 + $0x3140] sm:$0xff]
        %v3179 = vld [vmem:[%s1 + $0x3148] sm:$0xff]
        %v3180 = vld [vmem:[%s1 + $0x3150] sm:$0xff]
        %v3181 = vld [vmem:[%s1 + $0x3158] sm:$0xff]
        %v3182 = vld [vmem:[%s1 + $0x3160] sm:$0xff]
        %v3183 = vld [vmem:[%s1 + $0x3168] sm:$0xff]
        %v3184 = vld [vmem:[%s1 + $0x3170] sm:$0xff]
        %v3185 = vld [vmem:[%s1 + $0x3178] sm:$0xff]
        %v3186 = vld [vmem:[%s1 + $0x3180] sm:$0xff]
        %v3187 = vld [vmem:[%s1 + $0x3188] sm:$0xff]
        %v3188 = vld [vmem:[%s1 + $0x3190] sm:$0xff]
        %v3189 = vld [vmem:[%s1 + $0x3198] sm:$0xff]
        %v3190 = vld [vmem:[%s1 + $0x31a0] sm:$0xff]
        %v3191 = vld [vmem:[%s1 + $0x31a8] sm:$0xff]
        %v3192 = vld [vmem:[%s1 + $0x31b0] sm:$0xff]
        %v3193 = vld [vmem:[%s1 + $0x31b8] sm:$0xff]
        %v3194 = vld [vmem:[%s1 + $0x31c0] sm:$0xff]
        %v3195 = vld [vmem:[%s1 + $0x31c8] sm:$0xff]
        %v3196 = vld [vmem:[%s1 + $0x31d0] sm:$0xff]
        %v3197 = vld [vmem:[%s1 + $0x31d8] sm:$0xff]
        %v3198 = vld [vmem:[%s1 + $0x31e0] sm:$0xff]
        %v3199 = vld [vmem:[%s1 + $0x31e8] sm:$0xff]
        %v3200 = vld [vmem:[%s1 + $0x31f0] sm:$0xff]
        %v3201 = vld [vmem:[%s1 + $0x31f8] sm:$0xff]
        %v3202 = vld [vmem:[%s1 + $0x3200] sm:$0xff]
        %v3203 = vld [vmem:[%s1 + $0x3208] sm:$0xff]
        %v3204 = vld [vmem:[%s1 + $0x3210] sm:$0xff]
        %v3205 = vld [vmem:[%s1 + $0x3218] sm:$0xff]
        %v3206 = vld [vmem:[%s1 + $0x3220] sm:$0xff]
        %v3207 = vld [vmem:[%s1 + $0x3228] sm:$0xff]
        %v3208 = vld [vmem:[%s1 + $0x3230] sm:$0xff]
        %v3209 = vld [vmem:[%s1 + $0x3238] sm:$0xff]
        %v3210 = vld [vmem:[%s1 + $0x3240] sm:$0xff]
        %v3211 = vld [vmem:[%s1 + $0x3248] sm:$0xff]
        %v3212 = vld [vmem:[%s1 + $0x3250] sm:$0xff]
        %v3213 = vld [vmem:[%s1 + $0x3258] sm:$0xff]
        %v3214 = vld [vmem:[%s1 + $0x3260] sm:$0xff]
        %v3215 = vld [vmem:[%s1 + $0x3268] sm:$0xff]
        %v3216 = vld [vmem:[%s1 + $0x3270] sm:$0xff]
        %v3217 = vld [vmem:[%s1 + $0x3278] sm:$0xff]
        %v3218 = vld [vmem:[%s1 + $0x3280] sm:$0xff]
        %v3219 = vld [vmem:[%s1 + $0x3288] sm:$0xff]
        %v3220 = vld [vmem:[%s1 + $0x3290] sm:$0xff]
        %v3221 = vld [vmem:[%s1 + $0x3298] sm:$0xff]
        %v3222 = vld [vmem:[%s1 + $0x32a0] sm:$0xff]
        %v3223 = vld [vmem:[%s1 + $0x32a8] sm:$0xff]
        %v3224 = vld [vmem:[%s1 + $0x32b0] sm:$0xff]
        %v3225 = vld [vmem:[%s1 + $0x32b8] sm:$0xff]
        %v3226 = vld [vmem:[%s1 + $0x32c0] sm:$0xff]
        %v3227 = vld [vmem:[%s1 + $0x32c8] sm:$0xff]
        %v3228 = vld [vmem:[%s1 + $0x32d0] sm:$0xff]
        %v3229 = vld [vmem:[%s1 + $0x32d8] sm:$0xff]
        %v3230 = vld [vmem:[%s1 + $0x32e0] sm:$0xff]
        %v3231 = vld [vmem:[%s1 + $0x32e8] sm:$0xff]
        %v3232 = vld [vmem:[%s1 + $0x32f0] sm:$0xff]
        %v3233 = vld [vmem:[%s1 + $0x32f8] sm:$0xff]
        %v3234 = vld [vmem:[%s1 + $0x3300] sm:$0xff]
        %v3235 = vld [vmem:[%s1 + $0x3308] sm:$0xff]
        %v3236 = vld [vmem:[%s1 + $0x3310] sm:$0xff]
        %v3237 = vld [vmem:[%s1 + $0x3318] sm:$0xff]
        %v3238 = vld [vmem:[%s1 + $0x3320] sm:$0xff]
        %v3239 = vld [vmem:[%s1 + $0x3328] sm:$0xff]
        %v3240 = vld [vmem:[%s1 + $0x3330] sm:$0xff]
        %v3241 = vld [vmem:[%s1 + $0x3338] sm:$0xff]
        %v3242 = vld [vmem:[%s1 + $0x3340] sm:$0xff]
        %v3243 = vld [vmem:[%s1 + $0x3348] sm:$0xff]
        %v3244 = vld [vmem:[%s1 + $0x3350] sm:$0xff]
        %v3245 = vld [vmem:[%s1 + $0x3358] sm:$0xff]
        %v3246 = vld [vmem:[%s1 + $0x3360] sm:$0xff]
        %v3247 = vld [vmem:[%s1 + $0x3368] sm:$0xff]
        %v3248 = vld [vmem:[%s1 + $0x3370] sm:$0xff]
        %v3249 = vld [vmem:[%s1 + $0x3378] sm:$0xff]
        %v3250 = vld [vmem:[%s1 + $0x3380] sm:$0xff]
        %v3251 = vld [vmem:[%s1 + $0x3388] sm:$0xff]
        %v3252 = vld [vmem:[%s1 + $0x3390] sm:$0xff]
        %v3253 = vld [vmem:[%s1 + $0x3398] sm:$0xff]
        %v3254 = vld [vmem:[%s1 + $0x33a0] sm:$0xff]
        %v3255 = vld [vmem:[%s1 + $0x33a8] sm:$0xff]
        %v3256 = vld [vmem:[%s1 + $0x33b0] sm:$0xff]
        %v3257 = vld [vmem:[%s1 + $0x33b8] sm:$0xff]
        %v3258 = vld [vmem:[%s1 + $0x33c0] sm:$0xff]
        %v3259 = vld [vmem:[%s1 + $0x33c8] sm:$0xff]
        %v3260 = vld [vmem:[%s1 + $0x33d0] sm:$0xff]
        %v3261 = vld [vmem:[%s1 + $0x33d8] sm:$0xff]
        %v3262 = vld [vmem:[%s1 + $0x33e0] sm:$0xff]
        %v3263 = vld [vmem:[%s1 + $0x33e8] sm:$0xff]
        %v3264 = vld [vmem:[%s1 + $0x33f0] sm:$0xff]
        %v3265 = vld [vmem:[%s1 + $0x33f8] sm:$0xff]
        %v3266 = vld [vmem:[%s1 + $0x3400] sm:$0xff]
        %v3267 = vld [vmem:[%s1 + $0x3408] sm:$0xff]
        %v3268 = vld [vmem:[%s1 + $0x3410] sm:$0xff]
        %v3269 = vld [vmem:[%s1 + $0x3418] sm:$0xff]
        %v3270 = vld [vmem:[%s1 + $0x3420] sm:$0xff]
        %v3271 = vld [vmem:[%s1 + $0x3428] sm:$0xff]
        %v3272 = vld [vmem:[%s1 + $0x3430] sm:$0xff]
        %v3273 = vld [vmem:[%s1 + $0x3438] sm:$0xff]
        %v3274 = vld [vmem:[%s1 + $0x3440] sm:$0xff]
        %v3275 = vld [vmem:[%s1 + $0x3448] sm:$0xff]
        %v3276 = vld [vmem:[%s1 + $0x3450] sm:$0xff]
        %v3277 = vld [vmem:[%s1 + $0x3458] sm:$0xff]
        %v3278 = vld [vmem:[%s1 + $0x3460] sm:$0xff]
        %v3279 = vld [vmem:[%s1 + $0x3468] sm:$0xff]
        %v3280 = vld [vmem:[%s1 + $0x3470] sm:$0xff]
        %v3281 = vld [vmem:[%s1 + $0x3478] sm:$0xff]
        %v3282 = vld [vmem:[%s1 + $0x3480] sm:$0xff]
        %v3283 = vld [vmem:[%s1 + $0x3488] sm:$0xff]
        %v3284 = vld [vmem:[%s1 + $0x3490] sm:$0xff]
        %v3285 = vld [vmem:[%s1 + $0x3498] sm:$0xff]
        %v3286 = vld [vmem:[%s1 + $0x34a0] sm:$0xff]
        %v3287 = vld [vmem:[%s1 + $0x34a8] sm:$0xff]
        %v3288 = vld [vmem:[%s1 + $0x34b0] sm:$0xff]
        %v3289 = vld [vmem:[%s1 + $0x34b8] sm:$0xff]
        %v3290 = vld [vmem:[%s1 + $0x34c0] sm:$0xff]
        %v3291 = vld [vmem:[%s1 + $0x34c8] sm:$0xff]
        %v3292 = vld [vmem:[%s1 + $0x34d0] sm:$0xff]
        %v3293 = vld [vmem:[%s1 + $0x34d8] sm:$0xff]
        %v3294 = vld [vmem:[%s1 + $0x34e0] sm:$0xff]
        %v3295 = vld [vmem:[%s1 + $0x34e8] sm:$0xff]
        %v3296 = vld [vmem:[%s1 + $0x34f0] sm:$0xff]
        %v3297 = vld [vmem:[%s1 + $0x34f8] sm:$0xff]
        %v3298 = vld [vmem:[%s1 + $0x3500] sm:$0xff]
        %v3299 = vld [vmem:[%s1 + $0x3508] sm:$0xff]
        %v3300 = vld [vmem:[%s1 + $0x3510] sm:$0xff]
        %v3301 = vld [vmem:[%s1 + $0x3518] sm:$0xff]
        %v3302 = vld [vmem:[%s1 + $0x3520] sm:$0xff]
        %v3303 = vld [vmem:[%s1 + $0x3528] sm:$0xff]
        %v3304 = vld [vmem:[%s1 + $0x3530] sm:$0xff]
        %v3305 = vld [vmem:[%s1 + $0x3538] sm:$0xff]
        %v3306 = vld [vmem:[%s1 + $0x3540] sm:$0xff]
        %v3307 = vld [vmem:[%s1 + $0x3548] sm:$0xff]
        %v3308 = vld [vmem:[%s1 + $0x3550] sm:$0xff]
        %v3309 = vld [vmem:[%s1 + $0x3558] sm:$0xff]
        %v3310 = vld [vmem:[%s1 + $0x3560] sm:$0xff]
        %v3311 = vld [vmem:[%s1 + $0x3568] sm:$0xff]
        %v3312 = vld [vmem:[%s1 + $0x3570] sm:$0xff]
        %v3313 = vld [vmem:[%s1 + $0x3578] sm:$0xff]
        %v3314 = vld [vmem:[%s1 + $0x3580] sm:$0xff]
        %v3315 = vld [vmem:[%s1 + $0x3588] sm:$0xff]
        %v3316 = vld [vmem:[%s1 + $0x3590] sm:$0xff]
        %v3317 = vld [vmem:[%s1 + $0x3598] sm:$0xff]
        %v3318 = vld [vmem:[%s1 + $0x35a0] sm:$0xff]
        %v3319 = vld [vmem:[%s1 + $0x35a8] sm:$0xff]
        %v3320 = vld [vmem:[%s1 + $0x35b0] sm:$0xff]
        %v3321 = vld [vmem:[%s1 + $0x35b8] sm:$0xff]
        %v3322 = vld [vmem:[%s1 + $0x35c0] sm:$0xff]
        %v3323 = vld [vmem:[%s1 + $0x35c8] sm:$0xff]
        %v3324 = vld [vmem:[%s1 + $0x35d0] sm:$0xff]
        %v3325 = vld [vmem:[%s1 + $0x35d8] sm:$0xff]
        %v3326 = vld [vmem:[%s1 + $0x35e0] sm:$0xff]
        %v3327 = vld [vmem:[%s1 + $0x35e8] sm:$0xff]
        %v3328 = vld [vmem:[%s1 + $0x35f0] sm:$0xff]
        %v3329 = vld [vmem:[%s1 + $0x35f8] sm:$0xff]
        %v3330 = vld [vmem:[%s1 + $0x3600] sm:$0xff]
        %v3331 = vld [vmem:[%s1 + $0x3608] sm:$0xff]
        %v3332 = vld [vmem:[%s1 + $0x3610] sm:$0xff]
        %v3333 = vld [vmem:[%s1 + $0x3618] sm:$0xff]
        %v3334 = vld [vmem:[%s1 + $0x3620] sm:$0xff]
        %v3335 = vld [vmem:[%s1 + $0x3628] sm:$0xff]
        %v3336 = vld [vmem:[%s1 + $0x3630] sm:$0xff]
        %v3337 = vld [vmem:[%s1 + $0x3638] sm:$0xff]
        %v3338 = vld [vmem:[%s1 + $0x3640] sm:$0xff]
        %v3339 = vld [vmem:[%s1 + $0x3648] sm:$0xff]
        %v3340 = vld [vmem:[%s1 + $0x3650] sm:$0xff]
        %v3341 = vld [vmem:[%s1 + $0x3658] sm:$0xff]
        %v3342 = vld [vmem:[%s1 + $0x3660] sm:$0xff]
        %v3343 = vld [vmem:[%s1 + $0x3668] sm:$0xff]
        %v3344 = vld [vmem:[%s1 + $0x3670] sm:$0xff]
        %v3345 = vld [vmem:[%s1 + $0x3678] sm:$0xff]
        %v3346 = vld [vmem:[%s1 + $0x3680] sm:$0xff]
        %v3347 = vld [vmem:[%s1 + $0x3688] sm:$0xff]
        %v3348 = vld [vmem:[%s1 + $0x3690] sm:$0xff]
        %v3349 = vld [vmem:[%s1 + $0x3698] sm:$0xff]
        %v3350 = vld [vmem:[%s1 + $0x36a0] sm:$0xff]
        %v3351 = vld [vmem:[%s1 + $0x36a8] sm:$0xff]
        %v3352 = vld [vmem:[%s1 + $0x36b0] sm:$0xff]
        %v3353 = vld [vmem:[%s1 + $0x36b8] sm:$0xff]
        %v3354 = vld [vmem:[%s1 + $0x36c0] sm:$0xff]
        %v3355 = vld [vmem:[%s1 + $0x36c8] sm:$0xff]
        %v3356 = vld [vmem:[%s1 + $0x36d0] sm:$0xff]
        %v3357 = vld [vmem:[%s1 + $0x36d8] sm:$0xff]
        %v3358 = vld [vmem:[%s1 + $0x36e0] sm:$0xff]
        %v3359 = vld [vmem:[%s1 + $0x36e8] sm:$0xff]
        %v3360 = vld [vmem:[%s1 + $0x36f0] sm:$0xff]
        %v3361 = vld [vmem:[%s1 + $0x36f8] sm:$0xff]
        %v3362 = vld [vmem:[%s4] sm:$0x3]
        %v3364 = vlaneseq
        %v3365 = vshrl.u32 %v3364, 7
        %v3366 = vsub.s32 0, %v3365
        %v3367 = vrot.slane %v3362, %v3366
        %v3368 = vlaneseq
        %v3369 = vshrl.u32 %v3368, 7
        %v3370 = vsub.s32 1, %v3369
        %v3371 = vrot.slane %v3362, %v3370
        %3374 = vmatprep.subr.mxu0 %v1603
        %3375 = vmatpush1.msra.mxu0 %v1602
        %3376 = vmatprep.subr.mxu0 %v1605
        %3377 = vmatpush1.msra.mxu0 %v1604
        %3378 = vmatprep.subr.mxu0 %v1607
        %3379 = vmatpush1.msra.mxu0 %v1606
        %3380 = vmatprep.subr.mxu0 %v1609
        %3381 = vmatpush1.msra.mxu0 %v1608
        %3382 = vmatprep.subr.mxu0 %v1611
        %3383 = vmatpush1.msra.mxu0 %v1610
        %3384 = vmatprep.subr.mxu0 %v1613
        %3385 = vmatpush1.msra.mxu0 %v1612
        %3386 = vmatprep.subr.mxu0 %v1615
        %3387 = vmatpush1.msra.mxu0 %v1614
        %3388 = vmatprep.subr.mxu0 %v1617
        %3389 = vmatpush1.msra.mxu0 %v1616
        %3390 = vmatprep.subr.mxu0 %v1619
        %3391 = vmatpush1.msra.mxu0 %v1618
        %3392 = vmatprep.subr.mxu0 %v1621
        %3393 = vmatpush1.msra.mxu0 %v1620
        %3394 = vmatprep.subr.mxu0 %v1623
        %3395 = vmatpush1.msra.mxu0 %v1622
        %3396 = vmatprep.subr.mxu0 %v1625
        %3397 = vmatpush1.msra.mxu0 %v1624
        %3398 = vmatprep.subr.mxu0 %v1627
        %3399 = vmatpush1.msra.mxu0 %v1626
        %3400 = vmatprep.subr.mxu0 %v1629
        %3401 = vmatpush1.msra.mxu0 %v1628
        %3402 = vmatprep.subr.mxu0 %v1631
        %3403 = vmatpush1.msra.mxu0 %v1630
        %3404 = vmatprep.subr.mxu0 %v1633
        %3405 = vmatpush1.msra.mxu0 %v1632
        %3406 = vmatprep.subr.mxu0 %v1635
        %3407 = vmatpush1.msra.mxu0 %v1634
        %3408 = vmatprep.subr.mxu0 %v1637
        %3409 = vmatpush1.msra.mxu0 %v1636
        %3410 = vmatprep.subr.mxu0 %v1639
        %3411 = vmatpush1.msra.mxu0 %v1638
        %3412 = vmatprep.subr.mxu0 %v1641
        %3413 = vmatpush1.msra.mxu0 %v1640
        %3414 = vmatprep.subr.mxu0 %v1643
        %3415 = vmatpush1.msra.mxu0 %v1642
        %3416 = vmatprep.subr.mxu0 %v1645
        %3417 = vmatpush1.msra.mxu0 %v1644
        %3418 = vmatprep.subr.mxu0 %v1647
        %3419 = vmatpush1.msra.mxu0 %v1646
        %3420 = vmatprep.subr.mxu0 %v1649
        %3421 = vmatpush1.msra.mxu0 %v1648
        %3422 = vmatprep.subr.mxu0 %v1651
        %3423 = vmatpush1.msra.mxu0 %v1650
        %3424 = vmatprep.subr.mxu0 %v1653
        %3425 = vmatpush1.msra.mxu0 %v1652
        %3426 = vmatprep.subr.mxu0 %v1655
        %3427 = vmatpush1.msra.mxu0 %v1654
        %3428 = vmatprep.subr.mxu0 %v1657
        %3429 = vmatpush1.msra.mxu0 %v1656
        %3430 = vmatprep.subr.mxu0 %v1659
        %3431 = vmatpush1.msra.mxu0 %v1658
        %3432 = vmatprep.subr.mxu0 %v1661
        %3433 = vmatpush1.msra.mxu0 %v1660
        %3434 = vmatprep.subr.mxu0 %v1663
        %3435 = vmatpush1.msra.mxu0 %v1662
        %3436 = vmatprep.subr.mxu0 %v1665
        %3437 = vmatpush1.msra.mxu0 %v1664
        %3438 = vmatprep.mubr.f32.mxu0 %v1493
        %3439 = vmatmul.mubr.f32.gmra.mrb[0].mxu0 %v1492
        %v3440 = vpop.f32.mrb[0].mxu0
        %v3441 = vadd.f32 %v3367, %v3440
        %v3442 = vpop.f32.mrb[0].mxu0
        %v3443 = vadd.f32 %v3371, %v3442
        %3444 = vmatprep.mubr.f32.mxu0 %v1548
        %3445 = vmatmul.mubr.f32.gmra.mrb[0].mxu0 %v1547
        %v3446 = vpop.f32.mrb[0].mxu0
        %v3447 = vadd.f32 %v3367, %v3446
        %v3448 = vpop.f32.mrb[0].mxu0
        %v3449 = vadd.f32 %v3371, %v3448
        %3450 = vdwg.mxu0
        %3451 = vmatprep.subr.mxu0 %v1667
        %3452 = vmatpush1.msra.mxu0 %v1666
        %3453 = vmatprep.subr.mxu0 %v1669
        %3454 = vmatpush1.msra.mxu0 %v1668
        %3455 = vmatprep.subr.mxu0 %v1671
        %3456 = vmatpush1.msra.mxu0 %v1670
        %3457 = vmatprep.subr.mxu0 %v1673
        %3458 = vmatpush1.msra.mxu0 %v1672
        %3459 = vmatprep.subr.mxu0 %v1675
        %3460 = vmatpush1.msra.mxu0 %v1674
        %3461 = vmatprep.subr.mxu0 %v1677
        %3462 = vmatpush1.msra.mxu0 %v1676
        %3463 = vmatprep.subr.mxu0 %v1679
        %3464 = vmatpush1.msra.mxu0 %v1678
        %3465 = vmatprep.subr.mxu0 %v1681
        %3466 = vmatpush1.msra.mxu0 %v1680
        %3467 = vmatprep.subr.mxu0 %v1683
        %3468 = vmatpush1.msra.mxu0 %v1682
        %3469 = vmatprep.subr.mxu0 %v1685
        %3470 = vmatpush1.msra.mxu0 %v1684
        %3471 = vmatprep.subr.mxu0 %v1687
        %3472 = vmatpush1.msra.mxu0 %v1686
        %3473 = vmatprep.subr.mxu0 %v1689
        %3474 = vmatpush1.msra.mxu0 %v1688
        %3475 = vmatprep.subr.mxu0 %v1691
        %3476 = vmatpush1.msra.mxu0 %v1690
        %3477 = vmatprep.subr.mxu0 %v1693
        %3478 = vmatpush1.msra.mxu0 %v1692
        %3479 = vmatprep.subr.mxu0 %v1695
        %3480 = vmatpush1.msra.mxu0 %v1694
        %3481 = vmatprep.subr.mxu0 %v1697
        %3482 = vmatpush1.msra.mxu0 %v1696
        %3483 = vmatprep.subr.mxu0 %v1699
        %3484 = vmatpush1.msra.mxu0 %v1698
        %3485 = vmatprep.subr.mxu0 %v1701
        %3486 = vmatpush1.msra.mxu0 %v1700
        %3487 = vmatprep.subr.mxu0 %v1703
        %3488 = vmatpush1.msra.mxu0 %v1702
        %3489 = vmatprep.subr.mxu0 %v1705
        %3490 = vmatpush1.msra.mxu0 %v1704
        %3491 = vmatprep.subr.mxu0 %v1707
        %3492 = vmatpush1.msra.mxu0 %v1706
        %3493 = vmatprep.subr.mxu0 %v1709
        %3494 = vmatpush1.msra.mxu0 %v1708
        %3495 = vmatprep.subr.mxu0 %v1711
        %3496 = vmatpush1.msra.mxu0 %v1710
        %3497 = vmatprep.subr.mxu0 %v1713
        %3498 = vmatpush1.msra.mxu0 %v1712
        %3499 = vmatprep.subr.mxu0 %v1715
        %3500 = vmatpush1.msra.mxu0 %v1714
        %3501 = vmatprep.subr.mxu0 %v1717
        %3502 = vmatpush1.msra.mxu0 %v1716
        %3503 = vmatprep.subr.mxu0 %v1719
        %3504 = vmatpush1.msra.mxu0 %v1718
        %3505 = vmatprep.subr.mxu0 %v1721
        %3506 = vmatpush1.msra.mxu0 %v1720
        %3507 = vmatprep.subr.mxu0 %v1723
        %3508 = vmatpush1.msra.mxu0 %v1722
        %3509 = vmatprep.subr.mxu0 %v1725
        %3510 = vmatpush1.msra.mxu0 %v1724
        %3511 = vmatprep.subr.mxu0 %v1727
        %3512 = vmatpush1.msra.mxu0 %v1726
        %3513 = vmatprep.subr.mxu0 %v1729
        %3514 = vmatpush1.msra.mxu0 %v1728
        %3515 = vmatprep.mubr.f32.mxu0 %v1495
        %3516 = vmatmul.mubr.f32.gmra.mrb[0].mxu0 %v1494
        %v3517 = vpop.f32.mrb[0].mxu0
        %v3518 = vadd.f32 %v3441, %v3517
        %v3519 = vpop.f32.mrb[0].mxu0
        %v3520 = vadd.f32 %v3443, %v3519
        %3521 = vmatprep.mubr.f32.mxu0 %v1550
        %3522 = vmatmul.mubr.f32.gmra.mrb[0].mxu0 %v1549
        %v3523 = vpop.f32.mrb[0].mxu0
        %v3524 = vadd.f32 %v3447, %v3523
        %v3525 = vpop.f32.mrb[0].mxu0
        %v3526 = vadd.f32 %v3449, %v3525
        %3527 = vdwg.mxu0
        %3528 = vmatprep.subr.mxu0 %v1731
        %3529 = vmatpush1.msra.mxu0 %v1730
        %3530 = vmatprep.subr.mxu0 %v1733
        %3531 = vmatpush1.msra.mxu0 %v1732
        %3532 = vmatprep.subr.mxu0 %v1735
        %3533 = vmatpush1.msra.mxu0 %v1734
        %3534 = vmatprep.subr.mxu0 %v1737
        %3535 = vmatpush1.msra.mxu0 %v1736
        %3536 = vmatprep.subr.mxu0 %v1739
        %3537 = vmatpush1.msra.mxu0 %v1738
        %3538 = vmatprep.subr.mxu0 %v1741
        %3539 = vmatpush1.msra.mxu0 %v1740
        %3540 = vmatprep.subr.mxu0 %v1743
        %3541 = vmatpush1.msra.mxu0 %v1742
        %3542 = vmatprep.subr.mxu0 %v1745
        %3543 = vmatpush1.msra.mxu0 %v1744
        %3544 = vmatprep.subr.mxu0 %v1747
        %3545 = vmatpush1.msra.mxu0 %v1746
        %3546 = vmatprep.subr.mxu0 %v1749
        %3547 = vmatpush1.msra.mxu0 %v1748
        %3548 = vmatprep.subr.mxu0 %v1751
        %3549 = vmatpush1.msra.mxu0 %v1750
        %3550 = vmatprep.subr.mxu0 %v1753
        %3551 = vmatpush1.msra.mxu0 %v1752
        %3552 = vmatprep.subr.mxu0 %v1755
        %3553 = vmatpush1.msra.mxu0 %v1754
        %3554 = vmatprep.subr.mxu0 %v1757
        %3555 = vmatpush1.msra.mxu0 %v1756
        %3556 = vmatprep.subr.mxu0 %v1759
        %3557 = vmatpush1.msra.mxu0 %v1758
        %3558 = vmatprep.subr.mxu0 %v1761
        %3559 = vmatpush1.msra.mxu0 %v1760
        %3560 = vmatprep.subr.mxu0 %v1763
        %3561 = vmatpush1.msra.mxu0 %v1762
        %3562 = vmatprep.subr.mxu0 %v1765
        %3563 = vmatpush1.msra.mxu0 %v1764
        %3564 = vmatprep.subr.mxu0 %v1767
        %3565 = vmatpush1.msra.mxu0 %v1766
        %3566 = vmatprep.subr.mxu0 %v1769
        %3567 = vmatpush1.msra.mxu0 %v1768
        %3568 = vmatprep.subr.mxu0 %v1771
        %3569 = vmatpush1.msra.mxu0 %v1770
        %3570 = vmatprep.subr.mxu0 %v1773
        %3571 = vmatpush1.msra.mxu0 %v1772
        %3572 = vmatprep.subr.mxu0 %v1775
        %3573 = vmatpush1.msra.mxu0 %v1774
        %3574 = vmatprep.subr.mxu0 %v1777
        %3575 = vmatpush1.msra.mxu0 %v1776
        %3576 = vmatprep.subr.mxu0 %v1779
        %3577 = vmatpush1.msra.mxu0 %v1778
        %3578 = vmatprep.subr.mxu0 %v1781
        %3579 = vmatpush1.msra.mxu0 %v1780
        %3580 = vmatprep.subr.mxu0 %v1783
        %3581 = vmatpush1.msra.mxu0 %v1782
        %3582 = vmatprep.subr.mxu0 %v1785
        %3583 = vmatpush1.msra.mxu0 %v1784
        %3584 = vmatprep.subr.mxu0 %v1787
        %3585 = vmatpush1.msra.mxu0 %v1786
        %3586 = vmatprep.subr.mxu0 %v1789
        %3587 = vmatpush1.msra.mxu0 %v1788
        %3588 = vmatprep.subr.mxu0 %v1791
        %3589 = vmatpush1.msra.mxu0 %v1790
        %3590 = vmatprep.subr.mxu0 %v1793
        %3591 = vmatpush1.msra.mxu0 %v1792
        %3592 = vmatprep.mubr.f32.mxu0 %v1497
        %3593 = vmatmul.mubr.f32.gmra.mrb[0].mxu0 %v1496
        %v3594 = vpop.f32.mrb[0].mxu0
        %v3595 = vadd.f32 %v3518, %v3594
        %v3596 = vpop.f32.mrb[0].mxu0
        %v3597 = vadd.f32 %v3520, %v3596
        %3598 = vmatprep.mubr.f32.mxu0 %v1552
        %3599 = vmatmul.mubr.f32.gmra.mrb[0].mxu0 %v1551
        %v3600 = vpop.f32.mrb[0].mxu0
        %v3601 = vadd.f32 %v3524, %v3600
        %v3602 = vpop.f32.mrb[0].mxu0
        %v3603 = vadd.f32 %v3526, %v3602
        %3604 = vdwg.mxu0
        %3605 = vmatprep.subr.mxu0 %v1795
        %3606 = vmatpush1.msra.mxu0 %v1794
        %3607 = vmatprep.subr.mxu0 %v1797
        %3608 = vmatpush1.msra.mxu0 %v1796
        %3609 = vmatprep.subr.mxu0 %v1799
        %3610 = vmatpush1.msra.mxu0 %v1798
        %3611 = vmatprep.subr.mxu0 %v1801
        %3612 = vmatpush1.msra.mxu0 %v1800
        %3613 = vmatprep.subr.mxu0 %v1803
        %3614 = vmatpush1.msra.mxu0 %v1802
        %3615 = vmatprep.subr.mxu0 %v1805
        %3616 = vmatpush1.msra.mxu0 %v1804
        %3617 = vmatprep.subr.mxu0 %v1807
        %3618 = vmatpush1.msra.mxu0 %v1806
        %3619 = vmatprep.subr.mxu0 %v1809
        %3620 = vmatpush1.msra.mxu0 %v1808
        %3621 = vmatprep.subr.mxu0 %v1811
        %3622 = vmatpush1.msra.mxu0 %v1810
        %3623 = vmatprep.subr.mxu0 %v1813
        %3624 = vmatpush1.msra.mxu0 %v1812
        %3625 = vmatprep.subr.mxu0 %v1815
        %3626 = vmatpush1.msra.mxu0 %v1814
        %3627 = vmatprep.subr.mxu0 %v1817
        %3628 = vmatpush1.msra.mxu0 %v1816
        %3629 = vmatprep.subr.mxu0 %v1819
        %3630 = vmatpush1.msra.mxu0 %v1818
        %3631 = vmatprep.subr.mxu0 %v1821
        %3632 = vmatpush1.msra.mxu0 %v1820
        %3633 = vmatprep.subr.mxu0 %v1823
        %3634 = vmatpush1.msra.mxu0 %v1822
        %3635 = vmatprep.subr.mxu0 %v1825
        %3636 = vmatpush1.msra.mxu0 %v1824
        %3637 = vmatprep.subr.mxu0 %v1827
        %3638 = vmatpush1.msra.mxu0 %v1826
        %3639 = vmatprep.subr.mxu0 %v1829
        %3640 = vmatpush1.msra.mxu0 %v1828
        %3641 = vmatprep.subr.mxu0 %v1831
        %3642 = vmatpush1.msra.mxu0 %v1830
        %3643 = vmatprep.subr.mxu0 %v1833
        %3644 = vmatpush1.msra.mxu0 %v1832
        %3645 = vmatprep.subr.mxu0 %v1835
        %3646 = vmatpush1.msra.mxu0 %v1834
        %3647 = vmatprep.subr.mxu0 %v1837
        %3648 = vmatpush1.msra.mxu0 %v1836
        %3649 = vmatprep.subr.mxu0 %v1839
        %3650 = vmatpush1.msra.mxu0 %v1838
        %3651 = vmatprep.subr.mxu0 %v1841
        %3652 = vmatpush1.msra.mxu0 %v1840
        %3653 = vmatprep.subr.mxu0 %v1843
        %3654 = vmatpush1.msra.mxu0 %v1842
        %3655 = vmatprep.subr.mxu0 %v1845
        %3656 = vmatpush1.msra.mxu0 %v1844
        %3657 = vmatprep.subr.mxu0 %v1847
        %3658 = vmatpush1.msra.mxu0 %v1846
        %3659 = vmatprep.subr.mxu0 %v1849
        %3660 = vmatpush1.msra.mxu0 %v1848
        %3661 = vmatprep.subr.mxu0 %v1851
        %3662 = vmatpush1.msra.mxu0 %v1850
        %3663 = vmatprep.subr.mxu0 %v1853
        %3664 = vmatpush1.msra.mxu0 %v1852
        %3665 = vmatprep.subr.mxu0 %v1855
        %3666 = vmatpush1.msra.mxu0 %v1854
        %3667 = vmatprep.subr.mxu0 %v1857
        %3668 = vmatpush1.msra.mxu0 %v1856
        %3669 = vmatprep.mubr.f32.mxu0 %v1499
        %3670 = vmatmul.mubr.f32.gmra.mrb[0].mxu0 %v1498
        %v3671 = vpop.f32.mrb[0].mxu0
        %v3672 = vadd.f32 %v3595, %v3671
        %v3673 = vpop.f32.mrb[0].mxu0
        %v3674 = vadd.f32 %v3597, %v3673
        %3675 = vmatprep.mubr.f32.mxu0 %v1554
        %3676 = vmatmul.mubr.f32.gmra.mrb[0].mxu0 %v1553
        %v3677 = vpop.f32.mrb[0].mxu0
        %v3678 = vadd.f32 %v3601, %v3677
        %v3679 = vpop.f32.mrb[0].mxu0
        %v3680 = vadd.f32 %v3603, %v3679
        %3681 = vdwg.mxu0
        %3682 = vmatprep.subr.mxu0 %v1859
        %3683 = vmatpush1.msra.mxu0 %v1858
        %3684 = vmatprep.subr.mxu0 %v1861
        %3685 = vmatpush1.msra.mxu0 %v1860
        %3686 = vmatprep.subr.mxu0 %v1863
        %3687 = vmatpush1.msra.mxu0 %v1862
        %3688 = vmatprep.subr.mxu0 %v1865
        %3689 = vmatpush1.msra.mxu0 %v1864
        %3690 = vmatprep.subr.mxu0 %v1867
        %3691 = vmatpush1.msra.mxu0 %v1866
        %3692 = vmatprep.subr.mxu0 %v1869
        %3693 = vmatpush1.msra.mxu0 %v1868
        %3694 = vmatprep.subr.mxu0 %v1871
        %3695 = vmatpush1.msra.mxu0 %v1870
        %3696 = vmatprep.subr.mxu0 %v1873
        %3697 = vmatpush1.msra.mxu0 %v1872
        %3698 = vmatprep.subr.mxu0 %v1875
        %3699 = vmatpush1.msra.mxu0 %v1874
        %3700 = vmatprep.subr.mxu0 %v1877
        %3701 = vmatpush1.msra.mxu0 %v1876
        %3702 = vmatprep.subr.mxu0 %v1879
        %3703 = vmatpush1.msra.mxu0 %v1878
        %3704 = vmatprep.subr.mxu0 %v1881
        %3705 = vmatpush1.msra.mxu0 %v1880
        %3706 = vmatprep.subr.mxu0 %v1883
        %3707 = vmatpush1.msra.mxu0 %v1882
        %3708 = vmatprep.subr.mxu0 %v1885
        %3709 = vmatpush1.msra.mxu0 %v1884
        %3710 = vmatprep.subr.mxu0 %v1887
        %3711 = vmatpush1.msra.mxu0 %v1886
        %3712 = vmatprep.subr.mxu0 %v1889
        %3713 = vmatpush1.msra.mxu0 %v1888
        %3714 = vmatprep.subr.mxu0 %v1891
        %3715 = vmatpush1.msra.mxu0 %v1890
        %3716 = vmatprep.subr.mxu0 %v1893
        %3717 = vmatpush1.msra.mxu0 %v1892
        %3718 = vmatprep.subr.mxu0 %v1895
        %3719 = vmatpush1.msra.mxu0 %v1894
        %3720 = vmatprep.subr.mxu0 %v1897
        %3721 = vmatpush1.msra.mxu0 %v1896
        %3722 = vmatprep.subr.mxu0 %v1899
        %3723 = vmatpush1.msra.mxu0 %v1898
        %3724 = vmatprep.subr.mxu0 %v1901
        %3725 = vmatpush1.msra.mxu0 %v1900
        %3726 = vmatprep.subr.mxu0 %v1903
        %3727 = vmatpush1.msra.mxu0 %v1902
        %3728 = vmatprep.subr.mxu0 %v1905
        %3729 = vmatpush1.msra.mxu0 %v1904
        %3730 = vmatprep.subr.mxu0 %v1907
        %3731 = vmatpush1.msra.mxu0 %v1906
        %3732 = vmatprep.subr.mxu0 %v1909
        %3733 = vmatpush1.msra.mxu0 %v1908
        %3734 = vmatprep.subr.mxu0 %v1911
        %3735 = vmatpush1.msra.mxu0 %v1910
        %3736 = vmatprep.subr.mxu0 %v1913
        %3737 = vmatpush1.msra.mxu0 %v1912
        %3738 = vmatprep.subr.mxu0 %v1915
        %3739 = vmatpush1.msra.mxu0 %v1914
        %3740 = vmatprep.subr.mxu0 %v1917
        %3741 = vmatpush1.msra.mxu0 %v1916
        %3742 = vmatprep.subr.mxu0 %v1919
        %3743 = vmatpush1.msra.mxu0 %v1918
        %3744 = vmatprep.subr.mxu0 %v1921
        %3745 = vmatpush1.msra.mxu0 %v1920
        %3746 = vmatprep.mubr.f32.mxu0 %v1501
        %3747 = vmatmul.mubr.f32.gmra.mrb[0].mxu0 %v1500
        %v3748 = vpop.f32.mrb[0].mxu0
        %v3749 = vadd.f32 %v3672, %v3748
        %v3750 = vpop.f32.mrb[0].mxu0
        %v3751 = vadd.f32 %v3674, %v3750
        %3752 = vmatprep.mubr.f32.mxu0 %v1556
        %3753 = vmatmul.mubr.f32.gmra.mrb[0].mxu0 %v1555
        %v3754 = vpop.f32.mrb[0].mxu0
        %v3755 = vadd.f32 %v3678, %v3754
        %v3756 = vpop.f32.mrb[0].mxu0
        %v3757 = vadd.f32 %v3680, %v3756
        %3758 = vdwg.mxu0
        %3759 = vmatprep.subr.mxu0 %v1923
        %3760 = vmatpush1.msra.mxu0 %v1922
        %3761 = vmatprep.subr.mxu0 %v1925
        %3762 = vmatpush1.msra.mxu0 %v1924
        %3763 = vmatprep.subr.mxu0 %v1927
        %3764 = vmatpush1.msra.mxu0 %v1926
        %3765 = vmatprep.subr.mxu0 %v1929
        %3766 = vmatpush1.msra.mxu0 %v1928
        %3767 = vmatprep.subr.mxu0 %v1931
        %3768 = vmatpush1.msra.mxu0 %v1930
        %3769 = vmatprep.subr.mxu0 %v1933
        %3770 = vmatpush1.msra.mxu0 %v1932
        %3771 = vmatprep.subr.mxu0 %v1935
        %3772 = vmatpush1.msra.mxu0 %v1934
        %3773 = vmatprep.subr.mxu0 %v1937
        %3774 = vmatpush1.msra.mxu0 %v1936
        %3775 = vmatprep.subr.mxu0 %v1939
        %3776 = vmatpush1.msra.mxu0 %v1938
        %3777 = vmatprep.subr.mxu0 %v1941
        %3778 = vmatpush1.msra.mxu0 %v1940
        %3779 = vmatprep.subr.mxu0 %v1943
        %3780 = vmatpush1.msra.mxu0 %v1942
        %3781 = vmatprep.subr.mxu0 %v1945
        %3782 = vmatpush1.msra.mxu0 %v1944
        %3783 = vmatprep.subr.mxu0 %v1947
        %3784 = vmatpush1.msra.mxu0 %v1946
        %3785 = vmatprep.subr.mxu0 %v1949
        %3786 = vmatpush1.msra.mxu0 %v1948
        %3787 = vmatprep.subr.mxu0 %v1951
        %3788 = vmatpush1.msra.mxu0 %v1950
        %3789 = vmatprep.subr.mxu0 %v1953
        %3790 = vmatpush1.msra.mxu0 %v1952
        %3791 = vmatprep.subr.mxu0 %v1955
        %3792 = vmatpush1.msra.mxu0 %v1954
        %3793 = vmatprep.subr.mxu0 %v1957
        %3794 = vmatpush1.msra.mxu0 %v1956
        %3795 = vmatprep.subr.mxu0 %v1959
        %3796 = vmatpush1.msra.mxu0 %v1958
        %3797 = vmatprep.subr.mxu0 %v1961
        %3798 = vmatpush1.msra.mxu0 %v1960
        %3799 = vmatprep.subr.mxu0 %v1963
        %3800 = vmatpush1.msra.mxu0 %v1962
        %3801 = vmatprep.subr.mxu0 %v1965
        %3802 = vmatpush1.msra.mxu0 %v1964
        %3803 = vmatprep.subr.mxu0 %v1967
        %3804 = vmatpush1.msra.mxu0 %v1966
        %3805 = vmatprep.subr.mxu0 %v1969
        %3806 = vmatpush1.msra.mxu0 %v1968
        %3807 = vmatprep.subr.mxu0 %v1971
        %3808 = vmatpush1.msra.mxu0 %v1970
        %3809 = vmatprep.subr.mxu0 %v1973
        %3810 = vmatpush1.msra.mxu0 %v1972
        %3811 = vmatprep.subr.mxu0 %v1975
        %3812 = vmatpush1.msra.mxu0 %v1974
        %3813 = vmatprep.subr.mxu0 %v1977
        %3814 = vmatpush1.msra.mxu0 %v1976
        %3815 = vmatprep.subr.mxu0 %v1979
        %3816 = vmatpush1.msra.mxu0 %v1978
        %3817 = vmatprep.subr.mxu0 %v1981
        %3818 = vmatpush1.msra.mxu0 %v1980
        %3819 = vmatprep.subr.mxu0 %v1983
        %3820 = vmatpush1.msra.mxu0 %v1982
        %3821 = vmatprep.subr.mxu0 %v1985
        %3822 = vmatpush1.msra.mxu0 %v1984
        %3823 = vmatprep.mubr.f32.mxu0 %v1503
        %3824 = vmatmul.mubr.f32.gmra.mrb[0].mxu0 %v1502
        %v3825 = vpop.f32.mrb[0].mxu0
        %v3826 = vadd.f32 %v3749, %v3825
        %v3827 = vpop.f32.mrb[0].mxu0
        %v3828 = vadd.f32 %v3751, %v3827
        %3829 = vmatprep.mubr.f32.mxu0 %v1558
        %3830 = vmatmul.mubr.f32.gmra.mrb[0].mxu0 %v1557
        %v3831 = vpop.f32.mrb[0].mxu0
        %v3832 = vadd.f32 %v3755, %v3831
        %v3833 = vpop.f32.mrb[0].mxu0
        %v3834 = vadd.f32 %v3757, %v3833
        %3835 = vdwg.mxu0
        %3836 = vmatprep.subr.mxu0 %v1987
        %3837 = vmatpush1.msra.mxu0 %v1986
        %3838 = vmatprep.subr.mxu0 %v1989
        %3839 = vmatpush1.msra.mxu0 %v1988
        %3840 = vmatprep.subr.mxu0 %v1991
        %3841 = vmatpush1.msra.mxu0 %v1990
        %3842 = vmatprep.subr.mxu0 %v1993
        %3843 = vmatpush1.msra.mxu0 %v1992
        %3844 = vmatprep.subr.mxu0 %v1995
        %3845 = vmatpush1.msra.mxu0 %v1994
        %3846 = vmatprep.subr.mxu0 %v1997
        %3847 = vmatpush1.msra.mxu0 %v1996
        %3848 = vmatprep.subr.mxu0 %v1999
        %3849 = vmatpush1.msra.mxu0 %v1998
        %3850 = vmatprep.subr.mxu0 %v2001
        %3851 = vmatpush1.msra.mxu0 %v2000
        %3852 = vmatprep.subr.mxu0 %v2003
        %3853 = vmatpush1.msra.mxu0 %v2002
        %3854 = vmatprep.subr.mxu0 %v2005
        %3855 = vmatpush1.msra.mxu0 %v2004
        %3856 = vmatprep.subr.mxu0 %v2007
        %3857 = vmatpush1.msra.mxu0 %v2006
        %3858 = vmatprep.subr.mxu0 %v2009
        %3859 = vmatpush1.msra.mxu0 %v2008
        %3860 = vmatprep.subr.mxu0 %v2011
        %3861 = vmatpush1.msra.mxu0 %v2010
        %3862 = vmatprep.subr.mxu0 %v2013
        %3863 = vmatpush1.msra.mxu0 %v2012
        %3864 = vmatprep.subr.mxu0 %v2015
        %3865 = vmatpush1.msra.mxu0 %v2014
        %3866 = vmatprep.subr.mxu0 %v2017
        %3867 = vmatpush1.msra.mxu0 %v2016
        %3868 = vmatprep.subr.mxu0 %v2019
        %3869 = vmatpush1.msra.mxu0 %v2018
        %3870 = vmatprep.subr.mxu0 %v2021
        %3871 = vmatpush1.msra.mxu0 %v2020
        %3872 = vmatprep.subr.mxu0 %v2023
        %3873 = vmatpush1.msra.mxu0 %v2022
        %3874 = vmatprep.subr.mxu0 %v2025
        %3875 = vmatpush1.msra.mxu0 %v2024
        %3876 = vmatprep.subr.mxu0 %v2027
        %3877 = vmatpush1.msra.mxu0 %v2026
        %3878 = vmatprep.subr.mxu0 %v2029
        %3879 = vmatpush1.msra.mxu0 %v2028
        %3880 = vmatprep.subr.mxu0 %v2031
        %3881 = vmatpush1.msra.mxu0 %v2030
        %3882 = vmatprep.subr.mxu0 %v2033
        %3883 = vmatpush1.msra.mxu0 %v2032
        %3884 = vmatprep.subr.mxu0 %v2035
        %3885 = vmatpush1.msra.mxu0 %v2034
        %3886 = vmatprep.subr.mxu0 %v2037
        %3887 = vmatpush1.msra.mxu0 %v2036
        %3888 = vmatprep.subr.mxu0 %v2039
        %3889 = vmatpush1.msra.mxu0 %v2038
        %3890 = vmatprep.subr.mxu0 %v2041
        %3891 = vmatpush1.msra.mxu0 %v2040
        %3892 = vmatprep.subr.mxu0 %v2043
        %3893 = vmatpush1.msra.mxu0 %v2042
        %3894 = vmatprep.subr.mxu0 %v2045
        %3895 = vmatpush1.msra.mxu0 %v2044
        %3896 = vmatprep.subr.mxu0 %v2047
        %3897 = vmatpush1.msra.mxu0 %v2046
        %3898 = vmatprep.subr.mxu0 %v2049
        %3899 = vmatpush1.msra.mxu0 %v2048
        %3900 = vmatprep.mubr.f32.mxu0 %v1505
        %3901 = vmatmul.mubr.f32.gmra.mrb[0].mxu0 %v1504
        %v3902 = vpop.f32.mrb[0].mxu0
        %v3903 = vadd.f32 %v3826, %v3902
        %v3904 = vpop.f32.mrb[0].mxu0
        %v3905 = vadd.f32 %v3828, %v3904
        %3906 = vmatprep.mubr.f32.mxu0 %v1560
        %3907 = vmatmul.mubr.f32.gmra.mrb[0].mxu0 %v1559
        %v3908 = vpop.f32.mrb[0].mxu0
        %v3909 = vadd.f32 %v3832, %v3908
        %v3910 = vpop.f32.mrb[0].mxu0
        %v3911 = vadd.f32 %v3834, %v3910
        %3912 = vdwg.mxu0
        %3913 = vmatprep.subr.mxu0 %v2051
        %3914 = vmatpush1.msra.mxu0 %v2050
        %3915 = vmatprep.subr.mxu0 %v2053
        %3916 = vmatpush1.msra.mxu0 %v2052
        %3917 = vmatprep.subr.mxu0 %v2055
        %3918 = vmatpush1.msra.mxu0 %v2054
        %3919 = vmatprep.subr.mxu0 %v2057
        %3920 = vmatpush1.msra.mxu0 %v2056
        %3921 = vmatprep.subr.mxu0 %v2059
        %3922 = vmatpush1.msra.mxu0 %v2058
        %3923 = vmatprep.subr.mxu0 %v2061
        %3924 = vmatpush1.msra.mxu0 %v2060
        %3925 = vmatprep.subr.mxu0 %v2063
        %3926 = vmatpush1.msra.mxu0 %v2062
        %3927 = vmatprep.subr.mxu0 %v2065
        %3928 = vmatpush1.msra.mxu0 %v2064
        %3929 = vmatprep.subr.mxu0 %v2067
        %3930 = vmatpush1.msra.mxu0 %v2066
        %3931 = vmatprep.subr.mxu0 %v2069
        %3932 = vmatpush1.msra.mxu0 %v2068
        %3933 = vmatprep.subr.mxu0 %v2071
        %3934 = vmatpush1.msra.mxu0 %v2070
        %3935 = vmatprep.subr.mxu0 %v2073
        %3936 = vmatpush1.msra.mxu0 %v2072
        %3937 = vmatprep.subr.mxu0 %v2075
        %3938 = vmatpush1.msra.mxu0 %v2074
        %3939 = vmatprep.subr.mxu0 %v2077
        %3940 = vmatpush1.msra.mxu0 %v2076
        %3941 = vmatprep.subr.mxu0 %v2079
        %3942 = vmatpush1.msra.mxu0 %v2078
        %3943 = vmatprep.subr.mxu0 %v2081
        %3944 = vmatpush1.msra.mxu0 %v2080
        %3945 = vmatprep.subr.mxu0 %v2083
        %3946 = vmatpush1.msra.mxu0 %v2082
        %3947 = vmatprep.subr.mxu0 %v2085
        %3948 = vmatpush1.msra.mxu0 %v2084
        %3949 = vmatprep.subr.mxu0 %v2087
        %3950 = vmatpush1.msra.mxu0 %v2086
        %3951 = vmatprep.subr.mxu0 %v2089
        %3952 = vmatpush1.msra.mxu0 %v2088
        %3953 = vmatprep.subr.mxu0 %v2091
        %3954 = vmatpush1.msra.mxu0 %v2090
        %3955 = vmatprep.subr.mxu0 %v2093
        %3956 = vmatpush1.msra.mxu0 %v2092
        %3957 = vmatprep.subr.mxu0 %v2095
        %3958 = vmatpush1.msra.mxu0 %v2094
        %3959 = vmatprep.subr.mxu0 %v2097
        %3960 = vmatpush1.msra.mxu0 %v2096
        %3961 = vmatprep.subr.mxu0 %v2099
        %3962 = vmatpush1.msra.mxu0 %v2098
        %3963 = vmatprep.subr.mxu0 %v2101
        %3964 = vmatpush1.msra.mxu0 %v2100
        %3965 = vmatprep.subr.mxu0 %v2103
        %3966 = vmatpush1.msra.mxu0 %v2102
        %3967 = vmatprep.subr.mxu0 %v2105
        %3968 = vmatpush1.msra.mxu0 %v2104
        %3969 = vmatprep.subr.mxu0 %v2107
        %3970 = vmatpush1.msra.mxu0 %v2106
        %3971 = vmatprep.subr.mxu0 %v2109
        %3972 = vmatpush1.msra.mxu0 %v2108
        %3973 = vmatprep.subr.mxu0 %v2111
        %3974 = vmatpush1.msra.mxu0 %v2110
        %3975 = vmatprep.subr.mxu0 %v2113
        %3976 = vmatpush1.msra.mxu0 %v2112
        %3977 = vmatprep.mubr.f32.mxu0 %v1507
        %3978 = vmatmul.mubr.f32.gmra.mrb[0].mxu0 %v1506
        %v3979 = vpop.f32.mrb[0].mxu0
        %v3980 = vadd.f32 %v3903, %v3979
        %v3981 = vpop.f32.mrb[0].mxu0
        %v3982 = vadd.f32 %v3905, %v3981
        %3983 = vmatprep.mubr.f32.mxu0 %v1562
        %3984 = vmatmul.mubr.f32.gmra.mrb[0].mxu0 %v1561
        %v3985 = vpop.f32.mrb[0].mxu0
        %v3986 = vadd.f32 %v3909, %v3985
        %v3987 = vpop.f32.mrb[0].mxu0
        %v3988 = vadd.f32 %v3911, %v3987
        %3989 = vdwg.mxu0
        %3990 = vmatprep.subr.mxu0 %v2115
        %3991 = vmatpush1.msra.mxu0 %v2114
        %3992 = vmatprep.subr.mxu0 %v2117
        %3993 = vmatpush1.msra.mxu0 %v2116
        %3994 = vmatprep.subr.mxu0 %v2119
        %3995 = vmatpush1.msra.mxu0 %v2118
        %3996 = vmatprep.subr.mxu0 %v2121
        %3997 = vmatpush1.msra.mxu0 %v2120
        %3998 = vmatprep.subr.mxu0 %v2123
        %3999 = vmatpush1.msra.mxu0 %v2122
        %4000 = vmatprep.subr.mxu0 %v2125
        %4001 = vmatpush1.msra.mxu0 %v2124
        %4002 = vmatprep.subr.mxu0 %v2127
        %4003 = vmatpush1.msra.mxu0 %v2126
        %4004 = vmatprep.subr.mxu0 %v2129
        %4005 = vmatpush1.msra.mxu0 %v2128
        %4006 = vmatprep.subr.mxu0 %v2131
        %4007 = vmatpush1.msra.mxu0 %v2130
        %4008 = vmatprep.subr.mxu0 %v2133
        %4009 = vmatpush1.msra.mxu0 %v2132
        %4010 = vmatprep.subr.mxu0 %v2135
        %4011 = vmatpush1.msra.mxu0 %v2134
        %4012 = vmatprep.subr.mxu0 %v2137
        %4013 = vmatpush1.msra.mxu0 %v2136
        %4014 = vmatprep.subr.mxu0 %v2139
        %4015 = vmatpush1.msra.mxu0 %v2138
        %4016 = vmatprep.subr.mxu0 %v2141
        %4017 = vmatpush1.msra.mxu0 %v2140
        %4018 = vmatprep.subr.mxu0 %v2143
        %4019 = vmatpush1.msra.mxu0 %v2142
        %4020 = vmatprep.subr.mxu0 %v2145
        %4021 = vmatpush1.msra.mxu0 %v2144
        %4022 = vmatprep.subr.mxu0 %v2147
        %4023 = vmatpush1.msra.mxu0 %v2146
        %4024 = vmatprep.subr.mxu0 %v2149
        %4025 = vmatpush1.msra.mxu0 %v2148
        %4026 = vmatprep.subr.mxu0 %v2151
        %4027 = vmatpush1.msra.mxu0 %v2150
        %4028 = vmatprep.subr.mxu0 %v2153
        %4029 = vmatpush1.msra.mxu0 %v2152
        %4030 = vmatprep.subr.mxu0 %v2155
        %4031 = vmatpush1.msra.mxu0 %v2154
        %4032 = vmatprep.subr.mxu0 %v2157
        %4033 = vmatpush1.msra.mxu0 %v2156
        %4034 = vmatprep.subr.mxu0 %v2159
        %4035 = vmatpush1.msra.mxu0 %v2158
        %4036 = vmatprep.subr.mxu0 %v2161
        %4037 = vmatpush1.msra.mxu0 %v2160
        %4038 = vmatprep.subr.mxu0 %v2163
        %4039 = vmatpush1.msra.mxu0 %v2162
        %4040 = vmatprep.subr.mxu0 %v2165
        %4041 = vmatpush1.msra.mxu0 %v2164
        %4042 = vmatprep.subr.mxu0 %v2167
        %4043 = vmatpush1.msra.mxu0 %v2166
        %4044 = vmatprep.subr.mxu0 %v2169
        %4045 = vmatpush1.msra.mxu0 %v2168
        %4046 = vmatprep.subr.mxu0 %v2171
        %4047 = vmatpush1.msra.mxu0 %v2170
        %4048 = vmatprep.subr.mxu0 %v2173
        %4049 = vmatpush1.msra.mxu0 %v2172
        %4050 = vmatprep.subr.mxu0 %v2175
        %4051 = vmatpush1.msra.mxu0 %v2174
        %4052 = vmatprep.subr.mxu0 %v2177
        %4053 = vmatpush1.msra.mxu0 %v2176
        %4054 = vmatprep.mubr.f32.mxu0 %v1509
        %4055 = vmatmul.mubr.f32.gmra.mrb[0].mxu0 %v1508
        %v4056 = vpop.f32.mrb[0].mxu0
        %v4057 = vadd.f32 %v3980, %v4056
        %v4058 = vpop.f32.mrb[0].mxu0
        %v4059 = vadd.f32 %v3982, %v4058
        %4060 = vmatprep.mubr.f32.mxu0 %v1564
        %4061 = vmatmul.mubr.f32.gmra.mrb[0].mxu0 %v1563
        %v4062 = vpop.f32.mrb[0].mxu0
        %v4063 = vadd.f32 %v3986, %v4062
        %v4064 = vpop.f32.mrb[0].mxu0
        %v4065 = vadd.f32 %v3988, %v4064
        %4066 = vdwg.mxu0
        %4067 = vmatprep.subr.mxu0 %v2179
        %4068 = vmatpush1.msra.mxu0 %v2178
        %4069 = vmatprep.subr.mxu0 %v2181
        %4070 = vmatpush1.msra.mxu0 %v2180
        %4071 = vmatprep.subr.mxu0 %v2183
        %4072 = vmatpush1.msra.mxu0 %v2182
        %4073 = vmatprep.subr.mxu0 %v2185
        %4074 = vmatpush1.msra.mxu0 %v2184
        %4075 = vmatprep.subr.mxu0 %v2187
        %4076 = vmatpush1.msra.mxu0 %v2186
        %4077 = vmatprep.subr.mxu0 %v2189
        %4078 = vmatpush1.msra.mxu0 %v2188
        %4079 = vmatprep.subr.mxu0 %v2191
        %4080 = vmatpush1.msra.mxu0 %v2190
        %4081 = vmatprep.subr.mxu0 %v2193
        %4082 = vmatpush1.msra.mxu0 %v2192
        %4083 = vmatprep.subr.mxu0 %v2195
        %4084 = vmatpush1.msra.mxu0 %v2194
        %4085 = vmatprep.subr.mxu0 %v2197
        %4086 = vmatpush1.msra.mxu0 %v2196
        %4087 = vmatprep.subr.mxu0 %v2199
        %4088 = vmatpush1.msra.mxu0 %v2198
        %4089 = vmatprep.subr.mxu0 %v2201
        %4090 = vmatpush1.msra.mxu0 %v2200
        %4091 = vmatprep.subr.mxu0 %v2203
        %4092 = vmatpush1.msra.mxu0 %v2202
        %4093 = vmatprep.subr.mxu0 %v2205
        %4094 = vmatpush1.msra.mxu0 %v2204
        %4095 = vmatprep.subr.mxu0 %v2207
        %4096 = vmatpush1.msra.mxu0 %v2206
        %4097 = vmatprep.subr.mxu0 %v2209
        %4098 = vmatpush1.msra.mxu0 %v2208
        %4099 = vmatprep.subr.mxu0 %v2211
        %4100 = vmatpush1.msra.mxu0 %v2210
        %4101 = vmatprep.subr.mxu0 %v2213
        %4102 = vmatpush1.msra.mxu0 %v2212
        %4103 = vmatprep.subr.mxu0 %v2215
        %4104 = vmatpush1.msra.mxu0 %v2214
        %4105 = vmatprep.subr.mxu0 %v2217
        %4106 = vmatpush1.msra.mxu0 %v2216
        %4107 = vmatprep.subr.mxu0 %v2219
        %4108 = vmatpush1.msra.mxu0 %v2218
        %4109 = vmatprep.subr.mxu0 %v2221
        %4110 = vmatpush1.msra.mxu0 %v2220
        %4111 = vmatprep.subr.mxu0 %v2223
        %4112 = vmatpush1.msra.mxu0 %v2222
        %4113 = vmatprep.subr.mxu0 %v2225
        %4114 = vmatpush1.msra.mxu0 %v2224
        %4115 = vmatprep.subr.mxu0 %v2227
        %4116 = vmatpush1.msra.mxu0 %v2226
        %4117 = vmatprep.subr.mxu0 %v2229
        %4118 = vmatpush1.msra.mxu0 %v2228
        %4119 = vmatprep.subr.mxu0 %v2231
        %4120 = vmatpush1.msra.mxu0 %v2230
        %4121 = vmatprep.subr.mxu0 %v2233
        %4122 = vmatpush1.msra.mxu0 %v2232
        %4123 = vmatprep.subr.mxu0 %v2235
        %4124 = vmatpush1.msra.mxu0 %v2234
        %4125 = vmatprep.subr.mxu0 %v2237
        %4126 = vmatpush1.msra.mxu0 %v2236
        %4127 = vmatprep.subr.mxu0 %v2239
        %4128 = vmatpush1.msra.mxu0 %v2238
        %4129 = vmatprep.subr.mxu0 %v2241
        %4130 = vmatpush1.msra.mxu0 %v2240
        %4131 = vmatprep.mubr.f32.mxu0 %v1511
        %4132 = vmatmul.mubr.f32.gmra.mrb[0].mxu0 %v1510
        %v4133 = vpop.f32.mrb[0].mxu0
        %v4134 = vadd.f32 %v4057, %v4133
        %v4135 = vpop.f32.mrb[0].mxu0
        %v4136 = vadd.f32 %v4059, %v4135
        %4137 = vmatprep.mubr.f32.mxu0 %v1566
        %4138 = vmatmul.mubr.f32.gmra.mrb[0].mxu0 %v1565
        %v4139 = vpop.f32.mrb[0].mxu0
        %v4140 = vadd.f32 %v4063, %v4139
        %v4141 = vpop.f32.mrb[0].mxu0
        %v4142 = vadd.f32 %v4065, %v4141
        %4143 = vdwg.mxu0
        %4144 = vmatprep.subr.mxu0 %v2243
        %4145 = vmatpush1.msra.mxu0 %v2242
        %4146 = vmatprep.subr.mxu0 %v2245
        %4147 = vmatpush1.msra.mxu0 %v2244
        %4148 = vmatprep.subr.mxu0 %v2247
        %4149 = vmatpush1.msra.mxu0 %v2246
        %4150 = vmatprep.subr.mxu0 %v2249
        %4151 = vmatpush1.msra.mxu0 %v2248
        %4152 = vmatprep.subr.mxu0 %v2251
        %4153 = vmatpush1.msra.mxu0 %v2250
        %4154 = vmatprep.subr.mxu0 %v2253
        %4155 = vmatpush1.msra.mxu0 %v2252
        %4156 = vmatprep.subr.mxu0 %v2255
        %4157 = vmatpush1.msra.mxu0 %v2254
        %4158 = vmatprep.subr.mxu0 %v2257
        %4159 = vmatpush1.msra.mxu0 %v2256
        %4160 = vmatprep.subr.mxu0 %v2259
        %4161 = vmatpush1.msra.mxu0 %v2258
        %4162 = vmatprep.subr.mxu0 %v2261
        %4163 = vmatpush1.msra.mxu0 %v2260
        %4164 = vmatprep.subr.mxu0 %v2263
        %4165 = vmatpush1.msra.mxu0 %v2262
        %4166 = vmatprep.subr.mxu0 %v2265
        %4167 = vmatpush1.msra.mxu0 %v2264
        %4168 = vmatprep.subr.mxu0 %v2267
        %4169 = vmatpush1.msra.mxu0 %v2266
        %4170 = vmatprep.subr.mxu0 %v2269
        %4171 = vmatpush1.msra.mxu0 %v2268
        %4172 = vmatprep.subr.mxu0 %v2271
        %4173 = vmatpush1.msra.mxu0 %v2270
        %4174 = vmatprep.subr.mxu0 %v2273
        %4175 = vmatpush1.msra.mxu0 %v2272
        %4176 = vmatprep.subr.mxu0 %v2275
        %4177 = vmatpush1.msra.mxu0 %v2274
        %4178 = vmatprep.subr.mxu0 %v2277
        %4179 = vmatpush1.msra.mxu0 %v2276
        %4180 = vmatprep.subr.mxu0 %v2279
        %4181 = vmatpush1.msra.mxu0 %v2278
        %4182 = vmatprep.subr.mxu0 %v2281
        %4183 = vmatpush1.msra.mxu0 %v2280
        %4184 = vmatprep.subr.mxu0 %v2283
        %4185 = vmatpush1.msra.mxu0 %v2282
        %4186 = vmatprep.subr.mxu0 %v2285
        %4187 = vmatpush1.msra.mxu0 %v2284
        %4188 = vmatprep.subr.mxu0 %v2287
        %4189 = vmatpush1.msra.mxu0 %v2286
        %4190 = vmatprep.subr.mxu0 %v2289
        %4191 = vmatpush1.msra.mxu0 %v2288
        %4192 = vmatprep.subr.mxu0 %v2291
        %4193 = vmatpush1.msra.mxu0 %v2290
        %4194 = vmatprep.subr.mxu0 %v2293
        %4195 = vmatpush1.msra.mxu0 %v2292
        %4196 = vmatprep.subr.mxu0 %v2295
        %4197 = vmatpush1.msra.mxu0 %v2294
        %4198 = vmatprep.subr.mxu0 %v2297
        %4199 = vmatpush1.msra.mxu0 %v2296
        %4200 = vmatprep.subr.mxu0 %v2299
        %4201 = vmatpush1.msra.mxu0 %v2298
        %4202 = vmatprep.subr.mxu0 %v2301
        %4203 = vmatpush1.msra.mxu0 %v2300
        %4204 = vmatprep.subr.mxu0 %v2303
        %4205 = vmatpush1.msra.mxu0 %v2302
        %4206 = vmatprep.subr.mxu0 %v2305
        %4207 = vmatpush1.msra.mxu0 %v2304
        %4208 = vmatprep.mubr.f32.mxu0 %v1513
        %4209 = vmatmul.mubr.f32.gmra.mrb[0].mxu0 %v1512
        %v4210 = vpop.f32.mrb[0].mxu0
        %v4211 = vadd.f32 %v4134, %v4210
        %v4212 = vpop.f32.mrb[0].mxu0
        %v4213 = vadd.f32 %v4136, %v4212
        %4214 = vmatprep.mubr.f32.mxu0 %v1568
        %4215 = vmatmul.mubr.f32.gmra.mrb[0].mxu0 %v1567
        %v4216 = vpop.f32.mrb[0].mxu0
        %v4217 = vadd.f32 %v4140, %v4216
        %v4218 = vpop.f32.mrb[0].mxu0
        %v4219 = vadd.f32 %v4142, %v4218
        %4220 = vdwg.mxu0
        %4221 = vmatprep.subr.mxu0 %v2307
        %4222 = vmatpush1.msra.mxu0 %v2306
        %4223 = vmatprep.subr.mxu0 %v2309
        %4224 = vmatpush1.msra.mxu0 %v2308
        %4225 = vmatprep.subr.mxu0 %v2311
        %4226 = vmatpush1.msra.mxu0 %v2310
        %4227 = vmatprep.subr.mxu0 %v2313
        %4228 = vmatpush1.msra.mxu0 %v2312
        %4229 = vmatprep.subr.mxu0 %v2315
        %4230 = vmatpush1.msra.mxu0 %v2314
        %4231 = vmatprep.subr.mxu0 %v2317
        %4232 = vmatpush1.msra.mxu0 %v2316
        %4233 = vmatprep.subr.mxu0 %v2319
        %4234 = vmatpush1.msra.mxu0 %v2318
        %4235 = vmatprep.subr.mxu0 %v2321
        %4236 = vmatpush1.msra.mxu0 %v2320
        %4237 = vmatprep.subr.mxu0 %v2323
        %4238 = vmatpush1.msra.mxu0 %v2322
        %4239 = vmatprep.subr.mxu0 %v2325
        %4240 = vmatpush1.msra.mxu0 %v2324
        %4241 = vmatprep.subr.mxu0 %v2327
        %4242 = vmatpush1.msra.mxu0 %v2326
        %4243 = vmatprep.subr.mxu0 %v2329
        %4244 = vmatpush1.msra.mxu0 %v2328
        %4245 = vmatprep.subr.mxu0 %v2331
        %4246 = vmatpush1.msra.mxu0 %v2330
        %4247 = vmatprep.subr.mxu0 %v2333
        %4248 = vmatpush1.msra.mxu0 %v2332
        %4249 = vmatprep.subr.mxu0 %v2335
        %4250 = vmatpush1.msra.mxu0 %v2334
        %4251 = vmatprep.subr.mxu0 %v2337
        %4252 = vmatpush1.msra.mxu0 %v2336
        %4253 = vmatprep.subr.mxu0 %v2339
        %4254 = vmatpush1.msra.mxu0 %v2338
        %4255 = vmatprep.subr.mxu0 %v2341
        %4256 = vmatpush1.msra.mxu0 %v2340
        %4257 = vmatprep.subr.mxu0 %v2343
        %4258 = vmatpush1.msra.mxu0 %v2342
        %4259 = vmatprep.subr.mxu0 %v2345
        %4260 = vmatpush1.msra.mxu0 %v2344
        %4261 = vmatprep.subr.mxu0 %v2347
        %4262 = vmatpush1.msra.mxu0 %v2346
        %4263 = vmatprep.subr.mxu0 %v2349
        %4264 = vmatpush1.msra.mxu0 %v2348
        %4265 = vmatprep.subr.mxu0 %v2351
        %4266 = vmatpush1.msra.mxu0 %v2350
        %4267 = vmatprep.subr.mxu0 %v2353
        %4268 = vmatpush1.msra.mxu0 %v2352
        %4269 = vmatprep.subr.mxu0 %v2355
        %4270 = vmatpush1.msra.mxu0 %v2354
        %4271 = vmatprep.subr.mxu0 %v2357
        %4272 = vmatpush1.msra.mxu0 %v2356
        %4273 = vmatprep.subr.mxu0 %v2359
        %4274 = vmatpush1.msra.mxu0 %v2358
        %4275 = vmatprep.subr.mxu0 %v2361
        %4276 = vmatpush1.msra.mxu0 %v2360
        %4277 = vmatprep.subr.mxu0 %v2363
        %4278 = vmatpush1.msra.mxu0 %v2362
        %4279 = vmatprep.subr.mxu0 %v2365
        %4280 = vmatpush1.msra.mxu0 %v2364
        %4281 = vmatprep.subr.mxu0 %v2367
        %4282 = vmatpush1.msra.mxu0 %v2366
        %4283 = vmatprep.subr.mxu0 %v2369
        %4284 = vmatpush1.msra.mxu0 %v2368
        %4285 = vmatprep.mubr.f32.mxu0 %v1515
        %4286 = vmatmul.mubr.f32.gmra.mrb[0].mxu0 %v1514
        %v4287 = vpop.f32.mrb[0].mxu0
        %v4288 = vadd.f32 %v4211, %v4287
        %v4289 = vpop.f32.mrb[0].mxu0
        %v4290 = vadd.f32 %v4213, %v4289
        %4291 = vmatprep.mubr.f32.mxu0 %v1570
        %4292 = vmatmul.mubr.f32.gmra.mrb[0].mxu0 %v1569
        %v4293 = vpop.f32.mrb[0].mxu0
        %v4294 = vadd.f32 %v4217, %v4293
        %v4295 = vpop.f32.mrb[0].mxu0
        %v4296 = vadd.f32 %v4219, %v4295
        %4297 = vdwg.mxu0
        %4298 = vmatprep.subr.mxu0 %v2371
        %4299 = vmatpush1.msra.mxu0 %v2370
        %4300 = vmatprep.subr.mxu0 %v2373
        %4301 = vmatpush1.msra.mxu0 %v2372
        %4302 = vmatprep.subr.mxu0 %v2375
        %4303 = vmatpush1.msra.mxu0 %v2374
        %4304 = vmatprep.subr.mxu0 %v2377
        %4305 = vmatpush1.msra.mxu0 %v2376
        %4306 = vmatprep.subr.mxu0 %v2379
        %4307 = vmatpush1.msra.mxu0 %v2378
        %4308 = vmatprep.subr.mxu0 %v2381
        %4309 = vmatpush1.msra.mxu0 %v2380
        %4310 = vmatprep.subr.mxu0 %v2383
        %4311 = vmatpush1.msra.mxu0 %v2382
        %4312 = vmatprep.subr.mxu0 %v2385
        %4313 = vmatpush1.msra.mxu0 %v2384
        %4314 = vmatprep.subr.mxu0 %v2387
        %4315 = vmatpush1.msra.mxu0 %v2386
        %4316 = vmatprep.subr.mxu0 %v2389
        %4317 = vmatpush1.msra.mxu0 %v2388
        %4318 = vmatprep.subr.mxu0 %v2391
        %4319 = vmatpush1.msra.mxu0 %v2390
        %4320 = vmatprep.subr.mxu0 %v2393
        %4321 = vmatpush1.msra.mxu0 %v2392
        %4322 = vmatprep.subr.mxu0 %v2395
        %4323 = vmatpush1.msra.mxu0 %v2394
        %4324 = vmatprep.subr.mxu0 %v2397
        %4325 = vmatpush1.msra.mxu0 %v2396
        %4326 = vmatprep.subr.mxu0 %v2399
        %4327 = vmatpush1.msra.mxu0 %v2398
        %4328 = vmatprep.subr.mxu0 %v2401
        %4329 = vmatpush1.msra.mxu0 %v2400
        %4330 = vmatprep.subr.mxu0 %v2403
        %4331 = vmatpush1.msra.mxu0 %v2402
        %4332 = vmatprep.subr.mxu0 %v2405
        %4333 = vmatpush1.msra.mxu0 %v2404
        %4334 = vmatprep.subr.mxu0 %v2407
        %4335 = vmatpush1.msra.mxu0 %v2406
        %4336 = vmatprep.subr.mxu0 %v2409
        %4337 = vmatpush1.msra.mxu0 %v2408
        %4338 = vmatprep.subr.mxu0 %v2411
        %4339 = vmatpush1.msra.mxu0 %v2410
        %4340 = vmatprep.subr.mxu0 %v2413
        %4341 = vmatpush1.msra.mxu0 %v2412
        %4342 = vmatprep.subr.mxu0 %v2415
        %4343 = vmatpush1.msra.mxu0 %v2414
        %4344 = vmatprep.subr.mxu0 %v2417
        %4345 = vmatpush1.msra.mxu0 %v2416
        %4346 = vmatprep.subr.mxu0 %v2419
        %4347 = vmatpush1.msra.mxu0 %v2418
        %4348 = vmatprep.subr.mxu0 %v2421
        %4349 = vmatpush1.msra.mxu0 %v2420
        %4350 = vmatprep.subr.mxu0 %v2423
        %4351 = vmatpush1.msra.mxu0 %v2422
        %4352 = vmatprep.subr.mxu0 %v2425
        %4353 = vmatpush1.msra.mxu0 %v2424
        %4354 = vmatprep.subr.mxu0 %v2427
        %4355 = vmatpush1.msra.mxu0 %v2426
        %4356 = vmatprep.subr.mxu0 %v2429
        %4357 = vmatpush1.msra.mxu0 %v2428
        %4358 = vmatprep.subr.mxu0 %v2431
        %4359 = vmatpush1.msra.mxu0 %v2430
        %4360 = vmatprep.subr.mxu0 %v2433
        %4361 = vmatpush1.msra.mxu0 %v2432
        %4362 = vmatprep.mubr.f32.mxu0 %v1517
        %4363 = vmatmul.mubr.f32.gmra.mrb[0].mxu0 %v1516
        %v4364 = vpop.f32.mrb[0].mxu0
        %v4365 = vadd.f32 %v4288, %v4364
        %v4366 = vpop.f32.mrb[0].mxu0
        %v4367 = vadd.f32 %v4290, %v4366
        %4368 = vmatprep.mubr.f32.mxu0 %v1572
        %4369 = vmatmul.mubr.f32.gmra.mrb[0].mxu0 %v1571
        %v4370 = vpop.f32.mrb[0].mxu0
        %v4371 = vadd.f32 %v4294, %v4370
        %v4372 = vpop.f32.mrb[0].mxu0
        %v4373 = vadd.f32 %v4296, %v4372
        %4374 = vdwg.mxu0
        %4375 = vmatprep.subr.mxu0 %v2435
        %4376 = vmatpush1.msra.mxu0 %v2434
        %4377 = vmatprep.subr.mxu0 %v2437
        %4378 = vmatpush1.msra.mxu0 %v2436
        %4379 = vmatprep.subr.mxu0 %v2439
        %4380 = vmatpush1.msra.mxu0 %v2438
        %4381 = vmatprep.subr.mxu0 %v2441
        %4382 = vmatpush1.msra.mxu0 %v2440
        %4383 = vmatprep.subr.mxu0 %v2443
        %4384 = vmatpush1.msra.mxu0 %v2442
        %4385 = vmatprep.subr.mxu0 %v2445
        %4386 = vmatpush1.msra.mxu0 %v2444
        %4387 = vmatprep.subr.mxu0 %v2447
        %4388 = vmatpush1.msra.mxu0 %v2446
        %4389 = vmatprep.subr.mxu0 %v2449
        %4390 = vmatpush1.msra.mxu0 %v2448
        %4391 = vmatprep.subr.mxu0 %v2451
        %4392 = vmatpush1.msra.mxu0 %v2450
        %4393 = vmatprep.subr.mxu0 %v2453
        %4394 = vmatpush1.msra.mxu0 %v2452
        %4395 = vmatprep.subr.mxu0 %v2455
        %4396 = vmatpush1.msra.mxu0 %v2454
        %4397 = vmatprep.subr.mxu0 %v2457
        %4398 = vmatpush1.msra.mxu0 %v2456
        %4399 = vmatprep.subr.mxu0 %v2459
        %4400 = vmatpush1.msra.mxu0 %v2458
        %4401 = vmatprep.subr.mxu0 %v2461
        %4402 = vmatpush1.msra.mxu0 %v2460
        %4403 = vmatprep.subr.mxu0 %v2463
        %4404 = vmatpush1.msra.mxu0 %v2462
        %4405 = vmatprep.subr.mxu0 %v2465
        %4406 = vmatpush1.msra.mxu0 %v2464
        %4407 = vmatprep.subr.mxu0 %v2467
        %4408 = vmatpush1.msra.mxu0 %v2466
        %4409 = vmatprep.subr.mxu0 %v2469
        %4410 = vmatpush1.msra.mxu0 %v2468
        %4411 = vmatprep.subr.mxu0 %v2471
        %4412 = vmatpush1.msra.mxu0 %v2470
        %4413 = vmatprep.subr.mxu0 %v2473
        %4414 = vmatpush1.msra.mxu0 %v2472
        %4415 = vmatprep.subr.mxu0 %v2475
        %4416 = vmatpush1.msra.mxu0 %v2474
        %4417 = vmatprep.subr.mxu0 %v2477
        %4418 = vmatpush1.msra.mxu0 %v2476
        %4419 = vmatprep.subr.mxu0 %v2479
        %4420 = vmatpush1.msra.mxu0 %v2478
        %4421 = vmatprep.subr.mxu0 %v2481
        %4422 = vmatpush1.msra.mxu0 %v2480
        %4423 = vmatprep.subr.mxu0 %v2483
        %4424 = vmatpush1.msra.mxu0 %v2482
        %4425 = vmatprep.subr.mxu0 %v2485
        %4426 = vmatpush1.msra.mxu0 %v2484
        %4427 = vmatprep.subr.mxu0 %v2487
        %4428 = vmatpush1.msra.mxu0 %v2486
        %4429 = vmatprep.subr.mxu0 %v2489
        %4430 = vmatpush1.msra.mxu0 %v2488
        %4431 = vmatprep.subr.mxu0 %v2491
        %4432 = vmatpush1.msra.mxu0 %v2490
        %4433 = vmatprep.subr.mxu0 %v2493
        %4434 = vmatpush1.msra.mxu0 %v2492
        %4435 = vmatprep.subr.mxu0 %v2495
        %4436 = vmatpush1.msra.mxu0 %v2494
        %4437 = vmatprep.subr.mxu0 %v2497
        %4438 = vmatpush1.msra.mxu0 %v2496
        %4439 = vmatprep.mubr.f32.mxu0 %v1519
        %4440 = vmatmul.mubr.f32.gmra.mrb[0].mxu0 %v1518
        %v4441 = vpop.f32.mrb[0].mxu0
        %v4442 = vadd.f32 %v4365, %v4441
        %v4443 = vpop.f32.mrb[0].mxu0
        %v4444 = vadd.f32 %v4367, %v4443
        %4445 = vmatprep.mubr.f32.mxu0 %v1574
        %4446 = vmatmul.mubr.f32.gmra.mrb[0].mxu0 %v1573
        %v4447 = vpop.f32.mrb[0].mxu0
        %v4448 = vadd.f32 %v4371, %v4447
        %v4449 = vpop.f32.mrb[0].mxu0
        %v4450 = vadd.f32 %v4373, %v4449
        %4451 = vdwg.mxu0
        %4452 = vmatprep.subr.mxu0 %v2499
        %4453 = vmatpush1.msra.mxu0 %v2498
        %4454 = vmatprep.subr.mxu0 %v2501
        %4455 = vmatpush1.msra.mxu0 %v2500
        %4456 = vmatprep.subr.mxu0 %v2503
        %4457 = vmatpush1.msra.mxu0 %v2502
        %4458 = vmatprep.subr.mxu0 %v2505
        %4459 = vmatpush1.msra.mxu0 %v2504
        %4460 = vmatprep.subr.mxu0 %v2507
        %4461 = vmatpush1.msra.mxu0 %v2506
        %4462 = vmatprep.subr.mxu0 %v2509
        %4463 = vmatpush1.msra.mxu0 %v2508
        %4464 = vmatprep.subr.mxu0 %v2511
        %4465 = vmatpush1.msra.mxu0 %v2510
        %4466 = vmatprep.subr.mxu0 %v2513
        %4467 = vmatpush1.msra.mxu0 %v2512
        %4468 = vmatprep.subr.mxu0 %v2515
        %4469 = vmatpush1.msra.mxu0 %v2514
        %4470 = vmatprep.subr.mxu0 %v2517
        %4471 = vmatpush1.msra.mxu0 %v2516
        %4472 = vmatprep.subr.mxu0 %v2519
        %4473 = vmatpush1.msra.mxu0 %v2518
        %4474 = vmatprep.subr.mxu0 %v2521
        %4475 = vmatpush1.msra.mxu0 %v2520
        %4476 = vmatprep.subr.mxu0 %v2523
        %4477 = vmatpush1.msra.mxu0 %v2522
        %4478 = vmatprep.subr.mxu0 %v2525
        %4479 = vmatpush1.msra.mxu0 %v2524
        %4480 = vmatprep.subr.mxu0 %v2527
        %4481 = vmatpush1.msra.mxu0 %v2526
        %4482 = vmatprep.subr.mxu0 %v2529
        %4483 = vmatpush1.msra.mxu0 %v2528
        %4484 = vmatprep.subr.mxu0 %v2531
        %4485 = vmatpush1.msra.mxu0 %v2530
        %4486 = vmatprep.subr.mxu0 %v2533
        %4487 = vmatpush1.msra.mxu0 %v2532
        %4488 = vmatprep.subr.mxu0 %v2535
        %4489 = vmatpush1.msra.mxu0 %v2534
        %4490 = vmatprep.subr.mxu0 %v2537
        %4491 = vmatpush1.msra.mxu0 %v2536
        %4492 = vmatprep.subr.mxu0 %v2539
        %4493 = vmatpush1.msra.mxu0 %v2538
        %4494 = vmatprep.subr.mxu0 %v2541
        %4495 = vmatpush1.msra.mxu0 %v2540
        %4496 = vmatprep.subr.mxu0 %v2543
        %4497 = vmatpush1.msra.mxu0 %v2542
        %4498 = vmatprep.subr.mxu0 %v2545
        %4499 = vmatpush1.msra.mxu0 %v2544
        %4500 = vmatprep.subr.mxu0 %v2547
        %4501 = vmatpush1.msra.mxu0 %v2546
        %4502 = vmatprep.subr.mxu0 %v2549
        %4503 = vmatpush1.msra.mxu0 %v2548
        %4504 = vmatprep.subr.mxu0 %v2551
        %4505 = vmatpush1.msra.mxu0 %v2550
        %4506 = vmatprep.subr.mxu0 %v2553
        %4507 = vmatpush1.msra.mxu0 %v2552
        %4508 = vmatprep.subr.mxu0 %v2555
        %4509 = vmatpush1.msra.mxu0 %v2554
        %4510 = vmatprep.subr.mxu0 %v2557
        %4511 = vmatpush1.msra.mxu0 %v2556
        %4512 = vmatprep.subr.mxu0 %v2559
        %4513 = vmatpush1.msra.mxu0 %v2558
        %4514 = vmatprep.subr.mxu0 %v2561
        %4515 = vmatpush1.msra.mxu0 %v2560
        %4516 = vmatprep.mubr.f32.mxu0 %v1521
        %4517 = vmatmul.mubr.f32.gmra.mrb[0].mxu0 %v1520
        %v4518 = vpop.f32.mrb[0].mxu0
        %v4519 = vadd.f32 %v4442, %v4518
        %v4520 = vpop.f32.mrb[0].mxu0
        %v4521 = vadd.f32 %v4444, %v4520
        %4522 = vmatprep.mubr.f32.mxu0 %v1576
        %4523 = vmatmul.mubr.f32.gmra.mrb[0].mxu0 %v1575
        %v4524 = vpop.f32.mrb[0].mxu0
        %v4525 = vadd.f32 %v4448, %v4524
        %v4526 = vpop.f32.mrb[0].mxu0
        %v4527 = vadd.f32 %v4450, %v4526
        %4528 = vdwg.mxu0
        %4529 = vmatprep.subr.mxu0 %v2563
        %4530 = vmatpush1.msra.mxu0 %v2562
        %4531 = vmatprep.subr.mxu0 %v2565
        %4532 = vmatpush1.msra.mxu0 %v2564
        %4533 = vmatprep.subr.mxu0 %v2567
        %4534 = vmatpush1.msra.mxu0 %v2566
        %4535 = vmatprep.subr.mxu0 %v2569
        %4536 = vmatpush1.msra.mxu0 %v2568
        %4537 = vmatprep.subr.mxu0 %v2571
        %4538 = vmatpush1.msra.mxu0 %v2570
        %4539 = vmatprep.subr.mxu0 %v2573
        %4540 = vmatpush1.msra.mxu0 %v2572
        %4541 = vmatprep.subr.mxu0 %v2575
        %4542 = vmatpush1.msra.mxu0 %v2574
        %4543 = vmatprep.subr.mxu0 %v2577
        %4544 = vmatpush1.msra.mxu0 %v2576
        %4545 = vmatprep.subr.mxu0 %v2579
        %4546 = vmatpush1.msra.mxu0 %v2578
        %4547 = vmatprep.subr.mxu0 %v2581
        %4548 = vmatpush1.msra.mxu0 %v2580
        %4549 = vmatprep.subr.mxu0 %v2583
        %4550 = vmatpush1.msra.mxu0 %v2582
        %4551 = vmatprep.subr.mxu0 %v2585
        %4552 = vmatpush1.msra.mxu0 %v2584
        %4553 = vmatprep.subr.mxu0 %v2587
        %4554 = vmatpush1.msra.mxu0 %v2586
        %4555 = vmatprep.subr.mxu0 %v2589
        %4556 = vmatpush1.msra.mxu0 %v2588
        %4557 = vmatprep.subr.mxu0 %v2591
        %4558 = vmatpush1.msra.mxu0 %v2590
        %4559 = vmatprep.subr.mxu0 %v2593
        %4560 = vmatpush1.msra.mxu0 %v2592
        %4561 = vmatprep.subr.mxu0 %v2595
        %4562 = vmatpush1.msra.mxu0 %v2594
        %4563 = vmatprep.subr.mxu0 %v2597
        %4564 = vmatpush1.msra.mxu0 %v2596
        %4565 = vmatprep.subr.mxu0 %v2599
        %4566 = vmatpush1.msra.mxu0 %v2598
        %4567 = vmatprep.subr.mxu0 %v2601
        %4568 = vmatpush1.msra.mxu0 %v2600
        %4569 = vmatprep.subr.mxu0 %v2603
        %4570 = vmatpush1.msra.mxu0 %v2602
        %4571 = vmatprep.subr.mxu0 %v2605
        %4572 = vmatpush1.msra.mxu0 %v2604
        %4573 = vmatprep.subr.mxu0 %v2607
        %4574 = vmatpush1.msra.mxu0 %v2606
        %4575 = vmatprep.subr.mxu0 %v2609
        %4576 = vmatpush1.msra.mxu0 %v2608
        %4577 = vmatprep.subr.mxu0 %v2611
        %4578 = vmatpush1.msra.mxu0 %v2610
        %4579 = vmatprep.subr.mxu0 %v2613
        %4580 = vmatpush1.msra.mxu0 %v2612
        %4581 = vmatprep.subr.mxu0 %v2615
        %4582 = vmatpush1.msra.mxu0 %v2614
        %4583 = vmatprep.subr.mxu0 %v2617
        %4584 = vmatpush1.msra.mxu0 %v2616
        %4585 = vmatprep.subr.mxu0 %v2619
        %4586 = vmatpush1.msra.mxu0 %v2618
        %4587 = vmatprep.subr.mxu0 %v2621
        %4588 = vmatpush1.msra.mxu0 %v2620
        %4589 = vmatprep.subr.mxu0 %v2623
        %4590 = vmatpush1.msra.mxu0 %v2622
        %4591 = vmatprep.subr.mxu0 %v2625
        %4592 = vmatpush1.msra.mxu0 %v2624
        %4593 = vmatprep.mubr.f32.mxu0 %v1523
        %4594 = vmatmul.mubr.f32.gmra.mrb[0].mxu0 %v1522
        %v4595 = vpop.f32.mrb[0].mxu0
        %v4596 = vadd.f32 %v4519, %v4595
        %v4597 = vpop.f32.mrb[0].mxu0
        %v4598 = vadd.f32 %v4521, %v4597
        %4599 = vmatprep.mubr.f32.mxu0 %v1578
        %4600 = vmatmul.mubr.f32.gmra.mrb[0].mxu0 %v1577
        %v4601 = vpop.f32.mrb[0].mxu0
        %v4602 = vadd.f32 %v4525, %v4601
        %v4603 = vpop.f32.mrb[0].mxu0
        %v4604 = vadd.f32 %v4527, %v4603
        %4605 = vdwg.mxu0
        %4606 = vmatprep.subr.mxu0 %v2627
        %4607 = vmatpush1.msra.mxu0 %v2626
        %4608 = vmatprep.subr.mxu0 %v2629
        %4609 = vmatpush1.msra.mxu0 %v2628
        %4610 = vmatprep.subr.mxu0 %v2631
        %4611 = vmatpush1.msra.mxu0 %v2630
        %4612 = vmatprep.subr.mxu0 %v2633
        %4613 = vmatpush1.msra.mxu0 %v2632
        %4614 = vmatprep.subr.mxu0 %v2635
        %4615 = vmatpush1.msra.mxu0 %v2634
        %4616 = vmatprep.subr.mxu0 %v2637
        %4617 = vmatpush1.msra.mxu0 %v2636
        %4618 = vmatprep.subr.mxu0 %v2639
        %4619 = vmatpush1.msra.mxu0 %v2638
        %4620 = vmatprep.subr.mxu0 %v2641
        %4621 = vmatpush1.msra.mxu0 %v2640
        %4622 = vmatprep.subr.mxu0 %v2643
        %4623 = vmatpush1.msra.mxu0 %v2642
        %4624 = vmatprep.subr.mxu0 %v2645
        %4625 = vmatpush1.msra.mxu0 %v2644
        %4626 = vmatprep.subr.mxu0 %v2647
        %4627 = vmatpush1.msra.mxu0 %v2646
        %4628 = vmatprep.subr.mxu0 %v2649
        %4629 = vmatpush1.msra.mxu0 %v2648
        %4630 = vmatprep.subr.mxu0 %v2651
        %4631 = vmatpush1.msra.mxu0 %v2650
        %4632 = vmatprep.subr.mxu0 %v2653
        %4633 = vmatpush1.msra.mxu0 %v2652
        %4634 = vmatprep.subr.mxu0 %v2655
        %4635 = vmatpush1.msra.mxu0 %v2654
        %4636 = vmatprep.subr.mxu0 %v2657
        %4637 = vmatpush1.msra.mxu0 %v2656
        %4638 = vmatprep.subr.mxu0 %v2659
        %4639 = vmatpush1.msra.mxu0 %v2658
        %4640 = vmatprep.subr.mxu0 %v2661
        %4641 = vmatpush1.msra.mxu0 %v2660
        %4642 = vmatprep.subr.mxu0 %v2663
        %4643 = vmatpush1.msra.mxu0 %v2662
        %4644 = vmatprep.subr.mxu0 %v2665
        %4645 = vmatpush1.msra.mxu0 %v2664
        %4646 = vmatprep.subr.mxu0 %v2667
        %4647 = vmatpush1.msra.mxu0 %v2666
        %4648 = vmatprep.subr.mxu0 %v2669
        %4649 = vmatpush1.msra.mxu0 %v2668
        %4650 = vmatprep.subr.mxu0 %v2671
        %4651 = vmatpush1.msra.mxu0 %v2670
        %4652 = vmatprep.subr.mxu0 %v2673
        %4653 = vmatpush1.msra.mxu0 %v2672
        %4654 = vmatprep.subr.mxu0 %v2675
        %4655 = vmatpush1.msra.mxu0 %v2674
        %4656 = vmatprep.subr.mxu0 %v2677
        %4657 = vmatpush1.msra.mxu0 %v2676
        %4658 = vmatprep.subr.mxu0 %v2679
        %4659 = vmatpush1.msra.mxu0 %v2678
        %4660 = vmatprep.subr.mxu0 %v2681
        %4661 = vmatpush1.msra.mxu0 %v2680
        %4662 = vmatprep.subr.mxu0 %v2683
        %4663 = vmatpush1.msra.mxu0 %v2682
        %4664 = vmatprep.subr.mxu0 %v2685
        %4665 = vmatpush1.msra.mxu0 %v2684
        %4666 = vmatprep.subr.mxu0 %v2687
        %4667 = vmatpush1.msra.mxu0 %v2686
        %4668 = vmatprep.subr.mxu0 %v2689
        %4669 = vmatpush1.msra.mxu0 %v2688
        %4670 = vmatprep.mubr.f32.mxu0 %v1525
        %4671 = vmatmul.mubr.f32.gmra.mrb[0].mxu0 %v1524
        %v4672 = vpop.f32.mrb[0].mxu0
        %v4673 = vadd.f32 %v4596, %v4672
        %v4674 = vpop.f32.mrb[0].mxu0
        %v4675 = vadd.f32 %v4598, %v4674
        %4676 = vmatprep.mubr.f32.mxu0 %v1580
        %4677 = vmatmul.mubr.f32.gmra.mrb[0].mxu0 %v1579
        %v4678 = vpop.f32.mrb[0].mxu0
        %v4679 = vadd.f32 %v4602, %v4678
        %v4680 = vpop.f32.mrb[0].mxu0
        %v4681 = vadd.f32 %v4604, %v4680
        %4682 = vdwg.mxu0
        %4683 = vmatprep.subr.mxu0 %v2691
        %4684 = vmatpush1.msra.mxu0 %v2690
        %4685 = vmatprep.subr.mxu0 %v2693
        %4686 = vmatpush1.msra.mxu0 %v2692
        %4687 = vmatprep.subr.mxu0 %v2695
        %4688 = vmatpush1.msra.mxu0 %v2694
        %4689 = vmatprep.subr.mxu0 %v2697
        %4690 = vmatpush1.msra.mxu0 %v2696
        %4691 = vmatprep.subr.mxu0 %v2699
        %4692 = vmatpush1.msra.mxu0 %v2698
        %4693 = vmatprep.subr.mxu0 %v2701
        %4694 = vmatpush1.msra.mxu0 %v2700
        %4695 = vmatprep.subr.mxu0 %v2703
        %4696 = vmatpush1.msra.mxu0 %v2702
        %4697 = vmatprep.subr.mxu0 %v2705
        %4698 = vmatpush1.msra.mxu0 %v2704
        %4699 = vmatprep.subr.mxu0 %v2707
        %4700 = vmatpush1.msra.mxu0 %v2706
        %4701 = vmatprep.subr.mxu0 %v2709
        %4702 = vmatpush1.msra.mxu0 %v2708
        %4703 = vmatprep.subr.mxu0 %v2711
        %4704 = vmatpush1.msra.mxu0 %v2710
        %4705 = vmatprep.subr.mxu0 %v2713
        %4706 = vmatpush1.msra.mxu0 %v2712
        %4707 = vmatprep.subr.mxu0 %v2715
        %4708 = vmatpush1.msra.mxu0 %v2714
        %4709 = vmatprep.subr.mxu0 %v2717
        %4710 = vmatpush1.msra.mxu0 %v2716
        %4711 = vmatprep.subr.mxu0 %v2719
        %4712 = vmatpush1.msra.mxu0 %v2718
        %4713 = vmatprep.subr.mxu0 %v2721
        %4714 = vmatpush1.msra.mxu0 %v2720
        %4715 = vmatprep.subr.mxu0 %v2723
        %4716 = vmatpush1.msra.mxu0 %v2722
        %4717 = vmatprep.subr.mxu0 %v2725
        %4718 = vmatpush1.msra.mxu0 %v2724
        %4719 = vmatprep.subr.mxu0 %v2727
        %4720 = vmatpush1.msra.mxu0 %v2726
        %4721 = vmatprep.subr.mxu0 %v2729
        %4722 = vmatpush1.msra.mxu0 %v2728
        %4723 = vmatprep.subr.mxu0 %v2731
        %4724 = vmatpush1.msra.mxu0 %v2730
        %4725 = vmatprep.subr.mxu0 %v2733
        %4726 = vmatpush1.msra.mxu0 %v2732
        %4727 = vmatprep.subr.mxu0 %v2735
        %4728 = vmatpush1.msra.mxu0 %v2734
        %4729 = vmatprep.subr.mxu0 %v2737
        %4730 = vmatpush1.msra.mxu0 %v2736
        %4731 = vmatprep.subr.mxu0 %v2739
        %4732 = vmatpush1.msra.mxu0 %v2738
        %4733 = vmatprep.subr.mxu0 %v2741
        %4734 = vmatpush1.msra.mxu0 %v2740
        %4735 = vmatprep.subr.mxu0 %v2743
        %4736 = vmatpush1.msra.mxu0 %v2742
        %4737 = vmatprep.subr.mxu0 %v2745
        %4738 = vmatpush1.msra.mxu0 %v2744
        %4739 = vmatprep.subr.mxu0 %v2747
        %4740 = vmatpush1.msra.mxu0 %v2746
        %4741 = vmatprep.subr.mxu0 %v2749
        %4742 = vmatpush1.msra.mxu0 %v2748
        %4743 = vmatprep.subr.mxu0 %v2751
        %4744 = vmatpush1.msra.mxu0 %v2750
        %4745 = vmatprep.subr.mxu0 %v2753
        %4746 = vmatpush1.msra.mxu0 %v2752
        %4747 = vmatprep.mubr.f32.mxu0 %v1527
        %4748 = vmatmul.mubr.f32.gmra.mrb[0].mxu0 %v1526
        %v4749 = vpop.f32.mrb[0].mxu0
        %v4750 = vadd.f32 %v4673, %v4749
        %v4751 = vpop.f32.mrb[0].mxu0
        %v4752 = vadd.f32 %v4675, %v4751
        %4753 = vmatprep.mubr.f32.mxu0 %v1582
        %4754 = vmatmul.mubr.f32.gmra.mrb[0].mxu0 %v1581
        %v4755 = vpop.f32.mrb[0].mxu0
        %v4756 = vadd.f32 %v4679, %v4755
        %v4757 = vpop.f32.mrb[0].mxu0
        %v4758 = vadd.f32 %v4681, %v4757
        %4759 = vdwg.mxu0
        %4760 = vmatprep.subr.mxu0 %v2755
        %4761 = vmatpush1.msra.mxu0 %v2754
        %4762 = vmatprep.subr.mxu0 %v2757
        %4763 = vmatpush1.msra.mxu0 %v2756
        %4764 = vmatprep.subr.mxu0 %v2759
        %4765 = vmatpush1.msra.mxu0 %v2758
        %4766 = vmatprep.subr.mxu0 %v2761
        %4767 = vmatpush1.msra.mxu0 %v2760
        %4768 = vmatprep.subr.mxu0 %v2763
        %4769 = vmatpush1.msra.mxu0 %v2762
        %4770 = vmatprep.subr.mxu0 %v2765
        %4771 = vmatpush1.msra.mxu0 %v2764
        %4772 = vmatprep.subr.mxu0 %v2767
        %4773 = vmatpush1.msra.mxu0 %v2766
        %4774 = vmatprep.subr.mxu0 %v2769
        %4775 = vmatpush1.msra.mxu0 %v2768
        %4776 = vmatprep.subr.mxu0 %v2771
        %4777 = vmatpush1.msra.mxu0 %v2770
        %4778 = vmatprep.subr.mxu0 %v2773
        %4779 = vmatpush1.msra.mxu0 %v2772
        %4780 = vmatprep.subr.mxu0 %v2775
        %4781 = vmatpush1.msra.mxu0 %v2774
        %4782 = vmatprep.subr.mxu0 %v2777
        %4783 = vmatpush1.msra.mxu0 %v2776
        %4784 = vmatprep.subr.mxu0 %v2779
        %4785 = vmatpush1.msra.mxu0 %v2778
        %4786 = vmatprep.subr.mxu0 %v2781
        %4787 = vmatpush1.msra.mxu0 %v2780
        %4788 = vmatprep.subr.mxu0 %v2783
        %4789 = vmatpush1.msra.mxu0 %v2782
        %4790 = vmatprep.subr.mxu0 %v2785
        %4791 = vmatpush1.msra.mxu0 %v2784
        %4792 = vmatprep.subr.mxu0 %v2787
        %4793 = vmatpush1.msra.mxu0 %v2786
        %4794 = vmatprep.subr.mxu0 %v2789
        %4795 = vmatpush1.msra.mxu0 %v2788
        %4796 = vmatprep.subr.mxu0 %v2791
        %4797 = vmatpush1.msra.mxu0 %v2790
        %4798 = vmatprep.subr.mxu0 %v2793
        %4799 = vmatpush1.msra.mxu0 %v2792
        %4800 = vmatprep.subr.mxu0 %v2795
        %4801 = vmatpush1.msra.mxu0 %v2794
        %4802 = vmatprep.subr.mxu0 %v2797
        %4803 = vmatpush1.msra.mxu0 %v2796
        %4804 = vmatprep.subr.mxu0 %v2799
        %4805 = vmatpush1.msra.mxu0 %v2798
        %4806 = vmatprep.subr.mxu0 %v2801
        %4807 = vmatpush1.msra.mxu0 %v2800
        %4808 = vmatprep.subr.mxu0 %v2803
        %4809 = vmatpush1.msra.mxu0 %v2802
        %4810 = vmatprep.subr.mxu0 %v2805
        %4811 = vmatpush1.msra.mxu0 %v2804
        %4812 = vmatprep.subr.mxu0 %v2807
        %4813 = vmatpush1.msra.mxu0 %v2806
        %4814 = vmatprep.subr.mxu0 %v2809
        %4815 = vmatpush1.msra.mxu0 %v2808
        %4816 = vmatprep.subr.mxu0 %v2811
        %4817 = vmatpush1.msra.mxu0 %v2810
        %4818 = vmatprep.subr.mxu0 %v2813
        %4819 = vmatpush1.msra.mxu0 %v2812
        %4820 = vmatprep.subr.mxu0 %v2815
        %4821 = vmatpush1.msra.mxu0 %v2814
        %4822 = vmatprep.subr.mxu0 %v2817
        %4823 = vmatpush1.msra.mxu0 %v2816
        %4824 = vmatprep.mubr.f32.mxu0 %v1529
        %4825 = vmatmul.mubr.f32.gmra.mrb[0].mxu0 %v1528
        %v4826 = vpop.f32.mrb[0].mxu0
        %v4827 = vadd.f32 %v4750, %v4826
        %v4828 = vpop.f32.mrb[0].mxu0
        %v4829 = vadd.f32 %v4752, %v4828
        %4830 = vmatprep.mubr.f32.mxu0 %v1584
        %4831 = vmatmul.mubr.f32.gmra.mrb[0].mxu0 %v1583
        %v4832 = vpop.f32.mrb[0].mxu0
        %v4833 = vadd.f32 %v4756, %v4832
        %v4834 = vpop.f32.mrb[0].mxu0
        %v4835 = vadd.f32 %v4758, %v4834
        %4836 = vdwg.mxu0
        %4837 = vmatprep.subr.mxu0 %v2819
        %4838 = vmatpush1.msra.mxu0 %v2818
        %4839 = vmatprep.subr.mxu0 %v2821
        %4840 = vmatpush1.msra.mxu0 %v2820
        %4841 = vmatprep.subr.mxu0 %v2823
        %4842 = vmatpush1.msra.mxu0 %v2822
        %4843 = vmatprep.subr.mxu0 %v2825
        %4844 = vmatpush1.msra.mxu0 %v2824
        %4845 = vmatprep.subr.mxu0 %v2827
        %4846 = vmatpush1.msra.mxu0 %v2826
        %4847 = vmatprep.subr.mxu0 %v2829
        %4848 = vmatpush1.msra.mxu0 %v2828
        %4849 = vmatprep.subr.mxu0 %v2831
        %4850 = vmatpush1.msra.mxu0 %v2830
        %4851 = vmatprep.subr.mxu0 %v2833
        %4852 = vmatpush1.msra.mxu0 %v2832
        %4853 = vmatprep.subr.mxu0 %v2835
        %4854 = vmatpush1.msra.mxu0 %v2834
        %4855 = vmatprep.subr.mxu0 %v2837
        %4856 = vmatpush1.msra.mxu0 %v2836
        %4857 = vmatprep.subr.mxu0 %v2839
        %4858 = vmatpush1.msra.mxu0 %v2838
        %4859 = vmatprep.subr.mxu0 %v2841
        %4860 = vmatpush1.msra.mxu0 %v2840
        %4861 = vmatprep.subr.mxu0 %v2843
        %4862 = vmatpush1.msra.mxu0 %v2842
        %4863 = vmatprep.subr.mxu0 %v2845
        %4864 = vmatpush1.msra.mxu0 %v2844
        %4865 = vmatprep.subr.mxu0 %v2847
        %4866 = vmatpush1.msra.mxu0 %v2846
        %4867 = vmatprep.subr.mxu0 %v2849
        %4868 = vmatpush1.msra.mxu0 %v2848
        %4869 = vmatprep.subr.mxu0 %v2851
        %4870 = vmatpush1.msra.mxu0 %v2850
        %4871 = vmatprep.subr.mxu0 %v2853
        %4872 = vmatpush1.msra.mxu0 %v2852
        %4873 = vmatprep.subr.mxu0 %v2855
        %4874 = vmatpush1.msra.mxu0 %v2854
        %4875 = vmatprep.subr.mxu0 %v2857
        %4876 = vmatpush1.msra.mxu0 %v2856
        %4877 = vmatprep.subr.mxu0 %v2859
        %4878 = vmatpush1.msra.mxu0 %v2858
        %4879 = vmatprep.subr.mxu0 %v2861
        %4880 = vmatpush1.msra.mxu0 %v2860
        %4881 = vmatprep.subr.mxu0 %v2863
        %4882 = vmatpush1.msra.mxu0 %v2862
        %4883 = vmatprep.subr.mxu0 %v2865
        %4884 = vmatpush1.msra.mxu0 %v2864
        %4885 = vmatprep.subr.mxu0 %v2867
        %4886 = vmatpush1.msra.mxu0 %v2866
        %4887 = vmatprep.subr.mxu0 %v2869
        %4888 = vmatpush1.msra.mxu0 %v2868
        %4889 = vmatprep.subr.mxu0 %v2871
        %4890 = vmatpush1.msra.mxu0 %v2870
        %4891 = vmatprep.subr.mxu0 %v2873
        %4892 = vmatpush1.msra.mxu0 %v2872
        %4893 = vmatprep.subr.mxu0 %v2875
        %4894 = vmatpush1.msra.mxu0 %v2874
        %4895 = vmatprep.subr.mxu0 %v2877
        %4896 = vmatpush1.msra.mxu0 %v2876
        %4897 = vmatprep.subr.mxu0 %v2879
        %4898 = vmatpush1.msra.mxu0 %v2878
        %4899 = vmatprep.subr.mxu0 %v2881
        %4900 = vmatpush1.msra.mxu0 %v2880
        %4901 = vmatprep.mubr.f32.mxu0 %v1531
        %4902 = vmatmul.mubr.f32.gmra.mrb[0].mxu0 %v1530
        %v4903 = vpop.f32.mrb[0].mxu0
        %v4904 = vadd.f32 %v4827, %v4903
        %v4905 = vpop.f32.mrb[0].mxu0
        %v4906 = vadd.f32 %v4829, %v4905
        %4907 = vmatprep.mubr.f32.mxu0 %v1586
        %4908 = vmatmul.mubr.f32.gmra.mrb[0].mxu0 %v1585
        %v4909 = vpop.f32.mrb[0].mxu0
        %v4910 = vadd.f32 %v4833, %v4909
        %v4911 = vpop.f32.mrb[0].mxu0
        %v4912 = vadd.f32 %v4835, %v4911
        %4913 = vdwg.mxu0
        %4914 = vmatprep.subr.mxu0 %v2883
        %4915 = vmatpush1.msra.mxu0 %v2882
        %4916 = vmatprep.subr.mxu0 %v2885
        %4917 = vmatpush1.msra.mxu0 %v2884
        %4918 = vmatprep.subr.mxu0 %v2887
        %4919 = vmatpush1.msra.mxu0 %v2886
        %4920 = vmatprep.subr.mxu0 %v2889
        %4921 = vmatpush1.msra.mxu0 %v2888
        %4922 = vmatprep.subr.mxu0 %v2891
        %4923 = vmatpush1.msra.mxu0 %v2890
        %4924 = vmatprep.subr.mxu0 %v2893
        %4925 = vmatpush1.msra.mxu0 %v2892
        %4926 = vmatprep.subr.mxu0 %v2895
        %4927 = vmatpush1.msra.mxu0 %v2894
        %4928 = vmatprep.subr.mxu0 %v2897
        %4929 = vmatpush1.msra.mxu0 %v2896
        %4930 = vmatprep.subr.mxu0 %v2899
        %4931 = vmatpush1.msra.mxu0 %v2898
        %4932 = vmatprep.subr.mxu0 %v2901
        %4933 = vmatpush1.msra.mxu0 %v2900
        %4934 = vmatprep.subr.mxu0 %v2903
        %4935 = vmatpush1.msra.mxu0 %v2902
        %4936 = vmatprep.subr.mxu0 %v2905
        %4937 = vmatpush1.msra.mxu0 %v2904
        %4938 = vmatprep.subr.mxu0 %v2907
        %4939 = vmatpush1.msra.mxu0 %v2906
        %4940 = vmatprep.subr.mxu0 %v2909
        %4941 = vmatpush1.msra.mxu0 %v2908
        %4942 = vmatprep.subr.mxu0 %v2911
        %4943 = vmatpush1.msra.mxu0 %v2910
        %4944 = vmatprep.subr.mxu0 %v2913
        %4945 = vmatpush1.msra.mxu0 %v2912
        %4946 = vmatprep.subr.mxu0 %v2915
        %4947 = vmatpush1.msra.mxu0 %v2914
        %4948 = vmatprep.subr.mxu0 %v2917
        %4949 = vmatpush1.msra.mxu0 %v2916
        %4950 = vmatprep.subr.mxu0 %v2919
        %4951 = vmatpush1.msra.mxu0 %v2918
        %4952 = vmatprep.subr.mxu0 %v2921
        %4953 = vmatpush1.msra.mxu0 %v2920
        %4954 = vmatprep.subr.mxu0 %v2923
        %4955 = vmatpush1.msra.mxu0 %v2922
        %4956 = vmatprep.subr.mxu0 %v2925
        %4957 = vmatpush1.msra.mxu0 %v2924
        %4958 = vmatprep.subr.mxu0 %v2927
        %4959 = vmatpush1.msra.mxu0 %v2926
        %4960 = vmatprep.subr.mxu0 %v2929
        %4961 = vmatpush1.msra.mxu0 %v2928
        %4962 = vmatprep.subr.mxu0 %v2931
        %4963 = vmatpush1.msra.mxu0 %v2930
        %4964 = vmatprep.subr.mxu0 %v2933
        %4965 = vmatpush1.msra.mxu0 %v2932
        %4966 = vmatprep.subr.mxu0 %v2935
        %4967 = vmatpush1.msra.mxu0 %v2934
        %4968 = vmatprep.subr.mxu0 %v2937
        %4969 = vmatpush1.msra.mxu0 %v2936
        %4970 = vmatprep.subr.mxu0 %v2939
        %4971 = vmatpush1.msra.mxu0 %v2938
        %4972 = vmatprep.subr.mxu0 %v2941
        %4973 = vmatpush1.msra.mxu0 %v2940
        %4974 = vmatprep.subr.mxu0 %v2943
        %4975 = vmatpush1.msra.mxu0 %v2942
        %4976 = vmatprep.subr.mxu0 %v2945
        %4977 = vmatpush1.msra.mxu0 %v2944
        %4978 = vmatprep.mubr.f32.mxu0 %v1533
        %4979 = vmatmul.mubr.f32.gmra.mrb[0].mxu0 %v1532
        %v4980 = vpop.f32.mrb[0].mxu0
        %v4981 = vadd.f32 %v4904, %v4980
        %v4982 = vpop.f32.mrb[0].mxu0
        %v4983 = vadd.f32 %v4906, %v4982
        %4984 = vmatprep.mubr.f32.mxu0 %v1588
        %4985 = vmatmul.mubr.f32.gmra.mrb[0].mxu0 %v1587
        %v4986 = vpop.f32.mrb[0].mxu0
        %v4987 = vadd.f32 %v4910, %v4986
        %v4988 = vpop.f32.mrb[0].mxu0
        %v4989 = vadd.f32 %v4912, %v4988
        %4990 = vdwg.mxu0
        %4991 = vmatprep.subr.mxu0 %v2947
        %4992 = vmatpush1.msra.mxu0 %v2946
        %4993 = vmatprep.subr.mxu0 %v2949
        %4994 = vmatpush1.msra.mxu0 %v2948
        %4995 = vmatprep.subr.mxu0 %v2951
        %4996 = vmatpush1.msra.mxu0 %v2950
        %4997 = vmatprep.subr.mxu0 %v2953
        %4998 = vmatpush1.msra.mxu0 %v2952
        %4999 = vmatprep.subr.mxu0 %v2955
        %5000 = vmatpush1.msra.mxu0 %v2954
        %5001 = vmatprep.subr.mxu0 %v2957
        %5002 = vmatpush1.msra.mxu0 %v2956
        %5003 = vmatprep.subr.mxu0 %v2959
        %5004 = vmatpush1.msra.mxu0 %v2958
        %5005 = vmatprep.subr.mxu0 %v2961
        %5006 = vmatpush1.msra.mxu0 %v2960
        %5007 = vmatprep.subr.mxu0 %v2963
        %5008 = vmatpush1.msra.mxu0 %v2962
        %5009 = vmatprep.subr.mxu0 %v2965
        %5010 = vmatpush1.msra.mxu0 %v2964
        %5011 = vmatprep.subr.mxu0 %v2967
        %5012 = vmatpush1.msra.mxu0 %v2966
        %5013 = vmatprep.subr.mxu0 %v2969
        %5014 = vmatpush1.msra.mxu0 %v2968
        %5015 = vmatprep.subr.mxu0 %v2971
        %5016 = vmatpush1.msra.mxu0 %v2970
        %5017 = vmatprep.subr.mxu0 %v2973
        %5018 = vmatpush1.msra.mxu0 %v2972
        %5019 = vmatprep.subr.mxu0 %v2975
        %5020 = vmatpush1.msra.mxu0 %v2974
        %5021 = vmatprep.subr.mxu0 %v2977
        %5022 = vmatpush1.msra.mxu0 %v2976
        %5023 = vmatprep.subr.mxu0 %v2979
        %5024 = vmatpush1.msra.mxu0 %v2978
        %5025 = vmatprep.subr.mxu0 %v2981
        %5026 = vmatpush1.msra.mxu0 %v2980
        %5027 = vmatprep.subr.mxu0 %v2983
        %5028 = vmatpush1.msra.mxu0 %v2982
        %5029 = vmatprep.subr.mxu0 %v2985
        %5030 = vmatpush1.msra.mxu0 %v2984
        %5031 = vmatprep.subr.mxu0 %v2987
        %5032 = vmatpush1.msra.mxu0 %v2986
        %5033 = vmatprep.subr.mxu0 %v2989
        %5034 = vmatpush1.msra.mxu0 %v2988
        %5035 = vmatprep.subr.mxu0 %v2991
        %5036 = vmatpush1.msra.mxu0 %v2990
        %5037 = vmatprep.subr.mxu0 %v2993
        %5038 = vmatpush1.msra.mxu0 %v2992
        %5039 = vmatprep.subr.mxu0 %v2995
        %5040 = vmatpush1.msra.mxu0 %v2994
        %5041 = vmatprep.subr.mxu0 %v2997
        %5042 = vmatpush1.msra.mxu0 %v2996
        %5043 = vmatprep.subr.mxu0 %v2999
        %5044 = vmatpush1.msra.mxu0 %v2998
        %5045 = vmatprep.subr.mxu0 %v3001
        %5046 = vmatpush1.msra.mxu0 %v3000
        %5047 = vmatprep.subr.mxu0 %v3003
        %5048 = vmatpush1.msra.mxu0 %v3002
        %5049 = vmatprep.subr.mxu0 %v3005
        %5050 = vmatpush1.msra.mxu0 %v3004
        %5051 = vmatprep.subr.mxu0 %v3007
        %5052 = vmatpush1.msra.mxu0 %v3006
        %5053 = vmatprep.subr.mxu0 %v3009
        %5054 = vmatpush1.msra.mxu0 %v3008
        %5055 = vmatprep.mubr.f32.mxu0 %v1535
        %5056 = vmatmul.mubr.f32.gmra.mrb[0].mxu0 %v1534
        %v5057 = vpop.f32.mrb[0].mxu0
        %v5058 = vadd.f32 %v4981, %v5057
        %v5059 = vpop.f32.mrb[0].mxu0
        %v5060 = vadd.f32 %v4983, %v5059
        %5061 = vmatprep.mubr.f32.mxu0 %v1590
        %5062 = vmatmul.mubr.f32.gmra.mrb[0].mxu0 %v1589
        %v5063 = vpop.f32.mrb[0].mxu0
        %v5064 = vadd.f32 %v4987, %v5063
        %v5065 = vpop.f32.mrb[0].mxu0
        %v5066 = vadd.f32 %v4989, %v5065
        %5067 = vdwg.mxu0
        %5068 = vmatprep.subr.mxu0 %v3011
        %5069 = vmatpush1.msra.mxu0 %v3010
        %5070 = vmatprep.subr.mxu0 %v3013
        %5071 = vmatpush1.msra.mxu0 %v3012
        %5072 = vmatprep.subr.mxu0 %v3015
        %5073 = vmatpush1.msra.mxu0 %v3014
        %5074 = vmatprep.subr.mxu0 %v3017
        %5075 = vmatpush1.msra.mxu0 %v3016
        %5076 = vmatprep.subr.mxu0 %v3019
        %5077 = vmatpush1.msra.mxu0 %v3018
        %5078 = vmatprep.subr.mxu0 %v3021
        %5079 = vmatpush1.msra.mxu0 %v3020
        %5080 = vmatprep.subr.mxu0 %v3023
        %5081 = vmatpush1.msra.mxu0 %v3022
        %5082 = vmatprep.subr.mxu0 %v3025
        %5083 = vmatpush1.msra.mxu0 %v3024
        %5084 = vmatprep.subr.mxu0 %v3027
        %5085 = vmatpush1.msra.mxu0 %v3026
        %5086 = vmatprep.subr.mxu0 %v3029
        %5087 = vmatpush1.msra.mxu0 %v3028
        %5088 = vmatprep.subr.mxu0 %v3031
        %5089 = vmatpush1.msra.mxu0 %v3030
        %5090 = vmatprep.subr.mxu0 %v3033
        %5091 = vmatpush1.msra.mxu0 %v3032
        %5092 = vmatprep.subr.mxu0 %v3035
        %5093 = vmatpush1.msra.mxu0 %v3034
        %5094 = vmatprep.subr.mxu0 %v3037
        %5095 = vmatpush1.msra.mxu0 %v3036
        %5096 = vmatprep.subr.mxu0 %v3039
        %5097 = vmatpush1.msra.mxu0 %v3038
        %5098 = vmatprep.subr.mxu0 %v3041
        %5099 = vmatpush1.msra.mxu0 %v3040
        %5100 = vmatprep.subr.mxu0 %v3043
        %5101 = vmatpush1.msra.mxu0 %v3042
        %5102 = vmatprep.subr.mxu0 %v3045
        %5103 = vmatpush1.msra.mxu0 %v3044
        %5104 = vmatprep.subr.mxu0 %v3047
        %5105 = vmatpush1.msra.mxu0 %v3046
        %5106 = vmatprep.subr.mxu0 %v3049
        %5107 = vmatpush1.msra.mxu0 %v3048
        %5108 = vmatprep.subr.mxu0 %v3051
        %5109 = vmatpush1.msra.mxu0 %v3050
        %5110 = vmatprep.subr.mxu0 %v3053
        %5111 = vmatpush1.msra.mxu0 %v3052
        %5112 = vmatprep.subr.mxu0 %v3055
        %5113 = vmatpush1.msra.mxu0 %v3054
        %5114 = vmatprep.subr.mxu0 %v3057
        %5115 = vmatpush1.msra.mxu0 %v3056
        %5116 = vmatprep.subr.mxu0 %v3059
        %5117 = vmatpush1.msra.mxu0 %v3058
        %5118 = vmatprep.subr.mxu0 %v3061
        %5119 = vmatpush1.msra.mxu0 %v3060
        %5120 = vmatprep.subr.mxu0 %v3063
        %5121 = vmatpush1.msra.mxu0 %v3062
        %5122 = vmatprep.subr.mxu0 %v3065
        %5123 = vmatpush1.msra.mxu0 %v3064
        %5124 = vmatprep.subr.mxu0 %v3067
        %5125 = vmatpush1.msra.mxu0 %v3066
        %5126 = vmatprep.subr.mxu0 %v3069
        %5127 = vmatpush1.msra.mxu0 %v3068
        %5128 = vmatprep.subr.mxu0 %v3071
        %5129 = vmatpush1.msra.mxu0 %v3070
        %5130 = vmatprep.subr.mxu0 %v3073
        %5131 = vmatpush1.msra.mxu0 %v3072
        %5132 = vmatprep.mubr.f32.mxu0 %v1537
        %5133 = vmatmul.mubr.f32.gmra.mrb[0].mxu0 %v1536
        %v5134 = vpop.f32.mrb[0].mxu0
        %v5135 = vadd.f32 %v5058, %v5134
        %v5136 = vpop.f32.mrb[0].mxu0
        %v5137 = vadd.f32 %v5060, %v5136
        %5138 = vmatprep.mubr.f32.mxu0 %v1592
        %5139 = vmatmul.mubr.f32.gmra.mrb[0].mxu0 %v1591
        %v5140 = vpop.f32.mrb[0].mxu0
        %v5141 = vadd.f32 %v5064, %v5140
        %v5142 = vpop.f32.mrb[0].mxu0
        %v5143 = vadd.f32 %v5066, %v5142
        %5144 = vdwg.mxu0
        %5145 = vmatprep.subr.mxu0 %v3075
        %5146 = vmatpush1.msra.mxu0 %v3074
        %5147 = vmatprep.subr.mxu0 %v3077
        %5148 = vmatpush1.msra.mxu0 %v3076
        %5149 = vmatprep.subr.mxu0 %v3079
        %5150 = vmatpush1.msra.mxu0 %v3078
        %5151 = vmatprep.subr.mxu0 %v3081
        %5152 = vmatpush1.msra.mxu0 %v3080
        %5153 = vmatprep.subr.mxu0 %v3083
        %5154 = vmatpush1.msra.mxu0 %v3082
        %5155 = vmatprep.subr.mxu0 %v3085
        %5156 = vmatpush1.msra.mxu0 %v3084
        %5157 = vmatprep.subr.mxu0 %v3087
        %5158 = vmatpush1.msra.mxu0 %v3086
        %5159 = vmatprep.subr.mxu0 %v3089
        %5160 = vmatpush1.msra.mxu0 %v3088
        %5161 = vmatprep.subr.mxu0 %v3091
        %5162 = vmatpush1.msra.mxu0 %v3090
        %5163 = vmatprep.subr.mxu0 %v3093
        %5164 = vmatpush1.msra.mxu0 %v3092
        %5165 = vmatprep.subr.mxu0 %v3095
        %5166 = vmatpush1.msra.mxu0 %v3094
        %5167 = vmatprep.subr.mxu0 %v3097
        %5168 = vmatpush1.msra.mxu0 %v3096
        %5169 = vmatprep.subr.mxu0 %v3099
        %5170 = vmatpush1.msra.mxu0 %v3098
        %5171 = vmatprep.subr.mxu0 %v3101
        %5172 = vmatpush1.msra.mxu0 %v3100
        %5173 = vmatprep.subr.mxu0 %v3103
        %5174 = vmatpush1.msra.mxu0 %v3102
        %5175 = vmatprep.subr.mxu0 %v3105
        %5176 = vmatpush1.msra.mxu0 %v3104
        %5177 = vmatprep.subr.mxu0 %v3107
        %5178 = vmatpush1.msra.mxu0 %v3106
        %5179 = vmatprep.subr.mxu0 %v3109
        %5180 = vmatpush1.msra.mxu0 %v3108
        %5181 = vmatprep.subr.mxu0 %v3111
        %5182 = vmatpush1.msra.mxu0 %v3110
        %5183 = vmatprep.subr.mxu0 %v3113
        %5184 = vmatpush1.msra.mxu0 %v3112
        %5185 = vmatprep.subr.mxu0 %v3115
        %5186 = vmatpush1.msra.mxu0 %v3114
        %5187 = vmatprep.subr.mxu0 %v3117
        %5188 = vmatpush1.msra.mxu0 %v3116
        %5189 = vmatprep.subr.mxu0 %v3119
        %5190 = vmatpush1.msra.mxu0 %v3118
        %5191 = vmatprep.subr.mxu0 %v3121
        %5192 = vmatpush1.msra.mxu0 %v3120
        %5193 = vmatprep.subr.mxu0 %v3123
        %5194 = vmatpush1.msra.mxu0 %v3122
        %5195 = vmatprep.subr.mxu0 %v3125
        %5196 = vmatpush1.msra.mxu0 %v3124
        %5197 = vmatprep.subr.mxu0 %v3127
        %5198 = vmatpush1.msra.mxu0 %v3126
        %5199 = vmatprep.subr.mxu0 %v3129
        %5200 = vmatpush1.msra.mxu0 %v3128
        %5201 = vmatprep.subr.mxu0 %v3131
        %5202 = vmatpush1.msra.mxu0 %v3130
        %5203 = vmatprep.subr.mxu0 %v3133
        %5204 = vmatpush1.msra.mxu0 %v3132
        %5205 = vmatprep.subr.mxu0 %v3135
        %5206 = vmatpush1.msra.mxu0 %v3134
        %5207 = vmatprep.subr.mxu0 %v3137
        %5208 = vmatpush1.msra.mxu0 %v3136
        %5209 = vmatprep.mubr.f32.mxu0 %v1539
        %5210 = vmatmul.mubr.f32.gmra.mrb[0].mxu0 %v1538
        %v5211 = vpop.f32.mrb[0].mxu0
        %v5212 = vadd.f32 %v5135, %v5211
        %v5213 = vpop.f32.mrb[0].mxu0
        %v5214 = vadd.f32 %v5137, %v5213
        %5215 = vmatprep.mubr.f32.mxu0 %v1594
        %5216 = vmatmul.mubr.f32.gmra.mrb[0].mxu0 %v1593
        %v5217 = vpop.f32.mrb[0].mxu0
        %v5218 = vadd.f32 %v5141, %v5217
        %v5219 = vpop.f32.mrb[0].mxu0
        %v5220 = vadd.f32 %v5143, %v5219
        %5221 = vdwg.mxu0
        %5222 = vmatprep.subr.mxu0 %v3139
        %5223 = vmatpush1.msra.mxu0 %v3138
        %5224 = vmatprep.subr.mxu0 %v3141
        %5225 = vmatpush1.msra.mxu0 %v3140
        %5226 = vmatprep.subr.mxu0 %v3143
        %5227 = vmatpush1.msra.mxu0 %v3142
        %5228 = vmatprep.subr.mxu0 %v3145
        %5229 = vmatpush1.msra.mxu0 %v3144
        %5230 = vmatprep.subr.mxu0 %v3147
        %5231 = vmatpush1.msra.mxu0 %v3146
        %5232 = vmatprep.subr.mxu0 %v3149
        %5233 = vmatpush1.msra.mxu0 %v3148
        %5234 = vmatprep.subr.mxu0 %v3151
        %5235 = vmatpush1.msra.mxu0 %v3150
        %5236 = vmatprep.subr.mxu0 %v3153
        %5237 = vmatpush1.msra.mxu0 %v3152
        %5238 = vmatprep.subr.mxu0 %v3155
        %5239 = vmatpush1.msra.mxu0 %v3154
        %5240 = vmatprep.subr.mxu0 %v3157
        %5241 = vmatpush1.msra.mxu0 %v3156
        %5242 = vmatprep.subr.mxu0 %v3159
        %5243 = vmatpush1.msra.mxu0 %v3158
        %5244 = vmatprep.subr.mxu0 %v3161
        %5245 = vmatpush1.msra.mxu0 %v3160
        %5246 = vmatprep.subr.mxu0 %v3163
        %5247 = vmatpush1.msra.mxu0 %v3162
        %5248 = vmatprep.subr.mxu0 %v3165
        %5249 = vmatpush1.msra.mxu0 %v3164
        %5250 = vmatprep.subr.mxu0 %v3167
        %5251 = vmatpush1.msra.mxu0 %v3166
        %5252 = vmatprep.subr.mxu0 %v3169
        %5253 = vmatpush1.msra.mxu0 %v3168
        %5254 = vmatprep.subr.mxu0 %v3171
        %5255 = vmatpush1.msra.mxu0 %v3170
        %5256 = vmatprep.subr.mxu0 %v3173
        %5257 = vmatpush1.msra.mxu0 %v3172
        %5258 = vmatprep.subr.mxu0 %v3175
        %5259 = vmatpush1.msra.mxu0 %v3174
        %5260 = vmatprep.subr.mxu0 %v3177
        %5261 = vmatpush1.msra.mxu0 %v3176
        %5262 = vmatprep.subr.mxu0 %v3179
        %5263 = vmatpush1.msra.mxu0 %v3178
        %5264 = vmatprep.subr.mxu0 %v3181
        %5265 = vmatpush1.msra.mxu0 %v3180
        %5266 = vmatprep.subr.mxu0 %v3183
        %5267 = vmatpush1.msra.mxu0 %v3182
        %5268 = vmatprep.subr.mxu0 %v3185
        %5269 = vmatpush1.msra.mxu0 %v3184
        %5270 = vmatprep.subr.mxu0 %v3187
        %5271 = vmatpush1.msra.mxu0 %v3186
        %5272 = vmatprep.subr.mxu0 %v3189
        %5273 = vmatpush1.msra.mxu0 %v3188
        %5274 = vmatprep.subr.mxu0 %v3191
        %5275 = vmatpush1.msra.mxu0 %v3190
        %5276 = vmatprep.subr.mxu0 %v3193
        %5277 = vmatpush1.msra.mxu0 %v3192
        %5278 = vmatprep.subr.mxu0 %v3195
        %5279 = vmatpush1.msra.mxu0 %v3194
        %5280 = vmatprep.subr.mxu0 %v3197
        %5281 = vmatpush1.msra.mxu0 %v3196
        %5282 = vmatprep.subr.mxu0 %v3199
        %5283 = vmatpush1.msra.mxu0 %v3198
        %5284 = vmatprep.subr.mxu0 %v3201
        %5285 = vmatpush1.msra.mxu0 %v3200
        %5286 = vmatprep.mubr.f32.mxu0 %v1541
        %5287 = vmatmul.mubr.f32.gmra.mrb[0].mxu0 %v1540
        %v5288 = vpop.f32.mrb[0].mxu0
        %v5289 = vadd.f32 %v5212, %v5288
        %v5290 = vpop.f32.mrb[0].mxu0
        %v5291 = vadd.f32 %v5214, %v5290
        %5292 = vmatprep.mubr.f32.mxu0 %v1596
        %5293 = vmatmul.mubr.f32.gmra.mrb[0].mxu0 %v1595
        %v5294 = vpop.f32.mrb[0].mxu0
        %v5295 = vadd.f32 %v5218, %v5294
        %v5296 = vpop.f32.mrb[0].mxu0
        %v5297 = vadd.f32 %v5220, %v5296
        %5298 = vdwg.mxu0
        %5299 = vmatprep.subr.mxu0 %v3203
        %5300 = vmatpush1.msra.mxu0 %v3202
        %5301 = vmatprep.subr.mxu0 %v3205
        %5302 = vmatpush1.msra.mxu0 %v3204
        %5303 = vmatprep.subr.mxu0 %v3207
        %5304 = vmatpush1.msra.mxu0 %v3206
        %5305 = vmatprep.subr.mxu0 %v3209
        %5306 = vmatpush1.msra.mxu0 %v3208
        %5307 = vmatprep.subr.mxu0 %v3211
        %5308 = vmatpush1.msra.mxu0 %v3210
        %5309 = vmatprep.subr.mxu0 %v3213
        %5310 = vmatpush1.msra.mxu0 %v3212
        %5311 = vmatprep.subr.mxu0 %v3215
        %5312 = vmatpush1.msra.mxu0 %v3214
        %5313 = vmatprep.subr.mxu0 %v3217
        %5314 = vmatpush1.msra.mxu0 %v3216
        %5315 = vmatprep.subr.mxu0 %v3219
        %5316 = vmatpush1.msra.mxu0 %v3218
        %5317 = vmatprep.subr.mxu0 %v3221
        %5318 = vmatpush1.msra.mxu0 %v3220
        %5319 = vmatprep.subr.mxu0 %v3223
        %5320 = vmatpush1.msra.mxu0 %v3222
        %5321 = vmatprep.subr.mxu0 %v3225
        %5322 = vmatpush1.msra.mxu0 %v3224
        %5323 = vmatprep.subr.mxu0 %v3227
        %5324 = vmatpush1.msra.mxu0 %v3226
        %5325 = vmatprep.subr.mxu0 %v3229
        %5326 = vmatpush1.msra.mxu0 %v3228
        %5327 = vmatprep.subr.mxu0 %v3231
        %5328 = vmatpush1.msra.mxu0 %v3230
        %5329 = vmatprep.subr.mxu0 %v3233
        %5330 = vmatpush1.msra.mxu0 %v3232
        %5331 = vmatprep.subr.mxu0 %v3235
        %5332 = vmatpush1.msra.mxu0 %v3234
        %5333 = vmatprep.subr.mxu0 %v3237
        %5334 = vmatpush1.msra.mxu0 %v3236
        %5335 = vmatprep.subr.mxu0 %v3239
        %5336 = vmatpush1.msra.mxu0 %v3238
        %5337 = vmatprep.subr.mxu0 %v3241
        %5338 = vmatpush1.msra.mxu0 %v3240
        %5339 = vmatprep.subr.mxu0 %v3243
        %5340 = vmatpush1.msra.mxu0 %v3242
        %5341 = vmatprep.subr.mxu0 %v3245
        %5342 = vmatpush1.msra.mxu0 %v3244
        %5343 = vmatprep.subr.mxu0 %v3247
        %5344 = vmatpush1.msra.mxu0 %v3246
        %5345 = vmatprep.subr.mxu0 %v3249
        %5346 = vmatpush1.msra.mxu0 %v3248
        %5347 = vmatprep.subr.mxu0 %v3251
        %5348 = vmatpush1.msra.mxu0 %v3250
        %5349 = vmatprep.subr.mxu0 %v3253
        %5350 = vmatpush1.msra.mxu0 %v3252
        %5351 = vmatprep.subr.mxu0 %v3255
        %5352 = vmatpush1.msra.mxu0 %v3254
        %5353 = vmatprep.subr.mxu0 %v3257
        %5354 = vmatpush1.msra.mxu0 %v3256
        %5355 = vmatprep.subr.mxu0 %v3259
        %5356 = vmatpush1.msra.mxu0 %v3258
        %5357 = vmatprep.subr.mxu0 %v3261
        %5358 = vmatpush1.msra.mxu0 %v3260
        %5359 = vmatprep.subr.mxu0 %v3263
        %5360 = vmatpush1.msra.mxu0 %v3262
        %5361 = vmatprep.subr.mxu0 %v3265
        %5362 = vmatpush1.msra.mxu0 %v3264
        %5363 = vmatprep.mubr.f32.mxu0 %v1543
        %5364 = vmatmul.mubr.f32.gmra.mrb[0].mxu0 %v1542
        %v5365 = vpop.f32.mrb[0].mxu0
        %v5366 = vadd.f32 %v5289, %v5365
        %v5367 = vpop.f32.mrb[0].mxu0
        %v5368 = vadd.f32 %v5291, %v5367
        %5369 = vmatprep.mubr.f32.mxu0 %v1598
        %5370 = vmatmul.mubr.f32.gmra.mrb[0].mxu0 %v1597
        %v5371 = vpop.f32.mrb[0].mxu0
        %v5372 = vadd.f32 %v5295, %v5371
        %v5373 = vpop.f32.mrb[0].mxu0
        %v5374 = vadd.f32 %v5297, %v5373
        %5375 = vdwg.mxu0
        %5376 = vmatprep.subr.mxu0 %v3267
        %5377 = vmatpush1.msra.mxu0 %v3266
        %5378 = vmatprep.subr.mxu0 %v3269
        %5379 = vmatpush1.msra.mxu0 %v3268
        %5380 = vmatprep.subr.mxu0 %v3271
        %5381 = vmatpush1.msra.mxu0 %v3270
        %5382 = vmatprep.subr.mxu0 %v3273
        %5383 = vmatpush1.msra.mxu0 %v3272
        %5384 = vmatprep.subr.mxu0 %v3275
        %5385 = vmatpush1.msra.mxu0 %v3274
        %5386 = vmatprep.subr.mxu0 %v3277
        %5387 = vmatpush1.msra.mxu0 %v3276
        %5388 = vmatprep.subr.mxu0 %v3279
        %5389 = vmatpush1.msra.mxu0 %v3278
        %5390 = vmatprep.subr.mxu0 %v3281
        %5391 = vmatpush1.msra.mxu0 %v3280
        %5392 = vmatprep.subr.mxu0 %v3283
        %5393 = vmatpush1.msra.mxu0 %v3282
        %5394 = vmatprep.subr.mxu0 %v3285
        %5395 = vmatpush1.msra.mxu0 %v3284
        %5396 = vmatprep.subr.mxu0 %v3287
        %5397 = vmatpush1.msra.mxu0 %v3286
        %5398 = vmatprep.subr.mxu0 %v3289
        %5399 = vmatpush1.msra.mxu0 %v3288
        %5400 = vmatprep.subr.mxu0 %v3291
        %5401 = vmatpush1.msra.mxu0 %v3290
        %5402 = vmatprep.subr.mxu0 %v3293
        %5403 = vmatpush1.msra.mxu0 %v3292
        %5404 = vmatprep.subr.mxu0 %v3295
        %5405 = vmatpush1.msra.mxu0 %v3294
        %5406 = vmatprep.subr.mxu0 %v3297
        %5407 = vmatpush1.msra.mxu0 %v3296
        %5408 = vmatprep.subr.mxu0 %v3299
        %5409 = vmatpush1.msra.mxu0 %v3298
        %5410 = vmatprep.subr.mxu0 %v3301
        %5411 = vmatpush1.msra.mxu0 %v3300
        %5412 = vmatprep.subr.mxu0 %v3303
        %5413 = vmatpush1.msra.mxu0 %v3302
        %5414 = vmatprep.subr.mxu0 %v3305
        %5415 = vmatpush1.msra.mxu0 %v3304
        %5416 = vmatprep.subr.mxu0 %v3307
        %5417 = vmatpush1.msra.mxu0 %v3306
        %5418 = vmatprep.subr.mxu0 %v3309
        %5419 = vmatpush1.msra.mxu0 %v3308
        %5420 = vmatprep.subr.mxu0 %v3311
        %5421 = vmatpush1.msra.mxu0 %v3310
        %5422 = vmatprep.subr.mxu0 %v3313
        %5423 = vmatpush1.msra.mxu0 %v3312
        %5424 = vmatprep.subr.mxu0 %v3315
        %5425 = vmatpush1.msra.mxu0 %v3314
        %5426 = vmatprep.subr.mxu0 %v3317
        %5427 = vmatpush1.msra.mxu0 %v3316
        %5428 = vmatprep.subr.mxu0 %v3319
        %5429 = vmatpush1.msra.mxu0 %v3318
        %5430 = vmatprep.subr.mxu0 %v3321
        %5431 = vmatpush1.msra.mxu0 %v3320
        %5432 = vmatprep.subr.mxu0 %v3323
        %5433 = vmatpush1.msra.mxu0 %v3322
        %5434 = vmatprep.subr.mxu0 %v3325
        %5435 = vmatpush1.msra.mxu0 %v3324
        %5436 = vmatprep.subr.mxu0 %v3327
        %5437 = vmatpush1.msra.mxu0 %v3326
        %5438 = vmatprep.subr.mxu0 %v3329
        %5439 = vmatpush1.msra.mxu0 %v3328
        %5440 = vmatprep.mubr.f32.mxu0 %v1545
        %5441 = vmatmul.mubr.f32.gmra.mrb[0].mxu0 %v1544
        %v5442 = vpop.f32.mrb[0].mxu0
        %v5443 = vadd.f32 %v5366, %v5442
        %v5444 = vpop.f32.mrb[0].mxu0
        %v5445 = vadd.f32 %v5368, %v5444
        %5446 = vmatprep.mubr.f32.mxu0 %v1600
        %5447 = vmatmul.mubr.f32.gmra.mrb[0].mxu0 %v1599
        %v5448 = vpop.f32.mrb[0].mxu0
        %v5449 = vadd.f32 %v5372, %v5448
        %v5450 = vpop.f32.mrb[0].mxu0
        %v5451 = vadd.f32 %v5374, %v5450
        %5452 = vdwg.mxu0
        %5453 = vmatprep.subr.mxu0 %v3331
        %5454 = vmatpush1.msra.mxu0 %v3330
        %5455 = vmatprep.subr.mxu0 %v3333
        %5456 = vmatpush1.msra.mxu0 %v3332
        %5457 = vmatprep.subr.mxu0 %v3335
        %5458 = vmatpush1.msra.mxu0 %v3334
        %5459 = vmatprep.subr.mxu0 %v3337
        %5460 = vmatpush1.msra.mxu0 %v3336
        %5461 = vmatprep.subr.mxu0 %v3339
        %5462 = vmatpush1.msra.mxu0 %v3338
        %5463 = vmatprep.subr.mxu0 %v3341
        %5464 = vmatpush1.msra.mxu0 %v3340
        %5465 = vmatprep.subr.mxu0 %v3343
        %5466 = vmatpush1.msra.mxu0 %v3342
        %5467 = vmatprep.subr.mxu0 %v3345
        %5468 = vmatpush1.msra.mxu0 %v3344
        %5469 = vmatprep.subr.mxu0 %v3347
        %5470 = vmatpush1.msra.mxu0 %v3346
        %5471 = vmatprep.subr.mxu0 %v3349
        %5472 = vmatpush1.msra.mxu0 %v3348
        %5473 = vmatprep.subr.mxu0 %v3351
        %5474 = vmatpush1.msra.mxu0 %v3350
        %5475 = vmatprep.subr.mxu0 %v3353
        %5476 = vmatpush1.msra.mxu0 %v3352
        %5477 = vmatprep.subr.mxu0 %v3355
        %5478 = vmatpush1.msra.mxu0 %v3354
        %5479 = vmatprep.subr.mxu0 %v3357
        %5480 = vmatpush1.msra.mxu0 %v3356
        %5481 = vmatprep.subr.mxu0 %v3359
        %5482 = vmatpush1.msra.mxu0 %v3358
        %5483 = vmatprep.subr.mxu0 %v3361
        %5484 = vmatpush1.msra.mxu0 %v3360
        %5485 = vmatprep.subr.mxu0 0.0
        %5486 = vmatpush1.msra.mxu0 0.0
        %5487 = vmatprep.subr.mxu0 0.0
        %5488 = vmatpush1.msra.mxu0 0.0
        %5489 = vmatprep.subr.mxu0 0.0
        %5490 = vmatpush1.msra.mxu0 0.0
        %5491 = vmatprep.subr.mxu0 0.0
        %5492 = vmatpush1.msra.mxu0 0.0
        %5493 = vmatprep.subr.mxu0 0.0
        %5494 = vmatpush1.msra.mxu0 0.0
        %5495 = vmatprep.subr.mxu0 0.0
        %5496 = vmatpush1.msra.mxu0 0.0
        %5497 = vmatprep.subr.mxu0 0.0
        %5498 = vmatpush1.msra.mxu0 0.0
        %5499 = vmatprep.subr.mxu0 0.0
        %5500 = vmatpush1.msra.mxu0 0.0
        %5501 = vmatprep.subr.mxu0 0.0
        %5502 = vmatpush1.msra.mxu0 0.0
        %5503 = vmatprep.subr.mxu0 0.0
        %5504 = vmatpush1.msra.mxu0 0.0
        %5505 = vmatprep.subr.mxu0 0.0
        %5506 = vmatpush1.msra.mxu0 0.0
        %5507 = vmatprep.subr.mxu0 0.0
        %5508 = vmatpush1.msra.mxu0 0.0
        %5509 = vmatprep.subr.mxu0 0.0
        %5510 = vmatpush1.msra.mxu0 0.0
        %5511 = vmatprep.subr.mxu0 0.0
        %5512 = vmatpush1.msra.mxu0 0.0
        %5513 = vmatprep.subr.mxu0 0.0
        %5514 = vmatpush1.msra.mxu0 0.0
        %5515 = vmatprep.subr.mxu0 0.0
        %5516 = vmatpush1.msra.mxu0 0.0
        %5517 = vmatprep.mubr.f32.mxu0 0.0
        %5518 = vmatmul.mubr.f32.gmra.mrb[0].mxu0 %v1546
        %v5519 = vpop.f32.mrb[0].mxu0
        %v5520 = vadd.f32 %v5443, %v5519
        %v5521 = vpop.f32.mrb[0].mxu0
        %v5522 = vadd.f32 %v5445, %v5521
        %5523 = vmatprep.mubr.f32.mxu0 0.0
        %5524 = vmatmul.mubr.f32.gmra.mrb[0].mxu0 %v1601
        %v5525 = vpop.f32.mrb[0].mxu0
        %v5526 = vadd.f32 %v5449, %v5525
        %v5527 = vpop.f32.mrb[0].mxu0
        %v5528 = vadd.f32 %v5451, %v5527
        %5529 = vdwg.mxu0
        %v5530 = vld [vmem:[%s253 + $0x30] sm:$0xff]
        %v5531 = vld [vmem:[%s253 + $0x68] sm:$0xff]
        %v5532 = vld [vmem:[%s2] sm:$0xff]
        %v5533 = vld [vmem:[%s2 + $0x8] sm:$0xff]
        %v5534 = vld [vmem:[%s2 + $0x10] sm:$0xff]
        %v5535 = vld [vmem:[%s2 + $0x18] sm:$0xff]
        %v5536 = vld [vmem:[%s2 + $0x20] sm:$0xff]
        %v5537 = vld [vmem:[%s2 + $0x28] sm:$0xff]
        %v5538 = vld [vmem:[%s2 + $0x30] sm:$0xff]
        %v5539 = vld [vmem:[%s2 + $0x38] sm:$0xff]
        %v5540 = vld [vmem:[%s2 + $0x40] sm:$0xff]
        %v5541 = vld [vmem:[%s2 + $0x48] sm:$0xff]
        %v5542 = vld [vmem:[%s2 + $0x50] sm:$0xff]
        %v5543 = vld [vmem:[%s2 + $0x58] sm:$0xff]
        %v5544 = vld [vmem:[%s2 + $0x60] sm:$0xff]
        %v5545 = vld [vmem:[%s2 + $0x68] sm:$0xff]
        %v5546 = vld [vmem:[%s2 + $0x70] sm:$0xff]
        %v5547 = vld [vmem:[%s2 + $0x78] sm:$0xff]
        %v5548 = vld [vmem:[%s2 + $0x80] sm:$0xff]
        %v5549 = vld [vmem:[%s2 + $0x88] sm:$0xff]
        %v5550 = vld [vmem:[%s2 + $0x90] sm:$0xff]
        %v5551 = vld [vmem:[%s2 + $0x98] sm:$0xff]
        %v5552 = vld [vmem:[%s2 + $0xa0] sm:$0xff]
        %v5553 = vld [vmem:[%s2 + $0xa8] sm:$0xff]
        %v5554 = vld [vmem:[%s2 + $0xb0] sm:$0xff]
        %v5555 = vld [vmem:[%s2 + $0xb8] sm:$0xff]
        %v5556 = vld [vmem:[%s2 + $0xc0] sm:$0xff]
        %v5557 = vld [vmem:[%s2 + $0xc8] sm:$0xff]
        %v5558 = vld [vmem:[%s2 + $0xd0] sm:$0xff]
        %v5559 = vld [vmem:[%s2 + $0xd8] sm:$0xff]
        %v5560 = vld [vmem:[%s2 + $0xe0] sm:$0xff]
        %v5561 = vld [vmem:[%s2 + $0xe8] sm:$0xff]
        %v5562 = vld [vmem:[%s2 + $0xf0] sm:$0xff]
        %v5563 = vld [vmem:[%s2 + $0xf8] sm:$0xff]
        %5564 = vmatprep.subr.mxu0 %v5533
        %5565 = vmatpush1.msra.mxu0 %v5532
        %5566 = vmatprep.subr.mxu0 %v5535
        %5567 = vmatpush1.msra.mxu0 %v5534
        %5568 = vmatprep.subr.mxu0 %v5537
        %5569 = vmatpush1.msra.mxu0 %v5536
        %5570 = vmatprep.subr.mxu0 %v5539
        %5571 = vmatpush1.msra.mxu0 %v5538
        %5572 = vmatprep.subr.mxu0 %v5541
        %5573 = vmatpush1.msra.mxu0 %v5540
        %5574 = vmatprep.subr.mxu0 %v5543
        %5575 = vmatpush1.msra.mxu0 %v5542
        %5576 = vmatprep.subr.mxu0 %v5545
        %5577 = vmatpush1.msra.mxu0 %v5544
        %5578 = vmatprep.subr.mxu0 %v5547
        %5579 = vmatpush1.msra.mxu0 %v5546
        %5580 = vmatprep.subr.mxu0 %v5549
        %5581 = vmatpush1.msra.mxu0 %v5548
        %5582 = vmatprep.subr.mxu0 %v5551
        %5583 = vmatpush1.msra.mxu0 %v5550
        %5584 = vmatprep.subr.mxu0 %v5553
        %5585 = vmatpush1.msra.mxu0 %v5552
        %5586 = vmatprep.subr.mxu0 %v5555
        %5587 = vmatpush1.msra.mxu0 %v5554
        %5588 = vmatprep.subr.mxu0 %v5557
        %5589 = vmatpush1.msra.mxu0 %v5556
        %5590 = vmatprep.subr.mxu0 %v5559
        %5591 = vmatpush1.msra.mxu0 %v5558
        %5592 = vmatprep.subr.mxu0 %v5561
        %5593 = vmatpush1.msra.mxu0 %v5560
        %5594 = vmatprep.subr.mxu0 %v5563
        %5595 = vmatpush1.msra.mxu0 %v5562
        %5596 = vmatprep.subr.mxu0 0.0
        %5597 = vmatpush1.msra.mxu0 0.0
        %5598 = vmatprep.subr.mxu0 0.0
        %5599 = vmatpush1.msra.mxu0 0.0
        %5600 = vmatprep.subr.mxu0 0.0
        %5601 = vmatpush1.msra.mxu0 0.0
        %5602 = vmatprep.subr.mxu0 0.0
        %5603 = vmatpush1.msra.mxu0 0.0
        %5604 = vmatprep.subr.mxu0 0.0
        %5605 = vmatpush1.msra.mxu0 0.0
        %5606 = vmatprep.subr.mxu0 0.0
        %5607 = vmatpush1.msra.mxu0 0.0
        %5608 = vmatprep.subr.mxu0 0.0
        %5609 = vmatpush1.msra.mxu0 0.0
        %5610 = vmatprep.subr.mxu0 0.0
        %5611 = vmatpush1.msra.mxu0 0.0
        %5612 = vmatprep.subr.mxu0 0.0
        %5613 = vmatpush1.msra.mxu0 0.0
        %5614 = vmatprep.subr.mxu0 0.0
        %5615 = vmatpush1.msra.mxu0 0.0
        %5616 = vmatprep.subr.mxu0 0.0
        %5617 = vmatpush1.msra.mxu0 0.0
        %5618 = vmatprep.subr.mxu0 0.0
        %5619 = vmatpush1.msra.mxu0 0.0
        %5620 = vmatprep.subr.mxu0 0.0
        %5621 = vmatpush1.msra.mxu0 0.0
        %5622 = vmatprep.subr.mxu0 0.0
        %5623 = vmatpush1.msra.mxu0 0.0
        %5624 = vmatprep.subr.mxu0 0.0
        %5625 = vmatpush1.msra.mxu0 0.0
        %5626 = vmatprep.subr.mxu0 0.0
        %5627 = vmatpush1.msra.mxu0 0.0
        %5628 = vmatprep.mubr.f32.mxu0 0.0
        %5629 = vmatmul.mubr.f32.gmra.mrb[0].mxu0 %v5530
        %v5630 = vpop.f32.mrb[0].mxu0
        %v5631 = vadd.f32 0.0, %v5630
        %v5632 = vpop.f32.mrb[0].mxu0
        %v5633 = vadd.f32 0.0, %v5632
        %5634 = vmatprep.mubr.f32.mxu0 0.0
        %5635 = vmatmul.mubr.f32.gmra.mrb[0].mxu0 %v5531
        %v5636 = vpop.f32.mrb[0].mxu0
        %v5637 = vadd.f32 0.0, %v5636
        %v5638 = vpop.f32.mrb[0].mxu0
        %v5639 = vadd.f32 0.0, %v5638
        %5640 = vdwg.mxu0
        %v5641 = vmul.f32 %v5631, %v5520
        %v5642 = vmul.f32 %v5633, %v5522
        %v5643 = vmul.f32 %v5637, %v5526
        %v5644 = vmul.f32 %v5639, %v5528
        %v5645 = vld [vmem:[%s3] sm:$0xff]
        %v5646 = vld [vmem:[%s3 + $0x8] sm:$0xff]
        %v5647 = vld [vmem:[%s3 + $0x10] sm:$0xff]
        %v5648 = vld [vmem:[%s3 + $0x18] sm:$0xff]
        %v5649 = vld [vmem:[%s3 + $0x20] sm:$0xff]
        %v5650 = vld [vmem:[%s3 + $0x28] sm:$0xff]
        %v5651 = vld [vmem:[%s3 + $0x30] sm:$0xff]
        %v5652 = vld [vmem:[%s3 + $0x38] sm:$0xff]
        %v5653 = vld [vmem:[%s3 + $0x40] sm:$0xff]
        %v5654 = vld [vmem:[%s3 + $0x48] sm:$0xff]
        %v5655 = vld [vmem:[%s3 + $0x50] sm:$0xff]
        %v5656 = vld [vmem:[%s3 + $0x58] sm:$0xff]
        %v5657 = vld [vmem:[%s3 + $0x60] sm:$0xff]
        %v5658 = vld [vmem:[%s3 + $0x68] sm:$0xff]
        %v5659 = vld [vmem:[%s3 + $0x70] sm:$0xff]
        %v5660 = vld [vmem:[%s3 + $0x78] sm:$0xff]
        %v5661 = vld [vmem:[%s3 + $0x80] sm:$0xff]
        %v5662 = vld [vmem:[%s3 + $0x88] sm:$0xff]
        %v5663 = vld [vmem:[%s3 + $0x90] sm:$0xff]
        %v5664 = vld [vmem:[%s3 + $0x98] sm:$0xff]
        %v5665 = vld [vmem:[%s3 + $0xa0] sm:$0xff]
        %v5666 = vld [vmem:[%s3 + $0xa8] sm:$0xff]
        %v5667 = vld [vmem:[%s3 + $0xb0] sm:$0xff]
        %v5668 = vld [vmem:[%s3 + $0xb8] sm:$0xff]
        %v5669 = vld [vmem:[%s3 + $0xc0] sm:$0xff]
        %v5670 = vld [vmem:[%s3 + $0xc8] sm:$0xff]
        %v5671 = vld [vmem:[%s3 + $0xd0] sm:$0xff]
        %v5672 = vld [vmem:[%s3 + $0xd8] sm:$0xff]
        %v5673 = vld [vmem:[%s3 + $0xe0] sm:$0xff]
        %v5674 = vld [vmem:[%s3 + $0xe8] sm:$0xff]
        %v5675 = vld [vmem:[%s3 + $0xf0] sm:$0xff]
        %v5676 = vld [vmem:[%s3 + $0xf8] sm:$0xff]
        %v5677 = vld [vmem:[%s5] sm:$0x1]
        %v5679 = vlaneseq
        %v5680 = vshrl.u32 %v5679, 7
        %v5681 = vsub.s32 0, %v5680
        %v5682 = vrot.slane %v5677, %v5681
        %5684 = vmatprep.subr.mxu0 0.0
        %5685 = vmatpush1.msra.mxu0 %v5645
        %5686 = vmatprep.subr.mxu0 0.0
        %5687 = vmatpush1.msra.mxu0 %v5646
        %5688 = vmatprep.subr.mxu0 0.0
        %5689 = vmatpush1.msra.mxu0 %v5647
        %5690 = vmatprep.subr.mxu0 0.0
        %5691 = vmatpush1.msra.mxu0 %v5648
        %5692 = vmatprep.subr.mxu0 0.0
        %5693 = vmatpush1.msra.mxu0 %v5649
        %5694 = vmatprep.subr.mxu0 0.0
        %5695 = vmatpush1.msra.mxu0 %v5650
        %5696 = vmatprep.subr.mxu0 0.0
        %5697 = vmatpush1.msra.mxu0 %v5651
        %5698 = vmatprep.subr.mxu0 0.0
        %5699 = vmatpush1.msra.mxu0 %v5652
        %5700 = vmatprep.subr.mxu0 0.0
        %5701 = vmatpush1.msra.mxu0 %v5653
        %5702 = vmatprep.subr.mxu0 0.0
        %5703 = vmatpush1.msra.mxu0 %v5654
        %5704 = vmatprep.subr.mxu0 0.0
        %5705 = vmatpush1.msra.mxu0 %v5655
        %5706 = vmatprep.subr.mxu0 0.0
        %5707 = vmatpush1.msra.mxu0 %v5656
        %5708 = vmatprep.subr.mxu0 0.0
        %5709 = vmatpush1.msra.mxu0 %v5657
        %5710 = vmatprep.subr.mxu0 0.0
        %5711 = vmatpush1.msra.mxu0 %v5658
        %5712 = vmatprep.subr.mxu0 0.0
        %5713 = vmatpush1.msra.mxu0 %v5659
        %5714 = vmatprep.subr.mxu0 0.0
        %5715 = vmatpush1.msra.mxu0 %v5660
        %5716 = vmatprep.subr.mxu0 0.0
        %5717 = vmatpush1.msra.mxu0 %v5661
        %5718 = vmatprep.subr.mxu0 0.0
        %5719 = vmatpush1.msra.mxu0 %v5662
        %5720 = vmatprep.subr.mxu0 0.0
        %5721 = vmatpush1.msra.mxu0 %v5663
        %5722 = vmatprep.subr.mxu0 0.0
        %5723 = vmatpush1.msra.mxu0 %v5664
        %5724 = vmatprep.subr.mxu0 0.0
        %5725 = vmatpush1.msra.mxu0 %v5665
        %5726 = vmatprep.subr.mxu0 0.0
        %5727 = vmatpush1.msra.mxu0 %v5666
        %5728 = vmatprep.subr.mxu0 0.0
        %5729 = vmatpush1.msra.mxu0 %v5667
        %5730 = vmatprep.subr.mxu0 0.0
        %5731 = vmatpush1.msra.mxu0 %v5668
        %5732 = vmatprep.subr.mxu0 0.0
        %5733 = vmatpush1.msra.mxu0 %v5669
        %5734 = vmatprep.subr.mxu0 0.0
        %5735 = vmatpush1.msra.mxu0 %v5670
        %5736 = vmatprep.subr.mxu0 0.0
        %5737 = vmatpush1.msra.mxu0 %v5671
        %5738 = vmatprep.subr.mxu0 0.0
        %5739 = vmatpush1.msra.mxu0 %v5672
        %5740 = vmatprep.subr.mxu0 0.0
        %5741 = vmatpush1.msra.mxu0 %v5673
        %5742 = vmatprep.subr.mxu0 0.0
        %5743 = vmatpush1.msra.mxu0 %v5674
        %5744 = vmatprep.subr.mxu0 0.0
        %5745 = vmatpush1.msra.mxu0 %v5675
        %5746 = vmatprep.subr.mxu0 0.0
        %5747 = vmatpush1.msra.mxu0 %v5676
        %5748 = vmatprep.mubr.f32.mxu0 %v5642
        %5749 = vmatmul.mubr.f32.gmra.mrb[0].mxu0 %v5641
        %v5750 = vpop.f32.mrb[0].mxu0
        %v5751 = vadd.f32 %v5682, %v5750
        %v5752 = vpop.f32.mrb[0].mxu0
        %5753 = vmatprep.mubr.f32.mxu0 %v5644
        %5754 = vmatmul.mubr.f32.gmra.mrb[0].mxu0 %v5643
        %v5755 = vpop.f32.mrb[0].mxu0
        %v5756 = vadd.f32 %v5682, %v5755
        %v5757 = vpop.f32.mrb[0].mxu0
        %5758 = vdwg.mxu0
        %5759 = vst [vmem:[%s247] sm:$0xff] %v5751
        %5760 = vst [vmem:[%s247 + $0x8] sm:$0xff] %v5756
        %s5761 = sand.u32 %s159, 1
        %s5762 = scalar_lea.sflag [#allocation4], %s5761
        %s5763 = sand.u32 %s159, 1
        %s5764 = smul.addr %s5763, 16
        %s5765 = scalar_lea.vmem [#allocation3], %s5764
        // Predicated region
        $region45: #{struct_embedder_pallas.1} parent=43 // pred_check
          %p5766 = pneg %p169
        $region46: #{struct_embedder_pallas.1} parent=43 // pred_check_branch
          %5768 = sbr.rel (%p5766) target = $region48
        $region47: #{struct_embedder_pallas.1} parent=43 // pred_region
          %s5769 = smul.u32 2, %s20
          %s5771 = ssub.s32 256, 256
          %5772 = vsyncadd %s5762, %s5771
          %s5773 = smul.addr %s5769, 128
          %s5774 = scalar_lea.hbm %s6, %s5773
          %s5775 = sshll.u32 %s5765, 4
          %s5776 = int_to_ptr.vmem [resolvable:$true] %s5775
          %5781 = dma.vmem_to_hbm [thread:$0]  %s5776, 256, %s5774, %s5762, 128, 128, 8
        $region48: #{struct_embedder_pallas.1} parent=43 // pred_fallthru
          _
      $region44: #{struct_embedder_pallas.1} parent=5 // pred_fallthru
        _
      %p5782 = scmp.le.s32.totalorder 2, %s15
      // Predicated region
      $region49: #{struct_embedder_pallas.1} parent=5 // pred_check
        %p5783 = pneg %p5782
      $region50: #{struct_embedder_pallas.1} parent=5 // pred_check_branch
        %5785 = sbr.rel (%p5783) target = $region52
      $region51: #{struct_embedder_pallas.1} parent=5 // pred_region
        %s5786 = ssub.s32 %s15, 2
        // Predicated region
        $region53: #{struct_embedder_pallas.1} parent=51 // pred_check
          %p5787 = pneg %p175
        $region54: #{struct_embedder_pallas.1} parent=51 // pred_check_branch
          %5789 = sbr.rel (%p5787) target = $region56
        $region55: #{struct_embedder_pallas.1} parent=51 // pred_region
          %s5790 = sand.u32 %s160, 1
          %s5791 = scalar_lea.sflag [#allocation4], %s5790
          %s5792 = sand.u32 %s160, 1
          %s5793 = smul.addr %s5792, 16
          %s5794 = scalar_lea.vmem [#allocation3], %s5793
          %5795 = dma.done %s5791, 256
        $region56: #{struct_embedder_pallas.1} parent=51 // pred_fallthru
          _
      $region52: #{struct_embedder_pallas.1} parent=5 // pred_fallthru
        _
    $region6: #{struct_embedder_pallas.1} parent=1 // loop_footer
      %s19 = sadd.s32 1, %s15
    $region7: #{struct_embedder_pallas.1} parent=1 // loop_footer_branch
      %14 = sbr.rel target = $region3
    $region8: #{struct_embedder_pallas.1} parent=1 // loop_exit
      _
    %5796 = vsyncpa [#allocation4], 1
    %s5797 = scalar_lea.sflag [#allocation4], 1
    %5798 = vsyncpa %s5797, 1

</llo_original>
